<compile_context>
chip_gen: v7x
topology: tpu7x:2x2x1
jax: 0.10.0
libtpu: 0.0.40
codegen_flags: <defaults>
</compile_context>

<pallas_src>
import jax
import jax.numpy as jnp
from jax.experimental import pallas as pl
from jax.experimental.pallas import tpu as pltpu


def _make_fused_cnn_kernel(H, W, c_mid):
    """Build the fused 3-layer conv kernel for one image (grid over batch)."""
    P = W + 2                       # padded row width
    NPAD = (H + 2) * P              # padded spatial size, flattened
    EXT = ((P + 1 + 7) // 8) * 8    # 8-aligned zero extension, >= P+1
    EXTROWS = NPAD + 2 * EXT
    offsets = [(kh - 1) * P + (kw - 1) for kh in range(3) for kw in range(3)]

    def kernel(x0_ref, w0_ref, w1_ref, w2_ref, b_ref, m_ref, o_ref,
               ext_scr, patch_scr):
        # x0_ref    : (1, NPAD, 9*Cin)   layer-0 im2col patches (padded coords)
        # w0_ref    : (9*Cin, c_mid)
        # w1_ref    : (9*c_mid, c_mid)
        # w2_ref    : (9*c_mid, c_mid)
        # b_ref     : (3, c_mid)
        # m_ref     : (NPAD, 1)          1.0 on interior, 0.0 on the pad border
        # o_ref     : (1, NPAD, c_mid)   padded-flat output (border discarded)
        # ext_scr   : (EXTROWS, c_mid)   zero-extended activation (VMEM)
        # patch_scr : (NPAD, 9*c_mid)    im2col patch matrix for layers 1/2
        mask = m_ref[...]                                   # (NPAD, 1)

        # ---- layer 0: single MXU matmul over the pre-built patches ----
        a = jnp.dot(x0_ref[0], w0_ref[...],
                    preferred_element_type=jnp.float32)
        a = jnp.maximum(a + b_ref[0][None, :], 0.0) * mask

        # Zero the extension scratch once; only [EXT, EXT+NPAD) is rewritten,
        # so the zero borders persist for both layers below.
        ext_scr[...] = jnp.zeros_like(ext_scr)

        # ---- layers 1 and 2: VMEM-resident im2col + single K=9*c_mid dot ----
        for layer in range(2):
            w_ref = w1_ref if layer == 0 else w2_ref
            ext_scr[pl.ds(EXT, NPAD), :] = a
            for t, d in enumerate(offsets):
                patch_scr[:, pl.ds(t * c_mid, c_mid)] = (
                    ext_scr[pl.ds(EXT + d, NPAD), :])
            a = jnp.dot(patch_scr[...], w_ref[...],
                        preferred_element_type=jnp.float32)
            a = a + b_ref[layer + 1][None, :]
            if layer == 0:                 # ReLU + re-zero the pad border
                a = jnp.maximum(a, 0.0) * mask

        o_ref[0] = a

    return kernel, NPAD, EXTROWS


def _im2col_padded_flat(xpf, H, W):
    """Plain-JAX im2col on a padded-flat (N, NPAD, C) tensor (tap-major K)."""
    N, NPAD, C = xpf.shape
    P = W + 2
    ext = P + 1
    z = jnp.zeros((N, ext, C), xpf.dtype)
    xe = jnp.concatenate([z, xpf, z], axis=1)
    pieces = []
    for kh in range(3):
        for kw in range(3):
            d = (kh - 1) * P + (kw - 1)
            pieces.append(
                jax.lax.slice_in_dim(xe, ext + d, ext + d + NPAD, axis=1))
    return jnp.concatenate(pieces, axis=-1)        # (N, NPAD, 9*C)


@jax.jit
def cnn_model_forward(img_nchw, w0, b0, w1, b1, w2, b2):
    """Equivalent of CNN_Model.forward. Input NCHW, output NCHW."""
    N, Cin, H, W = img_nchw.shape
    Cout = w0.shape[-1]
    P = W + 2
    NPAD = (H + 2) * P

    # NCHW -> NHWC -> zero-pad -> flattened padded-spatial layout.
    x = jnp.transpose(img_nchw, (0, 2, 3, 1))
    xp = jnp.pad(x, ((0, 0), (1, 1), (1, 1), (0, 0)))
    xpf = xp.reshape(N, NPAD, Cin)
    x0col = _im2col_padded_flat(xpf, H, W)          # (N, NPAD, 9*Cin)

    # im2col weight layout: rows ordered (kh, kw, cin) == HWIO flattened.
    w0c = w0.reshape(9 * Cin, Cout)
    w1c = w1.reshape(9 * Cout, Cout)
    w2c = w2.reshape(9 * Cout, Cout)
    b_all = jnp.stack([b0, b1, b2], axis=0)         # (3, Cout)

    # Interior mask over padded-flat positions (1 inside H x W, 0 on border).
    ph = jnp.arange(H + 2)
    pw = jnp.arange(P)
    m2 = ((ph >= 1) & (ph <= H))[:, None] & ((pw >= 1) & (pw <= W))[None, :]
    mask = m2.astype(jnp.float32).reshape(NPAD, 1)

    kernel, npad, extrows = _make_fused_cnn_kernel(H, W, Cout)
    assert npad == NPAD

    out_pf = pl.pallas_call(
        kernel,
        out_shape=jax.ShapeDtypeStruct((N, NPAD, Cout), jnp.float32),
        grid=(N,),
        in_specs=[
            pl.BlockSpec((1, NPAD, 9 * Cin), lambda n: (n, 0, 0)),
            pl.BlockSpec((9 * Cin, Cout), lambda n: (0, 0)),
            pl.BlockSpec((9 * Cout, Cout), lambda n: (0, 0)),
            pl.BlockSpec((9 * Cout, Cout), lambda n: (0, 0)),
            pl.BlockSpec((3, Cout), lambda n: (0, 0)),
            pl.BlockSpec((NPAD, 1), lambda n: (0, 0)),
        ],
        out_specs=pl.BlockSpec((1, NPAD, Cout), lambda n: (n, 0, 0)),
        scratch_shapes=[
            pltpu.VMEM((extrows, Cout), jnp.float32),
            pltpu.VMEM((NPAD, 9 * Cout), jnp.float32),
        ],
        compiler_params=pltpu.CompilerParams(
            dimension_semantics=("parallel",)),
    )(x0col, w0c, w1c, w2c, b_all, mask)

    out = out_pf.reshape(N, H + 2, P, Cout)[:, 1:H + 1, 1:W + 1, :]
    return jnp.transpose(out, (0, 3, 1, 2))          # NHWC -> NCHW


def init_params(key, in_dim, hidden=64):
    """Deterministic parameter init (shapes match the PyTorch module)."""
    dims = [(in_dim, hidden), (hidden, hidden), (hidden, hidden)]
    params = []
    for i, (cin, cout) in enumerate(dims):
        kw_, kb_ = jax.random.split(jax.random.fold_in(key, i))
        fan_in = cin * 3 * 3
        bound = 1.0 / (fan_in ** 0.5)
        w = jax.random.uniform(kw_, (3, 3, cin, cout), jnp.float32,
                               minval=-bound, maxval=bound)
        bias = jax.random.uniform(kb_, (cout,), jnp.float32,
                                  minval=-bound, maxval=bound)
        params.append((w, bias))
    return params


def _reference_forward(img_nchw, params):
    """Pure-JAX reference (lax.conv) for correctness checking."""
    x = jnp.transpose(img_nchw, (0, 2, 3, 1))
    dn = jax.lax.conv_dimension_numbers(x.shape, params[0][0].shape,
                                        ("NHWC", "HWIO", "NHWC"))
    for i, (w, b) in enumerate(params):
        x = jax.lax.conv_general_dilated(
            x, w, window_strides=(1, 1), padding="SAME",
            dimension_numbers=dn)
        x = x + b[None, None, None, :]
        if i < 2:
            x = jnp.maximum(x, 0.0)
    return jnp.transpose(x, (0, 3, 1, 2))


if __name__ == "__main__":
    key = jax.random.PRNGKey(0)
    k_in, k_par = jax.random.split(key)

    N, C, Hs, Ws = 2, 4, 16, 16          # small shapes; in_dim = 4
    img = jax.random.normal(k_in, (N, C, Hs, Ws), jnp.float32)

    params = init_params(k_par, in_dim=C, hidden=64)
    (w0, b0), (w1, b1), (w2, b2) = params

    out = cnn_model_forward(img, w0, b0, w1, b1, w2, b2)
    out = jax.block_until_ready(out)

    assert out.shape == (N, 64, Hs, Ws), out.shape

    ref = jax.block_until_ready(_reference_forward(img, params))
    err = float(jnp.max(jnp.abs(out - ref)))
    assert err < 2e-4, f"max abs err vs reference: {err}"

    print("KERNEL_OK")
</pallas_src>

<mosaic_0001>
module attributes {stable_mosaic.version = 11 : i64} {
  func.func @kernel(%arg0: i32, %arg1: memref<1x324x36xf32, #tpu.memory_space<vmem>>, %arg2: memref<36x64xf32, #tpu.memory_space<vmem>>, %arg3: memref<576x64xf32, #tpu.memory_space<vmem>>, %arg4: memref<576x64xf32, #tpu.memory_space<vmem>>, %arg5: memref<3x64xf32, #tpu.memory_space<vmem>>, %arg6: memref<324x1xf32, #tpu.memory_space<vmem>>, %arg7: memref<1x324x64xf32, #tpu.memory_space<vmem>>, %arg8: memref<372x64xf32, #tpu.memory_space<vmem>>, %arg9: memref<324x576xf32, #tpu.memory_space<vmem>>) attributes {dimension_semantics = [#tpu.dimension_semantics<parallel>], iteration_bounds = array<i64: 2>, scalar_prefetch = 0 : i64, scratch_operands = 2 : i64, tpu.core_type = #tpu.core_type<tc>, window_params = [{transform_indices = @transform_0, window_bounds = array<i64: 1, 324, 36>}, {pipeline_mode = #tpu.pipeline_mode<synchronous>, transform_indices = @transform_1, window_bounds = array<i64: 36, 64>}, {pipeline_mode = #tpu.pipeline_mode<synchronous>, transform_indices = @transform_2, window_bounds = array<i64: 576, 64>}, {pipeline_mode = #tpu.pipeline_mode<synchronous>, transform_indices = @transform_3, window_bounds = array<i64: 576, 64>}, {pipeline_mode = #tpu.pipeline_mode<synchronous>, transform_indices = @transform_4, window_bounds = array<i64: 3, 64>}, {pipeline_mode = #tpu.pipeline_mode<synchronous>, transform_indices = @transform_5, window_bounds = array<i64: 324, 1>}, {transform_indices = @transform_6, window_bounds = array<i64: 1, 324, 64>}]} {
    %c0 = arith.constant 0 : index
    %c0_0 = arith.constant 0 : index
    %0 = vector.load %arg6[%c0, %c0_0] : memref<324x1xf32, #tpu.memory_space<vmem>>, vector<324x1xf32>
    %c0_1 = arith.constant 0 : index
    %c0_2 = arith.constant 0 : index
    %c0_3 = arith.constant 0 : index
    %1 = vector.load %arg1[%c0_1, %c0_2, %c0_3] : memref<1x324x36xf32, #tpu.memory_space<vmem>>, vector<1x324x36xf32>
    %2 = vector.shape_cast %1 : vector<1x324x36xf32> to vector<324x36xf32>
    %c0_4 = arith.constant 0 : index
    %c0_5 = arith.constant 0 : index
    %3 = vector.load %arg2[%c0_4, %c0_5] : memref<36x64xf32, #tpu.memory_space<vmem>>, vector<36x64xf32>
    %cst = arith.constant dense<0.000000e+00> : vector<324x64xf32>
    %4 = tpu.matmul %2, %3, %cst {dimension_numbers = #tpu.dot_dimension_numbers<[1], [0], [0], [1], [0, 0, 1, 1], [], []>} : vector<324x36xf32>, vector<36x64xf32>, vector<324x64xf32> -> vector<324x64xf32>
    %c0_6 = arith.constant 0 : index
    %c0_7 = arith.constant 0 : index
    %5 = vector.load %arg5[%c0_6, %c0_7] : memref<3x64xf32, #tpu.memory_space<vmem>>, vector<1x64xf32>
    %6 = vector.shape_cast %5 : vector<1x64xf32> to vector<64xf32>
    %7 = vector.shape_cast %6 : vector<64xf32> to vector<1x64xf32>
    %8 = vector.broadcast %7 : vector<1x64xf32> to vector<324x64xf32>
    %9 = arith.addf %4, %8 : vector<324x64xf32>
    %cst_8 = arith.constant 0.000000e+00 : f32
    %10 = vector.broadcast %cst_8 : f32 to vector<324x64xf32>
    %11 = arith.maximumf %9, %10 : vector<324x64xf32>
    %12 = vector.broadcast %0 : vector<324x1xf32> to vector<324x64xf32>
    %13 = arith.mulf %11, %12 : vector<324x64xf32>
    %cst_9 = arith.constant 0.000000e+00 : f32
    %14 = vector.broadcast %cst_9 : f32 to vector<372x64xf32>
    %c0_10 = arith.constant 0 : index
    %c0_11 = arith.constant 0 : index
    %15 = vector.load %arg8[%c0_10, %c0_11] : memref<372x64xf32, #tpu.memory_space<vmem>>, vector<372x64xf32>
    tpu.vector_store %arg8[%c0_10, %c0_11], %14 {strides = array<i32>} : memref<372x64xf32, #tpu.memory_space<vmem>>, vector<372x64xf32>,
    %c24 = arith.constant 24 : index
    %c0_12 = arith.constant 0 : index
    %16 = vector.load %arg8[%c24, %c0_12] : memref<372x64xf32, #tpu.memory_space<vmem>>, vector<324x64xf32>
    tpu.vector_store %arg8[%c24, %c0_12], %13 {strides = array<i32>} : memref<372x64xf32, #tpu.memory_space<vmem>>, vector<324x64xf32>,
    %c5 = arith.constant 5 : index
    %c0_13 = arith.constant 0 : index
    %17 = vector.load %arg8[%c5, %c0_13] : memref<372x64xf32, #tpu.memory_space<vmem>>, vector<324x64xf32>
    %c0_14 = arith.constant 0 : index
    %c0_15 = arith.constant 0 : index
    %18 = vector.load %arg9[%c0_14, %c0_15] : memref<324x576xf32, #tpu.memory_space<vmem>>, vector<324x64xf32>
    tpu.vector_store %arg9[%c0_14, %c0_15], %17 {strides = array<i32>} : memref<324x576xf32, #tpu.memory_space<vmem>>, vector<324x64xf32>,
    %c6 = arith.constant 6 : index
    %c0_16 = arith.constant 0 : index
    %19 = vector.load %arg8[%c6, %c0_16] : memref<372x64xf32, #tpu.memory_space<vmem>>, vector<324x64xf32>
    %c0_17 = arith.constant 0 : index
    %c64 = arith.constant 64 : index
    %20 = vector.load %arg9[%c0_17, %c64] : memref<324x576xf32, #tpu.memory_space<vmem>>, vector<324x64xf32>
    tpu.vector_store %arg9[%c0_17, %c64], %19 {strides = array<i32>} : memref<324x576xf32, #tpu.memory_space<vmem>>, vector<324x64xf32>,
    %c7 = arith.constant 7 : index
    %c0_18 = arith.constant 0 : index
    %21 = vector.load %arg8[%c7, %c0_18] : memref<372x64xf32, #tpu.memory_space<vmem>>, vector<324x64xf32>
    %c0_19 = arith.constant 0 : index
    %c128 = arith.constant 128 : index
    %22 = vector.load %arg9[%c0_19, %c128] : memref<324x576xf32, #tpu.memory_space<vmem>>, vector<324x64xf32>
    tpu.vector_store %arg9[%c0_19, %c128], %21 {strides = array<i32>} : memref<324x576xf32, #tpu.memory_space<vmem>>, vector<324x64xf32>,
    %c23 = arith.constant 23 : index
    %c0_20 = arith.constant 0 : index
    %23 = vector.load %arg8[%c23, %c0_20] : memref<372x64xf32, #tpu.memory_space<vmem>>, vector<324x64xf32>
    %c0_21 = arith.constant 0 : index
    %c192 = arith.constant 192 : index
    %24 = vector.load %arg9[%c0_21, %c192] : memref<324x576xf32, #tpu.memory_space<vmem>>, vector<324x64xf32>
    tpu.vector_store %arg9[%c0_21, %c192], %23 {strides = array<i32>} : memref<324x576xf32, #tpu.memory_space<vmem>>, vector<324x64xf32>,
    %c24_22 = arith.constant 24 : index
    %c0_23 = arith.constant 0 : index
    %25 = vector.load %arg8[%c24_22, %c0_23] : memref<372x64xf32, #tpu.memory_space<vmem>>, vector<324x64xf32>
    %c0_24 = arith.constant 0 : index
    %c256 = arith.constant 256 : index
    %26 = vector.load %arg9[%c0_24, %c256] : memref<324x576xf32, #tpu.memory_space<vmem>>, vector<324x64xf32>
    tpu.vector_store %arg9[%c0_24, %c256], %25 {strides = array<i32>} : memref<324x576xf32, #tpu.memory_space<vmem>>, vector<324x64xf32>,
    %c25 = arith.constant 25 : index
    %c0_25 = arith.constant 0 : index
    %27 = vector.load %arg8[%c25, %c0_25] : memref<372x64xf32, #tpu.memory_space<vmem>>, vector<324x64xf32>
    %c0_26 = arith.constant 0 : index
    %c320 = arith.constant 320 : index
    %28 = vector.load %arg9[%c0_26, %c320] : memref<324x576xf32, #tpu.memory_space<vmem>>, vector<324x64xf32>
    tpu.vector_store %arg9[%c0_26, %c320], %27 {strides = array<i32>} : memref<324x576xf32, #tpu.memory_space<vmem>>, vector<324x64xf32>,
    %c41 = arith.constant 41 : index
    %c0_27 = arith.constant 0 : index
    %29 = vector.load %arg8[%c41, %c0_27] : memref<372x64xf32, #tpu.memory_space<vmem>>, vector<324x64xf32>
    %c0_28 = arith.constant 0 : index
    %c384 = arith.constant 384 : index
    %30 = vector.load %arg9[%c0_28, %c384] : memref<324x576xf32, #tpu.memory_space<vmem>>, vector<324x64xf32>
    tpu.vector_store %arg9[%c0_28, %c384], %29 {strides = array<i32>} : memref<324x576xf32, #tpu.memory_space<vmem>>, vector<324x64xf32>,
    %c42 = arith.constant 42 : index
    %c0_29 = arith.constant 0 : index
    %31 = vector.load %arg8[%c42, %c0_29] : memref<372x64xf32, #tpu.memory_space<vmem>>, vector<324x64xf32>
    %c0_30 = arith.constant 0 : index
    %c448 = arith.constant 448 : index
    %32 = vector.load %arg9[%c0_30, %c448] : memref<324x576xf32, #tpu.memory_space<vmem>>, vector<324x64xf32>
    tpu.vector_store %arg9[%c0_30, %c448], %31 {strides = array<i32>} : memref<324x576xf32, #tpu.memory_space<vmem>>, vector<324x64xf32>,
    %c43 = arith.constant 43 : index
    %c0_31 = arith.constant 0 : index
    %33 = vector.load %arg8[%c43, %c0_31] : memref<372x64xf32, #tpu.memory_space<vmem>>, vector<324x64xf32>
    %c0_32 = arith.constant 0 : index
    %c512 = arith.constant 512 : index
    %34 = vector.load %arg9[%c0_32, %c512] : memref<324x576xf32, #tpu.memory_space<vmem>>, vector<324x64xf32>
    tpu.vector_store %arg9[%c0_32, %c512], %33 {strides = array<i32>} : memref<324x576xf32, #tpu.memory_space<vmem>>, vector<324x64xf32>,
    %c0_33 = arith.constant 0 : index
    %c0_34 = arith.constant 0 : index
    %35 = vector.load %arg9[%c0_33, %c0_34] : memref<324x576xf32, #tpu.memory_space<vmem>>, vector<324x576xf32>
    %c0_35 = arith.constant 0 : index
    %c0_36 = arith.constant 0 : index
    %36 = vector.load %arg3[%c0_35, %c0_36] : memref<576x64xf32, #tpu.memory_space<vmem>>, vector<576x64xf32>
    %cst_37 = arith.constant dense<0.000000e+00> : vector<324x64xf32>
    %37 = tpu.matmul %35, %36, %cst_37 {dimension_numbers = #tpu.dot_dimension_numbers<[1], [0], [0], [1], [0, 0, 1, 1], [], []>} : vector<324x576xf32>, vector<576x64xf32>, vector<324x64xf32> -> vector<324x64xf32>
    %c1 = arith.constant 1 : index
    %c0_38 = arith.constant 0 : index
    %38 = vector.load %arg5[%c1, %c0_38] : memref<3x64xf32, #tpu.memory_space<vmem>>, vector<1x64xf32>
    %39 = vector.shape_cast %38 : vector<1x64xf32> to vector<64xf32>
    %40 = vector.shape_cast %39 : vector<64xf32> to vector<1x64xf32>
    %41 = vector.broadcast %40 : vector<1x64xf32> to vector<324x64xf32>
    %42 = arith.addf %37, %41 : vector<324x64xf32>
    %cst_39 = arith.constant 0.000000e+00 : f32
    %43 = vector.broadcast %cst_39 : f32 to vector<324x64xf32>
    %44 = arith.maximumf %42, %43 : vector<324x64xf32>
    %45 = vector.broadcast %0 : vector<324x1xf32> to vector<324x64xf32>
    %46 = arith.mulf %44, %45 : vector<324x64xf32>
    %c24_40 = arith.constant 24 : index
    %c0_41 = arith.constant 0 : index
    %47 = vector.load %arg8[%c24_40, %c0_41] : memref<372x64xf32, #tpu.memory_space<vmem>>, vector<324x64xf32>
    tpu.vector_store %arg8[%c24_40, %c0_41], %46 {strides = array<i32>} : memref<372x64xf32, #tpu.memory_space<vmem>>, vector<324x64xf32>,
    %c5_42 = arith.constant 5 : index
    %c0_43 = arith.constant 0 : index
    %48 = vector.load %arg8[%c5_42, %c0_43] : memref<372x64xf32, #tpu.memory_space<vmem>>, vector<324x64xf32>
    %c0_44 = arith.constant 0 : index
    %c0_45 = arith.constant 0 : index
    %49 = vector.load %arg9[%c0_44, %c0_45] : memref<324x576xf32, #tpu.memory_space<vmem>>, vector<324x64xf32>
    tpu.vector_store %arg9[%c0_44, %c0_45], %48 {strides = array<i32>} : memref<324x576xf32, #tpu.memory_space<vmem>>, vector<324x64xf32>,
    %c6_46 = arith.constant 6 : index
    %c0_47 = arith.constant 0 : index
    %50 = vector.load %arg8[%c6_46, %c0_47] : memref<372x64xf32, #tpu.memory_space<vmem>>, vector<324x64xf32>
    %c0_48 = arith.constant 0 : index
    %c64_49 = arith.constant 64 : index
    %51 = vector.load %arg9[%c0_48, %c64_49] : memref<324x576xf32, #tpu.memory_space<vmem>>, vector<324x64xf32>
    tpu.vector_store %arg9[%c0_48, %c64_49], %50 {strides = array<i32>} : memref<324x576xf32, #tpu.memory_space<vmem>>, vector<324x64xf32>,
    %c7_50 = arith.constant 7 : index
    %c0_51 = arith.constant 0 : index
    %52 = vector.load %arg8[%c7_50, %c0_51] : memref<372x64xf32, #tpu.memory_space<vmem>>, vector<324x64xf32>
    %c0_52 = arith.constant 0 : index
    %c128_53 = arith.constant 128 : index
    %53 = vector.load %arg9[%c0_52, %c128_53] : memref<324x576xf32, #tpu.memory_space<vmem>>, vector<324x64xf32>
    tpu.vector_store %arg9[%c0_52, %c128_53], %52 {strides = array<i32>} : memref<324x576xf32, #tpu.memory_space<vmem>>, vector<324x64xf32>,
    %c23_54 = arith.constant 23 : index
    %c0_55 = arith.constant 0 : index
    %54 = vector.load %arg8[%c23_54, %c0_55] : memref<372x64xf32, #tpu.memory_space<vmem>>, vector<324x64xf32>
    %c0_56 = arith.constant 0 : index
    %c192_57 = arith.constant 192 : index
    %55 = vector.load %arg9[%c0_56, %c192_57] : memref<324x576xf32, #tpu.memory_space<vmem>>, vector<324x64xf32>
    tpu.vector_store %arg9[%c0_56, %c192_57], %54 {strides = array<i32>} : memref<324x576xf32, #tpu.memory_space<vmem>>, vector<324x64xf32>,
    %c24_58 = arith.constant 24 : index
    %c0_59 = arith.constant 0 : index
    %56 = vector.load %arg8[%c24_58, %c0_59] : memref<372x64xf32, #tpu.memory_space<vmem>>, vector<324x64xf32>
    %c0_60 = arith.constant 0 : index
    %c256_61 = arith.constant 256 : index
    %57 = vector.load %arg9[%c0_60, %c256_61] : memref<324x576xf32, #tpu.memory_space<vmem>>, vector<324x64xf32>
    tpu.vector_store %arg9[%c0_60, %c256_61], %56 {strides = array<i32>} : memref<324x576xf32, #tpu.memory_space<vmem>>, vector<324x64xf32>,
    %c25_62 = arith.constant 25 : index
    %c0_63 = arith.constant 0 : index
    %58 = vector.load %arg8[%c25_62, %c0_63] : memref<372x64xf32, #tpu.memory_space<vmem>>, vector<324x64xf32>
    %c0_64 = arith.constant 0 : index
    %c320_65 = arith.constant 320 : index
    %59 = vector.load %arg9[%c0_64, %c320_65] : memref<324x576xf32, #tpu.memory_space<vmem>>, vector<324x64xf32>
    tpu.vector_store %arg9[%c0_64, %c320_65], %58 {strides = array<i32>} : memref<324x576xf32, #tpu.memory_space<vmem>>, vector<324x64xf32>,
    %c41_66 = arith.constant 41 : index
    %c0_67 = arith.constant 0 : index
    %60 = vector.load %arg8[%c41_66, %c0_67] : memref<372x64xf32, #tpu.memory_space<vmem>>, vector<324x64xf32>
    %c0_68 = arith.constant 0 : index
    %c384_69 = arith.constant 384 : index
    %61 = vector.load %arg9[%c0_68, %c384_69] : memref<324x576xf32, #tpu.memory_space<vmem>>, vector<324x64xf32>
    tpu.vector_store %arg9[%c0_68, %c384_69], %60 {strides = array<i32>} : memref<324x576xf32, #tpu.memory_space<vmem>>, vector<324x64xf32>,
    %c42_70 = arith.constant 42 : index
    %c0_71 = arith.constant 0 : index
    %62 = vector.load %arg8[%c42_70, %c0_71] : memref<372x64xf32, #tpu.memory_space<vmem>>, vector<324x64xf32>
    %c0_72 = arith.constant 0 : index
    %c448_73 = arith.constant 448 : index
    %63 = vector.load %arg9[%c0_72, %c448_73] : memref<324x576xf32, #tpu.memory_space<vmem>>, vector<324x64xf32>
    tpu.vector_store %arg9[%c0_72, %c448_73], %62 {strides = array<i32>} : memref<324x576xf32, #tpu.memory_space<vmem>>, vector<324x64xf32>,
    %c43_74 = arith.constant 43 : index
    %c0_75 = arith.constant 0 : index
    %64 = vector.load %arg8[%c43_74, %c0_75] : memref<372x64xf32, #tpu.memory_space<vmem>>, vector<324x64xf32>
    %c0_76 = arith.constant 0 : index
    %c512_77 = arith.constant 512 : index
    %65 = vector.load %arg9[%c0_76, %c512_77] : memref<324x576xf32, #tpu.memory_space<vmem>>, vector<324x64xf32>
    tpu.vector_store %arg9[%c0_76, %c512_77], %64 {strides = array<i32>} : memref<324x576xf32, #tpu.memory_space<vmem>>, vector<324x64xf32>,
    %c0_78 = arith.constant 0 : index
    %c0_79 = arith.constant 0 : index
    %66 = vector.load %arg9[%c0_78, %c0_79] : memref<324x576xf32, #tpu.memory_space<vmem>>, vector<324x576xf32>
    %c0_80 = arith.constant 0 : index
    %c0_81 = arith.constant 0 : index
    %67 = vector.load %arg4[%c0_80, %c0_81] : memref<576x64xf32, #tpu.memory_space<vmem>>, vector<576x64xf32>
    %cst_82 = arith.constant dense<0.000000e+00> : vector<324x64xf32>
    %68 = tpu.matmul %66, %67, %cst_82 {dimension_numbers = #tpu.dot_dimension_numbers<[1], [0], [0], [1], [0, 0, 1, 1], [], []>} : vector<324x576xf32>, vector<576x64xf32>, vector<324x64xf32> -> vector<324x64xf32>
    %c2 = arith.constant 2 : index
    %c0_83 = arith.constant 0 : index
    %69 = vector.load %arg5[%c2, %c0_83] : memref<3x64xf32, #tpu.memory_space<vmem>>, vector<1x64xf32>
    %70 = vector.shape_cast %69 : vector<1x64xf32> to vector<64xf32>
    %71 = vector.shape_cast %70 : vector<64xf32> to vector<1x64xf32>
    %72 = vector.broadcast %71 : vector<1x64xf32> to vector<324x64xf32>
    %73 = arith.addf %68, %72 : vector<324x64xf32>
    %c0_84 = arith.constant 0 : index
    %c0_85 = arith.constant 0 : index
    %c0_86 = arith.constant 0 : index
    %74 = vector.load %arg7[%c0_84, %c0_85, %c0_86] : memref<1x324x64xf32, #tpu.memory_space<vmem>>, vector<1x324x64xf32>
    %75 = vector.shape_cast %74 : vector<1x324x64xf32> to vector<324x64xf32>
    %76 = vector.shape_cast %73 : vector<324x64xf32> to vector<1x324x64xf32>
    tpu.vector_store %arg7[%c0_84, %c0_85, %c0_86], %76 {strides = array<i32>} : memref<1x324x64xf32, #tpu.memory_space<vmem>>, vector<1x324x64xf32>,
    return
  }
  func.func @transform_0(%arg0: i32) -> (i32, i32, i32) {
    %c0_i32 = arith.constant 0 : i32
    %c0_i32_0 = arith.constant 0 : i32
    %c0_i32_1 = arith.constant 0 : i32
    return %arg0, %c0_i32, %c0_i32_0 : i32, i32, i32
  }
  func.func @transform_1(%arg0: i32) -> (i32, i32) {
    %c0_i32 = arith.constant 0 : i32
    %c0_i32_0 = arith.constant 0 : i32
    %c0_i32_1 = arith.constant 0 : i32
    return %c0_i32, %c0_i32_0 : i32, i32
  }
  func.func @transform_2(%arg0: i32) -> (i32, i32) {
    %c0_i32 = arith.constant 0 : i32
    %c0_i32_0 = arith.constant 0 : i32
    %c0_i32_1 = arith.constant 0 : i32
    return %c0_i32, %c0_i32_0 : i32, i32
  }
  func.func @transform_3(%arg0: i32) -> (i32, i32) {
    %c0_i32 = arith.constant 0 : i32
    %c0_i32_0 = arith.constant 0 : i32
    %c0_i32_1 = arith.constant 0 : i32
    return %c0_i32, %c0_i32_0 : i32, i32
  }
  func.func @transform_4(%arg0: i32) -> (i32, i32) {
    %c0_i32 = arith.constant 0 : i32
    %c0_i32_0 = arith.constant 0 : i32
    %c0_i32_1 = arith.constant 0 : i32
    return %c0_i32, %c0_i32_0 : i32, i32
  }
  func.func @transform_5(%arg0: i32) -> (i32, i32) {
    %c0_i32 = arith.constant 0 : i32
    %c0_i32_0 = arith.constant 0 : i32
    %c0_i32_1 = arith.constant 0 : i32
    return %c0_i32, %c0_i32_0 : i32, i32
  }
  func.func @transform_6(%arg0: i32) -> (i32, i32, i32) {
    %c0_i32 = arith.constant 0 : i32
    %c0_i32_0 = arith.constant 0 : i32
    %c0_i32_1 = arith.constant 0 : i32
    return %arg0, %c0_i32, %c0_i32_0 : i32, i32, i32
  }
}

</mosaic_0001>

<llo_original>
// kernel: cnn_model_forward.1
$region0: #{cnn_model_forward.1}
  #allocation0 [shape = 'u32[]', space=smem, size = 0x4, offset = 0x4, fixed_abs, tag = 'smem constant byte address 0x4 - core index']
  #allocation1 [shape = 'u32[144,128]{1,0:T(1,128)}', space=vmem, size = 0x12000, scoped, tag = 'internal scratch']
  #allocation2 [shape = 'f32[372,64]{1,0:T(8,128)}', space=vmem, size = 0x2f000, scoped, tag = 'scratch operand']
  #allocation3 [shape = 'f32[324,576]{1,0:T(8,128)}', space=vmem, size = 0xcd000, scoped, tag = 'scratch operand']
  %s0 = inlined_call_operand.vmem [shape: f32[2,324,36], index: 0, kind: input, shape index: {}]
  %s1 = inlined_call_operand.vmem [shape: f32[36,64], index: 1, kind: input, shape index: {}]
  %s2 = inlined_call_operand.vmem [shape: f32[576,64], index: 2, kind: input, shape index: {}]
  %s3 = inlined_call_operand.vmem [shape: f32[576,64], index: 3, kind: input, shape index: {}]
  %s4 = inlined_call_operand.vmem [shape: f32[3,64], index: 4, kind: input, shape index: {}]
  %s5 = inlined_call_operand.vmem [shape: f32[324,1], index: 5, kind: input, shape index: {}]
  %s6 = inlined_call_operand.vmem [shape: f32[2,324,64], index: 6, kind: output, shape index: {}]
  %s7 = sld [smem:[#allocation0]]
  $region57: #{cnn_model_forward.1} parent=0
    _
  %s9 = ssub.s32 1, %s7
  %s10 = scalar_select 0, %s9, %s7
  loop: start=0, step=1, limit=4
  $region2: #{cnn_model_forward.1} parent=0 // loop_pre_header
    _
  $region3: #{cnn_model_forward.1} parent=0 // loop_header
    %s12 = sphi 0, %s16
    %p13 = scmp.ge.s32.totalorder %s12, 4
    %s22 = sphi 0, %s24
    %s25 = sphi 0, %s22
    %s26 = sphi 0, %s25
    %s42 = sphi 0, %s26
    %s46 = sphi 0, %s46
    %s48 = sphi 0, %s46
    %s49 = sphi 0, %s48
    %s63 = sphi 0, %s49
    %s67 = sphi 0, %s67
    %s69 = sphi 0, %s67
    %s70 = sphi 0, %s69
    %s84 = sphi 0, %s70
    %s88 = sphi 0, %s88
    %s90 = sphi 0, %s88
    %s91 = sphi 0, %s90
    %s105 = sphi 0, %s91
    %s109 = sphi 0, %s109
    %s111 = sphi 0, %s109
    %s112 = sphi 0, %s111
    %s126 = sphi 0, %s112
    %s130 = sphi 0, %s130
    %s132 = sphi 0, %s130
    %s133 = sphi 0, %s132
    %s147 = sphi 0, %s133
    %s153 = sphi 0, %s155
    %s156 = sphi 0, %s153
    %s157 = sphi 0, %s156
    %s173 = sphi 0, %s157
  $region4: #{cnn_model_forward.1} parent=0 // loop_header_branch
    %15 = sbr.rel (%p13) target = $region8
  $region5: #{cnn_model_forward.1} parent=0 // loop_body
    %s17 = ssub.s32 %s12, 1
    %s18 = ssub.s32 %s12, 2
    %s19 = sadd.s32 %s12, 1
    %s20 = ssub.s32 %s12, %s19
    %p21 = scmp.eq.s32.totalorder %s20, 0
    %s23 = sadd.s32 %s22, 1
    %s24 = scalar_select %p21, %s22, %s23
    %p27 = pneg %p21
    %p28 = scmp.eq.s32.totalorder %s12, 1
    %p29 = por %p27, %p28
    %p30 = scmp.ne.s32.totalorder %s22, %s25
    %p31 = scmp.eq.s32.totalorder %s12, 0
    %p32 = por %p30, %p31
    %p33 = scmp.ne.s32.totalorder %s22, %s25
    %p34 = scmp.eq.s32.totalorder %s17, 1
    %p35 = por %p33, %p34
    %p36 = scmp.ne.s32.totalorder %s25, %s26
    %p37 = scmp.eq.s32.totalorder %s17, 0
    %p38 = por %p36, %p37
    %p39 = scmp.ne.s32.totalorder %s25, %s26
    %p40 = scmp.eq.s32.totalorder %s18, 1
    %p41 = por %p39, %p40
    %p43 = scmp.ne.s32.totalorder %s26, %s42
    %p44 = scmp.eq.s32.totalorder %s18, 0
    %p45 = por %p43, %p44
    %s47 = sadd.s32 %s46, 1
    %p50 = scmp.eq.s32.totalorder %s12, 1
    %p51 = scmp.ne.s32.totalorder %s46, %s48
    %p52 = scmp.eq.s32.totalorder %s12, 0
    %p53 = por %p51, %p52
    %p54 = scmp.ne.s32.totalorder %s46, %s48
    %p55 = scmp.eq.s32.totalorder %s17, 1
    %p56 = por %p54, %p55
    %p57 = scmp.ne.s32.totalorder %s48, %s49
    %p58 = scmp.eq.s32.totalorder %s17, 0
    %p59 = por %p57, %p58
    %p60 = scmp.ne.s32.totalorder %s48, %s49
    %p61 = scmp.eq.s32.totalorder %s18, 1
    %p62 = por %p60, %p61
    %p64 = scmp.ne.s32.totalorder %s49, %s63
    %p65 = scmp.eq.s32.totalorder %s18, 0
    %p66 = por %p64, %p65
    %s68 = sadd.s32 %s67, 1
    %p71 = scmp.eq.s32.totalorder %s12, 1
    %p72 = scmp.ne.s32.totalorder %s67, %s69
    %p73 = scmp.eq.s32.totalorder %s12, 0
    %p74 = por %p72, %p73
    %p75 = scmp.ne.s32.totalorder %s67, %s69
    %p76 = scmp.eq.s32.totalorder %s17, 1
    %p77 = por %p75, %p76
    %p78 = scmp.ne.s32.totalorder %s69, %s70
    %p79 = scmp.eq.s32.totalorder %s17, 0
    %p80 = por %p78, %p79
    %p81 = scmp.ne.s32.totalorder %s69, %s70
    %p82 = scmp.eq.s32.totalorder %s18, 1
    %p83 = por %p81, %p82
    %p85 = scmp.ne.s32.totalorder %s70, %s84
    %p86 = scmp.eq.s32.totalorder %s18, 0
    %p87 = por %p85, %p86
    %s89 = sadd.s32 %s88, 1
    %p92 = scmp.eq.s32.totalorder %s12, 1
    %p93 = scmp.ne.s32.totalorder %s88, %s90
    %p94 = scmp.eq.s32.totalorder %s12, 0
    %p95 = por %p93, %p94
    %p96 = scmp.ne.s32.totalorder %s88, %s90
    %p97 = scmp.eq.s32.totalorder %s17, 1
    %p98 = por %p96, %p97
    %p99 = scmp.ne.s32.totalorder %s90, %s91
    %p100 = scmp.eq.s32.totalorder %s17, 0
    %p101 = por %p99, %p100
    %p102 = scmp.ne.s32.totalorder %s90, %s91
    %p103 = scmp.eq.s32.totalorder %s18, 1
    %p104 = por %p102, %p103
    %p106 = scmp.ne.s32.totalorder %s91, %s105
    %p107 = scmp.eq.s32.totalorder %s18, 0
    %p108 = por %p106, %p107
    %s110 = sadd.s32 %s109, 1
    %p113 = scmp.eq.s32.totalorder %s12, 1
    %p114 = scmp.ne.s32.totalorder %s109, %s111
    %p115 = scmp.eq.s32.totalorder %s12, 0
    %p116 = por %p114, %p115
    %p117 = scmp.ne.s32.totalorder %s109, %s111
    %p118 = scmp.eq.s32.totalorder %s17, 1
    %p119 = por %p117, %p118
    %p120 = scmp.ne.s32.totalorder %s111, %s112
    %p121 = scmp.eq.s32.totalorder %s17, 0
    %p122 = por %p120, %p121
    %p123 = scmp.ne.s32.totalorder %s111, %s112
    %p124 = scmp.eq.s32.totalorder %s18, 1
    %p125 = por %p123, %p124
    %p127 = scmp.ne.s32.totalorder %s112, %s126
    %p128 = scmp.eq.s32.totalorder %s18, 0
    %p129 = por %p127, %p128
    %s131 = sadd.s32 %s130, 1
    %p134 = scmp.eq.s32.totalorder %s12, 1
    %p135 = scmp.ne.s32.totalorder %s130, %s132
    %p136 = scmp.eq.s32.totalorder %s12, 0
    %p137 = por %p135, %p136
    %p138 = scmp.ne.s32.totalorder %s130, %s132
    %p139 = scmp.eq.s32.totalorder %s17, 1
    %p140 = por %p138, %p139
    %p141 = scmp.ne.s32.totalorder %s132, %s133
    %p142 = scmp.eq.s32.totalorder %s17, 0
    %p143 = por %p141, %p142
    %p144 = scmp.ne.s32.totalorder %s132, %s133
    %p145 = scmp.eq.s32.totalorder %s18, 1
    %p146 = por %p144, %p145
    %p148 = scmp.ne.s32.totalorder %s133, %s147
    %p149 = scmp.eq.s32.totalorder %s18, 0
    %p150 = por %p148, %p149
    %s151 = ssub.s32 %s12, %s19
    %p152 = scmp.eq.s32.totalorder %s151, 0
    %s154 = sadd.s32 %s153, 1
    %s155 = scalar_select %p152, %s153, %s154
    %p158 = pneg %p152
    %p159 = scmp.eq.s32.totalorder %s12, 1
    %p160 = por %p158, %p159
    %p161 = scmp.ne.s32.totalorder %s153, %s156
    %p162 = scmp.eq.s32.totalorder %s12, 0
    %p163 = por %p161, %p162
    %p164 = scmp.ne.s32.totalorder %s153, %s156
    %p165 = scmp.eq.s32.totalorder %s17, 1
    %p166 = por %p164, %p165
    %p167 = scmp.ne.s32.totalorder %s156, %s157
    %p168 = scmp.eq.s32.totalorder %s17, 0
    %p169 = por %p167, %p168
    %p170 = scmp.ne.s32.totalorder %s156, %s157
    %p171 = scmp.eq.s32.totalorder %s18, 1
    %p172 = por %p170, %p171
    %p174 = scmp.ne.s32.totalorder %s157, %s173
    %p175 = scmp.eq.s32.totalorder %s18, 0
    %p176 = por %p174, %p175
    %p177 = scmp.le.s32.totalorder 1, %s12
    %p178 = scmp.lt.s32.totalorder %s12, 3
    %p179 = pnand %p177, %p178
    %p180 = pneg %p179
    // Predicated region
    $region9: #{cnn_model_forward.1} parent=5 // pred_check
      _
    $region10: #{cnn_model_forward.1} parent=5 // pred_check_branch
      %182 = sbr.rel (%p179) target = $region12
    $region11: #{cnn_model_forward.1} parent=5 // pred_region
      %s183 = ssub.s32 %s12, 1
      // Predicated region
      $region13: #{cnn_model_forward.1} parent=11 // pred_check
        %p184 = pneg %p59
      $region14: #{cnn_model_forward.1} parent=11 // pred_check_branch
        %186 = sbr.rel (%p184) target = $region16
      $region15: #{cnn_model_forward.1} parent=11 // pred_region
        _
      $region16: #{cnn_model_forward.1} parent=11 // pred_fallthru
        _
      // Predicated region
      $region17: #{cnn_model_forward.1} parent=11 // pred_check
        %p187 = pneg %p80
      $region18: #{cnn_model_forward.1} parent=11 // pred_check_branch
        %189 = sbr.rel (%p187) target = $region20
      $region19: #{cnn_model_forward.1} parent=11 // pred_region
        _
      $region20: #{cnn_model_forward.1} parent=11 // pred_fallthru
        _
      // Predicated region
      $region21: #{cnn_model_forward.1} parent=11 // pred_check
        %p190 = pneg %p101
      $region22: #{cnn_model_forward.1} parent=11 // pred_check_branch
        %192 = sbr.rel (%p190) target = $region24
      $region23: #{cnn_model_forward.1} parent=11 // pred_region
        _
      $region24: #{cnn_model_forward.1} parent=11 // pred_fallthru
        _
      // Predicated region
      $region25: #{cnn_model_forward.1} parent=11 // pred_check
        %p193 = pneg %p122
      $region26: #{cnn_model_forward.1} parent=11 // pred_check_branch
        %195 = sbr.rel (%p193) target = $region28
      $region27: #{cnn_model_forward.1} parent=11 // pred_region
        _
      $region28: #{cnn_model_forward.1} parent=11 // pred_fallthru
        _
      // Predicated region
      $region29: #{cnn_model_forward.1} parent=11 // pred_check
        %p196 = pneg %p143
      $region30: #{cnn_model_forward.1} parent=11 // pred_check_branch
        %198 = sbr.rel (%p196) target = $region32
      $region31: #{cnn_model_forward.1} parent=11 // pred_region
        _
      $region32: #{cnn_model_forward.1} parent=11 // pred_fallthru
        _
    $region12: #{cnn_model_forward.1} parent=5 // pred_fallthru
      _
    %p199 = scmp.lt.s32.totalorder %s12, 2
    // Predicated region
    $region33: #{cnn_model_forward.1} parent=5 // pred_check
      %p200 = pneg %p199
    $region34: #{cnn_model_forward.1} parent=5 // pred_check_branch
      %202 = sbr.rel (%p200) target = $region36
    $region35: #{cnn_model_forward.1} parent=5 // pred_region
      // Predicated region
      $region37: #{cnn_model_forward.1} parent=35 // pred_check
        %p203 = pneg %p32
      $region38: #{cnn_model_forward.1} parent=35 // pred_check_branch
        %205 = sbr.rel (%p203) target = $region40
      $region39: #{cnn_model_forward.1} parent=35 // pred_region
        %p206 = scmp.lt.s32.totalorder %s12, 1
        %s207 = scalar_select %p206, %s12, 1
        %s208 = smul.addr %s207, 41
        %s209 = smul.addr %s208, 8
        %s210 = scalar_lea.vmem %s0, %s209
      $region40: #{cnn_model_forward.1} parent=35 // pred_fallthru
        _
    $region36: #{cnn_model_forward.1} parent=5 // pred_fallthru
      _
    %p211 = scmp.le.s32.totalorder 1, %s12
    %p212 = scmp.lt.s32.totalorder %s12, 3
    %p213 = pnand %p211, %p212
    %p214 = pneg %p213
    // Predicated region
    $region41: #{cnn_model_forward.1} parent=5 // pred_check
      _
    $region42: #{cnn_model_forward.1} parent=5 // pred_check_branch
      %216 = sbr.rel (%p213) target = $region44
    $region43: #{cnn_model_forward.1} parent=5 // pred_region
      %s217 = ssub.s32 %s12, 1
      %p218 = scmp.lt.s32.totalorder %s17, 1
      %s219 = scalar_select %p218, %s17, 1
      %s220 = smul.addr %s219, 41
      %s221 = smul.addr %s220, 8
      %s222 = scalar_lea.vmem %s0, %s221
      %p223 = pneg %p38
      %p224 = pneg %p35
      %p225 = pneg %p59
      %p226 = pneg %p56
      %p227 = pneg %p80
      %p228 = pneg %p77
      %p229 = pneg %p101
      %p230 = pneg %p98
      %p231 = pneg %p122
      %p232 = pneg %p119
      %p233 = pneg %p143
      %p234 = pneg %p140
      %p235 = pneg %p169
      %p236 = pneg %p166
      %p237 = scmp.lt.s32.totalorder %s17, 1
      %s238 = scalar_select %p237, %s17, 1
      %s239 = smul.addr %s238, 41
      %s240 = smul.addr %s239, 8
      %s241 = scalar_lea.vmem %s6, %s240
      %p242 = scmp.lt.s32.totalorder %s17, 1
      %s243 = scalar_select %p242, %s17, 1
      %s244 = smul.addr %s243, 41
      %s245 = smul.addr %s244, 8
      %s246 = scalar_lea.vmem %s0, %s245
      %p247 = scmp.lt.s32.totalorder %s17, 1
      %s248 = scalar_select %p247, %s17, 1
      %s249 = smul.addr %s248, 41
      %s250 = smul.addr %s249, 8
      %s251 = scalar_lea.vmem %s6, %s250
      %v252 = vld [vmem:[%s5] sm:$0xff]
      %v253 = vld [vmem:[%s5 + $0x8] sm:$0xff]
      %v254 = vld [vmem:[%s5 + $0x10] sm:$0xff]
      %v255 = vld [vmem:[%s5 + $0x18] sm:$0xff]
      %v256 = vld [vmem:[%s5 + $0x20] sm:$0xff]
      %v257 = vld [vmem:[%s5 + $0x28] sm:$0xff]
      %v258 = vld [vmem:[%s5 + $0x30] sm:$0xff]
      %v259 = vld [vmem:[%s5 + $0x38] sm:$0xff]
      %v260 = vld [vmem:[%s5 + $0x40] sm:$0xff]
      %v261 = vld [vmem:[%s5 + $0x48] sm:$0xff]
      %v262 = vld [vmem:[%s5 + $0x50] sm:$0xff]
      %v263 = vld [vmem:[%s5 + $0x58] sm:$0xff]
      %v264 = vld [vmem:[%s5 + $0x60] sm:$0xff]
      %v265 = vld [vmem:[%s5 + $0x68] sm:$0xff]
      %v266 = vld [vmem:[%s5 + $0x70] sm:$0xff]
      %v267 = vld [vmem:[%s5 + $0x78] sm:$0xff]
      %v268 = vld [vmem:[%s5 + $0x80] sm:$0xff]
      %v269 = vld [vmem:[%s5 + $0x88] sm:$0xff]
      %v270 = vld [vmem:[%s5 + $0x90] sm:$0xff]
      %v271 = vld [vmem:[%s5 + $0x98] sm:$0xff]
      %v272 = vld [vmem:[%s5 + $0xa0] sm:$0xff]
      %v273 = vld [vmem:[%s5 + $0xa8] sm:$0xff]
      %v274 = vld [vmem:[%s5 + $0xb0] sm:$0xff]
      %v275 = vld [vmem:[%s5 + $0xb8] sm:$0xff]
      %v276 = vld [vmem:[%s5 + $0xc0] sm:$0xff]
      %v277 = vld [vmem:[%s5 + $0xc8] sm:$0xff]
      %v278 = vld [vmem:[%s5 + $0xd0] sm:$0xff]
      %v279 = vld [vmem:[%s5 + $0xd8] sm:$0xff]
      %v280 = vld [vmem:[%s5 + $0xe0] sm:$0xff]
      %v281 = vld [vmem:[%s5 + $0xe8] sm:$0xff]
      %v282 = vld [vmem:[%s5 + $0xf0] sm:$0xff]
      %v283 = vld [vmem:[%s5 + $0xf8] sm:$0xff]
      %v284 = vld [vmem:[%s5 + $0x100] sm:$0xff]
      %v285 = vld [vmem:[%s5 + $0x108] sm:$0xff]
      %v286 = vld [vmem:[%s5 + $0x110] sm:$0xff]
      %v287 = vld [vmem:[%s5 + $0x118] sm:$0xff]
      %v288 = vld [vmem:[%s5 + $0x120] sm:$0xff]
      %v289 = vld [vmem:[%s5 + $0x128] sm:$0xff]
      %v290 = vld [vmem:[%s5 + $0x130] sm:$0xff]
      %v291 = vld [vmem:[%s5 + $0x138] sm:$0xff]
      %v292 = vld [vmem:[%s5 + $0x140] sm:$0xf]
      %v293 = vld [vmem:[%s246] sm:$0xff]
      %v294 = vld [vmem:[%s246 + $0x8] sm:$0xff]
      %v295 = vld [vmem:[%s246 + $0x10] sm:$0xff]
      %v296 = vld [vmem:[%s246 + $0x18] sm:$0xff]
      %v297 = vld [vmem:[%s246 + $0x20] sm:$0xff]
      %v298 = vld [vmem:[%s246 + $0x28] sm:$0xff]
      %v299 = vld [vmem:[%s246 + $0x30] sm:$0xff]
      %v300 = vld [vmem:[%s246 + $0x38] sm:$0xff]
      %v301 = vld [vmem:[%s246 + $0x40] sm:$0xff]
      %v302 = vld [vmem:[%s246 + $0x48] sm:$0xff]
      %v303 = vld [vmem:[%s246 + $0x50] sm:$0xff]
      %v304 = vld [vmem:[%s246 + $0x58] sm:$0xff]
      %v305 = vld [vmem:[%s246 + $0x60] sm:$0xff]
      %v306 = vld [vmem:[%s246 + $0x68] sm:$0xff]
      %v307 = vld [vmem:[%s246 + $0x70] sm:$0xff]
      %v308 = vld [vmem:[%s246 + $0x78] sm:$0xff]
      %v309 = vld [vmem:[%s246 + $0x80] sm:$0xff]
      %v310 = vld [vmem:[%s246 + $0x88] sm:$0xff]
      %v311 = vld [vmem:[%s246 + $0x90] sm:$0xff]
      %v312 = vld [vmem:[%s246 + $0x98] sm:$0xff]
      %v313 = vld [vmem:[%s246 + $0xa0] sm:$0xff]
      %v314 = vld [vmem:[%s246 + $0xa8] sm:$0xff]
      %v315 = vld [vmem:[%s246 + $0xb0] sm:$0xff]
      %v316 = vld [vmem:[%s246 + $0xb8] sm:$0xff]
      %v317 = vld [vmem:[%s246 + $0xc0] sm:$0xff]
      %v318 = vld [vmem:[%s246 + $0xc8] sm:$0xff]
      %v319 = vld [vmem:[%s246 + $0xd0] sm:$0xff]
      %v320 = vld [vmem:[%s246 + $0xd8] sm:$0xff]
      %v321 = vld [vmem:[%s246 + $0xe0] sm:$0xff]
      %v322 = vld [vmem:[%s246 + $0xe8] sm:$0xff]
      %v323 = vld [vmem:[%s246 + $0xf0] sm:$0xff]
      %v324 = vld [vmem:[%s246 + $0xf8] sm:$0xff]
      %v325 = vld [vmem:[%s246 + $0x100] sm:$0xff]
      %v326 = vld [vmem:[%s246 + $0x108] sm:$0xff]
      %v327 = vld [vmem:[%s246 + $0x110] sm:$0xff]
      %v328 = vld [vmem:[%s246 + $0x118] sm:$0xff]
      %v329 = vld [vmem:[%s246 + $0x120] sm:$0xff]
      %v330 = vld [vmem:[%s246 + $0x128] sm:$0xff]
      %v331 = vld [vmem:[%s246 + $0x130] sm:$0xff]
      %v332 = vld [vmem:[%s246 + $0x138] sm:$0xff]
      %v333 = vld [vmem:[%s246 + $0x140] sm:$0xf]
      %v334 = vld [vmem:[%s1] sm:$0xff]
      %v335 = vld [vmem:[%s1 + $0x8] sm:$0xff]
      %v336 = vld [vmem:[%s1 + $0x10] sm:$0xff]
      %v337 = vld [vmem:[%s1 + $0x18] sm:$0xff]
      %v338 = vld [vmem:[%s1 + $0x20] sm:$0xf]
      %v339 = vld [vmem:[%s4] sm:$0x1]
      %v340 = vlaneseq
      %v341 = vshrl.u32 %v340, 7
      %v342 = vsub.s32 0, %v341
      %v343 = vrot.slane %v339, %v342
      %vm344 = vcmask 293888
      %v346 = vsel %vm344, %v293, 0
      %v349 = vsel %vm344, %v294, 0
      %v352 = vsel %vm344, %v295, 0
      %v355 = vsel %vm344, %v296, 0
      %v358 = vsel %vm344, %v297, 0
      %v361 = vsel %vm344, %v298, 0
      %v364 = vsel %vm344, %v299, 0
      %v367 = vsel %vm344, %v300, 0
      %v370 = vsel %vm344, %v301, 0
      %v373 = vsel %vm344, %v302, 0
      %v376 = vsel %vm344, %v303, 0
      %v379 = vsel %vm344, %v304, 0
      %v382 = vsel %vm344, %v305, 0
      %v385 = vsel %vm344, %v306, 0
      %v388 = vsel %vm344, %v307, 0
      %v391 = vsel %vm344, %v308, 0
      %v394 = vsel %vm344, %v309, 0
      %v397 = vsel %vm344, %v310, 0
      %v400 = vsel %vm344, %v311, 0
      %v403 = vsel %vm344, %v312, 0
      %v406 = vsel %vm344, %v313, 0
      %v409 = vsel %vm344, %v314, 0
      %v412 = vsel %vm344, %v315, 0
      %v415 = vsel %vm344, %v316, 0
      %v418 = vsel %vm344, %v317, 0
      %v421 = vsel %vm344, %v318, 0
      %v424 = vsel %vm344, %v319, 0
      %v427 = vsel %vm344, %v320, 0
      %v430 = vsel %vm344, %v321, 0
      %v433 = vsel %vm344, %v322, 0
      %v436 = vsel %vm344, %v323, 0
      %v439 = vsel %vm344, %v324, 0
      %v442 = vsel %vm344, %v325, 0
      %v445 = vsel %vm344, %v326, 0
      %v448 = vsel %vm344, %v327, 0
      %v451 = vsel %vm344, %v328, 0
      %v454 = vsel %vm344, %v329, 0
      %v457 = vsel %vm344, %v330, 0
      %v460 = vsel %vm344, %v331, 0
      %v463 = vsel %vm344, %v332, 0
      %v466 = vsel %vm344, %v333, 0
      %vm468 = vcmask 1043456
      %v470 = vsel %vm468, %v338, 0
      %472 = vmatprep.subr.mxu0 0.0
      %473 = vmatpush1.msra.mxu0 %v334
      %474 = vmatprep.subr.mxu0 0.0
      %475 = vmatpush1.msra.mxu0 %v335
      %476 = vmatprep.subr.mxu0 0.0
      %477 = vmatpush1.msra.mxu0 %v336
      %478 = vmatprep.subr.mxu0 0.0
      %479 = vmatpush1.msra.mxu0 %v337
      %480 = vmatprep.subr.mxu0 0.0
      %481 = vmatpush1.msra.mxu0 %v470
      %482 = vmatprep.subr.mxu0 0.0
      %483 = vmatpush1.msra.mxu0 0.0
      %484 = vmatprep.subr.mxu0 0.0
      %485 = vmatpush1.msra.mxu0 0.0
      %486 = vmatprep.subr.mxu0 0.0
      %487 = vmatpush1.msra.mxu0 0.0
      %488 = vmatprep.subr.mxu0 0.0
      %489 = vmatpush1.msra.mxu0 0.0
      %490 = vmatprep.subr.mxu0 0.0
      %491 = vmatpush1.msra.mxu0 0.0
      %492 = vmatprep.subr.mxu0 0.0
      %493 = vmatpush1.msra.mxu0 0.0
      %494 = vmatprep.subr.mxu0 0.0
      %495 = vmatpush1.msra.mxu0 0.0
      %496 = vmatprep.subr.mxu0 0.0
      %497 = vmatpush1.msra.mxu0 0.0
      %498 = vmatprep.subr.mxu0 0.0
      %499 = vmatpush1.msra.mxu0 0.0
      %500 = vmatprep.subr.mxu0 0.0
      %501 = vmatpush1.msra.mxu0 0.0
      %502 = vmatprep.subr.mxu0 0.0
      %503 = vmatpush1.msra.mxu0 0.0
      %504 = vmatprep.subr.mxu0 0.0
      %505 = vmatpush1.msra.mxu0 0.0
      %506 = vmatprep.subr.mxu0 0.0
      %507 = vmatpush1.msra.mxu0 0.0
      %508 = vmatprep.subr.mxu0 0.0
      %509 = vmatpush1.msra.mxu0 0.0
      %510 = vmatprep.subr.mxu0 0.0
      %511 = vmatpush1.msra.mxu0 0.0
      %512 = vmatprep.subr.mxu0 0.0
      %513 = vmatpush1.msra.mxu0 0.0
      %514 = vmatprep.subr.mxu0 0.0
      %515 = vmatpush1.msra.mxu0 0.0
      %516 = vmatprep.subr.mxu0 0.0
      %517 = vmatpush1.msra.mxu0 0.0
      %518 = vmatprep.subr.mxu0 0.0
      %519 = vmatpush1.msra.mxu0 0.0
      %520 = vmatprep.subr.mxu0 0.0
      %521 = vmatpush1.msra.mxu0 0.0
      %522 = vmatprep.subr.mxu0 0.0
      %523 = vmatpush1.msra.mxu0 0.0
      %524 = vmatprep.subr.mxu0 0.0
      %525 = vmatpush1.msra.mxu0 0.0
      %526 = vmatprep.subr.mxu0 0.0
      %527 = vmatpush1.msra.mxu0 0.0
      %528 = vmatprep.subr.mxu0 0.0
      %529 = vmatpush1.msra.mxu0 0.0
      %530 = vmatprep.subr.mxu0 0.0
      %531 = vmatpush1.msra.mxu0 0.0
      %532 = vmatprep.subr.mxu0 0.0
      %533 = vmatpush1.msra.mxu0 0.0
      %534 = vmatprep.subr.mxu0 0.0
      %535 = vmatpush1.msra.mxu0 0.0
      %536 = vmatprep.mubr.f32.mxu0 0.0
      %537 = vmatmul.mubr.f32.gmra.mrb[0].mxu0 %v346
      %v538 = vpop.f32.mrb[0].mxu0
      %v539 = vadd.f32 %v343, %v538
      %v540 = vpop.f32.mrb[0].mxu0
      %541 = vmatprep.mubr.f32.mxu0 0.0
      %542 = vmatmul.mubr.f32.gmra.mrb[0].mxu0 %v349
      %v543 = vpop.f32.mrb[0].mxu0
      %v544 = vadd.f32 %v343, %v543
      %v545 = vpop.f32.mrb[0].mxu0
      %546 = vmatprep.mubr.f32.mxu0 0.0
      %547 = vmatmul.mubr.f32.gmra.mrb[0].mxu0 %v352
      %v548 = vpop.f32.mrb[0].mxu0
      %v549 = vadd.f32 %v343, %v548
      %v550 = vpop.f32.mrb[0].mxu0
      %551 = vmatprep.mubr.f32.mxu0 0.0
      %552 = vmatmul.mubr.f32.gmra.mrb[0].mxu0 %v355
      %v553 = vpop.f32.mrb[0].mxu0
      %v554 = vadd.f32 %v343, %v553
      %v555 = vpop.f32.mrb[0].mxu0
      %556 = vmatprep.mubr.f32.mxu0 0.0
      %557 = vmatmul.mubr.f32.gmra.mrb[0].mxu0 %v358
      %v558 = vpop.f32.mrb[0].mxu0
      %v559 = vadd.f32 %v343, %v558
      %v560 = vpop.f32.mrb[0].mxu0
      %561 = vmatprep.mubr.f32.mxu0 0.0
      %562 = vmatmul.mubr.f32.gmra.mrb[0].mxu0 %v361
      %v563 = vpop.f32.mrb[0].mxu0
      %v564 = vadd.f32 %v343, %v563
      %v565 = vpop.f32.mrb[0].mxu0
      %566 = vmatprep.mubr.f32.mxu0 0.0
      %567 = vmatmul.mubr.f32.gmra.mrb[0].mxu0 %v364
      %v568 = vpop.f32.mrb[0].mxu0
      %v569 = vadd.f32 %v343, %v568
      %v570 = vpop.f32.mrb[0].mxu0
      %571 = vmatprep.mubr.f32.mxu0 0.0
      %572 = vmatmul.mubr.f32.gmra.mrb[0].mxu0 %v367
      %v573 = vpop.f32.mrb[0].mxu0
      %v574 = vadd.f32 %v343, %v573
      %v575 = vpop.f32.mrb[0].mxu0
      %576 = vmatprep.mubr.f32.mxu0 0.0
      %577 = vmatmul.mubr.f32.gmra.mrb[0].mxu0 %v370
      %v578 = vpop.f32.mrb[0].mxu0
      %v579 = vadd.f32 %v343, %v578
      %v580 = vpop.f32.mrb[0].mxu0
      %581 = vmatprep.mubr.f32.mxu0 0.0
      %582 = vmatmul.mubr.f32.gmra.mrb[0].mxu0 %v373
      %v583 = vpop.f32.mrb[0].mxu0
      %v584 = vadd.f32 %v343, %v583
      %v585 = vpop.f32.mrb[0].mxu0
      %586 = vmatprep.mubr.f32.mxu0 0.0
      %587 = vmatmul.mubr.f32.gmra.mrb[0].mxu0 %v376
      %v588 = vpop.f32.mrb[0].mxu0
      %v589 = vadd.f32 %v343, %v588
      %v590 = vpop.f32.mrb[0].mxu0
      %591 = vmatprep.mubr.f32.mxu0 0.0
      %592 = vmatmul.mubr.f32.gmra.mrb[0].mxu0 %v379
      %v593 = vpop.f32.mrb[0].mxu0
      %v594 = vadd.f32 %v343, %v593
      %v595 = vpop.f32.mrb[0].mxu0
      %596 = vmatprep.mubr.f32.mxu0 0.0
      %597 = vmatmul.mubr.f32.gmra.mrb[0].mxu0 %v382
      %v598 = vpop.f32.mrb[0].mxu0
      %v599 = vadd.f32 %v343, %v598
      %v600 = vpop.f32.mrb[0].mxu0
      %601 = vmatprep.mubr.f32.mxu0 0.0
      %602 = vmatmul.mubr.f32.gmra.mrb[0].mxu0 %v385
      %v603 = vpop.f32.mrb[0].mxu0
      %v604 = vadd.f32 %v343, %v603
      %v605 = vpop.f32.mrb[0].mxu0
      %606 = vmatprep.mubr.f32.mxu0 0.0
      %607 = vmatmul.mubr.f32.gmra.mrb[0].mxu0 %v388
      %v608 = vpop.f32.mrb[0].mxu0
      %v609 = vadd.f32 %v343, %v608
      %v610 = vpop.f32.mrb[0].mxu0
      %611 = vmatprep.mubr.f32.mxu0 0.0
      %612 = vmatmul.mubr.f32.gmra.mrb[0].mxu0 %v391
      %v613 = vpop.f32.mrb[0].mxu0
      %v614 = vadd.f32 %v343, %v613
      %v615 = vpop.f32.mrb[0].mxu0
      %616 = vmatprep.mubr.f32.mxu0 0.0
      %617 = vmatmul.mubr.f32.gmra.mrb[0].mxu0 %v394
      %v618 = vpop.f32.mrb[0].mxu0
      %v619 = vadd.f32 %v343, %v618
      %v620 = vpop.f32.mrb[0].mxu0
      %621 = vmatprep.mubr.f32.mxu0 0.0
      %622 = vmatmul.mubr.f32.gmra.mrb[0].mxu0 %v397
      %v623 = vpop.f32.mrb[0].mxu0
      %v624 = vadd.f32 %v343, %v623
      %v625 = vpop.f32.mrb[0].mxu0
      %626 = vmatprep.mubr.f32.mxu0 0.0
      %627 = vmatmul.mubr.f32.gmra.mrb[0].mxu0 %v400
      %v628 = vpop.f32.mrb[0].mxu0
      %v629 = vadd.f32 %v343, %v628
      %v630 = vpop.f32.mrb[0].mxu0
      %631 = vmatprep.mubr.f32.mxu0 0.0
      %632 = vmatmul.mubr.f32.gmra.mrb[0].mxu0 %v403
      %v633 = vpop.f32.mrb[0].mxu0
      %v634 = vadd.f32 %v343, %v633
      %v635 = vpop.f32.mrb[0].mxu0
      %636 = vmatprep.mubr.f32.mxu0 0.0
      %637 = vmatmul.mubr.f32.gmra.mrb[0].mxu0 %v406
      %v638 = vpop.f32.mrb[0].mxu0
      %v639 = vadd.f32 %v343, %v638
      %v640 = vpop.f32.mrb[0].mxu0
      %641 = vmatprep.mubr.f32.mxu0 0.0
      %642 = vmatmul.mubr.f32.gmra.mrb[0].mxu0 %v409
      %v643 = vpop.f32.mrb[0].mxu0
      %v644 = vadd.f32 %v343, %v643
      %v645 = vpop.f32.mrb[0].mxu0
      %646 = vmatprep.mubr.f32.mxu0 0.0
      %647 = vmatmul.mubr.f32.gmra.mrb[0].mxu0 %v412
      %v648 = vpop.f32.mrb[0].mxu0
      %v649 = vadd.f32 %v343, %v648
      %v650 = vpop.f32.mrb[0].mxu0
      %651 = vmatprep.mubr.f32.mxu0 0.0
      %652 = vmatmul.mubr.f32.gmra.mrb[0].mxu0 %v415
      %v653 = vpop.f32.mrb[0].mxu0
      %v654 = vadd.f32 %v343, %v653
      %v655 = vpop.f32.mrb[0].mxu0
      %656 = vmatprep.mubr.f32.mxu0 0.0
      %657 = vmatmul.mubr.f32.gmra.mrb[0].mxu0 %v418
      %v658 = vpop.f32.mrb[0].mxu0
      %v659 = vadd.f32 %v343, %v658
      %v660 = vpop.f32.mrb[0].mxu0
      %661 = vmatprep.mubr.f32.mxu0 0.0
      %662 = vmatmul.mubr.f32.gmra.mrb[0].mxu0 %v421
      %v663 = vpop.f32.mrb[0].mxu0
      %v664 = vadd.f32 %v343, %v663
      %v665 = vpop.f32.mrb[0].mxu0
      %666 = vmatprep.mubr.f32.mxu0 0.0
      %667 = vmatmul.mubr.f32.gmra.mrb[0].mxu0 %v424
      %v668 = vpop.f32.mrb[0].mxu0
      %v669 = vadd.f32 %v343, %v668
      %v670 = vpop.f32.mrb[0].mxu0
      %671 = vmatprep.mubr.f32.mxu0 0.0
      %672 = vmatmul.mubr.f32.gmra.mrb[0].mxu0 %v427
      %v673 = vpop.f32.mrb[0].mxu0
      %v674 = vadd.f32 %v343, %v673
      %v675 = vpop.f32.mrb[0].mxu0
      %676 = vmatprep.mubr.f32.mxu0 0.0
      %677 = vmatmul.mubr.f32.gmra.mrb[0].mxu0 %v430
      %v678 = vpop.f32.mrb[0].mxu0
      %v679 = vadd.f32 %v343, %v678
      %v680 = vpop.f32.mrb[0].mxu0
      %681 = vmatprep.mubr.f32.mxu0 0.0
      %682 = vmatmul.mubr.f32.gmra.mrb[0].mxu0 %v433
      %v683 = vpop.f32.mrb[0].mxu0
      %v684 = vadd.f32 %v343, %v683
      %v685 = vpop.f32.mrb[0].mxu0
      %686 = vmatprep.mubr.f32.mxu0 0.0
      %687 = vmatmul.mubr.f32.gmra.mrb[0].mxu0 %v436
      %v688 = vpop.f32.mrb[0].mxu0
      %v689 = vadd.f32 %v343, %v688
      %v690 = vpop.f32.mrb[0].mxu0
      %691 = vmatprep.mubr.f32.mxu0 0.0
      %692 = vmatmul.mubr.f32.gmra.mrb[0].mxu0 %v439
      %v693 = vpop.f32.mrb[0].mxu0
      %v694 = vadd.f32 %v343, %v693
      %v695 = vpop.f32.mrb[0].mxu0
      %696 = vmatprep.mubr.f32.mxu0 0.0
      %697 = vmatmul.mubr.f32.gmra.mrb[0].mxu0 %v442
      %v698 = vpop.f32.mrb[0].mxu0
      %v699 = vadd.f32 %v343, %v698
      %v700 = vpop.f32.mrb[0].mxu0
      %701 = vmatprep.mubr.f32.mxu0 0.0
      %702 = vmatmul.mubr.f32.gmra.mrb[0].mxu0 %v445
      %v703 = vpop.f32.mrb[0].mxu0
      %v704 = vadd.f32 %v343, %v703
      %v705 = vpop.f32.mrb[0].mxu0
      %706 = vmatprep.mubr.f32.mxu0 0.0
      %707 = vmatmul.mubr.f32.gmra.mrb[0].mxu0 %v448
      %v708 = vpop.f32.mrb[0].mxu0
      %v709 = vadd.f32 %v343, %v708
      %v710 = vpop.f32.mrb[0].mxu0
      %711 = vmatprep.mubr.f32.mxu0 0.0
      %712 = vmatmul.mubr.f32.gmra.mrb[0].mxu0 %v451
      %v713 = vpop.f32.mrb[0].mxu0
      %v714 = vadd.f32 %v343, %v713
      %v715 = vpop.f32.mrb[0].mxu0
      %716 = vmatprep.mubr.f32.mxu0 0.0
      %717 = vmatmul.mubr.f32.gmra.mrb[0].mxu0 %v454
      %v718 = vpop.f32.mrb[0].mxu0
      %v719 = vadd.f32 %v343, %v718
      %v720 = vpop.f32.mrb[0].mxu0
      %721 = vmatprep.mubr.f32.mxu0 0.0
      %722 = vmatmul.mubr.f32.gmra.mrb[0].mxu0 %v457
      %v723 = vpop.f32.mrb[0].mxu0
      %v724 = vadd.f32 %v343, %v723
      %v725 = vpop.f32.mrb[0].mxu0
      %726 = vmatprep.mubr.f32.mxu0 0.0
      %727 = vmatmul.mubr.f32.gmra.mrb[0].mxu0 %v460
      %v728 = vpop.f32.mrb[0].mxu0
      %v729 = vadd.f32 %v343, %v728
      %v730 = vpop.f32.mrb[0].mxu0
      %731 = vmatprep.mubr.f32.mxu0 0.0
      %732 = vmatmul.mubr.f32.gmra.mrb[0].mxu0 %v463
      %v733 = vpop.f32.mrb[0].mxu0
      %v734 = vadd.f32 %v343, %v733
      %v735 = vpop.f32.mrb[0].mxu0
      %736 = vmatprep.mubr.f32.mxu0 0.0
      %737 = vmatmul.mubr.f32.gmra.mrb[0].mxu0 %v466
      %v738 = vpop.f32.mrb[0].mxu0
      %v739 = vadd.f32 %v343, %v738
      %v740 = vpop.f32.mrb[0].mxu0
      %741 = vdwg.mxu0
      %v742 = vmax.f32 %v539, 0.0
      %v743 = vmax.f32 %v544, 0.0
      %v744 = vmax.f32 %v549, 0.0
      %v745 = vmax.f32 %v554, 0.0
      %v746 = vmax.f32 %v559, 0.0
      %v747 = vmax.f32 %v564, 0.0
      %v748 = vmax.f32 %v569, 0.0
      %v749 = vmax.f32 %v574, 0.0
      %v750 = vmax.f32 %v579, 0.0
      %v751 = vmax.f32 %v584, 0.0
      %v752 = vmax.f32 %v589, 0.0
      %v753 = vmax.f32 %v594, 0.0
      %v754 = vmax.f32 %v599, 0.0
      %v755 = vmax.f32 %v604, 0.0
      %v756 = vmax.f32 %v609, 0.0
      %v757 = vmax.f32 %v614, 0.0
      %v758 = vmax.f32 %v619, 0.0
      %v759 = vmax.f32 %v624, 0.0
      %v760 = vmax.f32 %v629, 0.0
      %v761 = vmax.f32 %v634, 0.0
      %v762 = vmax.f32 %v639, 0.0
      %v763 = vmax.f32 %v644, 0.0
      %v764 = vmax.f32 %v649, 0.0
      %v765 = vmax.f32 %v654, 0.0
      %v766 = vmax.f32 %v659, 0.0
      %v767 = vmax.f32 %v664, 0.0
      %v768 = vmax.f32 %v669, 0.0
      %v769 = vmax.f32 %v674, 0.0
      %v770 = vmax.f32 %v679, 0.0
      %v771 = vmax.f32 %v684, 0.0
      %v772 = vmax.f32 %v689, 0.0
      %v773 = vmax.f32 %v694, 0.0
      %v774 = vmax.f32 %v699, 0.0
      %v775 = vmax.f32 %v704, 0.0
      %v776 = vmax.f32 %v709, 0.0
      %v777 = vmax.f32 %v714, 0.0
      %v778 = vmax.f32 %v719, 0.0
      %v779 = vmax.f32 %v724, 0.0
      %v780 = vmax.f32 %v729, 0.0
      %v781 = vmax.f32 %v734, 0.0
      %v782 = vmax.f32 %v739, 0.0
      %784 = vset.pattern.permute.xlu0 0
      %785 = vperm.xlu0 %784, %v252
      %v786 = vpop.permute.xlu0 %785
      %789 = vset.pattern.permute.xlu0 0
      %790 = vperm.xlu0 %789, %v253
      %v791 = vpop.permute.xlu0 %790
      %794 = vset.pattern.permute.xlu0 0
      %795 = vperm.xlu0 %794, %v254
      %v796 = vpop.permute.xlu0 %795
      %799 = vset.pattern.permute.xlu0 0
      %800 = vperm.xlu0 %799, %v255
      %v801 = vpop.permute.xlu0 %800
      %804 = vset.pattern.permute.xlu0 0
      %805 = vperm.xlu0 %804, %v256
      %v806 = vpop.permute.xlu0 %805
      %809 = vset.pattern.permute.xlu0 0
      %810 = vperm.xlu0 %809, %v257
      %v811 = vpop.permute.xlu0 %810
      %814 = vset.pattern.permute.xlu0 0
      %815 = vperm.xlu0 %814, %v258
      %v816 = vpop.permute.xlu0 %815
      %819 = vset.pattern.permute.xlu0 0
      %820 = vperm.xlu0 %819, %v259
      %v821 = vpop.permute.xlu0 %820
      %824 = vset.pattern.permute.xlu0 0
      %825 = vperm.xlu0 %824, %v260
      %v826 = vpop.permute.xlu0 %825
      %829 = vset.pattern.permute.xlu0 0
      %830 = vperm.xlu0 %829, %v261
      %v831 = vpop.permute.xlu0 %830
      %834 = vset.pattern.permute.xlu0 0
      %835 = vperm.xlu0 %834, %v262
      %v836 = vpop.permute.xlu0 %835
      %839 = vset.pattern.permute.xlu0 0
      %840 = vperm.xlu0 %839, %v263
      %v841 = vpop.permute.xlu0 %840
      %844 = vset.pattern.permute.xlu0 0
      %845 = vperm.xlu0 %844, %v264
      %v846 = vpop.permute.xlu0 %845
      %849 = vset.pattern.permute.xlu0 0
      %850 = vperm.xlu0 %849, %v265
      %v851 = vpop.permute.xlu0 %850
      %854 = vset.pattern.permute.xlu0 0
      %855 = vperm.xlu0 %854, %v266
      %v856 = vpop.permute.xlu0 %855
      %859 = vset.pattern.permute.xlu0 0
      %860 = vperm.xlu0 %859, %v267
      %v861 = vpop.permute.xlu0 %860
      %864 = vset.pattern.permute.xlu0 0
      %865 = vperm.xlu0 %864, %v268
      %v866 = vpop.permute.xlu0 %865
      %869 = vset.pattern.permute.xlu0 0
      %870 = vperm.xlu0 %869, %v269
      %v871 = vpop.permute.xlu0 %870
      %874 = vset.pattern.permute.xlu0 0
      %875 = vperm.xlu0 %874, %v270
      %v876 = vpop.permute.xlu0 %875
      %879 = vset.pattern.permute.xlu0 0
      %880 = vperm.xlu0 %879, %v271
      %v881 = vpop.permute.xlu0 %880
      %884 = vset.pattern.permute.xlu0 0
      %885 = vperm.xlu0 %884, %v272
      %v886 = vpop.permute.xlu0 %885
      %889 = vset.pattern.permute.xlu0 0
      %890 = vperm.xlu0 %889, %v273
      %v891 = vpop.permute.xlu0 %890
      %894 = vset.pattern.permute.xlu0 0
      %895 = vperm.xlu0 %894, %v274
      %v896 = vpop.permute.xlu0 %895
      %899 = vset.pattern.permute.xlu0 0
      %900 = vperm.xlu0 %899, %v275
      %v901 = vpop.permute.xlu0 %900
      %904 = vset.pattern.permute.xlu0 0
      %905 = vperm.xlu0 %904, %v276
      %v906 = vpop.permute.xlu0 %905
      %909 = vset.pattern.permute.xlu0 0
      %910 = vperm.xlu0 %909, %v277
      %v911 = vpop.permute.xlu0 %910
      %914 = vset.pattern.permute.xlu0 0
      %915 = vperm.xlu0 %914, %v278
      %v916 = vpop.permute.xlu0 %915
      %919 = vset.pattern.permute.xlu0 0
      %920 = vperm.xlu0 %919, %v279
      %v921 = vpop.permute.xlu0 %920
      %924 = vset.pattern.permute.xlu0 0
      %925 = vperm.xlu0 %924, %v280
      %v926 = vpop.permute.xlu0 %925
      %929 = vset.pattern.permute.xlu0 0
      %930 = vperm.xlu0 %929, %v281
      %v931 = vpop.permute.xlu0 %930
      %934 = vset.pattern.permute.xlu0 0
      %935 = vperm.xlu0 %934, %v282
      %v936 = vpop.permute.xlu0 %935
      %939 = vset.pattern.permute.xlu0 0
      %940 = vperm.xlu0 %939, %v283
      %v941 = vpop.permute.xlu0 %940
      %944 = vset.pattern.permute.xlu0 0
      %945 = vperm.xlu0 %944, %v284
      %v946 = vpop.permute.xlu0 %945
      %949 = vset.pattern.permute.xlu0 0
      %950 = vperm.xlu0 %949, %v285
      %v951 = vpop.permute.xlu0 %950
      %954 = vset.pattern.permute.xlu0 0
      %955 = vperm.xlu0 %954, %v286
      %v956 = vpop.permute.xlu0 %955
      %959 = vset.pattern.permute.xlu0 0
      %960 = vperm.xlu0 %959, %v287
      %v961 = vpop.permute.xlu0 %960
      %964 = vset.pattern.permute.xlu0 0
      %965 = vperm.xlu0 %964, %v288
      %v966 = vpop.permute.xlu0 %965
      %969 = vset.pattern.permute.xlu0 0
      %970 = vperm.xlu0 %969, %v289
      %v971 = vpop.permute.xlu0 %970
      %974 = vset.pattern.permute.xlu0 0
      %975 = vperm.xlu0 %974, %v290
      %v976 = vpop.permute.xlu0 %975
      %979 = vset.pattern.permute.xlu0 0
      %980 = vperm.xlu0 %979, %v291
      %v981 = vpop.permute.xlu0 %980
      %984 = vset.pattern.permute.xlu0 0
      %985 = vperm.xlu0 %984, %v292
      %v986 = vpop.permute.xlu0 %985
      %v988 = vmul.f32 %v742, %v786
      %v989 = vmul.f32 %v743, %v791
      %v990 = vmul.f32 %v744, %v796
      %v991 = vmul.f32 %v745, %v801
      %v992 = vmul.f32 %v746, %v806
      %v993 = vmul.f32 %v747, %v811
      %v994 = vmul.f32 %v748, %v816
      %v995 = vmul.f32 %v749, %v821
      %v996 = vmul.f32 %v750, %v826
      %v997 = vmul.f32 %v751, %v831
      %v998 = vmul.f32 %v752, %v836
      %v999 = vmul.f32 %v753, %v841
      %v1000 = vmul.f32 %v754, %v846
      %v1001 = vmul.f32 %v755, %v851
      %v1002 = vmul.f32 %v756, %v856
      %v1003 = vmul.f32 %v757, %v861
      %v1004 = vmul.f32 %v758, %v866
      %v1005 = vmul.f32 %v759, %v871
      %v1006 = vmul.f32 %v760, %v876
      %v1007 = vmul.f32 %v761, %v881
      %v1008 = vmul.f32 %v762, %v886
      %v1009 = vmul.f32 %v763, %v891
      %v1010 = vmul.f32 %v764, %v896
      %v1011 = vmul.f32 %v765, %v901
      %v1012 = vmul.f32 %v766, %v906
      %v1013 = vmul.f32 %v767, %v911
      %v1014 = vmul.f32 %v768, %v916
      %v1015 = vmul.f32 %v769, %v921
      %v1016 = vmul.f32 %v770, %v926
      %v1017 = vmul.f32 %v771, %v931
      %v1018 = vmul.f32 %v772, %v936
      %v1019 = vmul.f32 %v773, %v941
      %v1020 = vmul.f32 %v774, %v946
      %v1021 = vmul.f32 %v775, %v951
      %v1022 = vmul.f32 %v776, %v956
      %v1023 = vmul.f32 %v777, %v961
      %v1024 = vmul.f32 %v778, %v966
      %v1025 = vmul.f32 %v779, %v971
      %v1026 = vmul.f32 %v780, %v976
      %v1027 = vmul.f32 %v781, %v981
      %v1028 = vmul.f32 %v782, %v986
      %vm1029 = vcmask 523264
      %1030 = vst.msk [vmem:[#allocation2] sm:$0xff] %vm1029, 0.0
      %1031 = vst.msk [vmem:[#allocation2 + $0x8] sm:$0xff] %vm1029, 0.0
      %1032 = vst.msk [vmem:[#allocation2 + $0x10] sm:$0xff] %vm1029, 0.0
      %1033 = vst.msk [vmem:[#allocation2 + $0x18] sm:$0xff] %vm1029, 0.0
      %1034 = vst.msk [vmem:[#allocation2 + $0x20] sm:$0xff] %vm1029, 0.0
      %1035 = vst.msk [vmem:[#allocation2 + $0x28] sm:$0xff] %vm1029, 0.0
      %1036 = vst.msk [vmem:[#allocation2 + $0x30] sm:$0xff] %vm1029, 0.0
      %1037 = vst.msk [vmem:[#allocation2 + $0x38] sm:$0xff] %vm1029, 0.0
      %1038 = vst.msk [vmem:[#allocation2 + $0x40] sm:$0xff] %vm1029, 0.0
      %1039 = vst.msk [vmem:[#allocation2 + $0x48] sm:$0xff] %vm1029, 0.0
      %1040 = vst.msk [vmem:[#allocation2 + $0x50] sm:$0xff] %vm1029, 0.0
      %1041 = vst.msk [vmem:[#allocation2 + $0x58] sm:$0xff] %vm1029, 0.0
      %1042 = vst.msk [vmem:[#allocation2 + $0x60] sm:$0xff] %vm1029, 0.0
      %1043 = vst.msk [vmem:[#allocation2 + $0x68] sm:$0xff] %vm1029, 0.0
      %1044 = vst.msk [vmem:[#allocation2 + $0x70] sm:$0xff] %vm1029, 0.0
      %1045 = vst.msk [vmem:[#allocation2 + $0x78] sm:$0xff] %vm1029, 0.0
      %1046 = vst.msk [vmem:[#allocation2 + $0x80] sm:$0xff] %vm1029, 0.0
      %1047 = vst.msk [vmem:[#allocation2 + $0x88] sm:$0xff] %vm1029, 0.0
      %1048 = vst.msk [vmem:[#allocation2 + $0x90] sm:$0xff] %vm1029, 0.0
      %1049 = vst.msk [vmem:[#allocation2 + $0x98] sm:$0xff] %vm1029, 0.0
      %1050 = vst.msk [vmem:[#allocation2 + $0xa0] sm:$0xff] %vm1029, 0.0
      %1051 = vst.msk [vmem:[#allocation2 + $0xa8] sm:$0xff] %vm1029, 0.0
      %1052 = vst.msk [vmem:[#allocation2 + $0xb0] sm:$0xff] %vm1029, 0.0
      %1053 = vst.msk [vmem:[#allocation2 + $0xb8] sm:$0xff] %vm1029, 0.0
      %1054 = vst.msk [vmem:[#allocation2 + $0xc0] sm:$0xff] %vm1029, 0.0
      %1055 = vst.msk [vmem:[#allocation2 + $0xc8] sm:$0xff] %vm1029, 0.0
      %1056 = vst.msk [vmem:[#allocation2 + $0xd0] sm:$0xff] %vm1029, 0.0
      %1057 = vst.msk [vmem:[#allocation2 + $0xd8] sm:$0xff] %vm1029, 0.0
      %1058 = vst.msk [vmem:[#allocation2 + $0xe0] sm:$0xff] %vm1029, 0.0
      %1059 = vst.msk [vmem:[#allocation2 + $0xe8] sm:$0xff] %vm1029, 0.0
      %1060 = vst.msk [vmem:[#allocation2 + $0xf0] sm:$0xff] %vm1029, 0.0
      %1061 = vst.msk [vmem:[#allocation2 + $0xf8] sm:$0xff] %vm1029, 0.0
      %1062 = vst.msk [vmem:[#allocation2 + $0x100] sm:$0xff] %vm1029, 0.0
      %1063 = vst.msk [vmem:[#allocation2 + $0x108] sm:$0xff] %vm1029, 0.0
      %1064 = vst.msk [vmem:[#allocation2 + $0x110] sm:$0xff] %vm1029, 0.0
      %1065 = vst.msk [vmem:[#allocation2 + $0x118] sm:$0xff] %vm1029, 0.0
      %1066 = vst.msk [vmem:[#allocation2 + $0x120] sm:$0xff] %vm1029, 0.0
      %1067 = vst.msk [vmem:[#allocation2 + $0x128] sm:$0xff] %vm1029, 0.0
      %1068 = vst.msk [vmem:[#allocation2 + $0x130] sm:$0xff] %vm1029, 0.0
      %1069 = vst.msk [vmem:[#allocation2 + $0x138] sm:$0xff] %vm1029, 0.0
      %1070 = vst.msk [vmem:[#allocation2 + $0x140] sm:$0xff] %vm1029, 0.0
      %1071 = vst.msk [vmem:[#allocation2 + $0x148] sm:$0xff] %vm1029, 0.0
      %1072 = vst.msk [vmem:[#allocation2 + $0x150] sm:$0xff] %vm1029, 0.0
      %1073 = vst.msk [vmem:[#allocation2 + $0x158] sm:$0xff] %vm1029, 0.0
      %1074 = vst.msk [vmem:[#allocation2 + $0x160] sm:$0xff] %vm1029, 0.0
      %1075 = vst.msk [vmem:[#allocation2 + $0x168] sm:$0xff] %vm1029, 0.0
      %vm1076 = vcmask 519168
      %1077 = vst.msk [vmem:[#allocation2 + $0x170] sm:$0xf] %vm1076, 0.0
      %1078 = vst.msk [vmem:[#allocation2 + $0x18] sm:$0xff] %vm1029, %v988
      %1079 = vst.msk [vmem:[#allocation2 + $0x20] sm:$0xff] %vm1029, %v989
      %1080 = vst.msk [vmem:[#allocation2 + $0x28] sm:$0xff] %vm1029, %v990
      %1081 = vst.msk [vmem:[#allocation2 + $0x30] sm:$0xff] %vm1029, %v991
      %1082 = vst.msk [vmem:[#allocation2 + $0x38] sm:$0xff] %vm1029, %v992
      %1083 = vst.msk [vmem:[#allocation2 + $0x40] sm:$0xff] %vm1029, %v993
      %1084 = vst.msk [vmem:[#allocation2 + $0x48] sm:$0xff] %vm1029, %v994
      %1085 = vst.msk [vmem:[#allocation2 + $0x50] sm:$0xff] %vm1029, %v995
      %1086 = vst.msk [vmem:[#allocation2 + $0x58] sm:$0xff] %vm1029, %v996
      %1087 = vst.msk [vmem:[#allocation2 + $0x60] sm:$0xff] %vm1029, %v997
      %1088 = vst.msk [vmem:[#allocation2 + $0x68] sm:$0xff] %vm1029, %v998
      %1089 = vst.msk [vmem:[#allocation2 + $0x70] sm:$0xff] %vm1029, %v999
      %1090 = vst.msk [vmem:[#allocation2 + $0x78] sm:$0xff] %vm1029, %v1000
      %1091 = vst.msk [vmem:[#allocation2 + $0x80] sm:$0xff] %vm1029, %v1001
      %1092 = vst.msk [vmem:[#allocation2 + $0x88] sm:$0xff] %vm1029, %v1002
      %1093 = vst.msk [vmem:[#allocation2 + $0x90] sm:$0xff] %vm1029, %v1003
      %1094 = vst.msk [vmem:[#allocation2 + $0x98] sm:$0xff] %vm1029, %v1004
      %1095 = vst.msk [vmem:[#allocation2 + $0xa0] sm:$0xff] %vm1029, %v1005
      %1096 = vst.msk [vmem:[#allocation2 + $0xa8] sm:$0xff] %vm1029, %v1006
      %1097 = vst.msk [vmem:[#allocation2 + $0xb0] sm:$0xff] %vm1029, %v1007
      %1098 = vst.msk [vmem:[#allocation2 + $0xb8] sm:$0xff] %vm1029, %v1008
      %1099 = vst.msk [vmem:[#allocation2 + $0xc0] sm:$0xff] %vm1029, %v1009
      %1100 = vst.msk [vmem:[#allocation2 + $0xc8] sm:$0xff] %vm1029, %v1010
      %1101 = vst.msk [vmem:[#allocation2 + $0xd0] sm:$0xff] %vm1029, %v1011
      %1102 = vst.msk [vmem:[#allocation2 + $0xd8] sm:$0xff] %vm1029, %v1012
      %1103 = vst.msk [vmem:[#allocation2 + $0xe0] sm:$0xff] %vm1029, %v1013
      %1104 = vst.msk [vmem:[#allocation2 + $0xe8] sm:$0xff] %vm1029, %v1014
      %1105 = vst.msk [vmem:[#allocation2 + $0xf0] sm:$0xff] %vm1029, %v1015
      %1106 = vst.msk [vmem:[#allocation2 + $0xf8] sm:$0xff] %vm1029, %v1016
      %1107 = vst.msk [vmem:[#allocation2 + $0x100] sm:$0xff] %vm1029, %v1017
      %1108 = vst.msk [vmem:[#allocation2 + $0x108] sm:$0xff] %vm1029, %v1018
      %1109 = vst.msk [vmem:[#allocation2 + $0x110] sm:$0xff] %vm1029, %v1019
      %1110 = vst.msk [vmem:[#allocation2 + $0x118] sm:$0xff] %vm1029, %v1020
      %1111 = vst.msk [vmem:[#allocation2 + $0x120] sm:$0xff] %vm1029, %v1021
      %1112 = vst.msk [vmem:[#allocation2 + $0x128] sm:$0xff] %vm1029, %v1022
      %1113 = vst.msk [vmem:[#allocation2 + $0x130] sm:$0xff] %vm1029, %v1023
      %1114 = vst.msk [vmem:[#allocation2 + $0x138] sm:$0xff] %vm1029, %v1024
      %1115 = vst.msk [vmem:[#allocation2 + $0x140] sm:$0xff] %vm1029, %v1025
      %1116 = vst.msk [vmem:[#allocation2 + $0x148] sm:$0xff] %vm1029, %v1026
      %1117 = vst.msk [vmem:[#allocation2 + $0x150] sm:$0xff] %vm1029, %v1027
      %1118 = vst.msk [vmem:[#allocation2 + $0x158] sm:$0xf] %vm1076, %v1028
      %v1119 = vld [vmem:[#allocation2 + $0x5] sm:$0xff]
      %v1120 = vld [vmem:[#allocation2 + $0xd] sm:$0xff]
      %v1121 = vld [vmem:[#allocation2 + $0x15] sm:$0xff]
      %v1122 = vld [vmem:[#allocation2 + $0x1d] sm:$0xff]
      %v1123 = vld [vmem:[#allocation2 + $0x25] sm:$0xff]
      %v1124 = vld [vmem:[#allocation2 + $0x2d] sm:$0xff]
      %v1125 = vld [vmem:[#allocation2 + $0x35] sm:$0xff]
      %v1126 = vld [vmem:[#allocation2 + $0x3d] sm:$0xff]
      %v1127 = vld [vmem:[#allocation2 + $0x45] sm:$0xff]
      %v1128 = vld [vmem:[#allocation2 + $0x4d] sm:$0xff]
      %v1129 = vld [vmem:[#allocation2 + $0x55] sm:$0xff]
      %v1130 = vld [vmem:[#allocation2 + $0x5d] sm:$0xff]
      %v1131 = vld [vmem:[#allocation2 + $0x65] sm:$0xff]
      %v1132 = vld [vmem:[#allocation2 + $0x6d] sm:$0xff]
      %v1133 = vld [vmem:[#allocation2 + $0x75] sm:$0xff]
      %v1134 = vld [vmem:[#allocation2 + $0x7d] sm:$0xff]
      %v1135 = vld [vmem:[#allocation2 + $0x85] sm:$0xff]
      %v1136 = vld [vmem:[#allocation2 + $0x8d] sm:$0xff]
      %v1137 = vld [vmem:[#allocation2 + $0x95] sm:$0xff]
      %v1138 = vld [vmem:[#allocation2 + $0x9d] sm:$0xff]
      %v1139 = vld [vmem:[#allocation2 + $0xa5] sm:$0xff]
      %v1140 = vld [vmem:[#allocation2 + $0xad] sm:$0xff]
      %v1141 = vld [vmem:[#allocation2 + $0xb5] sm:$0xff]
      %v1142 = vld [vmem:[#allocation2 + $0xbd] sm:$0xff]
      %v1143 = vld [vmem:[#allocation2 + $0xc5] sm:$0xff]
      %v1144 = vld [vmem:[#allocation2 + $0xcd] sm:$0xff]
      %v1145 = vld [vmem:[#allocation2 + $0xd5] sm:$0xff]
      %v1146 = vld [vmem:[#allocation2 + $0xdd] sm:$0xff]
      %v1147 = vld [vmem:[#allocation2 + $0xe5] sm:$0xff]
      %v1148 = vld [vmem:[#allocation2 + $0xed] sm:$0xff]
      %v1149 = vld [vmem:[#allocation2 + $0xf5] sm:$0xff]
      %v1150 = vld [vmem:[#allocation2 + $0xfd] sm:$0xff]
      %v1151 = vld [vmem:[#allocation2 + $0x105] sm:$0xff]
      %v1152 = vld [vmem:[#allocation2 + $0x10d] sm:$0xff]
      %v1153 = vld [vmem:[#allocation2 + $0x115] sm:$0xff]
      %v1154 = vld [vmem:[#allocation2 + $0x11d] sm:$0xff]
      %v1155 = vld [vmem:[#allocation2 + $0x125] sm:$0xff]
      %v1156 = vld [vmem:[#allocation2 + $0x12d] sm:$0xff]
      %v1157 = vld [vmem:[#allocation2 + $0x135] sm:$0xff]
      %v1158 = vld [vmem:[#allocation2 + $0x13d] sm:$0xff]
      %v1159 = vld [vmem:[#allocation2 + $0x145] sm:$0xf]
      %1160 = vst.msk [vmem:[#allocation3] sm:$0xff] %vm1029, %v1119
      %1161 = vst.msk [vmem:[#allocation3 + $0x28] sm:$0xff] %vm1029, %v1120
      %1162 = vst.msk [vmem:[#allocation3 + $0x50] sm:$0xff] %vm1029, %v1121
      %1163 = vst.msk [vmem:[#allocation3 + $0x78] sm:$0xff] %vm1029, %v1122
      %1164 = vst.msk [vmem:[#allocation3 + $0xa0] sm:$0xff] %vm1029, %v1123
      %1165 = vst.msk [vmem:[#allocation3 + $0xc8] sm:$0xff] %vm1029, %v1124
      %1166 = vst.msk [vmem:[#allocation3 + $0xf0] sm:$0xff] %vm1029, %v1125
      %1167 = vst.msk [vmem:[#allocation3 + $0x118] sm:$0xff] %vm1029, %v1126
      %1168 = vst.msk [vmem:[#allocation3 + $0x140] sm:$0xff] %vm1029, %v1127
      %1169 = vst.msk [vmem:[#allocation3 + $0x168] sm:$0xff] %vm1029, %v1128
      %1170 = vst.msk [vmem:[#allocation3 + $0x190] sm:$0xff] %vm1029, %v1129
      %1171 = vst.msk [vmem:[#allocation3 + $0x1b8] sm:$0xff] %vm1029, %v1130
      %1172 = vst.msk [vmem:[#allocation3 + $0x1e0] sm:$0xff] %vm1029, %v1131
      %1173 = vst.msk [vmem:[#allocation3 + $0x208] sm:$0xff] %vm1029, %v1132
      %1174 = vst.msk [vmem:[#allocation3 + $0x230] sm:$0xff] %vm1029, %v1133
      %1175 = vst.msk [vmem:[#allocation3 + $0x258] sm:$0xff] %vm1029, %v1134
      %1176 = vst.msk [vmem:[#allocation3 + $0x280] sm:$0xff] %vm1029, %v1135
      %1177 = vst.msk [vmem:[#allocation3 + $0x2a8] sm:$0xff] %vm1029, %v1136
      %1178 = vst.msk [vmem:[#allocation3 + $0x2d0] sm:$0xff] %vm1029, %v1137
      %1179 = vst.msk [vmem:[#allocation3 + $0x2f8] sm:$0xff] %vm1029, %v1138
      %1180 = vst.msk [vmem:[#allocation3 + $0x320] sm:$0xff] %vm1029, %v1139
      %1181 = vst.msk [vmem:[#allocation3 + $0x348] sm:$0xff] %vm1029, %v1140
      %1182 = vst.msk [vmem:[#allocation3 + $0x370] sm:$0xff] %vm1029, %v1141
      %1183 = vst.msk [vmem:[#allocation3 + $0x398] sm:$0xff] %vm1029, %v1142
      %1184 = vst.msk [vmem:[#allocation3 + $0x3c0] sm:$0xff] %vm1029, %v1143
      %1185 = vst.msk [vmem:[#allocation3 + $0x3e8] sm:$0xff] %vm1029, %v1144
      %1186 = vst.msk [vmem:[#allocation3 + $0x410] sm:$0xff] %vm1029, %v1145
      %1187 = vst.msk [vmem:[#allocation3 + $0x438] sm:$0xff] %vm1029, %v1146
      %1188 = vst.msk [vmem:[#allocation3 + $0x460] sm:$0xff] %vm1029, %v1147
      %1189 = vst.msk [vmem:[#allocation3 + $0x488] sm:$0xff] %vm1029, %v1148
      %1190 = vst.msk [vmem:[#allocation3 + $0x4b0] sm:$0xff] %vm1029, %v1149
      %1191 = vst.msk [vmem:[#allocation3 + $0x4d8] sm:$0xff] %vm1029, %v1150
      %1192 = vst.msk [vmem:[#allocation3 + $0x500] sm:$0xff] %vm1029, %v1151
      %1193 = vst.msk [vmem:[#allocation3 + $0x528] sm:$0xff] %vm1029, %v1152
      %1194 = vst.msk [vmem:[#allocation3 + $0x550] sm:$0xff] %vm1029, %v1153
      %1195 = vst.msk [vmem:[#allocation3 + $0x578] sm:$0xff] %vm1029, %v1154
      %1196 = vst.msk [vmem:[#allocation3 + $0x5a0] sm:$0xff] %vm1029, %v1155
      %1197 = vst.msk [vmem:[#allocation3 + $0x5c8] sm:$0xff] %vm1029, %v1156
      %1198 = vst.msk [vmem:[#allocation3 + $0x5f0] sm:$0xff] %vm1029, %v1157
      %1199 = vst.msk [vmem:[#allocation3 + $0x618] sm:$0xff] %vm1029, %v1158
      %1200 = vst.msk [vmem:[#allocation3 + $0x640] sm:$0xf] %vm1076, %v1159
      %v1201 = vld [vmem:[#allocation2 + $0x6] sm:$0xff]
      %v1202 = vld [vmem:[#allocation2 + $0xe] sm:$0xff]
      %v1203 = vld [vmem:[#allocation2 + $0x16] sm:$0xff]
      %v1204 = vld [vmem:[#allocation2 + $0x1e] sm:$0xff]
      %v1205 = vld [vmem:[#allocation2 + $0x26] sm:$0xff]
      %v1206 = vld [vmem:[#allocation2 + $0x2e] sm:$0xff]
      %v1207 = vld [vmem:[#allocation2 + $0x36] sm:$0xff]
      %v1208 = vld [vmem:[#allocation2 + $0x3e] sm:$0xff]
      %v1209 = vld [vmem:[#allocation2 + $0x46] sm:$0xff]
      %v1210 = vld [vmem:[#allocation2 + $0x4e] sm:$0xff]
      %v1211 = vld [vmem:[#allocation2 + $0x56] sm:$0xff]
      %v1212 = vld [vmem:[#allocation2 + $0x5e] sm:$0xff]
      %v1213 = vld [vmem:[#allocation2 + $0x66] sm:$0xff]
      %v1214 = vld [vmem:[#allocation2 + $0x6e] sm:$0xff]
      %v1215 = vld [vmem:[#allocation2 + $0x76] sm:$0xff]
      %v1216 = vld [vmem:[#allocation2 + $0x7e] sm:$0xff]
      %v1217 = vld [vmem:[#allocation2 + $0x86] sm:$0xff]
      %v1218 = vld [vmem:[#allocation2 + $0x8e] sm:$0xff]
      %v1219 = vld [vmem:[#allocation2 + $0x96] sm:$0xff]
      %v1220 = vld [vmem:[#allocation2 + $0x9e] sm:$0xff]
      %v1221 = vld [vmem:[#allocation2 + $0xa6] sm:$0xff]
      %v1222 = vld [vmem:[#allocation2 + $0xae] sm:$0xff]
      %v1223 = vld [vmem:[#allocation2 + $0xb6] sm:$0xff]
      %v1224 = vld [vmem:[#allocation2 + $0xbe] sm:$0xff]
      %v1225 = vld [vmem:[#allocation2 + $0xc6] sm:$0xff]
      %v1226 = vld [vmem:[#allocation2 + $0xce] sm:$0xff]
      %v1227 = vld [vmem:[#allocation2 + $0xd6] sm:$0xff]
      %v1228 = vld [vmem:[#allocation2 + $0xde] sm:$0xff]
      %v1229 = vld [vmem:[#allocation2 + $0xe6] sm:$0xff]
      %v1230 = vld [vmem:[#allocation2 + $0xee] sm:$0xff]
      %v1231 = vld [vmem:[#allocation2 + $0xf6] sm:$0xff]
      %v1232 = vld [vmem:[#allocation2 + $0xfe] sm:$0xff]
      %v1233 = vld [vmem:[#allocation2 + $0x106] sm:$0xff]
      %v1234 = vld [vmem:[#allocation2 + $0x10e] sm:$0xff]
      %v1235 = vld [vmem:[#allocation2 + $0x116] sm:$0xff]
      %v1236 = vld [vmem:[#allocation2 + $0x11e] sm:$0xff]
      %v1237 = vld [vmem:[#allocation2 + $0x126] sm:$0xff]
      %v1238 = vld [vmem:[#allocation2 + $0x12e] sm:$0xff]
      %v1239 = vld [vmem:[#allocation2 + $0x136] sm:$0xff]
      %v1240 = vld [vmem:[#allocation2 + $0x13e] sm:$0xff]
      %v1241 = vld [vmem:[#allocation2 + $0x146] sm:$0xf]
      %1283 = vrot.lane.b32.xlu0 %v1201, 64
      %v1284 = vpop.permute.xlu0 %1283
      %1285 = vrot.lane.b32.xlu0 %v1202, 64
      %v1286 = vpop.permute.xlu0 %1285
      %1287 = vrot.lane.b32.xlu0 %v1203, 64
      %v1288 = vpop.permute.xlu0 %1287
      %1289 = vrot.lane.b32.xlu0 %v1204, 64
      %v1290 = vpop.permute.xlu0 %1289
      %1291 = vrot.lane.b32.xlu0 %v1205, 64
      %v1292 = vpop.permute.xlu0 %1291
      %1293 = vrot.lane.b32.xlu0 %v1206, 64
      %v1294 = vpop.permute.xlu0 %1293
      %1295 = vrot.lane.b32.xlu0 %v1207, 64
      %v1296 = vpop.permute.xlu0 %1295
      %1297 = vrot.lane.b32.xlu0 %v1208, 64
      %v1298 = vpop.permute.xlu0 %1297
      %1299 = vrot.lane.b32.xlu0 %v1209, 64
      %v1300 = vpop.permute.xlu0 %1299
      %1301 = vrot.lane.b32.xlu0 %v1210, 64
      %v1302 = vpop.permute.xlu0 %1301
      %1303 = vrot.lane.b32.xlu0 %v1211, 64
      %v1304 = vpop.permute.xlu0 %1303
      %1305 = vrot.lane.b32.xlu0 %v1212, 64
      %v1306 = vpop.permute.xlu0 %1305
      %1307 = vrot.lane.b32.xlu0 %v1213, 64
      %v1308 = vpop.permute.xlu0 %1307
      %1309 = vrot.lane.b32.xlu0 %v1214, 64
      %v1310 = vpop.permute.xlu0 %1309
      %1311 = vrot.lane.b32.xlu0 %v1215, 64
      %v1312 = vpop.permute.xlu0 %1311
      %1313 = vrot.lane.b32.xlu0 %v1216, 64
      %v1314 = vpop.permute.xlu0 %1313
      %1315 = vrot.lane.b32.xlu0 %v1217, 64
      %v1316 = vpop.permute.xlu0 %1315
      %1317 = vrot.lane.b32.xlu0 %v1218, 64
      %v1318 = vpop.permute.xlu0 %1317
      %1319 = vrot.lane.b32.xlu0 %v1219, 64
      %v1320 = vpop.permute.xlu0 %1319
      %1321 = vrot.lane.b32.xlu0 %v1220, 64
      %v1322 = vpop.permute.xlu0 %1321
      %1323 = vrot.lane.b32.xlu0 %v1221, 64
      %v1324 = vpop.permute.xlu0 %1323
      %1325 = vrot.lane.b32.xlu0 %v1222, 64
      %v1326 = vpop.permute.xlu0 %1325
      %1327 = vrot.lane.b32.xlu0 %v1223, 64
      %v1328 = vpop.permute.xlu0 %1327
      %1329 = vrot.lane.b32.xlu0 %v1224, 64
      %v1330 = vpop.permute.xlu0 %1329
      %1331 = vrot.lane.b32.xlu0 %v1225, 64
      %v1332 = vpop.permute.xlu0 %1331
      %1333 = vrot.lane.b32.xlu0 %v1226, 64
      %v1334 = vpop.permute.xlu0 %1333
      %1335 = vrot.lane.b32.xlu0 %v1227, 64
      %v1336 = vpop.permute.xlu0 %1335
      %1337 = vrot.lane.b32.xlu0 %v1228, 64
      %v1338 = vpop.permute.xlu0 %1337
      %1339 = vrot.lane.b32.xlu0 %v1229, 64
      %v1340 = vpop.permute.xlu0 %1339
      %1341 = vrot.lane.b32.xlu0 %v1230, 64
      %v1342 = vpop.permute.xlu0 %1341
      %1343 = vrot.lane.b32.xlu0 %v1231, 64
      %v1344 = vpop.permute.xlu0 %1343
      %1345 = vrot.lane.b32.xlu0 %v1232, 64
      %v1346 = vpop.permute.xlu0 %1345
      %1347 = vrot.lane.b32.xlu0 %v1233, 64
      %v1348 = vpop.permute.xlu0 %1347
      %1349 = vrot.lane.b32.xlu0 %v1234, 64
      %v1350 = vpop.permute.xlu0 %1349
      %1351 = vrot.lane.b32.xlu0 %v1235, 64
      %v1352 = vpop.permute.xlu0 %1351
      %1353 = vrot.lane.b32.xlu0 %v1236, 64
      %v1354 = vpop.permute.xlu0 %1353
      %1355 = vrot.lane.b32.xlu0 %v1237, 64
      %v1356 = vpop.permute.xlu0 %1355
      %1357 = vrot.lane.b32.xlu0 %v1238, 64
      %v1358 = vpop.permute.xlu0 %1357
      %1359 = vrot.lane.b32.xlu0 %v1239, 64
      %v1360 = vpop.permute.xlu0 %1359
      %1361 = vrot.lane.b32.xlu0 %v1240, 64
      %v1362 = vpop.permute.xlu0 %1361
      %1363 = vrot.lane.b32.xlu0 %v1241, 64
      %v1364 = vpop.permute.xlu0 %1363
      %vm1406 = vcmask 1048064
      %1407 = vst.msk [vmem:[#allocation3] sm:$0xff] %vm1406, %v1284
      %1408 = vst.msk [vmem:[#allocation3 + $0x28] sm:$0xff] %vm1406, %v1286
      %1409 = vst.msk [vmem:[#allocation3 + $0x50] sm:$0xff] %vm1406, %v1288
      %1410 = vst.msk [vmem:[#allocation3 + $0x78] sm:$0xff] %vm1406, %v1290
      %1411 = vst.msk [vmem:[#allocation3 + $0xa0] sm:$0xff] %vm1406, %v1292
      %1412 = vst.msk [vmem:[#allocation3 + $0xc8] sm:$0xff] %vm1406, %v1294
      %1413 = vst.msk [vmem:[#allocation3 + $0xf0] sm:$0xff] %vm1406, %v1296
      %1414 = vst.msk [vmem:[#allocation3 + $0x118] sm:$0xff] %vm1406, %v1298
      %1415 = vst.msk [vmem:[#allocation3 + $0x140] sm:$0xff] %vm1406, %v1300
      %1416 = vst.msk [vmem:[#allocation3 + $0x168] sm:$0xff] %vm1406, %v1302
      %1417 = vst.msk [vmem:[#allocation3 + $0x190] sm:$0xff] %vm1406, %v1304
      %1418 = vst.msk [vmem:[#allocation3 + $0x1b8] sm:$0xff] %vm1406, %v1306
      %1419 = vst.msk [vmem:[#allocation3 + $0x1e0] sm:$0xff] %vm1406, %v1308
      %1420 = vst.msk [vmem:[#allocation3 + $0x208] sm:$0xff] %vm1406, %v1310
      %1421 = vst.msk [vmem:[#allocation3 + $0x230] sm:$0xff] %vm1406, %v1312
      %1422 = vst.msk [vmem:[#allocation3 + $0x258] sm:$0xff] %vm1406, %v1314
      %1423 = vst.msk [vmem:[#allocation3 + $0x280] sm:$0xff] %vm1406, %v1316
      %1424 = vst.msk [vmem:[#allocation3 + $0x2a8] sm:$0xff] %vm1406, %v1318
      %1425 = vst.msk [vmem:[#allocation3 + $0x2d0] sm:$0xff] %vm1406, %v1320
      %1426 = vst.msk [vmem:[#allocation3 + $0x2f8] sm:$0xff] %vm1406, %v1322
      %1427 = vst.msk [vmem:[#allocation3 + $0x320] sm:$0xff] %vm1406, %v1324
      %1428 = vst.msk [vmem:[#allocation3 + $0x348] sm:$0xff] %vm1406, %v1326
      %1429 = vst.msk [vmem:[#allocation3 + $0x370] sm:$0xff] %vm1406, %v1328
      %1430 = vst.msk [vmem:[#allocation3 + $0x398] sm:$0xff] %vm1406, %v1330
      %1431 = vst.msk [vmem:[#allocation3 + $0x3c0] sm:$0xff] %vm1406, %v1332
      %1432 = vst.msk [vmem:[#allocation3 + $0x3e8] sm:$0xff] %vm1406, %v1334
      %1433 = vst.msk [vmem:[#allocation3 + $0x410] sm:$0xff] %vm1406, %v1336
      %1434 = vst.msk [vmem:[#allocation3 + $0x438] sm:$0xff] %vm1406, %v1338
      %1435 = vst.msk [vmem:[#allocation3 + $0x460] sm:$0xff] %vm1406, %v1340
      %1436 = vst.msk [vmem:[#allocation3 + $0x488] sm:$0xff] %vm1406, %v1342
      %1437 = vst.msk [vmem:[#allocation3 + $0x4b0] sm:$0xff] %vm1406, %v1344
      %1438 = vst.msk [vmem:[#allocation3 + $0x4d8] sm:$0xff] %vm1406, %v1346
      %1439 = vst.msk [vmem:[#allocation3 + $0x500] sm:$0xff] %vm1406, %v1348
      %1440 = vst.msk [vmem:[#allocation3 + $0x528] sm:$0xff] %vm1406, %v1350
      %1441 = vst.msk [vmem:[#allocation3 + $0x550] sm:$0xff] %vm1406, %v1352
      %1442 = vst.msk [vmem:[#allocation3 + $0x578] sm:$0xff] %vm1406, %v1354
      %1443 = vst.msk [vmem:[#allocation3 + $0x5a0] sm:$0xff] %vm1406, %v1356
      %1444 = vst.msk [vmem:[#allocation3 + $0x5c8] sm:$0xff] %vm1406, %v1358
      %1445 = vst.msk [vmem:[#allocation3 + $0x5f0] sm:$0xff] %vm1406, %v1360
      %1446 = vst.msk [vmem:[#allocation3 + $0x618] sm:$0xff] %vm1406, %v1362
      %vm1447 = vcmask 1043968
      %1448 = vst.msk [vmem:[#allocation3 + $0x640] sm:$0xf] %vm1447, %v1364
      %v1449 = vld [vmem:[#allocation2 + $0x7] sm:$0xff]
      %v1450 = vld [vmem:[#allocation2 + $0xf] sm:$0xff]
      %v1451 = vld [vmem:[#allocation2 + $0x17] sm:$0xff]
      %v1452 = vld [vmem:[#allocation2 + $0x1f] sm:$0xff]
      %v1453 = vld [vmem:[#allocation2 + $0x27] sm:$0xff]
      %v1454 = vld [vmem:[#allocation2 + $0x2f] sm:$0xff]
      %v1455 = vld [vmem:[#allocation2 + $0x37] sm:$0xff]
      %v1456 = vld [vmem:[#allocation2 + $0x3f] sm:$0xff]
      %v1457 = vld [vmem:[#allocation2 + $0x47] sm:$0xff]
      %v1458 = vld [vmem:[#allocation2 + $0x4f] sm:$0xff]
      %v1459 = vld [vmem:[#allocation2 + $0x57] sm:$0xff]
      %v1460 = vld [vmem:[#allocation2 + $0x5f] sm:$0xff]
      %v1461 = vld [vmem:[#allocation2 + $0x67] sm:$0xff]
      %v1462 = vld [vmem:[#allocation2 + $0x6f] sm:$0xff]
      %v1463 = vld [vmem:[#allocation2 + $0x77] sm:$0xff]
      %v1464 = vld [vmem:[#allocation2 + $0x7f] sm:$0xff]
      %v1465 = vld [vmem:[#allocation2 + $0x87] sm:$0xff]
      %v1466 = vld [vmem:[#allocation2 + $0x8f] sm:$0xff]
      %v1467 = vld [vmem:[#allocation2 + $0x97] sm:$0xff]
      %v1468 = vld [vmem:[#allocation2 + $0x9f] sm:$0xff]
      %v1469 = vld [vmem:[#allocation2 + $0xa7] sm:$0xff]
      %v1470 = vld [vmem:[#allocation2 + $0xaf] sm:$0xff]
      %v1471 = vld [vmem:[#allocation2 + $0xb7] sm:$0xff]
      %v1472 = vld [vmem:[#allocation2 + $0xbf] sm:$0xff]
      %v1473 = vld [vmem:[#allocation2 + $0xc7] sm:$0xff]
      %v1474 = vld [vmem:[#allocation2 + $0xcf] sm:$0xff]
      %v1475 = vld [vmem:[#allocation2 + $0xd7] sm:$0xff]
      %v1476 = vld [vmem:[#allocation2 + $0xdf] sm:$0xff]
      %v1477 = vld [vmem:[#allocation2 + $0xe7] sm:$0xff]
      %v1478 = vld [vmem:[#allocation2 + $0xef] sm:$0xff]
      %v1479 = vld [vmem:[#allocation2 + $0xf7] sm:$0xff]
      %v1480 = vld [vmem:[#allocation2 + $0xff] sm:$0xff]
      %v1481 = vld [vmem:[#allocation2 + $0x107] sm:$0xff]
      %v1482 = vld [vmem:[#allocation2 + $0x10f] sm:$0xff]
      %v1483 = vld [vmem:[#allocation2 + $0x117] sm:$0xff]
      %v1484 = vld [vmem:[#allocation2 + $0x11f] sm:$0xff]
      %v1485 = vld [vmem:[#allocation2 + $0x127] sm:$0xff]
      %v1486 = vld [vmem:[#allocation2 + $0x12f] sm:$0xff]
      %v1487 = vld [vmem:[#allocation2 + $0x137] sm:$0xff]
      %v1488 = vld [vmem:[#allocation2 + $0x13f] sm:$0xff]
      %v1489 = vld [vmem:[#allocation2 + $0x147] sm:$0xf]
      %1490 = vst.msk [vmem:[#allocation3 + $0x8] sm:$0xff] %vm1029, %v1449
      %1491 = vst.msk [vmem:[#allocation3 + $0x30] sm:$0xff] %vm1029, %v1450
      %1492 = vst.msk [vmem:[#allocation3 + $0x58] sm:$0xff] %vm1029, %v1451
      %1493 = vst.msk [vmem:[#allocation3 + $0x80] sm:$0xff] %vm1029, %v1452
      %1494 = vst.msk [vmem:[#allocation3 + $0xa8] sm:$0xff] %vm1029, %v1453
      %1495 = vst.msk [vmem:[#allocation3 + $0xd0] sm:$0xff] %vm1029, %v1454
      %1496 = vst.msk [vmem:[#allocation3 + $0xf8] sm:$0xff] %vm1029, %v1455
      %1497 = vst.msk [vmem:[#allocation3 + $0x120] sm:$0xff] %vm1029, %v1456
      %1498 = vst.msk [vmem:[#allocation3 + $0x148] sm:$0xff] %vm1029, %v1457
      %1499 = vst.msk [vmem:[#allocation3 + $0x170] sm:$0xff] %vm1029, %v1458
      %1500 = vst.msk [vmem:[#allocation3 + $0x198] sm:$0xff] %vm1029, %v1459
      %1501 = vst.msk [vmem:[#allocation3 + $0x1c0] sm:$0xff] %vm1029, %v1460
      %1502 = vst.msk [vmem:[#allocation3 + $0x1e8] sm:$0xff] %vm1029, %v1461
      %1503 = vst.msk [vmem:[#allocation3 + $0x210] sm:$0xff] %vm1029, %v1462
      %1504 = vst.msk [vmem:[#allocation3 + $0x238] sm:$0xff] %vm1029, %v1463
      %1505 = vst.msk [vmem:[#allocation3 + $0x260] sm:$0xff] %vm1029, %v1464
      %1506 = vst.msk [vmem:[#allocation3 + $0x288] sm:$0xff] %vm1029, %v1465
      %1507 = vst.msk [vmem:[#allocation3 + $0x2b0] sm:$0xff] %vm1029, %v1466
      %1508 = vst.msk [vmem:[#allocation3 + $0x2d8] sm:$0xff] %vm1029, %v1467
      %1509 = vst.msk [vmem:[#allocation3 + $0x300] sm:$0xff] %vm1029, %v1468
      %1510 = vst.msk [vmem:[#allocation3 + $0x328] sm:$0xff] %vm1029, %v1469
      %1511 = vst.msk [vmem:[#allocation3 + $0x350] sm:$0xff] %vm1029, %v1470
      %1512 = vst.msk [vmem:[#allocation3 + $0x378] sm:$0xff] %vm1029, %v1471
      %1513 = vst.msk [vmem:[#allocation3 + $0x3a0] sm:$0xff] %vm1029, %v1472
      %1514 = vst.msk [vmem:[#allocation3 + $0x3c8] sm:$0xff] %vm1029, %v1473
      %1515 = vst.msk [vmem:[#allocation3 + $0x3f0] sm:$0xff] %vm1029, %v1474
      %1516 = vst.msk [vmem:[#allocation3 + $0x418] sm:$0xff] %vm1029, %v1475
      %1517 = vst.msk [vmem:[#allocation3 + $0x440] sm:$0xff] %vm1029, %v1476
      %1518 = vst.msk [vmem:[#allocation3 + $0x468] sm:$0xff] %vm1029, %v1477
      %1519 = vst.msk [vmem:[#allocation3 + $0x490] sm:$0xff] %vm1029, %v1478
      %1520 = vst.msk [vmem:[#allocation3 + $0x4b8] sm:$0xff] %vm1029, %v1479
      %1521 = vst.msk [vmem:[#allocation3 + $0x4e0] sm:$0xff] %vm1029, %v1480
      %1522 = vst.msk [vmem:[#allocation3 + $0x508] sm:$0xff] %vm1029, %v1481
      %1523 = vst.msk [vmem:[#allocation3 + $0x530] sm:$0xff] %vm1029, %v1482
      %1524 = vst.msk [vmem:[#allocation3 + $0x558] sm:$0xff] %vm1029, %v1483
      %1525 = vst.msk [vmem:[#allocation3 + $0x580] sm:$0xff] %vm1029, %v1484
      %1526 = vst.msk [vmem:[#allocation3 + $0x5a8] sm:$0xff] %vm1029, %v1485
      %1527 = vst.msk [vmem:[#allocation3 + $0x5d0] sm:$0xff] %vm1029, %v1486
      %1528 = vst.msk [vmem:[#allocation3 + $0x5f8] sm:$0xff] %vm1029, %v1487
      %1529 = vst.msk [vmem:[#allocation3 + $0x620] sm:$0xff] %vm1029, %v1488
      %1530 = vst.msk [vmem:[#allocation3 + $0x648] sm:$0xf] %vm1076, %v1489
      %v1531 = vld [vmem:[#allocation2 + $0x17] sm:$0xff]
      %v1532 = vld [vmem:[#allocation2 + $0x1f] sm:$0xff]
      %v1533 = vld [vmem:[#allocation2 + $0x27] sm:$0xff]
      %v1534 = vld [vmem:[#allocation2 + $0x2f] sm:$0xff]
      %v1535 = vld [vmem:[#allocation2 + $0x37] sm:$0xff]
      %v1536 = vld [vmem:[#allocation2 + $0x3f] sm:$0xff]
      %v1537 = vld [vmem:[#allocation2 + $0x47] sm:$0xff]
      %v1538 = vld [vmem:[#allocation2 + $0x4f] sm:$0xff]
      %v1539 = vld [vmem:[#allocation2 + $0x57] sm:$0xff]
      %v1540 = vld [vmem:[#allocation2 + $0x5f] sm:$0xff]
      %v1541 = vld [vmem:[#allocation2 + $0x67] sm:$0xff]
      %v1542 = vld [vmem:[#allocation2 + $0x6f] sm:$0xff]
      %v1543 = vld [vmem:[#allocation2 + $0x77] sm:$0xff]
      %v1544 = vld [vmem:[#allocation2 + $0x7f] sm:$0xff]
      %v1545 = vld [vmem:[#allocation2 + $0x87] sm:$0xff]
      %v1546 = vld [vmem:[#allocation2 + $0x8f] sm:$0xff]
      %v1547 = vld [vmem:[#allocation2 + $0x97] sm:$0xff]
      %v1548 = vld [vmem:[#allocation2 + $0x9f] sm:$0xff]
      %v1549 = vld [vmem:[#allocation2 + $0xa7] sm:$0xff]
      %v1550 = vld [vmem:[#allocation2 + $0xaf] sm:$0xff]
      %v1551 = vld [vmem:[#allocation2 + $0xb7] sm:$0xff]
      %v1552 = vld [vmem:[#allocation2 + $0xbf] sm:$0xff]
      %v1553 = vld [vmem:[#allocation2 + $0xc7] sm:$0xff]
      %v1554 = vld [vmem:[#allocation2 + $0xcf] sm:$0xff]
      %v1555 = vld [vmem:[#allocation2 + $0xd7] sm:$0xff]
      %v1556 = vld [vmem:[#allocation2 + $0xdf] sm:$0xff]
      %v1557 = vld [vmem:[#allocation2 + $0xe7] sm:$0xff]
      %v1558 = vld [vmem:[#allocation2 + $0xef] sm:$0xff]
      %v1559 = vld [vmem:[#allocation2 + $0xf7] sm:$0xff]
      %v1560 = vld [vmem:[#allocation2 + $0xff] sm:$0xff]
      %v1561 = vld [vmem:[#allocation2 + $0x107] sm:$0xff]
      %v1562 = vld [vmem:[#allocation2 + $0x10f] sm:$0xff]
      %v1563 = vld [vmem:[#allocation2 + $0x117] sm:$0xff]
      %v1564 = vld [vmem:[#allocation2 + $0x11f] sm:$0xff]
      %v1565 = vld [vmem:[#allocation2 + $0x127] sm:$0xff]
      %v1566 = vld [vmem:[#allocation2 + $0x12f] sm:$0xff]
      %v1567 = vld [vmem:[#allocation2 + $0x137] sm:$0xff]
      %v1568 = vld [vmem:[#allocation2 + $0x13f] sm:$0xff]
      %v1569 = vld [vmem:[#allocation2 + $0x147] sm:$0xff]
      %v1570 = vld [vmem:[#allocation2 + $0x14f] sm:$0xff]
      %v1571 = vld [vmem:[#allocation2 + $0x157] sm:$0xf]
      %1613 = vrot.lane.b32.xlu0 %v1531, 64
      %v1614 = vpop.permute.xlu0 %1613
      %1615 = vrot.lane.b32.xlu0 %v1532, 64
      %v1616 = vpop.permute.xlu0 %1615
      %1617 = vrot.lane.b32.xlu0 %v1533, 64
      %v1618 = vpop.permute.xlu0 %1617
      %1619 = vrot.lane.b32.xlu0 %v1534, 64
      %v1620 = vpop.permute.xlu0 %1619
      %1621 = vrot.lane.b32.xlu0 %v1535, 64
      %v1622 = vpop.permute.xlu0 %1621
      %1623 = vrot.lane.b32.xlu0 %v1536, 64
      %v1624 = vpop.permute.xlu0 %1623
      %1625 = vrot.lane.b32.xlu0 %v1537, 64
      %v1626 = vpop.permute.xlu0 %1625
      %1627 = vrot.lane.b32.xlu0 %v1538, 64
      %v1628 = vpop.permute.xlu0 %1627
      %1629 = vrot.lane.b32.xlu0 %v1539, 64
      %v1630 = vpop.permute.xlu0 %1629
      %1631 = vrot.lane.b32.xlu0 %v1540, 64
      %v1632 = vpop.permute.xlu0 %1631
      %1633 = vrot.lane.b32.xlu0 %v1541, 64
      %v1634 = vpop.permute.xlu0 %1633
      %1635 = vrot.lane.b32.xlu0 %v1542, 64
      %v1636 = vpop.permute.xlu0 %1635
      %1637 = vrot.lane.b32.xlu0 %v1543, 64
      %v1638 = vpop.permute.xlu0 %1637
      %1639 = vrot.lane.b32.xlu0 %v1544, 64
      %v1640 = vpop.permute.xlu0 %1639
      %1641 = vrot.lane.b32.xlu0 %v1545, 64
      %v1642 = vpop.permute.xlu0 %1641
      %1643 = vrot.lane.b32.xlu0 %v1546, 64
      %v1644 = vpop.permute.xlu0 %1643
      %1645 = vrot.lane.b32.xlu0 %v1547, 64
      %v1646 = vpop.permute.xlu0 %1645
      %1647 = vrot.lane.b32.xlu0 %v1548, 64
      %v1648 = vpop.permute.xlu0 %1647
      %1649 = vrot.lane.b32.xlu0 %v1549, 64
      %v1650 = vpop.permute.xlu0 %1649
      %1651 = vrot.lane.b32.xlu0 %v1550, 64
      %v1652 = vpop.permute.xlu0 %1651
      %1653 = vrot.lane.b32.xlu0 %v1551, 64
      %v1654 = vpop.permute.xlu0 %1653
      %1655 = vrot.lane.b32.xlu0 %v1552, 64
      %v1656 = vpop.permute.xlu0 %1655
      %1657 = vrot.lane.b32.xlu0 %v1553, 64
      %v1658 = vpop.permute.xlu0 %1657
      %1659 = vrot.lane.b32.xlu0 %v1554, 64
      %v1660 = vpop.permute.xlu0 %1659
      %1661 = vrot.lane.b32.xlu0 %v1555, 64
      %v1662 = vpop.permute.xlu0 %1661
      %1663 = vrot.lane.b32.xlu0 %v1556, 64
      %v1664 = vpop.permute.xlu0 %1663
      %1665 = vrot.lane.b32.xlu0 %v1557, 64
      %v1666 = vpop.permute.xlu0 %1665
      %1667 = vrot.lane.b32.xlu0 %v1558, 64
      %v1668 = vpop.permute.xlu0 %1667
      %1669 = vrot.lane.b32.xlu0 %v1559, 64
      %v1670 = vpop.permute.xlu0 %1669
      %1671 = vrot.lane.b32.xlu0 %v1560, 64
      %v1672 = vpop.permute.xlu0 %1671
      %1673 = vrot.lane.b32.xlu0 %v1561, 64
      %v1674 = vpop.permute.xlu0 %1673
      %1675 = vrot.lane.b32.xlu0 %v1562, 64
      %v1676 = vpop.permute.xlu0 %1675
      %1677 = vrot.lane.b32.xlu0 %v1563, 64
      %v1678 = vpop.permute.xlu0 %1677
      %1679 = vrot.lane.b32.xlu0 %v1564, 64
      %v1680 = vpop.permute.xlu0 %1679
      %1681 = vrot.lane.b32.xlu0 %v1565, 64
      %v1682 = vpop.permute.xlu0 %1681
      %1683 = vrot.lane.b32.xlu0 %v1566, 64
      %v1684 = vpop.permute.xlu0 %1683
      %1685 = vrot.lane.b32.xlu0 %v1567, 64
      %v1686 = vpop.permute.xlu0 %1685
      %1687 = vrot.lane.b32.xlu0 %v1568, 64
      %v1688 = vpop.permute.xlu0 %1687
      %1689 = vrot.lane.b32.xlu0 %v1569, 64
      %v1690 = vpop.permute.xlu0 %1689
      %1691 = vrot.lane.b32.xlu0 %v1570, 64
      %v1692 = vpop.permute.xlu0 %1691
      %1693 = vrot.lane.b32.xlu0 %v1571, 64
      %v1694 = vpop.permute.xlu0 %1693
      %1736 = vst.msk [vmem:[#allocation3 + $0x8] sm:$0xff] %vm1406, %v1614
      %1737 = vst.msk [vmem:[#allocation3 + $0x30] sm:$0xff] %vm1406, %v1616
      %1738 = vst.msk [vmem:[#allocation3 + $0x58] sm:$0xff] %vm1406, %v1618
      %1739 = vst.msk [vmem:[#allocation3 + $0x80] sm:$0xff] %vm1406, %v1620
      %1740 = vst.msk [vmem:[#allocation3 + $0xa8] sm:$0xff] %vm1406, %v1622
      %1741 = vst.msk [vmem:[#allocation3 + $0xd0] sm:$0xff] %vm1406, %v1624
      %1742 = vst.msk [vmem:[#allocation3 + $0xf8] sm:$0xff] %vm1406, %v1626
      %1743 = vst.msk [vmem:[#allocation3 + $0x120] sm:$0xff] %vm1406, %v1628
      %1744 = vst.msk [vmem:[#allocation3 + $0x148] sm:$0xff] %vm1406, %v1630
      %1745 = vst.msk [vmem:[#allocation3 + $0x170] sm:$0xff] %vm1406, %v1632
      %1746 = vst.msk [vmem:[#allocation3 + $0x198] sm:$0xff] %vm1406, %v1634
      %1747 = vst.msk [vmem:[#allocation3 + $0x1c0] sm:$0xff] %vm1406, %v1636
      %1748 = vst.msk [vmem:[#allocation3 + $0x1e8] sm:$0xff] %vm1406, %v1638
      %1749 = vst.msk [vmem:[#allocation3 + $0x210] sm:$0xff] %vm1406, %v1640
      %1750 = vst.msk [vmem:[#allocation3 + $0x238] sm:$0xff] %vm1406, %v1642
      %1751 = vst.msk [vmem:[#allocation3 + $0x260] sm:$0xff] %vm1406, %v1644
      %1752 = vst.msk [vmem:[#allocation3 + $0x288] sm:$0xff] %vm1406, %v1646
      %1753 = vst.msk [vmem:[#allocation3 + $0x2b0] sm:$0xff] %vm1406, %v1648
      %1754 = vst.msk [vmem:[#allocation3 + $0x2d8] sm:$0xff] %vm1406, %v1650
      %1755 = vst.msk [vmem:[#allocation3 + $0x300] sm:$0xff] %vm1406, %v1652
      %1756 = vst.msk [vmem:[#allocation3 + $0x328] sm:$0xff] %vm1406, %v1654
      %1757 = vst.msk [vmem:[#allocation3 + $0x350] sm:$0xff] %vm1406, %v1656
      %1758 = vst.msk [vmem:[#allocation3 + $0x378] sm:$0xff] %vm1406, %v1658
      %1759 = vst.msk [vmem:[#allocation3 + $0x3a0] sm:$0xff] %vm1406, %v1660
      %1760 = vst.msk [vmem:[#allocation3 + $0x3c8] sm:$0xff] %vm1406, %v1662
      %1761 = vst.msk [vmem:[#allocation3 + $0x3f0] sm:$0xff] %vm1406, %v1664
      %1762 = vst.msk [vmem:[#allocation3 + $0x418] sm:$0xff] %vm1406, %v1666
      %1763 = vst.msk [vmem:[#allocation3 + $0x440] sm:$0xff] %vm1406, %v1668
      %1764 = vst.msk [vmem:[#allocation3 + $0x468] sm:$0xff] %vm1406, %v1670
      %1765 = vst.msk [vmem:[#allocation3 + $0x490] sm:$0xff] %vm1406, %v1672
      %1766 = vst.msk [vmem:[#allocation3 + $0x4b8] sm:$0xff] %vm1406, %v1674
      %1767 = vst.msk [vmem:[#allocation3 + $0x4e0] sm:$0xff] %vm1406, %v1676
      %1768 = vst.msk [vmem:[#allocation3 + $0x508] sm:$0xff] %vm1406, %v1678
      %1769 = vst.msk [vmem:[#allocation3 + $0x530] sm:$0xff] %vm1406, %v1680
      %1770 = vst.msk [vmem:[#allocation3 + $0x558] sm:$0xff] %vm1406, %v1682
      %1771 = vst.msk [vmem:[#allocation3 + $0x580] sm:$0xff] %vm1406, %v1684
      %1772 = vst.msk [vmem:[#allocation3 + $0x5a8] sm:$0xff] %vm1406, %v1686
      %1773 = vst.msk [vmem:[#allocation3 + $0x5d0] sm:$0xff] %vm1406, %v1688
      %1774 = vst.msk [vmem:[#allocation3 + $0x5f8] sm:$0xff] %vm1406, %v1690
      %1775 = vst.msk [vmem:[#allocation3 + $0x620] sm:$0xff] %vm1406, %v1692
      %1776 = vst.msk [vmem:[#allocation3 + $0x648] sm:$0xf] %vm1447, %v1694
      %v1777 = vld [vmem:[#allocation2 + $0x18] sm:$0xff]
      %v1778 = vld [vmem:[#allocation2 + $0x20] sm:$0xff]
      %v1779 = vld [vmem:[#allocation2 + $0x28] sm:$0xff]
      %v1780 = vld [vmem:[#allocation2 + $0x30] sm:$0xff]
      %v1781 = vld [vmem:[#allocation2 + $0x38] sm:$0xff]
      %v1782 = vld [vmem:[#allocation2 + $0x40] sm:$0xff]
      %v1783 = vld [vmem:[#allocation2 + $0x48] sm:$0xff]
      %v1784 = vld [vmem:[#allocation2 + $0x50] sm:$0xff]
      %v1785 = vld [vmem:[#allocation2 + $0x58] sm:$0xff]
      %v1786 = vld [vmem:[#allocation2 + $0x60] sm:$0xff]
      %v1787 = vld [vmem:[#allocation2 + $0x68] sm:$0xff]
      %v1788 = vld [vmem:[#allocation2 + $0x70] sm:$0xff]
      %v1789 = vld [vmem:[#allocation2 + $0x78] sm:$0xff]
      %v1790 = vld [vmem:[#allocation2 + $0x80] sm:$0xff]
      %v1791 = vld [vmem:[#allocation2 + $0x88] sm:$0xff]
      %v1792 = vld [vmem:[#allocation2 + $0x90] sm:$0xff]
      %v1793 = vld [vmem:[#allocation2 + $0x98] sm:$0xff]
      %v1794 = vld [vmem:[#allocation2 + $0xa0] sm:$0xff]
      %v1795 = vld [vmem:[#allocation2 + $0xa8] sm:$0xff]
      %v1796 = vld [vmem:[#allocation2 + $0xb0] sm:$0xff]
      %v1797 = vld [vmem:[#allocation2 + $0xb8] sm:$0xff]
      %v1798 = vld [vmem:[#allocation2 + $0xc0] sm:$0xff]
      %v1799 = vld [vmem:[#allocation2 + $0xc8] sm:$0xff]
      %v1800 = vld [vmem:[#allocation2 + $0xd0] sm:$0xff]
      %v1801 = vld [vmem:[#allocation2 + $0xd8] sm:$0xff]
      %v1802 = vld [vmem:[#allocation2 + $0xe0] sm:$0xff]
      %v1803 = vld [vmem:[#allocation2 + $0xe8] sm:$0xff]
      %v1804 = vld [vmem:[#allocation2 + $0xf0] sm:$0xff]
      %v1805 = vld [vmem:[#allocation2 + $0xf8] sm:$0xff]
      %v1806 = vld [vmem:[#allocation2 + $0x100] sm:$0xff]
      %v1807 = vld [vmem:[#allocation2 + $0x108] sm:$0xff]
      %v1808 = vld [vmem:[#allocation2 + $0x110] sm:$0xff]
      %v1809 = vld [vmem:[#allocation2 + $0x118] sm:$0xff]
      %v1810 = vld [vmem:[#allocation2 + $0x120] sm:$0xff]
      %v1811 = vld [vmem:[#allocation2 + $0x128] sm:$0xff]
      %v1812 = vld [vmem:[#allocation2 + $0x130] sm:$0xff]
      %v1813 = vld [vmem:[#allocation2 + $0x138] sm:$0xff]
      %v1814 = vld [vmem:[#allocation2 + $0x140] sm:$0xff]
      %v1815 = vld [vmem:[#allocation2 + $0x148] sm:$0xff]
      %v1816 = vld [vmem:[#allocation2 + $0x150] sm:$0xff]
      %v1817 = vld [vmem:[#allocation2 + $0x158] sm:$0xf]
      %1818 = vst.msk [vmem:[#allocation3 + $0x10] sm:$0xff] %vm1029, %v1777
      %1819 = vst.msk [vmem:[#allocation3 + $0x38] sm:$0xff] %vm1029, %v1778
      %1820 = vst.msk [vmem:[#allocation3 + $0x60] sm:$0xff] %vm1029, %v1779
      %1821 = vst.msk [vmem:[#allocation3 + $0x88] sm:$0xff] %vm1029, %v1780
      %1822 = vst.msk [vmem:[#allocation3 + $0xb0] sm:$0xff] %vm1029, %v1781
      %1823 = vst.msk [vmem:[#allocation3 + $0xd8] sm:$0xff] %vm1029, %v1782
      %1824 = vst.msk [vmem:[#allocation3 + $0x100] sm:$0xff] %vm1029, %v1783
      %1825 = vst.msk [vmem:[#allocation3 + $0x128] sm:$0xff] %vm1029, %v1784
      %1826 = vst.msk [vmem:[#allocation3 + $0x150] sm:$0xff] %vm1029, %v1785
      %1827 = vst.msk [vmem:[#allocation3 + $0x178] sm:$0xff] %vm1029, %v1786
      %1828 = vst.msk [vmem:[#allocation3 + $0x1a0] sm:$0xff] %vm1029, %v1787
      %1829 = vst.msk [vmem:[#allocation3 + $0x1c8] sm:$0xff] %vm1029, %v1788
      %1830 = vst.msk [vmem:[#allocation3 + $0x1f0] sm:$0xff] %vm1029, %v1789
      %1831 = vst.msk [vmem:[#allocation3 + $0x218] sm:$0xff] %vm1029, %v1790
      %1832 = vst.msk [vmem:[#allocation3 + $0x240] sm:$0xff] %vm1029, %v1791
      %1833 = vst.msk [vmem:[#allocation3 + $0x268] sm:$0xff] %vm1029, %v1792
      %1834 = vst.msk [vmem:[#allocation3 + $0x290] sm:$0xff] %vm1029, %v1793
      %1835 = vst.msk [vmem:[#allocation3 + $0x2b8] sm:$0xff] %vm1029, %v1794
      %1836 = vst.msk [vmem:[#allocation3 + $0x2e0] sm:$0xff] %vm1029, %v1795
      %1837 = vst.msk [vmem:[#allocation3 + $0x308] sm:$0xff] %vm1029, %v1796
      %1838 = vst.msk [vmem:[#allocation3 + $0x330] sm:$0xff] %vm1029, %v1797
      %1839 = vst.msk [vmem:[#allocation3 + $0x358] sm:$0xff] %vm1029, %v1798
      %1840 = vst.msk [vmem:[#allocation3 + $0x380] sm:$0xff] %vm1029, %v1799
      %1841 = vst.msk [vmem:[#allocation3 + $0x3a8] sm:$0xff] %vm1029, %v1800
      %1842 = vst.msk [vmem:[#allocation3 + $0x3d0] sm:$0xff] %vm1029, %v1801
      %1843 = vst.msk [vmem:[#allocation3 + $0x3f8] sm:$0xff] %vm1029, %v1802
      %1844 = vst.msk [vmem:[#allocation3 + $0x420] sm:$0xff] %vm1029, %v1803
      %1845 = vst.msk [vmem:[#allocation3 + $0x448] sm:$0xff] %vm1029, %v1804
      %1846 = vst.msk [vmem:[#allocation3 + $0x470] sm:$0xff] %vm1029, %v1805
      %1847 = vst.msk [vmem:[#allocation3 + $0x498] sm:$0xff] %vm1029, %v1806
      %1848 = vst.msk [vmem:[#allocation3 + $0x4c0] sm:$0xff] %vm1029, %v1807
      %1849 = vst.msk [vmem:[#allocation3 + $0x4e8] sm:$0xff] %vm1029, %v1808
      %1850 = vst.msk [vmem:[#allocation3 + $0x510] sm:$0xff] %vm1029, %v1809
      %1851 = vst.msk [vmem:[#allocation3 + $0x538] sm:$0xff] %vm1029, %v1810
      %1852 = vst.msk [vmem:[#allocation3 + $0x560] sm:$0xff] %vm1029, %v1811
      %1853 = vst.msk [vmem:[#allocation3 + $0x588] sm:$0xff] %vm1029, %v1812
      %1854 = vst.msk [vmem:[#allocation3 + $0x5b0] sm:$0xff] %vm1029, %v1813
      %1855 = vst.msk [vmem:[#allocation3 + $0x5d8] sm:$0xff] %vm1029, %v1814
      %1856 = vst.msk [vmem:[#allocation3 + $0x600] sm:$0xff] %vm1029, %v1815
      %1857 = vst.msk [vmem:[#allocation3 + $0x628] sm:$0xff] %vm1029, %v1816
      %1858 = vst.msk [vmem:[#allocation3 + $0x650] sm:$0xf] %vm1076, %v1817
      %v1859 = vld [vmem:[#allocation2 + $0x19] sm:$0xff]
      %v1860 = vld [vmem:[#allocation2 + $0x21] sm:$0xff]
      %v1861 = vld [vmem:[#allocation2 + $0x29] sm:$0xff]
      %v1862 = vld [vmem:[#allocation2 + $0x31] sm:$0xff]
      %v1863 = vld [vmem:[#allocation2 + $0x39] sm:$0xff]
      %v1864 = vld [vmem:[#allocation2 + $0x41] sm:$0xff]
      %v1865 = vld [vmem:[#allocation2 + $0x49] sm:$0xff]
      %v1866 = vld [vmem:[#allocation2 + $0x51] sm:$0xff]
      %v1867 = vld [vmem:[#allocation2 + $0x59] sm:$0xff]
      %v1868 = vld [vmem:[#allocation2 + $0x61] sm:$0xff]
      %v1869 = vld [vmem:[#allocation2 + $0x69] sm:$0xff]
      %v1870 = vld [vmem:[#allocation2 + $0x71] sm:$0xff]
      %v1871 = vld [vmem:[#allocation2 + $0x79] sm:$0xff]
      %v1872 = vld [vmem:[#allocation2 + $0x81] sm:$0xff]
      %v1873 = vld [vmem:[#allocation2 + $0x89] sm:$0xff]
      %v1874 = vld [vmem:[#allocation2 + $0x91] sm:$0xff]
      %v1875 = vld [vmem:[#allocation2 + $0x99] sm:$0xff]
      %v1876 = vld [vmem:[#allocation2 + $0xa1] sm:$0xff]
      %v1877 = vld [vmem:[#allocation2 + $0xa9] sm:$0xff]
      %v1878 = vld [vmem:[#allocation2 + $0xb1] sm:$0xff]
      %v1879 = vld [vmem:[#allocation2 + $0xb9] sm:$0xff]
      %v1880 = vld [vmem:[#allocation2 + $0xc1] sm:$0xff]
      %v1881 = vld [vmem:[#allocation2 + $0xc9] sm:$0xff]
      %v1882 = vld [vmem:[#allocation2 + $0xd1] sm:$0xff]
      %v1883 = vld [vmem:[#allocation2 + $0xd9] sm:$0xff]
      %v1884 = vld [vmem:[#allocation2 + $0xe1] sm:$0xff]
      %v1885 = vld [vmem:[#allocation2 + $0xe9] sm:$0xff]
      %v1886 = vld [vmem:[#allocation2 + $0xf1] sm:$0xff]
      %v1887 = vld [vmem:[#allocation2 + $0xf9] sm:$0xff]
      %v1888 = vld [vmem:[#allocation2 + $0x101] sm:$0xff]
      %v1889 = vld [vmem:[#allocation2 + $0x109] sm:$0xff]
      %v1890 = vld [vmem:[#allocation2 + $0x111] sm:$0xff]
      %v1891 = vld [vmem:[#allocation2 + $0x119] sm:$0xff]
      %v1892 = vld [vmem:[#allocation2 + $0x121] sm:$0xff]
      %v1893 = vld [vmem:[#allocation2 + $0x129] sm:$0xff]
      %v1894 = vld [vmem:[#allocation2 + $0x131] sm:$0xff]
      %v1895 = vld [vmem:[#allocation2 + $0x139] sm:$0xff]
      %v1896 = vld [vmem:[#allocation2 + $0x141] sm:$0xff]
      %v1897 = vld [vmem:[#allocation2 + $0x149] sm:$0xff]
      %v1898 = vld [vmem:[#allocation2 + $0x151] sm:$0xff]
      %v1899 = vld [vmem:[#allocation2 + $0x159] sm:$0xf]
      %1941 = vrot.lane.b32.xlu0 %v1859, 64
      %v1942 = vpop.permute.xlu0 %1941
      %1943 = vrot.lane.b32.xlu0 %v1860, 64
      %v1944 = vpop.permute.xlu0 %1943
      %1945 = vrot.lane.b32.xlu0 %v1861, 64
      %v1946 = vpop.permute.xlu0 %1945
      %1947 = vrot.lane.b32.xlu0 %v1862, 64
      %v1948 = vpop.permute.xlu0 %1947
      %1949 = vrot.lane.b32.xlu0 %v1863, 64
      %v1950 = vpop.permute.xlu0 %1949
      %1951 = vrot.lane.b32.xlu0 %v1864, 64
      %v1952 = vpop.permute.xlu0 %1951
      %1953 = vrot.lane.b32.xlu0 %v1865, 64
      %v1954 = vpop.permute.xlu0 %1953
      %1955 = vrot.lane.b32.xlu0 %v1866, 64
      %v1956 = vpop.permute.xlu0 %1955
      %1957 = vrot.lane.b32.xlu0 %v1867, 64
      %v1958 = vpop.permute.xlu0 %1957
      %1959 = vrot.lane.b32.xlu0 %v1868, 64
      %v1960 = vpop.permute.xlu0 %1959
      %1961 = vrot.lane.b32.xlu0 %v1869, 64
      %v1962 = vpop.permute.xlu0 %1961
      %1963 = vrot.lane.b32.xlu0 %v1870, 64
      %v1964 = vpop.permute.xlu0 %1963
      %1965 = vrot.lane.b32.xlu0 %v1871, 64
      %v1966 = vpop.permute.xlu0 %1965
      %1967 = vrot.lane.b32.xlu0 %v1872, 64
      %v1968 = vpop.permute.xlu0 %1967
      %1969 = vrot.lane.b32.xlu0 %v1873, 64
      %v1970 = vpop.permute.xlu0 %1969
      %1971 = vrot.lane.b32.xlu0 %v1874, 64
      %v1972 = vpop.permute.xlu0 %1971
      %1973 = vrot.lane.b32.xlu0 %v1875, 64
      %v1974 = vpop.permute.xlu0 %1973
      %1975 = vrot.lane.b32.xlu0 %v1876, 64
      %v1976 = vpop.permute.xlu0 %1975
      %1977 = vrot.lane.b32.xlu0 %v1877, 64
      %v1978 = vpop.permute.xlu0 %1977
      %1979 = vrot.lane.b32.xlu0 %v1878, 64
      %v1980 = vpop.permute.xlu0 %1979
      %1981 = vrot.lane.b32.xlu0 %v1879, 64
      %v1982 = vpop.permute.xlu0 %1981
      %1983 = vrot.lane.b32.xlu0 %v1880, 64
      %v1984 = vpop.permute.xlu0 %1983
      %1985 = vrot.lane.b32.xlu0 %v1881, 64
      %v1986 = vpop.permute.xlu0 %1985
      %1987 = vrot.lane.b32.xlu0 %v1882, 64
      %v1988 = vpop.permute.xlu0 %1987
      %1989 = vrot.lane.b32.xlu0 %v1883, 64
      %v1990 = vpop.permute.xlu0 %1989
      %1991 = vrot.lane.b32.xlu0 %v1884, 64
      %v1992 = vpop.permute.xlu0 %1991
      %1993 = vrot.lane.b32.xlu0 %v1885, 64
      %v1994 = vpop.permute.xlu0 %1993
      %1995 = vrot.lane.b32.xlu0 %v1886, 64
      %v1996 = vpop.permute.xlu0 %1995
      %1997 = vrot.lane.b32.xlu0 %v1887, 64
      %v1998 = vpop.permute.xlu0 %1997
      %1999 = vrot.lane.b32.xlu0 %v1888, 64
      %v2000 = vpop.permute.xlu0 %1999
      %2001 = vrot.lane.b32.xlu0 %v1889, 64
      %v2002 = vpop.permute.xlu0 %2001
      %2003 = vrot.lane.b32.xlu0 %v1890, 64
      %v2004 = vpop.permute.xlu0 %2003
      %2005 = vrot.lane.b32.xlu0 %v1891, 64
      %v2006 = vpop.permute.xlu0 %2005
      %2007 = vrot.lane.b32.xlu0 %v1892, 64
      %v2008 = vpop.permute.xlu0 %2007
      %2009 = vrot.lane.b32.xlu0 %v1893, 64
      %v2010 = vpop.permute.xlu0 %2009
      %2011 = vrot.lane.b32.xlu0 %v1894, 64
      %v2012 = vpop.permute.xlu0 %2011
      %2013 = vrot.lane.b32.xlu0 %v1895, 64
      %v2014 = vpop.permute.xlu0 %2013
      %2015 = vrot.lane.b32.xlu0 %v1896, 64
      %v2016 = vpop.permute.xlu0 %2015
      %2017 = vrot.lane.b32.xlu0 %v1897, 64
      %v2018 = vpop.permute.xlu0 %2017
      %2019 = vrot.lane.b32.xlu0 %v1898, 64
      %v2020 = vpop.permute.xlu0 %2019
      %2021 = vrot.lane.b32.xlu0 %v1899, 64
      %v2022 = vpop.permute.xlu0 %2021
      %2064 = vst.msk [vmem:[#allocation3 + $0x10] sm:$0xff] %vm1406, %v1942
      %2065 = vst.msk [vmem:[#allocation3 + $0x38] sm:$0xff] %vm1406, %v1944
      %2066 = vst.msk [vmem:[#allocation3 + $0x60] sm:$0xff] %vm1406, %v1946
      %2067 = vst.msk [vmem:[#allocation3 + $0x88] sm:$0xff] %vm1406, %v1948
      %2068 = vst.msk [vmem:[#allocation3 + $0xb0] sm:$0xff] %vm1406, %v1950
      %2069 = vst.msk [vmem:[#allocation3 + $0xd8] sm:$0xff] %vm1406, %v1952
      %2070 = vst.msk [vmem:[#allocation3 + $0x100] sm:$0xff] %vm1406, %v1954
      %2071 = vst.msk [vmem:[#allocation3 + $0x128] sm:$0xff] %vm1406, %v1956
      %2072 = vst.msk [vmem:[#allocation3 + $0x150] sm:$0xff] %vm1406, %v1958
      %2073 = vst.msk [vmem:[#allocation3 + $0x178] sm:$0xff] %vm1406, %v1960
      %2074 = vst.msk [vmem:[#allocation3 + $0x1a0] sm:$0xff] %vm1406, %v1962
      %2075 = vst.msk [vmem:[#allocation3 + $0x1c8] sm:$0xff] %vm1406, %v1964
      %2076 = vst.msk [vmem:[#allocation3 + $0x1f0] sm:$0xff] %vm1406, %v1966
      %2077 = vst.msk [vmem:[#allocation3 + $0x218] sm:$0xff] %vm1406, %v1968
      %2078 = vst.msk [vmem:[#allocation3 + $0x240] sm:$0xff] %vm1406, %v1970
      %2079 = vst.msk [vmem:[#allocation3 + $0x268] sm:$0xff] %vm1406, %v1972
      %2080 = vst.msk [vmem:[#allocation3 + $0x290] sm:$0xff] %vm1406, %v1974
      %2081 = vst.msk [vmem:[#allocation3 + $0x2b8] sm:$0xff] %vm1406, %v1976
      %2082 = vst.msk [vmem:[#allocation3 + $0x2e0] sm:$0xff] %vm1406, %v1978
      %2083 = vst.msk [vmem:[#allocation3 + $0x308] sm:$0xff] %vm1406, %v1980
      %2084 = vst.msk [vmem:[#allocation3 + $0x330] sm:$0xff] %vm1406, %v1982
      %2085 = vst.msk [vmem:[#allocation3 + $0x358] sm:$0xff] %vm1406, %v1984
      %2086 = vst.msk [vmem:[#allocation3 + $0x380] sm:$0xff] %vm1406, %v1986
      %2087 = vst.msk [vmem:[#allocation3 + $0x3a8] sm:$0xff] %vm1406, %v1988
      %2088 = vst.msk [vmem:[#allocation3 + $0x3d0] sm:$0xff] %vm1406, %v1990
      %2089 = vst.msk [vmem:[#allocation3 + $0x3f8] sm:$0xff] %vm1406, %v1992
      %2090 = vst.msk [vmem:[#allocation3 + $0x420] sm:$0xff] %vm1406, %v1994
      %2091 = vst.msk [vmem:[#allocation3 + $0x448] sm:$0xff] %vm1406, %v1996
      %2092 = vst.msk [vmem:[#allocation3 + $0x470] sm:$0xff] %vm1406, %v1998
      %2093 = vst.msk [vmem:[#allocation3 + $0x498] sm:$0xff] %vm1406, %v2000
      %2094 = vst.msk [vmem:[#allocation3 + $0x4c0] sm:$0xff] %vm1406, %v2002
      %2095 = vst.msk [vmem:[#allocation3 + $0x4e8] sm:$0xff] %vm1406, %v2004
      %2096 = vst.msk [vmem:[#allocation3 + $0x510] sm:$0xff] %vm1406, %v2006
      %2097 = vst.msk [vmem:[#allocation3 + $0x538] sm:$0xff] %vm1406, %v2008
      %2098 = vst.msk [vmem:[#allocation3 + $0x560] sm:$0xff] %vm1406, %v2010
      %2099 = vst.msk [vmem:[#allocation3 + $0x588] sm:$0xff] %vm1406, %v2012
      %2100 = vst.msk [vmem:[#allocation3 + $0x5b0] sm:$0xff] %vm1406, %v2014
      %2101 = vst.msk [vmem:[#allocation3 + $0x5d8] sm:$0xff] %vm1406, %v2016
      %2102 = vst.msk [vmem:[#allocation3 + $0x600] sm:$0xff] %vm1406, %v2018
      %2103 = vst.msk [vmem:[#allocation3 + $0x628] sm:$0xff] %vm1406, %v2020
      %2104 = vst.msk [vmem:[#allocation3 + $0x650] sm:$0xf] %vm1447, %v2022
      %v2105 = vld [vmem:[#allocation2 + $0x29] sm:$0xff]
      %v2106 = vld [vmem:[#allocation2 + $0x31] sm:$0xff]
      %v2107 = vld [vmem:[#allocation2 + $0x39] sm:$0xff]
      %v2108 = vld [vmem:[#allocation2 + $0x41] sm:$0xff]
      %v2109 = vld [vmem:[#allocation2 + $0x49] sm:$0xff]
      %v2110 = vld [vmem:[#allocation2 + $0x51] sm:$0xff]
      %v2111 = vld [vmem:[#allocation2 + $0x59] sm:$0xff]
      %v2112 = vld [vmem:[#allocation2 + $0x61] sm:$0xff]
      %v2113 = vld [vmem:[#allocation2 + $0x69] sm:$0xff]
      %v2114 = vld [vmem:[#allocation2 + $0x71] sm:$0xff]
      %v2115 = vld [vmem:[#allocation2 + $0x79] sm:$0xff]
      %v2116 = vld [vmem:[#allocation2 + $0x81] sm:$0xff]
      %v2117 = vld [vmem:[#allocation2 + $0x89] sm:$0xff]
      %v2118 = vld [vmem:[#allocation2 + $0x91] sm:$0xff]
      %v2119 = vld [vmem:[#allocation2 + $0x99] sm:$0xff]
      %v2120 = vld [vmem:[#allocation2 + $0xa1] sm:$0xff]
      %v2121 = vld [vmem:[#allocation2 + $0xa9] sm:$0xff]
      %v2122 = vld [vmem:[#allocation2 + $0xb1] sm:$0xff]
      %v2123 = vld [vmem:[#allocation2 + $0xb9] sm:$0xff]
      %v2124 = vld [vmem:[#allocation2 + $0xc1] sm:$0xff]
      %v2125 = vld [vmem:[#allocation2 + $0xc9] sm:$0xff]
      %v2126 = vld [vmem:[#allocation2 + $0xd1] sm:$0xff]
      %v2127 = vld [vmem:[#allocation2 + $0xd9] sm:$0xff]
      %v2128 = vld [vmem:[#allocation2 + $0xe1] sm:$0xff]
      %v2129 = vld [vmem:[#allocation2 + $0xe9] sm:$0xff]
      %v2130 = vld [vmem:[#allocation2 + $0xf1] sm:$0xff]
      %v2131 = vld [vmem:[#allocation2 + $0xf9] sm:$0xff]
      %v2132 = vld [vmem:[#allocation2 + $0x101] sm:$0xff]
      %v2133 = vld [vmem:[#allocation2 + $0x109] sm:$0xff]
      %v2134 = vld [vmem:[#allocation2 + $0x111] sm:$0xff]
      %v2135 = vld [vmem:[#allocation2 + $0x119] sm:$0xff]
      %v2136 = vld [vmem:[#allocation2 + $0x121] sm:$0xff]
      %v2137 = vld [vmem:[#allocation2 + $0x129] sm:$0xff]
      %v2138 = vld [vmem:[#allocation2 + $0x131] sm:$0xff]
      %v2139 = vld [vmem:[#allocation2 + $0x139] sm:$0xff]
      %v2140 = vld [vmem:[#allocation2 + $0x141] sm:$0xff]
      %v2141 = vld [vmem:[#allocation2 + $0x149] sm:$0xff]
      %v2142 = vld [vmem:[#allocation2 + $0x151] sm:$0xff]
      %v2143 = vld [vmem:[#allocation2 + $0x159] sm:$0xff]
      %v2144 = vld [vmem:[#allocation2 + $0x161] sm:$0xff]
      %v2145 = vld [vmem:[#allocation2 + $0x169] sm:$0xf]
      %2146 = vst.msk [vmem:[#allocation3 + $0x18] sm:$0xff] %vm1029, %v2105
      %2147 = vst.msk [vmem:[#allocation3 + $0x40] sm:$0xff] %vm1029, %v2106
      %2148 = vst.msk [vmem:[#allocation3 + $0x68] sm:$0xff] %vm1029, %v2107
      %2149 = vst.msk [vmem:[#allocation3 + $0x90] sm:$0xff] %vm1029, %v2108
      %2150 = vst.msk [vmem:[#allocation3 + $0xb8] sm:$0xff] %vm1029, %v2109
      %2151 = vst.msk [vmem:[#allocation3 + $0xe0] sm:$0xff] %vm1029, %v2110
      %2152 = vst.msk [vmem:[#allocation3 + $0x108] sm:$0xff] %vm1029, %v2111
      %2153 = vst.msk [vmem:[#allocation3 + $0x130] sm:$0xff] %vm1029, %v2112
      %2154 = vst.msk [vmem:[#allocation3 + $0x158] sm:$0xff] %vm1029, %v2113
      %2155 = vst.msk [vmem:[#allocation3 + $0x180] sm:$0xff] %vm1029, %v2114
      %2156 = vst.msk [vmem:[#allocation3 + $0x1a8] sm:$0xff] %vm1029, %v2115
      %2157 = vst.msk [vmem:[#allocation3 + $0x1d0] sm:$0xff] %vm1029, %v2116
      %2158 = vst.msk [vmem:[#allocation3 + $0x1f8] sm:$0xff] %vm1029, %v2117
      %2159 = vst.msk [vmem:[#allocation3 + $0x220] sm:$0xff] %vm1029, %v2118
      %2160 = vst.msk [vmem:[#allocation3 + $0x248] sm:$0xff] %vm1029, %v2119
      %2161 = vst.msk [vmem:[#allocation3 + $0x270] sm:$0xff] %vm1029, %v2120
      %2162 = vst.msk [vmem:[#allocation3 + $0x298] sm:$0xff] %vm1029, %v2121
      %2163 = vst.msk [vmem:[#allocation3 + $0x2c0] sm:$0xff] %vm1029, %v2122
      %2164 = vst.msk [vmem:[#allocation3 + $0x2e8] sm:$0xff] %vm1029, %v2123
      %2165 = vst.msk [vmem:[#allocation3 + $0x310] sm:$0xff] %vm1029, %v2124
      %2166 = vst.msk [vmem:[#allocation3 + $0x338] sm:$0xff] %vm1029, %v2125
      %2167 = vst.msk [vmem:[#allocation3 + $0x360] sm:$0xff] %vm1029, %v2126
      %2168 = vst.msk [vmem:[#allocation3 + $0x388] sm:$0xff] %vm1029, %v2127
      %2169 = vst.msk [vmem:[#allocation3 + $0x3b0] sm:$0xff] %vm1029, %v2128
      %2170 = vst.msk [vmem:[#allocation3 + $0x3d8] sm:$0xff] %vm1029, %v2129
      %2171 = vst.msk [vmem:[#allocation3 + $0x400] sm:$0xff] %vm1029, %v2130
      %2172 = vst.msk [vmem:[#allocation3 + $0x428] sm:$0xff] %vm1029, %v2131
      %2173 = vst.msk [vmem:[#allocation3 + $0x450] sm:$0xff] %vm1029, %v2132
      %2174 = vst.msk [vmem:[#allocation3 + $0x478] sm:$0xff] %vm1029, %v2133
      %2175 = vst.msk [vmem:[#allocation3 + $0x4a0] sm:$0xff] %vm1029, %v2134
      %2176 = vst.msk [vmem:[#allocation3 + $0x4c8] sm:$0xff] %vm1029, %v2135
      %2177 = vst.msk [vmem:[#allocation3 + $0x4f0] sm:$0xff] %vm1029, %v2136
      %2178 = vst.msk [vmem:[#allocation3 + $0x518] sm:$0xff] %vm1029, %v2137
      %2179 = vst.msk [vmem:[#allocation3 + $0x540] sm:$0xff] %vm1029, %v2138
      %2180 = vst.msk [vmem:[#allocation3 + $0x568] sm:$0xff] %vm1029, %v2139
      %2181 = vst.msk [vmem:[#allocation3 + $0x590] sm:$0xff] %vm1029, %v2140
      %2182 = vst.msk [vmem:[#allocation3 + $0x5b8] sm:$0xff] %vm1029, %v2141
      %2183 = vst.msk [vmem:[#allocation3 + $0x5e0] sm:$0xff] %vm1029, %v2142
      %2184 = vst.msk [vmem:[#allocation3 + $0x608] sm:$0xff] %vm1029, %v2143
      %2185 = vst.msk [vmem:[#allocation3 + $0x630] sm:$0xff] %vm1029, %v2144
      %2186 = vst.msk [vmem:[#allocation3 + $0x658] sm:$0xf] %vm1076, %v2145
      %v2187 = vld [vmem:[#allocation2 + $0x2a] sm:$0xff]
      %v2188 = vld [vmem:[#allocation2 + $0x32] sm:$0xff]
      %v2189 = vld [vmem:[#allocation2 + $0x3a] sm:$0xff]
      %v2190 = vld [vmem:[#allocation2 + $0x42] sm:$0xff]
      %v2191 = vld [vmem:[#allocation2 + $0x4a] sm:$0xff]
      %v2192 = vld [vmem:[#allocation2 + $0x52] sm:$0xff]
      %v2193 = vld [vmem:[#allocation2 + $0x5a] sm:$0xff]
      %v2194 = vld [vmem:[#allocation2 + $0x62] sm:$0xff]
      %v2195 = vld [vmem:[#allocation2 + $0x6a] sm:$0xff]
      %v2196 = vld [vmem:[#allocation2 + $0x72] sm:$0xff]
      %v2197 = vld [vmem:[#allocation2 + $0x7a] sm:$0xff]
      %v2198 = vld [vmem:[#allocation2 + $0x82] sm:$0xff]
      %v2199 = vld [vmem:[#allocation2 + $0x8a] sm:$0xff]
      %v2200 = vld [vmem:[#allocation2 + $0x92] sm:$0xff]
      %v2201 = vld [vmem:[#allocation2 + $0x9a] sm:$0xff]
      %v2202 = vld [vmem:[#allocation2 + $0xa2] sm:$0xff]
      %v2203 = vld [vmem:[#allocation2 + $0xaa] sm:$0xff]
      %v2204 = vld [vmem:[#allocation2 + $0xb2] sm:$0xff]
      %v2205 = vld [vmem:[#allocation2 + $0xba] sm:$0xff]
      %v2206 = vld [vmem:[#allocation2 + $0xc2] sm:$0xff]
      %v2207 = vld [vmem:[#allocation2 + $0xca] sm:$0xff]
      %v2208 = vld [vmem:[#allocation2 + $0xd2] sm:$0xff]
      %v2209 = vld [vmem:[#allocation2 + $0xda] sm:$0xff]
      %v2210 = vld [vmem:[#allocation2 + $0xe2] sm:$0xff]
      %v2211 = vld [vmem:[#allocation2 + $0xea] sm:$0xff]
      %v2212 = vld [vmem:[#allocation2 + $0xf2] sm:$0xff]
      %v2213 = vld [vmem:[#allocation2 + $0xfa] sm:$0xff]
      %v2214 = vld [vmem:[#allocation2 + $0x102] sm:$0xff]
      %v2215 = vld [vmem:[#allocation2 + $0x10a] sm:$0xff]
      %v2216 = vld [vmem:[#allocation2 + $0x112] sm:$0xff]
      %v2217 = vld [vmem:[#allocation2 + $0x11a] sm:$0xff]
      %v2218 = vld [vmem:[#allocation2 + $0x122] sm:$0xff]
      %v2219 = vld [vmem:[#allocation2 + $0x12a] sm:$0xff]
      %v2220 = vld [vmem:[#allocation2 + $0x132] sm:$0xff]
      %v2221 = vld [vmem:[#allocation2 + $0x13a] sm:$0xff]
      %v2222 = vld [vmem:[#allocation2 + $0x142] sm:$0xff]
      %v2223 = vld [vmem:[#allocation2 + $0x14a] sm:$0xff]
      %v2224 = vld [vmem:[#allocation2 + $0x152] sm:$0xff]
      %v2225 = vld [vmem:[#allocation2 + $0x15a] sm:$0xff]
      %v2226 = vld [vmem:[#allocation2 + $0x162] sm:$0xff]
      %v2227 = vld [vmem:[#allocation2 + $0x16a] sm:$0xf]
      %2269 = vrot.lane.b32.xlu0 %v2187, 64
      %v2270 = vpop.permute.xlu0 %2269
      %2271 = vrot.lane.b32.xlu0 %v2188, 64
      %v2272 = vpop.permute.xlu0 %2271
      %2273 = vrot.lane.b32.xlu0 %v2189, 64
      %v2274 = vpop.permute.xlu0 %2273
      %2275 = vrot.lane.b32.xlu0 %v2190, 64
      %v2276 = vpop.permute.xlu0 %2275
      %2277 = vrot.lane.b32.xlu0 %v2191, 64
      %v2278 = vpop.permute.xlu0 %2277
      %2279 = vrot.lane.b32.xlu0 %v2192, 64
      %v2280 = vpop.permute.xlu0 %2279
      %2281 = vrot.lane.b32.xlu0 %v2193, 64
      %v2282 = vpop.permute.xlu0 %2281
      %2283 = vrot.lane.b32.xlu0 %v2194, 64
      %v2284 = vpop.permute.xlu0 %2283
      %2285 = vrot.lane.b32.xlu0 %v2195, 64
      %v2286 = vpop.permute.xlu0 %2285
      %2287 = vrot.lane.b32.xlu0 %v2196, 64
      %v2288 = vpop.permute.xlu0 %2287
      %2289 = vrot.lane.b32.xlu0 %v2197, 64
      %v2290 = vpop.permute.xlu0 %2289
      %2291 = vrot.lane.b32.xlu0 %v2198, 64
      %v2292 = vpop.permute.xlu0 %2291
      %2293 = vrot.lane.b32.xlu0 %v2199, 64
      %v2294 = vpop.permute.xlu0 %2293
      %2295 = vrot.lane.b32.xlu0 %v2200, 64
      %v2296 = vpop.permute.xlu0 %2295
      %2297 = vrot.lane.b32.xlu0 %v2201, 64
      %v2298 = vpop.permute.xlu0 %2297
      %2299 = vrot.lane.b32.xlu0 %v2202, 64
      %v2300 = vpop.permute.xlu0 %2299
      %2301 = vrot.lane.b32.xlu0 %v2203, 64
      %v2302 = vpop.permute.xlu0 %2301
      %2303 = vrot.lane.b32.xlu0 %v2204, 64
      %v2304 = vpop.permute.xlu0 %2303
      %2305 = vrot.lane.b32.xlu0 %v2205, 64
      %v2306 = vpop.permute.xlu0 %2305
      %2307 = vrot.lane.b32.xlu0 %v2206, 64
      %v2308 = vpop.permute.xlu0 %2307
      %2309 = vrot.lane.b32.xlu0 %v2207, 64
      %v2310 = vpop.permute.xlu0 %2309
      %2311 = vrot.lane.b32.xlu0 %v2208, 64
      %v2312 = vpop.permute.xlu0 %2311
      %2313 = vrot.lane.b32.xlu0 %v2209, 64
      %v2314 = vpop.permute.xlu0 %2313
      %2315 = vrot.lane.b32.xlu0 %v2210, 64
      %v2316 = vpop.permute.xlu0 %2315
      %2317 = vrot.lane.b32.xlu0 %v2211, 64
      %v2318 = vpop.permute.xlu0 %2317
      %2319 = vrot.lane.b32.xlu0 %v2212, 64
      %v2320 = vpop.permute.xlu0 %2319
      %2321 = vrot.lane.b32.xlu0 %v2213, 64
      %v2322 = vpop.permute.xlu0 %2321
      %2323 = vrot.lane.b32.xlu0 %v2214, 64
      %v2324 = vpop.permute.xlu0 %2323
      %2325 = vrot.lane.b32.xlu0 %v2215, 64
      %v2326 = vpop.permute.xlu0 %2325
      %2327 = vrot.lane.b32.xlu0 %v2216, 64
      %v2328 = vpop.permute.xlu0 %2327
      %2329 = vrot.lane.b32.xlu0 %v2217, 64
      %v2330 = vpop.permute.xlu0 %2329
      %2331 = vrot.lane.b32.xlu0 %v2218, 64
      %v2332 = vpop.permute.xlu0 %2331
      %2333 = vrot.lane.b32.xlu0 %v2219, 64
      %v2334 = vpop.permute.xlu0 %2333
      %2335 = vrot.lane.b32.xlu0 %v2220, 64
      %v2336 = vpop.permute.xlu0 %2335
      %2337 = vrot.lane.b32.xlu0 %v2221, 64
      %v2338 = vpop.permute.xlu0 %2337
      %2339 = vrot.lane.b32.xlu0 %v2222, 64
      %v2340 = vpop.permute.xlu0 %2339
      %2341 = vrot.lane.b32.xlu0 %v2223, 64
      %v2342 = vpop.permute.xlu0 %2341
      %2343 = vrot.lane.b32.xlu0 %v2224, 64
      %v2344 = vpop.permute.xlu0 %2343
      %2345 = vrot.lane.b32.xlu0 %v2225, 64
      %v2346 = vpop.permute.xlu0 %2345
      %2347 = vrot.lane.b32.xlu0 %v2226, 64
      %v2348 = vpop.permute.xlu0 %2347
      %2349 = vrot.lane.b32.xlu0 %v2227, 64
      %v2350 = vpop.permute.xlu0 %2349
      %2392 = vst.msk [vmem:[#allocation3 + $0x18] sm:$0xff] %vm1406, %v2270
      %2393 = vst.msk [vmem:[#allocation3 + $0x40] sm:$0xff] %vm1406, %v2272
      %2394 = vst.msk [vmem:[#allocation3 + $0x68] sm:$0xff] %vm1406, %v2274
      %2395 = vst.msk [vmem:[#allocation3 + $0x90] sm:$0xff] %vm1406, %v2276
      %2396 = vst.msk [vmem:[#allocation3 + $0xb8] sm:$0xff] %vm1406, %v2278
      %2397 = vst.msk [vmem:[#allocation3 + $0xe0] sm:$0xff] %vm1406, %v2280
      %2398 = vst.msk [vmem:[#allocation3 + $0x108] sm:$0xff] %vm1406, %v2282
      %2399 = vst.msk [vmem:[#allocation3 + $0x130] sm:$0xff] %vm1406, %v2284
      %2400 = vst.msk [vmem:[#allocation3 + $0x158] sm:$0xff] %vm1406, %v2286
      %2401 = vst.msk [vmem:[#allocation3 + $0x180] sm:$0xff] %vm1406, %v2288
      %2402 = vst.msk [vmem:[#allocation3 + $0x1a8] sm:$0xff] %vm1406, %v2290
      %2403 = vst.msk [vmem:[#allocation3 + $0x1d0] sm:$0xff] %vm1406, %v2292
      %2404 = vst.msk [vmem:[#allocation3 + $0x1f8] sm:$0xff] %vm1406, %v2294
      %2405 = vst.msk [vmem:[#allocation3 + $0x220] sm:$0xff] %vm1406, %v2296
      %2406 = vst.msk [vmem:[#allocation3 + $0x248] sm:$0xff] %vm1406, %v2298
      %2407 = vst.msk [vmem:[#allocation3 + $0x270] sm:$0xff] %vm1406, %v2300
      %2408 = vst.msk [vmem:[#allocation3 + $0x298] sm:$0xff] %vm1406, %v2302
      %2409 = vst.msk [vmem:[#allocation3 + $0x2c0] sm:$0xff] %vm1406, %v2304
      %2410 = vst.msk [vmem:[#allocation3 + $0x2e8] sm:$0xff] %vm1406, %v2306
      %2411 = vst.msk [vmem:[#allocation3 + $0x310] sm:$0xff] %vm1406, %v2308
      %2412 = vst.msk [vmem:[#allocation3 + $0x338] sm:$0xff] %vm1406, %v2310
      %2413 = vst.msk [vmem:[#allocation3 + $0x360] sm:$0xff] %vm1406, %v2312
      %2414 = vst.msk [vmem:[#allocation3 + $0x388] sm:$0xff] %vm1406, %v2314
      %2415 = vst.msk [vmem:[#allocation3 + $0x3b0] sm:$0xff] %vm1406, %v2316
      %2416 = vst.msk [vmem:[#allocation3 + $0x3d8] sm:$0xff] %vm1406, %v2318
      %2417 = vst.msk [vmem:[#allocation3 + $0x400] sm:$0xff] %vm1406, %v2320
      %2418 = vst.msk [vmem:[#allocation3 + $0x428] sm:$0xff] %vm1406, %v2322
      %2419 = vst.msk [vmem:[#allocation3 + $0x450] sm:$0xff] %vm1406, %v2324
      %2420 = vst.msk [vmem:[#allocation3 + $0x478] sm:$0xff] %vm1406, %v2326
      %2421 = vst.msk [vmem:[#allocation3 + $0x4a0] sm:$0xff] %vm1406, %v2328
      %2422 = vst.msk [vmem:[#allocation3 + $0x4c8] sm:$0xff] %vm1406, %v2330
      %2423 = vst.msk [vmem:[#allocation3 + $0x4f0] sm:$0xff] %vm1406, %v2332
      %2424 = vst.msk [vmem:[#allocation3 + $0x518] sm:$0xff] %vm1406, %v2334
      %2425 = vst.msk [vmem:[#allocation3 + $0x540] sm:$0xff] %vm1406, %v2336
      %2426 = vst.msk [vmem:[#allocation3 + $0x568] sm:$0xff] %vm1406, %v2338
      %2427 = vst.msk [vmem:[#allocation3 + $0x590] sm:$0xff] %vm1406, %v2340
      %2428 = vst.msk [vmem:[#allocation3 + $0x5b8] sm:$0xff] %vm1406, %v2342
      %2429 = vst.msk [vmem:[#allocation3 + $0x5e0] sm:$0xff] %vm1406, %v2344
      %2430 = vst.msk [vmem:[#allocation3 + $0x608] sm:$0xff] %vm1406, %v2346
      %2431 = vst.msk [vmem:[#allocation3 + $0x630] sm:$0xff] %vm1406, %v2348
      %2432 = vst.msk [vmem:[#allocation3 + $0x658] sm:$0xf] %vm1447, %v2350
      %v2433 = vld [vmem:[#allocation2 + $0x2b] sm:$0xff]
      %v2434 = vld [vmem:[#allocation2 + $0x33] sm:$0xff]
      %v2435 = vld [vmem:[#allocation2 + $0x3b] sm:$0xff]
      %v2436 = vld [vmem:[#allocation2 + $0x43] sm:$0xff]
      %v2437 = vld [vmem:[#allocation2 + $0x4b] sm:$0xff]
      %v2438 = vld [vmem:[#allocation2 + $0x53] sm:$0xff]
      %v2439 = vld [vmem:[#allocation2 + $0x5b] sm:$0xff]
      %v2440 = vld [vmem:[#allocation2 + $0x63] sm:$0xff]
      %v2441 = vld [vmem:[#allocation2 + $0x6b] sm:$0xff]
      %v2442 = vld [vmem:[#allocation2 + $0x73] sm:$0xff]
      %v2443 = vld [vmem:[#allocation2 + $0x7b] sm:$0xff]
      %v2444 = vld [vmem:[#allocation2 + $0x83] sm:$0xff]
      %v2445 = vld [vmem:[#allocation2 + $0x8b] sm:$0xff]
      %v2446 = vld [vmem:[#allocation2 + $0x93] sm:$0xff]
      %v2447 = vld [vmem:[#allocation2 + $0x9b] sm:$0xff]
      %v2448 = vld [vmem:[#allocation2 + $0xa3] sm:$0xff]
      %v2449 = vld [vmem:[#allocation2 + $0xab] sm:$0xff]
      %v2450 = vld [vmem:[#allocation2 + $0xb3] sm:$0xff]
      %v2451 = vld [vmem:[#allocation2 + $0xbb] sm:$0xff]
      %v2452 = vld [vmem:[#allocation2 + $0xc3] sm:$0xff]
      %v2453 = vld [vmem:[#allocation2 + $0xcb] sm:$0xff]
      %v2454 = vld [vmem:[#allocation2 + $0xd3] sm:$0xff]
      %v2455 = vld [vmem:[#allocation2 + $0xdb] sm:$0xff]
      %v2456 = vld [vmem:[#allocation2 + $0xe3] sm:$0xff]
      %v2457 = vld [vmem:[#allocation2 + $0xeb] sm:$0xff]
      %v2458 = vld [vmem:[#allocation2 + $0xf3] sm:$0xff]
      %v2459 = vld [vmem:[#allocation2 + $0xfb] sm:$0xff]
      %v2460 = vld [vmem:[#allocation2 + $0x103] sm:$0xff]
      %v2461 = vld [vmem:[#allocation2 + $0x10b] sm:$0xff]
      %v2462 = vld [vmem:[#allocation2 + $0x113] sm:$0xff]
      %v2463 = vld [vmem:[#allocation2 + $0x11b] sm:$0xff]
      %v2464 = vld [vmem:[#allocation2 + $0x123] sm:$0xff]
      %v2465 = vld [vmem:[#allocation2 + $0x12b] sm:$0xff]
      %v2466 = vld [vmem:[#allocation2 + $0x133] sm:$0xff]
      %v2467 = vld [vmem:[#allocation2 + $0x13b] sm:$0xff]
      %v2468 = vld [vmem:[#allocation2 + $0x143] sm:$0xff]
      %v2469 = vld [vmem:[#allocation2 + $0x14b] sm:$0xff]
      %v2470 = vld [vmem:[#allocation2 + $0x153] sm:$0xff]
      %v2471 = vld [vmem:[#allocation2 + $0x15b] sm:$0xff]
      %v2472 = vld [vmem:[#allocation2 + $0x163] sm:$0xff]
      %v2473 = vld [vmem:[#allocation2 + $0x16b] sm:$0xf]
      %2474 = vst.msk [vmem:[#allocation3 + $0x20] sm:$0xff] %vm1029, %v2433
      %2475 = vst.msk [vmem:[#allocation3 + $0x48] sm:$0xff] %vm1029, %v2434
      %2476 = vst.msk [vmem:[#allocation3 + $0x70] sm:$0xff] %vm1029, %v2435
      %2477 = vst.msk [vmem:[#allocation3 + $0x98] sm:$0xff] %vm1029, %v2436
      %2478 = vst.msk [vmem:[#allocation3 + $0xc0] sm:$0xff] %vm1029, %v2437
      %2479 = vst.msk [vmem:[#allocation3 + $0xe8] sm:$0xff] %vm1029, %v2438
      %2480 = vst.msk [vmem:[#allocation3 + $0x110] sm:$0xff] %vm1029, %v2439
      %2481 = vst.msk [vmem:[#allocation3 + $0x138] sm:$0xff] %vm1029, %v2440
      %2482 = vst.msk [vmem:[#allocation3 + $0x160] sm:$0xff] %vm1029, %v2441
      %2483 = vst.msk [vmem:[#allocation3 + $0x188] sm:$0xff] %vm1029, %v2442
      %2484 = vst.msk [vmem:[#allocation3 + $0x1b0] sm:$0xff] %vm1029, %v2443
      %2485 = vst.msk [vmem:[#allocation3 + $0x1d8] sm:$0xff] %vm1029, %v2444
      %2486 = vst.msk [vmem:[#allocation3 + $0x200] sm:$0xff] %vm1029, %v2445
      %2487 = vst.msk [vmem:[#allocation3 + $0x228] sm:$0xff] %vm1029, %v2446
      %2488 = vst.msk [vmem:[#allocation3 + $0x250] sm:$0xff] %vm1029, %v2447
      %2489 = vst.msk [vmem:[#allocation3 + $0x278] sm:$0xff] %vm1029, %v2448
      %2490 = vst.msk [vmem:[#allocation3 + $0x2a0] sm:$0xff] %vm1029, %v2449
      %2491 = vst.msk [vmem:[#allocation3 + $0x2c8] sm:$0xff] %vm1029, %v2450
      %2492 = vst.msk [vmem:[#allocation3 + $0x2f0] sm:$0xff] %vm1029, %v2451
      %2493 = vst.msk [vmem:[#allocation3 + $0x318] sm:$0xff] %vm1029, %v2452
      %2494 = vst.msk [vmem:[#allocation3 + $0x340] sm:$0xff] %vm1029, %v2453
      %2495 = vst.msk [vmem:[#allocation3 + $0x368] sm:$0xff] %vm1029, %v2454
      %2496 = vst.msk [vmem:[#allocation3 + $0x390] sm:$0xff] %vm1029, %v2455
      %2497 = vst.msk [vmem:[#allocation3 + $0x3b8] sm:$0xff] %vm1029, %v2456
      %2498 = vst.msk [vmem:[#allocation3 + $0x3e0] sm:$0xff] %vm1029, %v2457
      %2499 = vst.msk [vmem:[#allocation3 + $0x408] sm:$0xff] %vm1029, %v2458
      %2500 = vst.msk [vmem:[#allocation3 + $0x430] sm:$0xff] %vm1029, %v2459
      %2501 = vst.msk [vmem:[#allocation3 + $0x458] sm:$0xff] %vm1029, %v2460
      %2502 = vst.msk [vmem:[#allocation3 + $0x480] sm:$0xff] %vm1029, %v2461
      %2503 = vst.msk [vmem:[#allocation3 + $0x4a8] sm:$0xff] %vm1029, %v2462
      %2504 = vst.msk [vmem:[#allocation3 + $0x4d0] sm:$0xff] %vm1029, %v2463
      %2505 = vst.msk [vmem:[#allocation3 + $0x4f8] sm:$0xff] %vm1029, %v2464
      %2506 = vst.msk [vmem:[#allocation3 + $0x520] sm:$0xff] %vm1029, %v2465
      %2507 = vst.msk [vmem:[#allocation3 + $0x548] sm:$0xff] %vm1029, %v2466
      %2508 = vst.msk [vmem:[#allocation3 + $0x570] sm:$0xff] %vm1029, %v2467
      %2509 = vst.msk [vmem:[#allocation3 + $0x598] sm:$0xff] %vm1029, %v2468
      %2510 = vst.msk [vmem:[#allocation3 + $0x5c0] sm:$0xff] %vm1029, %v2469
      %2511 = vst.msk [vmem:[#allocation3 + $0x5e8] sm:$0xff] %vm1029, %v2470
      %2512 = vst.msk [vmem:[#allocation3 + $0x610] sm:$0xff] %vm1029, %v2471
      %2513 = vst.msk [vmem:[#allocation3 + $0x638] sm:$0xff] %vm1029, %v2472
      %2514 = vst.msk [vmem:[#allocation3 + $0x660] sm:$0xf] %vm1076, %v2473
      %v2515 = vld [vmem:[#allocation3] sm:$0xff]
      %v2516 = vld [vmem:[#allocation3 + $0x8] sm:$0xff]
      %v2517 = vld [vmem:[#allocation3 + $0x10] sm:$0xff]
      %v2518 = vld [vmem:[#allocation3 + $0x18] sm:$0xff]
      %v2519 = vld [vmem:[#allocation3 + $0x20] sm:$0xff]
      %v2520 = vld [vmem:[#allocation3 + $0x28] sm:$0xff]
      %v2521 = vld [vmem:[#allocation3 + $0x30] sm:$0xff]
      %v2522 = vld [vmem:[#allocation3 + $0x38] sm:$0xff]
      %v2523 = vld [vmem:[#allocation3 + $0x40] sm:$0xff]
      %v2524 = vld [vmem:[#allocation3 + $0x48] sm:$0xff]
      %v2525 = vld [vmem:[#allocation3 + $0x50] sm:$0xff]
      %v2526 = vld [vmem:[#allocation3 + $0x58] sm:$0xff]
      %v2527 = vld [vmem:[#allocation3 + $0x60] sm:$0xff]
      %v2528 = vld [vmem:[#allocation3 + $0x68] sm:$0xff]
      %v2529 = vld [vmem:[#allocation3 + $0x70] sm:$0xff]
      %v2530 = vld [vmem:[#allocation3 + $0x78] sm:$0xff]
      %v2531 = vld [vmem:[#allocation3 + $0x80] sm:$0xff]
      %v2532 = vld [vmem:[#allocation3 + $0x88] sm:$0xff]
      %v2533 = vld [vmem:[#allocation3 + $0x90] sm:$0xff]
      %v2534 = vld [vmem:[#allocation3 + $0x98] sm:$0xff]
      %v2535 = vld [vmem:[#allocation3 + $0xa0] sm:$0xff]
      %v2536 = vld [vmem:[#allocation3 + $0xa8] sm:$0xff]
      %v2537 = vld [vmem:[#allocation3 + $0xb0] sm:$0xff]
      %v2538 = vld [vmem:[#allocation3 + $0xb8] sm:$0xff]
      %v2539 = vld [vmem:[#allocation3 + $0xc0] sm:$0xff]
      %v2540 = vld [vmem:[#allocation3 + $0xc8] sm:$0xff]
      %v2541 = vld [vmem:[#allocation3 + $0xd0] sm:$0xff]
      %v2542 = vld [vmem:[#allocation3 + $0xd8] sm:$0xff]
      %v2543 = vld [vmem:[#allocation3 + $0xe0] sm:$0xff]
      %v2544 = vld [vmem:[#allocation3 + $0xe8] sm:$0xff]
      %v2545 = vld [vmem:[#allocation3 + $0xf0] sm:$0xff]
      %v2546 = vld [vmem:[#allocation3 + $0xf8] sm:$0xff]
      %v2547 = vld [vmem:[#allocation3 + $0x100] sm:$0xff]
      %v2548 = vld [vmem:[#allocation3 + $0x108] sm:$0xff]
      %v2549 = vld [vmem:[#allocation3 + $0x110] sm:$0xff]
      %v2550 = vld [vmem:[#allocation3 + $0x118] sm:$0xff]
      %v2551 = vld [vmem:[#allocation3 + $0x120] sm:$0xff]
      %v2552 = vld [vmem:[#allocation3 + $0x128] sm:$0xff]
      %v2553 = vld [vmem:[#allocation3 + $0x130] sm:$0xff]
      %v2554 = vld [vmem:[#allocation3 + $0x138] sm:$0xff]
      %v2555 = vld [vmem:[#allocation3 + $0x140] sm:$0xff]
      %v2556 = vld [vmem:[#allocation3 + $0x148] sm:$0xff]
      %v2557 = vld [vmem:[#allocation3 + $0x150] sm:$0xff]
      %v2558 = vld [vmem:[#allocation3 + $0x158] sm:$0xff]
      %v2559 = vld [vmem:[#allocation3 + $0x160] sm:$0xff]
      %v2560 = vld [vmem:[#allocation3 + $0x168] sm:$0xff]
      %v2561 = vld [vmem:[#allocation3 + $0x170] sm:$0xff]
      %v2562 = vld [vmem:[#allocation3 + $0x178] sm:$0xff]
      %v2563 = vld [vmem:[#allocation3 + $0x180] sm:$0xff]
      %v2564 = vld [vmem:[#allocation3 + $0x188] sm:$0xff]
      %v2565 = vld [vmem:[#allocation3 + $0x190] sm:$0xff]
      %v2566 = vld [vmem:[#allocation3 + $0x198] sm:$0xff]
      %v2567 = vld [vmem:[#allocation3 + $0x1a0] sm:$0xff]
      %v2568 = vld [vmem:[#allocation3 + $0x1a8] sm:$0xff]
      %v2569 = vld [vmem:[#allocation3 + $0x1b0] sm:$0xff]
      %v2570 = vld [vmem:[#allocation3 + $0x1b8] sm:$0xff]
      %v2571 = vld [vmem:[#allocation3 + $0x1c0] sm:$0xff]
      %v2572 = vld [vmem:[#allocation3 + $0x1c8] sm:$0xff]
      %v2573 = vld [vmem:[#allocation3 + $0x1d0] sm:$0xff]
      %v2574 = vld [vmem:[#allocation3 + $0x1d8] sm:$0xff]
      %v2575 = vld [vmem:[#allocation3 + $0x1e0] sm:$0xff]
      %v2576 = vld [vmem:[#allocation3 + $0x1e8] sm:$0xff]
      %v2577 = vld [vmem:[#allocation3 + $0x1f0] sm:$0xff]
      %v2578 = vld [vmem:[#allocation3 + $0x1f8] sm:$0xff]
      %v2579 = vld [vmem:[#allocation3 + $0x200] sm:$0xff]
      %v2580 = vld [vmem:[#allocation3 + $0x208] sm:$0xff]
      %v2581 = vld [vmem:[#allocation3 + $0x210] sm:$0xff]
      %v2582 = vld [vmem:[#allocation3 + $0x218] sm:$0xff]
      %v2583 = vld [vmem:[#allocation3 + $0x220] sm:$0xff]
      %v2584 = vld [vmem:[#allocation3 + $0x228] sm:$0xff]
      %v2585 = vld [vmem:[#allocation3 + $0x230] sm:$0xff]
      %v2586 = vld [vmem:[#allocation3 + $0x238] sm:$0xff]
      %v2587 = vld [vmem:[#allocation3 + $0x240] sm:$0xff]
      %v2588 = vld [vmem:[#allocation3 + $0x248] sm:$0xff]
      %v2589 = vld [vmem:[#allocation3 + $0x250] sm:$0xff]
      %v2590 = vld [vmem:[#allocation3 + $0x258] sm:$0xff]
      %v2591 = vld [vmem:[#allocation3 + $0x260] sm:$0xff]
      %v2592 = vld [vmem:[#allocation3 + $0x268] sm:$0xff]
      %v2593 = vld [vmem:[#allocation3 + $0x270] sm:$0xff]
      %v2594 = vld [vmem:[#allocation3 + $0x278] sm:$0xff]
      %v2595 = vld [vmem:[#allocation3 + $0x280] sm:$0xff]
      %v2596 = vld [vmem:[#allocation3 + $0x288] sm:$0xff]
      %v2597 = vld [vmem:[#allocation3 + $0x290] sm:$0xff]
      %v2598 = vld [vmem:[#allocation3 + $0x298] sm:$0xff]
      %v2599 = vld [vmem:[#allocation3 + $0x2a0] sm:$0xff]
      %v2600 = vld [vmem:[#allocation3 + $0x2a8] sm:$0xff]
      %v2601 = vld [vmem:[#allocation3 + $0x2b0] sm:$0xff]
      %v2602 = vld [vmem:[#allocation3 + $0x2b8] sm:$0xff]
      %v2603 = vld [vmem:[#allocation3 + $0x2c0] sm:$0xff]
      %v2604 = vld [vmem:[#allocation3 + $0x2c8] sm:$0xff]
      %v2605 = vld [vmem:[#allocation3 + $0x2d0] sm:$0xff]
      %v2606 = vld [vmem:[#allocation3 + $0x2d8] sm:$0xff]
      %v2607 = vld [vmem:[#allocation3 + $0x2e0] sm:$0xff]
      %v2608 = vld [vmem:[#allocation3 + $0x2e8] sm:$0xff]
      %v2609 = vld [vmem:[#allocation3 + $0x2f0] sm:$0xff]
      %v2610 = vld [vmem:[#allocation3 + $0x2f8] sm:$0xff]
      %v2611 = vld [vmem:[#allocation3 + $0x300] sm:$0xff]
      %v2612 = vld [vmem:[#allocation3 + $0x308] sm:$0xff]
      %v2613 = vld [vmem:[#allocation3 + $0x310] sm:$0xff]
      %v2614 = vld [vmem:[#allocation3 + $0x318] sm:$0xff]
      %v2615 = vld [vmem:[#allocation3 + $0x320] sm:$0xff]
      %v2616 = vld [vmem:[#allocation3 + $0x328] sm:$0xff]
      %v2617 = vld [vmem:[#allocation3 + $0x330] sm:$0xff]
      %v2618 = vld [vmem:[#allocation3 + $0x338] sm:$0xff]
      %v2619 = vld [vmem:[#allocation3 + $0x340] sm:$0xff]
      %v2620 = vld [vmem:[#allocation3 + $0x348] sm:$0xff]
      %v2621 = vld [vmem:[#allocation3 + $0x350] sm:$0xff]
      %v2622 = vld [vmem:[#allocation3 + $0x358] sm:$0xff]
      %v2623 = vld [vmem:[#allocation3 + $0x360] sm:$0xff]
      %v2624 = vld [vmem:[#allocation3 + $0x368] sm:$0xff]
      %v2625 = vld [vmem:[#allocation3 + $0x370] sm:$0xff]
      %v2626 = vld [vmem:[#allocation3 + $0x378] sm:$0xff]
      %v2627 = vld [vmem:[#allocation3 + $0x380] sm:$0xff]
      %v2628 = vld [vmem:[#allocation3 + $0x388] sm:$0xff]
      %v2629 = vld [vmem:[#allocation3 + $0x390] sm:$0xff]
      %v2630 = vld [vmem:[#allocation3 + $0x398] sm:$0xff]
      %v2631 = vld [vmem:[#allocation3 + $0x3a0] sm:$0xff]
      %v2632 = vld [vmem:[#allocation3 + $0x3a8] sm:$0xff]
      %v2633 = vld [vmem:[#allocation3 + $0x3b0] sm:$0xff]
      %v2634 = vld [vmem:[#allocation3 + $0x3b8] sm:$0xff]
      %v2635 = vld [vmem:[#allocation3 + $0x3c0] sm:$0xff]
      %v2636 = vld [vmem:[#allocation3 + $0x3c8] sm:$0xff]
      %v2637 = vld [vmem:[#allocation3 + $0x3d0] sm:$0xff]
      %v2638 = vld [vmem:[#allocation3 + $0x3d8] sm:$0xff]
      %v2639 = vld [vmem:[#allocation3 + $0x3e0] sm:$0xff]
      %v2640 = vld [vmem:[#allocation3 + $0x3e8] sm:$0xff]
      %v2641 = vld [vmem:[#allocation3 + $0x3f0] sm:$0xff]
      %v2642 = vld [vmem:[#allocation3 + $0x3f8] sm:$0xff]
      %v2643 = vld [vmem:[#allocation3 + $0x400] sm:$0xff]
      %v2644 = vld [vmem:[#allocation3 + $0x408] sm:$0xff]
      %v2645 = vld [vmem:[#allocation3 + $0x410] sm:$0xff]
      %v2646 = vld [vmem:[#allocation3 + $0x418] sm:$0xff]
      %v2647 = vld [vmem:[#allocation3 + $0x420] sm:$0xff]
      %v2648 = vld [vmem:[#allocation3 + $0x428] sm:$0xff]
      %v2649 = vld [vmem:[#allocation3 + $0x430] sm:$0xff]
      %v2650 = vld [vmem:[#allocation3 + $0x438] sm:$0xff]
      %v2651 = vld [vmem:[#allocation3 + $0x440] sm:$0xff]
      %v2652 = vld [vmem:[#allocation3 + $0x448] sm:$0xff]
      %v2653 = vld [vmem:[#allocation3 + $0x450] sm:$0xff]
      %v2654 = vld [vmem:[#allocation3 + $0x458] sm:$0xff]
      %v2655 = vld [vmem:[#allocation3 + $0x460] sm:$0xff]
      %v2656 = vld [vmem:[#allocation3 + $0x468] sm:$0xff]
      %v2657 = vld [vmem:[#allocation3 + $0x470] sm:$0xff]
      %v2658 = vld [vmem:[#allocation3 + $0x478] sm:$0xff]
      %v2659 = vld [vmem:[#allocation3 + $0x480] sm:$0xff]
      %v2660 = vld [vmem:[#allocation3 + $0x488] sm:$0xff]
      %v2661 = vld [vmem:[#allocation3 + $0x490] sm:$0xff]
      %v2662 = vld [vmem:[#allocation3 + $0x498] sm:$0xff]
      %v2663 = vld [vmem:[#allocation3 + $0x4a0] sm:$0xff]
      %v2664 = vld [vmem:[#allocation3 + $0x4a8] sm:$0xff]
      %v2665 = vld [vmem:[#allocation3 + $0x4b0] sm:$0xff]
      %v2666 = vld [vmem:[#allocation3 + $0x4b8] sm:$0xff]
      %v2667 = vld [vmem:[#allocation3 + $0x4c0] sm:$0xff]
      %v2668 = vld [vmem:[#allocation3 + $0x4c8] sm:$0xff]
      %v2669 = vld [vmem:[#allocation3 + $0x4d0] sm:$0xff]
      %v2670 = vld [vmem:[#allocation3 + $0x4d8] sm:$0xff]
      %v2671 = vld [vmem:[#allocation3 + $0x4e0] sm:$0xff]
      %v2672 = vld [vmem:[#allocation3 + $0x4e8] sm:$0xff]
      %v2673 = vld [vmem:[#allocation3 + $0x4f0] sm:$0xff]
      %v2674 = vld [vmem:[#allocation3 + $0x4f8] sm:$0xff]
      %v2675 = vld [vmem:[#allocation3 + $0x500] sm:$0xff]
      %v2676 = vld [vmem:[#allocation3 + $0x508] sm:$0xff]
      %v2677 = vld [vmem:[#allocation3 + $0x510] sm:$0xff]
      %v2678 = vld [vmem:[#allocation3 + $0x518] sm:$0xff]
      %v2679 = vld [vmem:[#allocation3 + $0x520] sm:$0xff]
      %v2680 = vld [vmem:[#allocation3 + $0x528] sm:$0xff]
      %v2681 = vld [vmem:[#allocation3 + $0x530] sm:$0xff]
      %v2682 = vld [vmem:[#allocation3 + $0x538] sm:$0xff]
      %v2683 = vld [vmem:[#allocation3 + $0x540] sm:$0xff]
      %v2684 = vld [vmem:[#allocation3 + $0x548] sm:$0xff]
      %v2685 = vld [vmem:[#allocation3 + $0x550] sm:$0xff]
      %v2686 = vld [vmem:[#allocation3 + $0x558] sm:$0xff]
      %v2687 = vld [vmem:[#allocation3 + $0x560] sm:$0xff]
      %v2688 = vld [vmem:[#allocation3 + $0x568] sm:$0xff]
      %v2689 = vld [vmem:[#allocation3 + $0x570] sm:$0xff]
      %v2690 = vld [vmem:[#allocation3 + $0x578] sm:$0xff]
      %v2691 = vld [vmem:[#allocation3 + $0x580] sm:$0xff]
      %v2692 = vld [vmem:[#allocation3 + $0x588] sm:$0xff]
      %v2693 = vld [vmem:[#allocation3 + $0x590] sm:$0xff]
      %v2694 = vld [vmem:[#allocation3 + $0x598] sm:$0xff]
      %v2695 = vld [vmem:[#allocation3 + $0x5a0] sm:$0xff]
      %v2696 = vld [vmem:[#allocation3 + $0x5a8] sm:$0xff]
      %v2697 = vld [vmem:[#allocation3 + $0x5b0] sm:$0xff]
      %v2698 = vld [vmem:[#allocation3 + $0x5b8] sm:$0xff]
      %v2699 = vld [vmem:[#allocation3 + $0x5c0] sm:$0xff]
      %v2700 = vld [vmem:[#allocation3 + $0x5c8] sm:$0xff]
      %v2701 = vld [vmem:[#allocation3 + $0x5d0] sm:$0xff]
      %v2702 = vld [vmem:[#allocation3 + $0x5d8] sm:$0xff]
      %v2703 = vld [vmem:[#allocation3 + $0x5e0] sm:$0xff]
      %v2704 = vld [vmem:[#allocation3 + $0x5e8] sm:$0xff]
      %v2705 = vld [vmem:[#allocation3 + $0x5f0] sm:$0xff]
      %v2706 = vld [vmem:[#allocation3 + $0x5f8] sm:$0xff]
      %v2707 = vld [vmem:[#allocation3 + $0x600] sm:$0xff]
      %v2708 = vld [vmem:[#allocation3 + $0x608] sm:$0xff]
      %v2709 = vld [vmem:[#allocation3 + $0x610] sm:$0xff]
      %v2710 = vld [vmem:[#allocation3 + $0x618] sm:$0xff]
      %v2711 = vld [vmem:[#allocation3 + $0x620] sm:$0xff]
      %v2712 = vld [vmem:[#allocation3 + $0x628] sm:$0xff]
      %v2713 = vld [vmem:[#allocation3 + $0x630] sm:$0xff]
      %v2714 = vld [vmem:[#allocation3 + $0x638] sm:$0xff]
      %v2715 = vld [vmem:[#allocation3 + $0x640] sm:$0xf]
      %v2716 = vld [vmem:[#allocation3 + $0x648] sm:$0xf]
      %v2717 = vld [vmem:[#allocation3 + $0x650] sm:$0xf]
      %v2718 = vld [vmem:[#allocation3 + $0x658] sm:$0xf]
      %v2719 = vld [vmem:[#allocation3 + $0x660] sm:$0xf]
      %v2720 = vld [vmem:[%s2] sm:$0xff]
      %v2721 = vld [vmem:[%s2 + $0x8] sm:$0xff]
      %v2722 = vld [vmem:[%s2 + $0x10] sm:$0xff]
      %v2723 = vld [vmem:[%s2 + $0x18] sm:$0xff]
      %v2724 = vld [vmem:[%s2 + $0x20] sm:$0xff]
      %v2725 = vld [vmem:[%s2 + $0x28] sm:$0xff]
      %v2726 = vld [vmem:[%s2 + $0x30] sm:$0xff]
      %v2727 = vld [vmem:[%s2 + $0x38] sm:$0xff]
      %v2728 = vld [vmem:[%s2 + $0x40] sm:$0xff]
      %v2729 = vld [vmem:[%s2 + $0x48] sm:$0xff]
      %v2730 = vld [vmem:[%s2 + $0x50] sm:$0xff]
      %v2731 = vld [vmem:[%s2 + $0x58] sm:$0xff]
      %v2732 = vld [vmem:[%s2 + $0x60] sm:$0xff]
      %v2733 = vld [vmem:[%s2 + $0x68] sm:$0xff]
      %v2734 = vld [vmem:[%s2 + $0x70] sm:$0xff]
      %v2735 = vld [vmem:[%s2 + $0x78] sm:$0xff]
      %v2736 = vld [vmem:[%s2 + $0x80] sm:$0xff]
      %v2737 = vld [vmem:[%s2 + $0x88] sm:$0xff]
      %v2738 = vld [vmem:[%s2 + $0x90] sm:$0xff]
      %v2739 = vld [vmem:[%s2 + $0x98] sm:$0xff]
      %v2740 = vld [vmem:[%s2 + $0xa0] sm:$0xff]
      %v2741 = vld [vmem:[%s2 + $0xa8] sm:$0xff]
      %v2742 = vld [vmem:[%s2 + $0xb0] sm:$0xff]
      %v2743 = vld [vmem:[%s2 + $0xb8] sm:$0xff]
      %v2744 = vld [vmem:[%s2 + $0xc0] sm:$0xff]
      %v2745 = vld [vmem:[%s2 + $0xc8] sm:$0xff]
      %v2746 = vld [vmem:[%s2 + $0xd0] sm:$0xff]
      %v2747 = vld [vmem:[%s2 + $0xd8] sm:$0xff]
      %v2748 = vld [vmem:[%s2 + $0xe0] sm:$0xff]
      %v2749 = vld [vmem:[%s2 + $0xe8] sm:$0xff]
      %v2750 = vld [vmem:[%s2 + $0xf0] sm:$0xff]
      %v2751 = vld [vmem:[%s2 + $0xf8] sm:$0xff]
      %v2752 = vld [vmem:[%s2 + $0x100] sm:$0xff]
      %v2753 = vld [vmem:[%s2 + $0x108] sm:$0xff]
      %v2754 = vld [vmem:[%s2 + $0x110] sm:$0xff]
      %v2755 = vld [vmem:[%s2 + $0x118] sm:$0xff]
      %v2756 = vld [vmem:[%s2 + $0x120] sm:$0xff]
      %v2757 = vld [vmem:[%s2 + $0x128] sm:$0xff]
      %v2758 = vld [vmem:[%s2 + $0x130] sm:$0xff]
      %v2759 = vld [vmem:[%s2 + $0x138] sm:$0xff]
      %v2760 = vld [vmem:[%s2 + $0x140] sm:$0xff]
      %v2761 = vld [vmem:[%s2 + $0x148] sm:$0xff]
      %v2762 = vld [vmem:[%s2 + $0x150] sm:$0xff]
      %v2763 = vld [vmem:[%s2 + $0x158] sm:$0xff]
      %v2764 = vld [vmem:[%s2 + $0x160] sm:$0xff]
      %v2765 = vld [vmem:[%s2 + $0x168] sm:$0xff]
      %v2766 = vld [vmem:[%s2 + $0x170] sm:$0xff]
      %v2767 = vld [vmem:[%s2 + $0x178] sm:$0xff]
      %v2768 = vld [vmem:[%s2 + $0x180] sm:$0xff]
      %v2769 = vld [vmem:[%s2 + $0x188] sm:$0xff]
      %v2770 = vld [vmem:[%s2 + $0x190] sm:$0xff]
      %v2771 = vld [vmem:[%s2 + $0x198] sm:$0xff]
      %v2772 = vld [vmem:[%s2 + $0x1a0] sm:$0xff]
      %v2773 = vld [vmem:[%s2 + $0x1a8] sm:$0xff]
      %v2774 = vld [vmem:[%s2 + $0x1b0] sm:$0xff]
      %v2775 = vld [vmem:[%s2 + $0x1b8] sm:$0xff]
      %v2776 = vld [vmem:[%s2 + $0x1c0] sm:$0xff]
      %v2777 = vld [vmem:[%s2 + $0x1c8] sm:$0xff]
      %v2778 = vld [vmem:[%s2 + $0x1d0] sm:$0xff]
      %v2779 = vld [vmem:[%s2 + $0x1d8] sm:$0xff]
      %v2780 = vld [vmem:[%s2 + $0x1e0] sm:$0xff]
      %v2781 = vld [vmem:[%s2 + $0x1e8] sm:$0xff]
      %v2782 = vld [vmem:[%s2 + $0x1f0] sm:$0xff]
      %v2783 = vld [vmem:[%s2 + $0x1f8] sm:$0xff]
      %v2784 = vld [vmem:[%s2 + $0x200] sm:$0xff]
      %v2785 = vld [vmem:[%s2 + $0x208] sm:$0xff]
      %v2786 = vld [vmem:[%s2 + $0x210] sm:$0xff]
      %v2787 = vld [vmem:[%s2 + $0x218] sm:$0xff]
      %v2788 = vld [vmem:[%s2 + $0x220] sm:$0xff]
      %v2789 = vld [vmem:[%s2 + $0x228] sm:$0xff]
      %v2790 = vld [vmem:[%s2 + $0x230] sm:$0xff]
      %v2791 = vld [vmem:[%s2 + $0x238] sm:$0xff]
      %v2792 = vld [vmem:[%s4 + $0x1] sm:$0x1]
      %v2793 = vlaneseq
      %v2794 = vshrl.u32 %v2793, 7
      %v2795 = vsub.s32 0, %v2794
      %v2796 = vrot.slane %v2792, %v2795
      %v2798 = vsel %vm1029, %v2519, 0
      %v2801 = vsel %vm1029, %v2524, 0
      %v2804 = vsel %vm1029, %v2529, 0
      %v2807 = vsel %vm1029, %v2534, 0
      %v2810 = vsel %vm1029, %v2539, 0
      %v2813 = vsel %vm1029, %v2544, 0
      %v2816 = vsel %vm1029, %v2549, 0
      %v2819 = vsel %vm1029, %v2554, 0
      %v2822 = vsel %vm1029, %v2559, 0
      %v2825 = vsel %vm1029, %v2564, 0
      %v2828 = vsel %vm1029, %v2569, 0
      %v2831 = vsel %vm1029, %v2574, 0
      %v2834 = vsel %vm1029, %v2579, 0
      %v2837 = vsel %vm1029, %v2584, 0
      %v2840 = vsel %vm1029, %v2589, 0
      %v2843 = vsel %vm1029, %v2594, 0
      %v2846 = vsel %vm1029, %v2599, 0
      %v2849 = vsel %vm1029, %v2604, 0
      %v2852 = vsel %vm1029, %v2609, 0
      %v2855 = vsel %vm1029, %v2614, 0
      %v2858 = vsel %vm1029, %v2619, 0
      %v2861 = vsel %vm1029, %v2624, 0
      %v2864 = vsel %vm1029, %v2629, 0
      %v2867 = vsel %vm1029, %v2634, 0
      %v2870 = vsel %vm1029, %v2639, 0
      %v2873 = vsel %vm1029, %v2644, 0
      %v2876 = vsel %vm1029, %v2649, 0
      %v2879 = vsel %vm1029, %v2654, 0
      %v2882 = vsel %vm1029, %v2659, 0
      %v2885 = vsel %vm1029, %v2664, 0
      %v2888 = vsel %vm1029, %v2669, 0
      %v2891 = vsel %vm1029, %v2674, 0
      %v2894 = vsel %vm1029, %v2679, 0
      %v2897 = vsel %vm1029, %v2684, 0
      %v2900 = vsel %vm1029, %v2689, 0
      %v2903 = vsel %vm1029, %v2694, 0
      %v2906 = vsel %vm1029, %v2699, 0
      %v2909 = vsel %vm1029, %v2704, 0
      %v2912 = vsel %vm1029, %v2709, 0
      %v2915 = vsel %vm1029, %v2714, 0
      %v2918 = vsel %vm1029, %v2719, 0
      %2920 = vmatprep.subr.mxu0 0.0
      %2921 = vmatpush1.msra.mxu0 %v2720
      %2922 = vmatprep.subr.mxu0 0.0
      %2923 = vmatpush1.msra.mxu0 %v2721
      %2924 = vmatprep.subr.mxu0 0.0
      %2925 = vmatpush1.msra.mxu0 %v2722
      %2926 = vmatprep.subr.mxu0 0.0
      %2927 = vmatpush1.msra.mxu0 %v2723
      %2928 = vmatprep.subr.mxu0 0.0
      %2929 = vmatpush1.msra.mxu0 %v2724
      %2930 = vmatprep.subr.mxu0 0.0
      %2931 = vmatpush1.msra.mxu0 %v2725
      %2932 = vmatprep.subr.mxu0 0.0
      %2933 = vmatpush1.msra.mxu0 %v2726
      %2934 = vmatprep.subr.mxu0 0.0
      %2935 = vmatpush1.msra.mxu0 %v2727
      %2936 = vmatprep.subr.mxu0 0.0
      %2937 = vmatpush1.msra.mxu0 %v2728
      %2938 = vmatprep.subr.mxu0 0.0
      %2939 = vmatpush1.msra.mxu0 %v2729
      %2940 = vmatprep.subr.mxu0 0.0
      %2941 = vmatpush1.msra.mxu0 %v2730
      %2942 = vmatprep.subr.mxu0 0.0
      %2943 = vmatpush1.msra.mxu0 %v2731
      %2944 = vmatprep.subr.mxu0 0.0
      %2945 = vmatpush1.msra.mxu0 %v2732
      %2946 = vmatprep.subr.mxu0 0.0
      %2947 = vmatpush1.msra.mxu0 %v2733
      %2948 = vmatprep.subr.mxu0 0.0
      %2949 = vmatpush1.msra.mxu0 %v2734
      %2950 = vmatprep.subr.mxu0 0.0
      %2951 = vmatpush1.msra.mxu0 %v2735
      %2952 = vmatprep.subr.mxu0 0.0
      %2953 = vmatpush1.msra.mxu0 %v2736
      %2954 = vmatprep.subr.mxu0 0.0
      %2955 = vmatpush1.msra.mxu0 %v2737
      %2956 = vmatprep.subr.mxu0 0.0
      %2957 = vmatpush1.msra.mxu0 %v2738
      %2958 = vmatprep.subr.mxu0 0.0
      %2959 = vmatpush1.msra.mxu0 %v2739
      %2960 = vmatprep.subr.mxu0 0.0
      %2961 = vmatpush1.msra.mxu0 %v2740
      %2962 = vmatprep.subr.mxu0 0.0
      %2963 = vmatpush1.msra.mxu0 %v2741
      %2964 = vmatprep.subr.mxu0 0.0
      %2965 = vmatpush1.msra.mxu0 %v2742
      %2966 = vmatprep.subr.mxu0 0.0
      %2967 = vmatpush1.msra.mxu0 %v2743
      %2968 = vmatprep.subr.mxu0 0.0
      %2969 = vmatpush1.msra.mxu0 %v2744
      %2970 = vmatprep.subr.mxu0 0.0
      %2971 = vmatpush1.msra.mxu0 %v2745
      %2972 = vmatprep.subr.mxu0 0.0
      %2973 = vmatpush1.msra.mxu0 %v2746
      %2974 = vmatprep.subr.mxu0 0.0
      %2975 = vmatpush1.msra.mxu0 %v2747
      %2976 = vmatprep.subr.mxu0 0.0
      %2977 = vmatpush1.msra.mxu0 %v2748
      %2978 = vmatprep.subr.mxu0 0.0
      %2979 = vmatpush1.msra.mxu0 %v2749
      %2980 = vmatprep.subr.mxu0 0.0
      %2981 = vmatpush1.msra.mxu0 %v2750
      %2982 = vmatprep.subr.mxu0 0.0
      %2983 = vmatpush1.msra.mxu0 %v2751
      %2984 = vmatprep.mubr.f32.mxu0 %v2516
      %2985 = vmatmul.mubr.f32.gmra.mrb[0].mxu0 %v2515
      %v2986 = vpop.f32.mrb[0].mxu0
      %v2987 = vadd.f32 %v2796, %v2986
      %v2988 = vpop.f32.mrb[0].mxu0
      %2989 = vmatprep.mubr.f32.mxu0 %v2521
      %2990 = vmatmul.mubr.f32.gmra.mrb[0].mxu0 %v2520
      %v2991 = vpop.f32.mrb[0].mxu0
      %v2992 = vadd.f32 %v2796, %v2991
      %v2993 = vpop.f32.mrb[0].mxu0
      %2994 = vmatprep.mubr.f32.mxu0 %v2526
      %2995 = vmatmul.mubr.f32.gmra.mrb[0].mxu0 %v2525
      %v2996 = vpop.f32.mrb[0].mxu0
      %v2997 = vadd.f32 %v2796, %v2996
      %v2998 = vpop.f32.mrb[0].mxu0
      %2999 = vmatprep.mubr.f32.mxu0 %v2531
      %3000 = vmatmul.mubr.f32.gmra.mrb[0].mxu0 %v2530
      %v3001 = vpop.f32.mrb[0].mxu0
      %v3002 = vadd.f32 %v2796, %v3001
      %v3003 = vpop.f32.mrb[0].mxu0
      %3004 = vmatprep.mubr.f32.mxu0 %v2536
      %3005 = vmatmul.mubr.f32.gmra.mrb[0].mxu0 %v2535
      %v3006 = vpop.f32.mrb[0].mxu0
      %v3007 = vadd.f32 %v2796, %v3006
      %v3008 = vpop.f32.mrb[0].mxu0
      %3009 = vmatprep.mubr.f32.mxu0 %v2541
      %3010 = vmatmul.mubr.f32.gmra.mrb[0].mxu0 %v2540
      %v3011 = vpop.f32.mrb[0].mxu0
      %v3012 = vadd.f32 %v2796, %v3011
      %v3013 = vpop.f32.mrb[0].mxu0
      %3014 = vmatprep.mubr.f32.mxu0 %v2546
      %3015 = vmatmul.mubr.f32.gmra.mrb[0].mxu0 %v2545
      %v3016 = vpop.f32.mrb[0].mxu0
      %v3017 = vadd.f32 %v2796, %v3016
      %v3018 = vpop.f32.mrb[0].mxu0
      %3019 = vmatprep.mubr.f32.mxu0 %v2551
      %3020 = vmatmul.mubr.f32.gmra.mrb[0].mxu0 %v2550
      %v3021 = vpop.f32.mrb[0].mxu0
      %v3022 = vadd.f32 %v2796, %v3021
      %v3023 = vpop.f32.mrb[0].mxu0
      %3024 = vmatprep.mubr.f32.mxu0 %v2556
      %3025 = vmatmul.mubr.f32.gmra.mrb[0].mxu0 %v2555
      %v3026 = vpop.f32.mrb[0].mxu0
      %v3027 = vadd.f32 %v2796, %v3026
      %v3028 = vpop.f32.mrb[0].mxu0
      %3029 = vmatprep.mubr.f32.mxu0 %v2561
      %3030 = vmatmul.mubr.f32.gmra.mrb[0].mxu0 %v2560
      %v3031 = vpop.f32.mrb[0].mxu0
      %v3032 = vadd.f32 %v2796, %v3031
      %v3033 = vpop.f32.mrb[0].mxu0
      %3034 = vmatprep.mubr.f32.mxu0 %v2566
      %3035 = vmatmul.mubr.f32.gmra.mrb[0].mxu0 %v2565
      %v3036 = vpop.f32.mrb[0].mxu0
      %v3037 = vadd.f32 %v2796, %v3036
      %v3038 = vpop.f32.mrb[0].mxu0
      %3039 = vmatprep.mubr.f32.mxu0 %v2571
      %3040 = vmatmul.mubr.f32.gmra.mrb[0].mxu0 %v2570
      %v3041 = vpop.f32.mrb[0].mxu0
      %v3042 = vadd.f32 %v2796, %v3041
      %v3043 = vpop.f32.mrb[0].mxu0
      %3044 = vmatprep.mubr.f32.mxu0 %v2576
      %3045 = vmatmul.mubr.f32.gmra.mrb[0].mxu0 %v2575
      %v3046 = vpop.f32.mrb[0].mxu0
      %v3047 = vadd.f32 %v2796, %v3046
      %v3048 = vpop.f32.mrb[0].mxu0
      %3049 = vmatprep.mubr.f32.mxu0 %v2581
      %3050 = vmatmul.mubr.f32.gmra.mrb[0].mxu0 %v2580
      %v3051 = vpop.f32.mrb[0].mxu0
      %v3052 = vadd.f32 %v2796, %v3051
      %v3053 = vpop.f32.mrb[0].mxu0
      %3054 = vmatprep.mubr.f32.mxu0 %v2586
      %3055 = vmatmul.mubr.f32.gmra.mrb[0].mxu0 %v2585
      %v3056 = vpop.f32.mrb[0].mxu0
      %v3057 = vadd.f32 %v2796, %v3056
      %v3058 = vpop.f32.mrb[0].mxu0
      %3059 = vmatprep.mubr.f32.mxu0 %v2591
      %3060 = vmatmul.mubr.f32.gmra.mrb[0].mxu0 %v2590
      %v3061 = vpop.f32.mrb[0].mxu0
      %v3062 = vadd.f32 %v2796, %v3061
      %v3063 = vpop.f32.mrb[0].mxu0
      %3064 = vmatprep.mubr.f32.mxu0 %v2596
      %3065 = vmatmul.mubr.f32.gmra.mrb[0].mxu0 %v2595
      %v3066 = vpop.f32.mrb[0].mxu0
      %v3067 = vadd.f32 %v2796, %v3066
      %v3068 = vpop.f32.mrb[0].mxu0
      %3069 = vmatprep.mubr.f32.mxu0 %v2601
      %3070 = vmatmul.mubr.f32.gmra.mrb[0].mxu0 %v2600
      %v3071 = vpop.f32.mrb[0].mxu0
      %v3072 = vadd.f32 %v2796, %v3071
      %v3073 = vpop.f32.mrb[0].mxu0
      %3074 = vmatprep.mubr.f32.mxu0 %v2606
      %3075 = vmatmul.mubr.f32.gmra.mrb[0].mxu0 %v2605
      %v3076 = vpop.f32.mrb[0].mxu0
      %v3077 = vadd.f32 %v2796, %v3076
      %v3078 = vpop.f32.mrb[0].mxu0
      %3079 = vmatprep.mubr.f32.mxu0 %v2611
      %3080 = vmatmul.mubr.f32.gmra.mrb[0].mxu0 %v2610
      %v3081 = vpop.f32.mrb[0].mxu0
      %v3082 = vadd.f32 %v2796, %v3081
      %v3083 = vpop.f32.mrb[0].mxu0
      %3084 = vmatprep.mubr.f32.mxu0 %v2616
      %3085 = vmatmul.mubr.f32.gmra.mrb[0].mxu0 %v2615
      %v3086 = vpop.f32.mrb[0].mxu0
      %v3087 = vadd.f32 %v2796, %v3086
      %v3088 = vpop.f32.mrb[0].mxu0
      %3089 = vmatprep.mubr.f32.mxu0 %v2621
      %3090 = vmatmul.mubr.f32.gmra.mrb[0].mxu0 %v2620
      %v3091 = vpop.f32.mrb[0].mxu0
      %v3092 = vadd.f32 %v2796, %v3091
      %v3093 = vpop.f32.mrb[0].mxu0
      %3094 = vmatprep.mubr.f32.mxu0 %v2626
      %3095 = vmatmul.mubr.f32.gmra.mrb[0].mxu0 %v2625
      %v3096 = vpop.f32.mrb[0].mxu0
      %v3097 = vadd.f32 %v2796, %v3096
      %v3098 = vpop.f32.mrb[0].mxu0
      %3099 = vmatprep.mubr.f32.mxu0 %v2631
      %3100 = vmatmul.mubr.f32.gmra.mrb[0].mxu0 %v2630
      %v3101 = vpop.f32.mrb[0].mxu0
      %v3102 = vadd.f32 %v2796, %v3101
      %v3103 = vpop.f32.mrb[0].mxu0
      %3104 = vmatprep.mubr.f32.mxu0 %v2636
      %3105 = vmatmul.mubr.f32.gmra.mrb[0].mxu0 %v2635
      %v3106 = vpop.f32.mrb[0].mxu0
      %v3107 = vadd.f32 %v2796, %v3106
      %v3108 = vpop.f32.mrb[0].mxu0
      %3109 = vmatprep.mubr.f32.mxu0 %v2641
      %3110 = vmatmul.mubr.f32.gmra.mrb[0].mxu0 %v2640
      %v3111 = vpop.f32.mrb[0].mxu0
      %v3112 = vadd.f32 %v2796, %v3111
      %v3113 = vpop.f32.mrb[0].mxu0
      %3114 = vmatprep.mubr.f32.mxu0 %v2646
      %3115 = vmatmul.mubr.f32.gmra.mrb[0].mxu0 %v2645
      %v3116 = vpop.f32.mrb[0].mxu0
      %v3117 = vadd.f32 %v2796, %v3116
      %v3118 = vpop.f32.mrb[0].mxu0
      %3119 = vmatprep.mubr.f32.mxu0 %v2651
      %3120 = vmatmul.mubr.f32.gmra.mrb[0].mxu0 %v2650
      %v3121 = vpop.f32.mrb[0].mxu0
      %v3122 = vadd.f32 %v2796, %v3121
      %v3123 = vpop.f32.mrb[0].mxu0
      %3124 = vmatprep.mubr.f32.mxu0 %v2656
      %3125 = vmatmul.mubr.f32.gmra.mrb[0].mxu0 %v2655
      %v3126 = vpop.f32.mrb[0].mxu0
      %v3127 = vadd.f32 %v2796, %v3126
      %v3128 = vpop.f32.mrb[0].mxu0
      %3129 = vmatprep.mubr.f32.mxu0 %v2661
      %3130 = vmatmul.mubr.f32.gmra.mrb[0].mxu0 %v2660
      %v3131 = vpop.f32.mrb[0].mxu0
      %v3132 = vadd.f32 %v2796, %v3131
      %v3133 = vpop.f32.mrb[0].mxu0
      %3134 = vmatprep.mubr.f32.mxu0 %v2666
      %3135 = vmatmul.mubr.f32.gmra.mrb[0].mxu0 %v2665
      %v3136 = vpop.f32.mrb[0].mxu0
      %v3137 = vadd.f32 %v2796, %v3136
      %v3138 = vpop.f32.mrb[0].mxu0
      %3139 = vmatprep.mubr.f32.mxu0 %v2671
      %3140 = vmatmul.mubr.f32.gmra.mrb[0].mxu0 %v2670
      %v3141 = vpop.f32.mrb[0].mxu0
      %v3142 = vadd.f32 %v2796, %v3141
      %v3143 = vpop.f32.mrb[0].mxu0
      %3144 = vmatprep.mubr.f32.mxu0 %v2676
      %3145 = vmatmul.mubr.f32.gmra.mrb[0].mxu0 %v2675
      %v3146 = vpop.f32.mrb[0].mxu0
      %v3147 = vadd.f32 %v2796, %v3146
      %v3148 = vpop.f32.mrb[0].mxu0
      %3149 = vmatprep.mubr.f32.mxu0 %v2681
      %3150 = vmatmul.mubr.f32.gmra.mrb[0].mxu0 %v2680
      %v3151 = vpop.f32.mrb[0].mxu0
      %v3152 = vadd.f32 %v2796, %v3151
      %v3153 = vpop.f32.mrb[0].mxu0
      %3154 = vmatprep.mubr.f32.mxu0 %v2686
      %3155 = vmatmul.mubr.f32.gmra.mrb[0].mxu0 %v2685
      %v3156 = vpop.f32.mrb[0].mxu0
      %v3157 = vadd.f32 %v2796, %v3156
      %v3158 = vpop.f32.mrb[0].mxu0
      %3159 = vmatprep.mubr.f32.mxu0 %v2691
      %3160 = vmatmul.mubr.f32.gmra.mrb[0].mxu0 %v2690
      %v3161 = vpop.f32.mrb[0].mxu0
      %v3162 = vadd.f32 %v2796, %v3161
      %v3163 = vpop.f32.mrb[0].mxu0
      %3164 = vmatprep.mubr.f32.mxu0 %v2696
      %3165 = vmatmul.mubr.f32.gmra.mrb[0].mxu0 %v2695
      %v3166 = vpop.f32.mrb[0].mxu0
      %v3167 = vadd.f32 %v2796, %v3166
      %v3168 = vpop.f32.mrb[0].mxu0
      %3169 = vmatprep.mubr.f32.mxu0 %v2701
      %3170 = vmatmul.mubr.f32.gmra.mrb[0].mxu0 %v2700
      %v3171 = vpop.f32.mrb[0].mxu0
      %v3172 = vadd.f32 %v2796, %v3171
      %v3173 = vpop.f32.mrb[0].mxu0
      %3174 = vmatprep.mubr.f32.mxu0 %v2706
      %3175 = vmatmul.mubr.f32.gmra.mrb[0].mxu0 %v2705
      %v3176 = vpop.f32.mrb[0].mxu0
      %v3177 = vadd.f32 %v2796, %v3176
      %v3178 = vpop.f32.mrb[0].mxu0
      %3179 = vmatprep.mubr.f32.mxu0 %v2711
      %3180 = vmatmul.mubr.f32.gmra.mrb[0].mxu0 %v2710
      %v3181 = vpop.f32.mrb[0].mxu0
      %v3182 = vadd.f32 %v2796, %v3181
      %v3183 = vpop.f32.mrb[0].mxu0
      %3184 = vmatprep.mubr.f32.mxu0 %v2716
      %3185 = vmatmul.mubr.f32.gmra.mrb[0].mxu0 %v2715
      %v3186 = vpop.f32.mrb[0].mxu0
      %v3187 = vadd.f32 %v2796, %v3186
      %v3188 = vpop.f32.mrb[0].mxu0
      %3189 = vdwg.mxu0
      %3190 = vmatprep.subr.mxu0 0.0
      %3191 = vmatpush1.msra.mxu0 %v2752
      %3192 = vmatprep.subr.mxu0 0.0
      %3193 = vmatpush1.msra.mxu0 %v2753
      %3194 = vmatprep.subr.mxu0 0.0
      %3195 = vmatpush1.msra.mxu0 %v2754
      %3196 = vmatprep.subr.mxu0 0.0
      %3197 = vmatpush1.msra.mxu0 %v2755
      %3198 = vmatprep.subr.mxu0 0.0
      %3199 = vmatpush1.msra.mxu0 %v2756
      %3200 = vmatprep.subr.mxu0 0.0
      %3201 = vmatpush1.msra.mxu0 %v2757
      %3202 = vmatprep.subr.mxu0 0.0
      %3203 = vmatpush1.msra.mxu0 %v2758
      %3204 = vmatprep.subr.mxu0 0.0
      %3205 = vmatpush1.msra.mxu0 %v2759
      %3206 = vmatprep.subr.mxu0 0.0
      %3207 = vmatpush1.msra.mxu0 %v2760
      %3208 = vmatprep.subr.mxu0 0.0
      %3209 = vmatpush1.msra.mxu0 %v2761
      %3210 = vmatprep.subr.mxu0 0.0
      %3211 = vmatpush1.msra.mxu0 %v2762
      %3212 = vmatprep.subr.mxu0 0.0
      %3213 = vmatpush1.msra.mxu0 %v2763
      %3214 = vmatprep.subr.mxu0 0.0
      %3215 = vmatpush1.msra.mxu0 %v2764
      %3216 = vmatprep.subr.mxu0 0.0
      %3217 = vmatpush1.msra.mxu0 %v2765
      %3218 = vmatprep.subr.mxu0 0.0
      %3219 = vmatpush1.msra.mxu0 %v2766
      %3220 = vmatprep.subr.mxu0 0.0
      %3221 = vmatpush1.msra.mxu0 %v2767
      %3222 = vmatprep.subr.mxu0 0.0
      %3223 = vmatpush1.msra.mxu0 %v2768
      %3224 = vmatprep.subr.mxu0 0.0
      %3225 = vmatpush1.msra.mxu0 %v2769
      %3226 = vmatprep.subr.mxu0 0.0
      %3227 = vmatpush1.msra.mxu0 %v2770
      %3228 = vmatprep.subr.mxu0 0.0
      %3229 = vmatpush1.msra.mxu0 %v2771
      %3230 = vmatprep.subr.mxu0 0.0
      %3231 = vmatpush1.msra.mxu0 %v2772
      %3232 = vmatprep.subr.mxu0 0.0
      %3233 = vmatpush1.msra.mxu0 %v2773
      %3234 = vmatprep.subr.mxu0 0.0
      %3235 = vmatpush1.msra.mxu0 %v2774
      %3236 = vmatprep.subr.mxu0 0.0
      %3237 = vmatpush1.msra.mxu0 %v2775
      %3238 = vmatprep.subr.mxu0 0.0
      %3239 = vmatpush1.msra.mxu0 %v2776
      %3240 = vmatprep.subr.mxu0 0.0
      %3241 = vmatpush1.msra.mxu0 %v2777
      %3242 = vmatprep.subr.mxu0 0.0
      %3243 = vmatpush1.msra.mxu0 %v2778
      %3244 = vmatprep.subr.mxu0 0.0
      %3245 = vmatpush1.msra.mxu0 %v2779
      %3246 = vmatprep.subr.mxu0 0.0
      %3247 = vmatpush1.msra.mxu0 %v2780
      %3248 = vmatprep.subr.mxu0 0.0
      %3249 = vmatpush1.msra.mxu0 %v2781
      %3250 = vmatprep.subr.mxu0 0.0
      %3251 = vmatpush1.msra.mxu0 %v2782
      %3252 = vmatprep.subr.mxu0 0.0
      %3253 = vmatpush1.msra.mxu0 %v2783
      %3254 = vmatprep.mubr.f32.mxu0 %v2518
      %3255 = vmatmul.mubr.f32.gmra.mrb[0].mxu0 %v2517
      %v3256 = vpop.f32.mrb[0].mxu0
      %v3257 = vadd.f32 %v2987, %v3256
      %v3258 = vpop.f32.mrb[0].mxu0
      %3259 = vmatprep.mubr.f32.mxu0 %v2523
      %3260 = vmatmul.mubr.f32.gmra.mrb[0].mxu0 %v2522
      %v3261 = vpop.f32.mrb[0].mxu0
      %v3262 = vadd.f32 %v2992, %v3261
      %v3263 = vpop.f32.mrb[0].mxu0
      %3264 = vmatprep.mubr.f32.mxu0 %v2528
      %3265 = vmatmul.mubr.f32.gmra.mrb[0].mxu0 %v2527
      %v3266 = vpop.f32.mrb[0].mxu0
      %v3267 = vadd.f32 %v2997, %v3266
      %v3268 = vpop.f32.mrb[0].mxu0
      %3269 = vmatprep.mubr.f32.mxu0 %v2533
      %3270 = vmatmul.mubr.f32.gmra.mrb[0].mxu0 %v2532
      %v3271 = vpop.f32.mrb[0].mxu0
      %v3272 = vadd.f32 %v3002, %v3271
      %v3273 = vpop.f32.mrb[0].mxu0
      %3274 = vmatprep.mubr.f32.mxu0 %v2538
      %3275 = vmatmul.mubr.f32.gmra.mrb[0].mxu0 %v2537
      %v3276 = vpop.f32.mrb[0].mxu0
      %v3277 = vadd.f32 %v3007, %v3276
      %v3278 = vpop.f32.mrb[0].mxu0
      %3279 = vmatprep.mubr.f32.mxu0 %v2543
      %3280 = vmatmul.mubr.f32.gmra.mrb[0].mxu0 %v2542
      %v3281 = vpop.f32.mrb[0].mxu0
      %v3282 = vadd.f32 %v3012, %v3281
      %v3283 = vpop.f32.mrb[0].mxu0
      %3284 = vmatprep.mubr.f32.mxu0 %v2548
      %3285 = vmatmul.mubr.f32.gmra.mrb[0].mxu0 %v2547
      %v3286 = vpop.f32.mrb[0].mxu0
      %v3287 = vadd.f32 %v3017, %v3286
      %v3288 = vpop.f32.mrb[0].mxu0
      %3289 = vmatprep.mubr.f32.mxu0 %v2553
      %3290 = vmatmul.mubr.f32.gmra.mrb[0].mxu0 %v2552
      %v3291 = vpop.f32.mrb[0].mxu0
      %v3292 = vadd.f32 %v3022, %v3291
      %v3293 = vpop.f32.mrb[0].mxu0
      %3294 = vmatprep.mubr.f32.mxu0 %v2558
      %3295 = vmatmul.mubr.f32.gmra.mrb[0].mxu0 %v2557
      %v3296 = vpop.f32.mrb[0].mxu0
      %v3297 = vadd.f32 %v3027, %v3296
      %v3298 = vpop.f32.mrb[0].mxu0
      %3299 = vmatprep.mubr.f32.mxu0 %v2563
      %3300 = vmatmul.mubr.f32.gmra.mrb[0].mxu0 %v2562
      %v3301 = vpop.f32.mrb[0].mxu0
      %v3302 = vadd.f32 %v3032, %v3301
      %v3303 = vpop.f32.mrb[0].mxu0
      %3304 = vmatprep.mubr.f32.mxu0 %v2568
      %3305 = vmatmul.mubr.f32.gmra.mrb[0].mxu0 %v2567
      %v3306 = vpop.f32.mrb[0].mxu0
      %v3307 = vadd.f32 %v3037, %v3306
      %v3308 = vpop.f32.mrb[0].mxu0
      %3309 = vmatprep.mubr.f32.mxu0 %v2573
      %3310 = vmatmul.mubr.f32.gmra.mrb[0].mxu0 %v2572
      %v3311 = vpop.f32.mrb[0].mxu0
      %v3312 = vadd.f32 %v3042, %v3311
      %v3313 = vpop.f32.mrb[0].mxu0
      %3314 = vmatprep.mubr.f32.mxu0 %v2578
      %3315 = vmatmul.mubr.f32.gmra.mrb[0].mxu0 %v2577
      %v3316 = vpop.f32.mrb[0].mxu0
      %v3317 = vadd.f32 %v3047, %v3316
      %v3318 = vpop.f32.mrb[0].mxu0
      %3319 = vmatprep.mubr.f32.mxu0 %v2583
      %3320 = vmatmul.mubr.f32.gmra.mrb[0].mxu0 %v2582
      %v3321 = vpop.f32.mrb[0].mxu0
      %v3322 = vadd.f32 %v3052, %v3321
      %v3323 = vpop.f32.mrb[0].mxu0
      %3324 = vmatprep.mubr.f32.mxu0 %v2588
      %3325 = vmatmul.mubr.f32.gmra.mrb[0].mxu0 %v2587
      %v3326 = vpop.f32.mrb[0].mxu0
      %v3327 = vadd.f32 %v3057, %v3326
      %v3328 = vpop.f32.mrb[0].mxu0
      %3329 = vmatprep.mubr.f32.mxu0 %v2593
      %3330 = vmatmul.mubr.f32.gmra.mrb[0].mxu0 %v2592
      %v3331 = vpop.f32.mrb[0].mxu0
      %v3332 = vadd.f32 %v3062, %v3331
      %v3333 = vpop.f32.mrb[0].mxu0
      %3334 = vmatprep.mubr.f32.mxu0 %v2598
      %3335 = vmatmul.mubr.f32.gmra.mrb[0].mxu0 %v2597
      %v3336 = vpop.f32.mrb[0].mxu0
      %v3337 = vadd.f32 %v3067, %v3336
      %v3338 = vpop.f32.mrb[0].mxu0
      %3339 = vmatprep.mubr.f32.mxu0 %v2603
      %3340 = vmatmul.mubr.f32.gmra.mrb[0].mxu0 %v2602
      %v3341 = vpop.f32.mrb[0].mxu0
      %v3342 = vadd.f32 %v3072, %v3341
      %v3343 = vpop.f32.mrb[0].mxu0
      %3344 = vmatprep.mubr.f32.mxu0 %v2608
      %3345 = vmatmul.mubr.f32.gmra.mrb[0].mxu0 %v2607
      %v3346 = vpop.f32.mrb[0].mxu0
      %v3347 = vadd.f32 %v3077, %v3346
      %v3348 = vpop.f32.mrb[0].mxu0
      %3349 = vmatprep.mubr.f32.mxu0 %v2613
      %3350 = vmatmul.mubr.f32.gmra.mrb[0].mxu0 %v2612
      %v3351 = vpop.f32.mrb[0].mxu0
      %v3352 = vadd.f32 %v3082, %v3351
      %v3353 = vpop.f32.mrb[0].mxu0
      %3354 = vmatprep.mubr.f32.mxu0 %v2618
      %3355 = vmatmul.mubr.f32.gmra.mrb[0].mxu0 %v2617
      %v3356 = vpop.f32.mrb[0].mxu0
      %v3357 = vadd.f32 %v3087, %v3356
      %v3358 = vpop.f32.mrb[0].mxu0
      %3359 = vmatprep.mubr.f32.mxu0 %v2623
      %3360 = vmatmul.mubr.f32.gmra.mrb[0].mxu0 %v2622
      %v3361 = vpop.f32.mrb[0].mxu0
      %v3362 = vadd.f32 %v3092, %v3361
      %v3363 = vpop.f32.mrb[0].mxu0
      %3364 = vmatprep.mubr.f32.mxu0 %v2628
      %3365 = vmatmul.mubr.f32.gmra.mrb[0].mxu0 %v2627
      %v3366 = vpop.f32.mrb[0].mxu0
      %v3367 = vadd.f32 %v3097, %v3366
      %v3368 = vpop.f32.mrb[0].mxu0
      %3369 = vmatprep.mubr.f32.mxu0 %v2633
      %3370 = vmatmul.mubr.f32.gmra.mrb[0].mxu0 %v2632
      %v3371 = vpop.f32.mrb[0].mxu0
      %v3372 = vadd.f32 %v3102, %v3371
      %v3373 = vpop.f32.mrb[0].mxu0
      %3374 = vmatprep.mubr.f32.mxu0 %v2638
      %3375 = vmatmul.mubr.f32.gmra.mrb[0].mxu0 %v2637
      %v3376 = vpop.f32.mrb[0].mxu0
      %v3377 = vadd.f32 %v3107, %v3376
      %v3378 = vpop.f32.mrb[0].mxu0
      %3379 = vmatprep.mubr.f32.mxu0 %v2643
      %3380 = vmatmul.mubr.f32.gmra.mrb[0].mxu0 %v2642
      %v3381 = vpop.f32.mrb[0].mxu0
      %v3382 = vadd.f32 %v3112, %v3381
      %v3383 = vpop.f32.mrb[0].mxu0
      %3384 = vmatprep.mubr.f32.mxu0 %v2648
      %3385 = vmatmul.mubr.f32.gmra.mrb[0].mxu0 %v2647
      %v3386 = vpop.f32.mrb[0].mxu0
      %v3387 = vadd.f32 %v3117, %v3386
      %v3388 = vpop.f32.mrb[0].mxu0
      %3389 = vmatprep.mubr.f32.mxu0 %v2653
      %3390 = vmatmul.mubr.f32.gmra.mrb[0].mxu0 %v2652
      %v3391 = vpop.f32.mrb[0].mxu0
      %v3392 = vadd.f32 %v3122, %v3391
      %v3393 = vpop.f32.mrb[0].mxu0
      %3394 = vmatprep.mubr.f32.mxu0 %v2658
      %3395 = vmatmul.mubr.f32.gmra.mrb[0].mxu0 %v2657
      %v3396 = vpop.f32.mrb[0].mxu0
      %v3397 = vadd.f32 %v3127, %v3396
      %v3398 = vpop.f32.mrb[0].mxu0
      %3399 = vmatprep.mubr.f32.mxu0 %v2663
      %3400 = vmatmul.mubr.f32.gmra.mrb[0].mxu0 %v2662
      %v3401 = vpop.f32.mrb[0].mxu0
      %v3402 = vadd.f32 %v3132, %v3401
      %v3403 = vpop.f32.mrb[0].mxu0
      %3404 = vmatprep.mubr.f32.mxu0 %v2668
      %3405 = vmatmul.mubr.f32.gmra.mrb[0].mxu0 %v2667
      %v3406 = vpop.f32.mrb[0].mxu0
      %v3407 = vadd.f32 %v3137, %v3406
      %v3408 = vpop.f32.mrb[0].mxu0
      %3409 = vmatprep.mubr.f32.mxu0 %v2673
      %3410 = vmatmul.mubr.f32.gmra.mrb[0].mxu0 %v2672
      %v3411 = vpop.f32.mrb[0].mxu0
      %v3412 = vadd.f32 %v3142, %v3411
      %v3413 = vpop.f32.mrb[0].mxu0
      %3414 = vmatprep.mubr.f32.mxu0 %v2678
      %3415 = vmatmul.mubr.f32.gmra.mrb[0].mxu0 %v2677
      %v3416 = vpop.f32.mrb[0].mxu0
      %v3417 = vadd.f32 %v3147, %v3416
      %v3418 = vpop.f32.mrb[0].mxu0
      %3419 = vmatprep.mubr.f32.mxu0 %v2683
      %3420 = vmatmul.mubr.f32.gmra.mrb[0].mxu0 %v2682
      %v3421 = vpop.f32.mrb[0].mxu0
      %v3422 = vadd.f32 %v3152, %v3421
      %v3423 = vpop.f32.mrb[0].mxu0
      %3424 = vmatprep.mubr.f32.mxu0 %v2688
      %3425 = vmatmul.mubr.f32.gmra.mrb[0].mxu0 %v2687
      %v3426 = vpop.f32.mrb[0].mxu0
      %v3427 = vadd.f32 %v3157, %v3426
      %v3428 = vpop.f32.mrb[0].mxu0
      %3429 = vmatprep.mubr.f32.mxu0 %v2693
      %3430 = vmatmul.mubr.f32.gmra.mrb[0].mxu0 %v2692
      %v3431 = vpop.f32.mrb[0].mxu0
      %v3432 = vadd.f32 %v3162, %v3431
      %v3433 = vpop.f32.mrb[0].mxu0
      %3434 = vmatprep.mubr.f32.mxu0 %v2698
      %3435 = vmatmul.mubr.f32.gmra.mrb[0].mxu0 %v2697
      %v3436 = vpop.f32.mrb[0].mxu0
      %v3437 = vadd.f32 %v3167, %v3436
      %v3438 = vpop.f32.mrb[0].mxu0
      %3439 = vmatprep.mubr.f32.mxu0 %v2703
      %3440 = vmatmul.mubr.f32.gmra.mrb[0].mxu0 %v2702
      %v3441 = vpop.f32.mrb[0].mxu0
      %v3442 = vadd.f32 %v3172, %v3441
      %v3443 = vpop.f32.mrb[0].mxu0
      %3444 = vmatprep.mubr.f32.mxu0 %v2708
      %3445 = vmatmul.mubr.f32.gmra.mrb[0].mxu0 %v2707
      %v3446 = vpop.f32.mrb[0].mxu0
      %v3447 = vadd.f32 %v3177, %v3446
      %v3448 = vpop.f32.mrb[0].mxu0
      %3449 = vmatprep.mubr.f32.mxu0 %v2713
      %3450 = vmatmul.mubr.f32.gmra.mrb[0].mxu0 %v2712
      %v3451 = vpop.f32.mrb[0].mxu0
      %v3452 = vadd.f32 %v3182, %v3451
      %v3453 = vpop.f32.mrb[0].mxu0
      %3454 = vmatprep.mubr.f32.mxu0 %v2718
      %3455 = vmatmul.mubr.f32.gmra.mrb[0].mxu0 %v2717
      %v3456 = vpop.f32.mrb[0].mxu0
      %v3457 = vadd.f32 %v3187, %v3456
      %v3458 = vpop.f32.mrb[0].mxu0
      %3459 = vdwg.mxu0
      %3460 = vmatprep.subr.mxu0 0.0
      %3461 = vmatpush1.msra.mxu0 %v2784
      %3462 = vmatprep.subr.mxu0 0.0
      %3463 = vmatpush1.msra.mxu0 %v2785
      %3464 = vmatprep.subr.mxu0 0.0
      %3465 = vmatpush1.msra.mxu0 %v2786
      %3466 = vmatprep.subr.mxu0 0.0
      %3467 = vmatpush1.msra.mxu0 %v2787
      %3468 = vmatprep.subr.mxu0 0.0
      %3469 = vmatpush1.msra.mxu0 %v2788
      %3470 = vmatprep.subr.mxu0 0.0
      %3471 = vmatpush1.msra.mxu0 %v2789
      %3472 = vmatprep.subr.mxu0 0.0
      %3473 = vmatpush1.msra.mxu0 %v2790
      %3474 = vmatprep.subr.mxu0 0.0
      %3475 = vmatpush1.msra.mxu0 %v2791
      %3476 = vmatprep.subr.mxu0 0.0
      %3477 = vmatpush1.msra.mxu0 0.0
      %3478 = vmatprep.subr.mxu0 0.0
      %3479 = vmatpush1.msra.mxu0 0.0
      %3480 = vmatprep.subr.mxu0 0.0
      %3481 = vmatpush1.msra.mxu0 0.0
      %3482 = vmatprep.subr.mxu0 0.0
      %3483 = vmatpush1.msra.mxu0 0.0
      %3484 = vmatprep.subr.mxu0 0.0
      %3485 = vmatpush1.msra.mxu0 0.0
      %3486 = vmatprep.subr.mxu0 0.0
      %3487 = vmatpush1.msra.mxu0 0.0
      %3488 = vmatprep.subr.mxu0 0.0
      %3489 = vmatpush1.msra.mxu0 0.0
      %3490 = vmatprep.subr.mxu0 0.0
      %3491 = vmatpush1.msra.mxu0 0.0
      %3492 = vmatprep.subr.mxu0 0.0
      %3493 = vmatpush1.msra.mxu0 0.0
      %3494 = vmatprep.subr.mxu0 0.0
      %3495 = vmatpush1.msra.mxu0 0.0
      %3496 = vmatprep.subr.mxu0 0.0
      %3497 = vmatpush1.msra.mxu0 0.0
      %3498 = vmatprep.subr.mxu0 0.0
      %3499 = vmatpush1.msra.mxu0 0.0
      %3500 = vmatprep.subr.mxu0 0.0
      %3501 = vmatpush1.msra.mxu0 0.0
      %3502 = vmatprep.subr.mxu0 0.0
      %3503 = vmatpush1.msra.mxu0 0.0
      %3504 = vmatprep.subr.mxu0 0.0
      %3505 = vmatpush1.msra.mxu0 0.0
      %3506 = vmatprep.subr.mxu0 0.0
      %3507 = vmatpush1.msra.mxu0 0.0
      %3508 = vmatprep.subr.mxu0 0.0
      %3509 = vmatpush1.msra.mxu0 0.0
      %3510 = vmatprep.subr.mxu0 0.0
      %3511 = vmatpush1.msra.mxu0 0.0
      %3512 = vmatprep.subr.mxu0 0.0
      %3513 = vmatpush1.msra.mxu0 0.0
      %3514 = vmatprep.subr.mxu0 0.0
      %3515 = vmatpush1.msra.mxu0 0.0
      %3516 = vmatprep.subr.mxu0 0.0
      %3517 = vmatpush1.msra.mxu0 0.0
      %3518 = vmatprep.subr.mxu0 0.0
      %3519 = vmatpush1.msra.mxu0 0.0
      %3520 = vmatprep.subr.mxu0 0.0
      %3521 = vmatpush1.msra.mxu0 0.0
      %3522 = vmatprep.subr.mxu0 0.0
      %3523 = vmatpush1.msra.mxu0 0.0
      %3524 = vmatprep.mubr.f32.mxu0 0.0
      %3525 = vmatmul.mubr.f32.gmra.mrb[0].mxu0 %v2798
      %v3526 = vpop.f32.mrb[0].mxu0
      %v3527 = vadd.f32 %v3257, %v3526
      %v3528 = vpop.f32.mrb[0].mxu0
      %3529 = vmatprep.mubr.f32.mxu0 0.0
      %3530 = vmatmul.mubr.f32.gmra.mrb[0].mxu0 %v2801
      %v3531 = vpop.f32.mrb[0].mxu0
      %v3532 = vadd.f32 %v3262, %v3531
      %v3533 = vpop.f32.mrb[0].mxu0
      %3534 = vmatprep.mubr.f32.mxu0 0.0
      %3535 = vmatmul.mubr.f32.gmra.mrb[0].mxu0 %v2804
      %v3536 = vpop.f32.mrb[0].mxu0
      %v3537 = vadd.f32 %v3267, %v3536
      %v3538 = vpop.f32.mrb[0].mxu0
      %3539 = vmatprep.mubr.f32.mxu0 0.0
      %3540 = vmatmul.mubr.f32.gmra.mrb[0].mxu0 %v2807
      %v3541 = vpop.f32.mrb[0].mxu0
      %v3542 = vadd.f32 %v3272, %v3541
      %v3543 = vpop.f32.mrb[0].mxu0
      %3544 = vmatprep.mubr.f32.mxu0 0.0
      %3545 = vmatmul.mubr.f32.gmra.mrb[0].mxu0 %v2810
      %v3546 = vpop.f32.mrb[0].mxu0
      %v3547 = vadd.f32 %v3277, %v3546
      %v3548 = vpop.f32.mrb[0].mxu0
      %3549 = vmatprep.mubr.f32.mxu0 0.0
      %3550 = vmatmul.mubr.f32.gmra.mrb[0].mxu0 %v2813
      %v3551 = vpop.f32.mrb[0].mxu0
      %v3552 = vadd.f32 %v3282, %v3551
      %v3553 = vpop.f32.mrb[0].mxu0
      %3554 = vmatprep.mubr.f32.mxu0 0.0
      %3555 = vmatmul.mubr.f32.gmra.mrb[0].mxu0 %v2816
      %v3556 = vpop.f32.mrb[0].mxu0
      %v3557 = vadd.f32 %v3287, %v3556
      %v3558 = vpop.f32.mrb[0].mxu0
      %3559 = vmatprep.mubr.f32.mxu0 0.0
      %3560 = vmatmul.mubr.f32.gmra.mrb[0].mxu0 %v2819
      %v3561 = vpop.f32.mrb[0].mxu0
      %v3562 = vadd.f32 %v3292, %v3561
      %v3563 = vpop.f32.mrb[0].mxu0
      %3564 = vmatprep.mubr.f32.mxu0 0.0
      %3565 = vmatmul.mubr.f32.gmra.mrb[0].mxu0 %v2822
      %v3566 = vpop.f32.mrb[0].mxu0
      %v3567 = vadd.f32 %v3297, %v3566
      %v3568 = vpop.f32.mrb[0].mxu0
      %3569 = vmatprep.mubr.f32.mxu0 0.0
      %3570 = vmatmul.mubr.f32.gmra.mrb[0].mxu0 %v2825
      %v3571 = vpop.f32.mrb[0].mxu0
      %v3572 = vadd.f32 %v3302, %v3571
      %v3573 = vpop.f32.mrb[0].mxu0
      %3574 = vmatprep.mubr.f32.mxu0 0.0
      %3575 = vmatmul.mubr.f32.gmra.mrb[0].mxu0 %v2828
      %v3576 = vpop.f32.mrb[0].mxu0
      %v3577 = vadd.f32 %v3307, %v3576
      %v3578 = vpop.f32.mrb[0].mxu0
      %3579 = vmatprep.mubr.f32.mxu0 0.0
      %3580 = vmatmul.mubr.f32.gmra.mrb[0].mxu0 %v2831
      %v3581 = vpop.f32.mrb[0].mxu0
      %v3582 = vadd.f32 %v3312, %v3581
      %v3583 = vpop.f32.mrb[0].mxu0
      %3584 = vmatprep.mubr.f32.mxu0 0.0
      %3585 = vmatmul.mubr.f32.gmra.mrb[0].mxu0 %v2834
      %v3586 = vpop.f32.mrb[0].mxu0
      %v3587 = vadd.f32 %v3317, %v3586
      %v3588 = vpop.f32.mrb[0].mxu0
      %3589 = vmatprep.mubr.f32.mxu0 0.0
      %3590 = vmatmul.mubr.f32.gmra.mrb[0].mxu0 %v2837
      %v3591 = vpop.f32.mrb[0].mxu0
      %v3592 = vadd.f32 %v3322, %v3591
      %v3593 = vpop.f32.mrb[0].mxu0
      %3594 = vmatprep.mubr.f32.mxu0 0.0
      %3595 = vmatmul.mubr.f32.gmra.mrb[0].mxu0 %v2840
      %v3596 = vpop.f32.mrb[0].mxu0
      %v3597 = vadd.f32 %v3327, %v3596
      %v3598 = vpop.f32.mrb[0].mxu0
      %3599 = vmatprep.mubr.f32.mxu0 0.0
      %3600 = vmatmul.mubr.f32.gmra.mrb[0].mxu0 %v2843
      %v3601 = vpop.f32.mrb[0].mxu0
      %v3602 = vadd.f32 %v3332, %v3601
      %v3603 = vpop.f32.mrb[0].mxu0
      %3604 = vmatprep.mubr.f32.mxu0 0.0
      %3605 = vmatmul.mubr.f32.gmra.mrb[0].mxu0 %v2846
      %v3606 = vpop.f32.mrb[0].mxu0
      %v3607 = vadd.f32 %v3337, %v3606
      %v3608 = vpop.f32.mrb[0].mxu0
      %3609 = vmatprep.mubr.f32.mxu0 0.0
      %3610 = vmatmul.mubr.f32.gmra.mrb[0].mxu0 %v2849
      %v3611 = vpop.f32.mrb[0].mxu0
      %v3612 = vadd.f32 %v3342, %v3611
      %v3613 = vpop.f32.mrb[0].mxu0
      %3614 = vmatprep.mubr.f32.mxu0 0.0
      %3615 = vmatmul.mubr.f32.gmra.mrb[0].mxu0 %v2852
      %v3616 = vpop.f32.mrb[0].mxu0
      %v3617 = vadd.f32 %v3347, %v3616
      %v3618 = vpop.f32.mrb[0].mxu0
      %3619 = vmatprep.mubr.f32.mxu0 0.0
      %3620 = vmatmul.mubr.f32.gmra.mrb[0].mxu0 %v2855
      %v3621 = vpop.f32.mrb[0].mxu0
      %v3622 = vadd.f32 %v3352, %v3621
      %v3623 = vpop.f32.mrb[0].mxu0
      %3624 = vmatprep.mubr.f32.mxu0 0.0
      %3625 = vmatmul.mubr.f32.gmra.mrb[0].mxu0 %v2858
      %v3626 = vpop.f32.mrb[0].mxu0
      %v3627 = vadd.f32 %v3357, %v3626
      %v3628 = vpop.f32.mrb[0].mxu0
      %3629 = vmatprep.mubr.f32.mxu0 0.0
      %3630 = vmatmul.mubr.f32.gmra.mrb[0].mxu0 %v2861
      %v3631 = vpop.f32.mrb[0].mxu0
      %v3632 = vadd.f32 %v3362, %v3631
      %v3633 = vpop.f32.mrb[0].mxu0
      %3634 = vmatprep.mubr.f32.mxu0 0.0
      %3635 = vmatmul.mubr.f32.gmra.mrb[0].mxu0 %v2864
      %v3636 = vpop.f32.mrb[0].mxu0
      %v3637 = vadd.f32 %v3367, %v3636
      %v3638 = vpop.f32.mrb[0].mxu0
      %3639 = vmatprep.mubr.f32.mxu0 0.0
      %3640 = vmatmul.mubr.f32.gmra.mrb[0].mxu0 %v2867
      %v3641 = vpop.f32.mrb[0].mxu0
      %v3642 = vadd.f32 %v3372, %v3641
      %v3643 = vpop.f32.mrb[0].mxu0
      %3644 = vmatprep.mubr.f32.mxu0 0.0
      %3645 = vmatmul.mubr.f32.gmra.mrb[0].mxu0 %v2870
      %v3646 = vpop.f32.mrb[0].mxu0
      %v3647 = vadd.f32 %v3377, %v3646
      %v3648 = vpop.f32.mrb[0].mxu0
      %3649 = vmatprep.mubr.f32.mxu0 0.0
      %3650 = vmatmul.mubr.f32.gmra.mrb[0].mxu0 %v2873
      %v3651 = vpop.f32.mrb[0].mxu0
      %v3652 = vadd.f32 %v3382, %v3651
      %v3653 = vpop.f32.mrb[0].mxu0
      %3654 = vmatprep.mubr.f32.mxu0 0.0
      %3655 = vmatmul.mubr.f32.gmra.mrb[0].mxu0 %v2876
      %v3656 = vpop.f32.mrb[0].mxu0
      %v3657 = vadd.f32 %v3387, %v3656
      %v3658 = vpop.f32.mrb[0].mxu0
      %3659 = vmatprep.mubr.f32.mxu0 0.0
      %3660 = vmatmul.mubr.f32.gmra.mrb[0].mxu0 %v2879
      %v3661 = vpop.f32.mrb[0].mxu0
      %v3662 = vadd.f32 %v3392, %v3661
      %v3663 = vpop.f32.mrb[0].mxu0
      %3664 = vmatprep.mubr.f32.mxu0 0.0
      %3665 = vmatmul.mubr.f32.gmra.mrb[0].mxu0 %v2882
      %v3666 = vpop.f32.mrb[0].mxu0
      %v3667 = vadd.f32 %v3397, %v3666
      %v3668 = vpop.f32.mrb[0].mxu0
      %3669 = vmatprep.mubr.f32.mxu0 0.0
      %3670 = vmatmul.mubr.f32.gmra.mrb[0].mxu0 %v2885
      %v3671 = vpop.f32.mrb[0].mxu0
      %v3672 = vadd.f32 %v3402, %v3671
      %v3673 = vpop.f32.mrb[0].mxu0
      %3674 = vmatprep.mubr.f32.mxu0 0.0
      %3675 = vmatmul.mubr.f32.gmra.mrb[0].mxu0 %v2888
      %v3676 = vpop.f32.mrb[0].mxu0
      %v3677 = vadd.f32 %v3407, %v3676
      %v3678 = vpop.f32.mrb[0].mxu0
      %3679 = vmatprep.mubr.f32.mxu0 0.0
      %3680 = vmatmul.mubr.f32.gmra.mrb[0].mxu0 %v2891
      %v3681 = vpop.f32.mrb[0].mxu0
      %v3682 = vadd.f32 %v3412, %v3681
      %v3683 = vpop.f32.mrb[0].mxu0
      %3684 = vmatprep.mubr.f32.mxu0 0.0
      %3685 = vmatmul.mubr.f32.gmra.mrb[0].mxu0 %v2894
      %v3686 = vpop.f32.mrb[0].mxu0
      %v3687 = vadd.f32 %v3417, %v3686
      %v3688 = vpop.f32.mrb[0].mxu0
      %3689 = vmatprep.mubr.f32.mxu0 0.0
      %3690 = vmatmul.mubr.f32.gmra.mrb[0].mxu0 %v2897
      %v3691 = vpop.f32.mrb[0].mxu0
      %v3692 = vadd.f32 %v3422, %v3691
      %v3693 = vpop.f32.mrb[0].mxu0
      %3694 = vmatprep.mubr.f32.mxu0 0.0
      %3695 = vmatmul.mubr.f32.gmra.mrb[0].mxu0 %v2900
      %v3696 = vpop.f32.mrb[0].mxu0
      %v3697 = vadd.f32 %v3427, %v3696
      %v3698 = vpop.f32.mrb[0].mxu0
      %3699 = vmatprep.mubr.f32.mxu0 0.0
      %3700 = vmatmul.mubr.f32.gmra.mrb[0].mxu0 %v2903
      %v3701 = vpop.f32.mrb[0].mxu0
      %v3702 = vadd.f32 %v3432, %v3701
      %v3703 = vpop.f32.mrb[0].mxu0
      %3704 = vmatprep.mubr.f32.mxu0 0.0
      %3705 = vmatmul.mubr.f32.gmra.mrb[0].mxu0 %v2906
      %v3706 = vpop.f32.mrb[0].mxu0
      %v3707 = vadd.f32 %v3437, %v3706
      %v3708 = vpop.f32.mrb[0].mxu0
      %3709 = vmatprep.mubr.f32.mxu0 0.0
      %3710 = vmatmul.mubr.f32.gmra.mrb[0].mxu0 %v2909
      %v3711 = vpop.f32.mrb[0].mxu0
      %v3712 = vadd.f32 %v3442, %v3711
      %v3713 = vpop.f32.mrb[0].mxu0
      %3714 = vmatprep.mubr.f32.mxu0 0.0
      %3715 = vmatmul.mubr.f32.gmra.mrb[0].mxu0 %v2912
      %v3716 = vpop.f32.mrb[0].mxu0
      %v3717 = vadd.f32 %v3447, %v3716
      %v3718 = vpop.f32.mrb[0].mxu0
      %3719 = vmatprep.mubr.f32.mxu0 0.0
      %3720 = vmatmul.mubr.f32.gmra.mrb[0].mxu0 %v2915
      %v3721 = vpop.f32.mrb[0].mxu0
      %v3722 = vadd.f32 %v3452, %v3721
      %v3723 = vpop.f32.mrb[0].mxu0
      %3724 = vmatprep.mubr.f32.mxu0 0.0
      %3725 = vmatmul.mubr.f32.gmra.mrb[0].mxu0 %v2918
      %v3726 = vpop.f32.mrb[0].mxu0
      %v3727 = vadd.f32 %v3457, %v3726
      %v3728 = vpop.f32.mrb[0].mxu0
      %3729 = vdwg.mxu0
      %v3730 = vmax.f32 %v3527, 0.0
      %v3731 = vmax.f32 %v3532, 0.0
      %v3732 = vmax.f32 %v3537, 0.0
      %v3733 = vmax.f32 %v3542, 0.0
      %v3734 = vmax.f32 %v3547, 0.0
      %v3735 = vmax.f32 %v3552, 0.0
      %v3736 = vmax.f32 %v3557, 0.0
      %v3737 = vmax.f32 %v3562, 0.0
      %v3738 = vmax.f32 %v3567, 0.0
      %v3739 = vmax.f32 %v3572, 0.0
      %v3740 = vmax.f32 %v3577, 0.0
      %v3741 = vmax.f32 %v3582, 0.0
      %v3742 = vmax.f32 %v3587, 0.0
      %v3743 = vmax.f32 %v3592, 0.0
      %v3744 = vmax.f32 %v3597, 0.0
      %v3745 = vmax.f32 %v3602, 0.0
      %v3746 = vmax.f32 %v3607, 0.0
      %v3747 = vmax.f32 %v3612, 0.0
      %v3748 = vmax.f32 %v3617, 0.0
      %v3749 = vmax.f32 %v3622, 0.0
      %v3750 = vmax.f32 %v3627, 0.0
      %v3751 = vmax.f32 %v3632, 0.0
      %v3752 = vmax.f32 %v3637, 0.0
      %v3753 = vmax.f32 %v3642, 0.0
      %v3754 = vmax.f32 %v3647, 0.0
      %v3755 = vmax.f32 %v3652, 0.0
      %v3756 = vmax.f32 %v3657, 0.0
      %v3757 = vmax.f32 %v3662, 0.0
      %v3758 = vmax.f32 %v3667, 0.0
      %v3759 = vmax.f32 %v3672, 0.0
      %v3760 = vmax.f32 %v3677, 0.0
      %v3761 = vmax.f32 %v3682, 0.0
      %v3762 = vmax.f32 %v3687, 0.0
      %v3763 = vmax.f32 %v3692, 0.0
      %v3764 = vmax.f32 %v3697, 0.0
      %v3765 = vmax.f32 %v3702, 0.0
      %v3766 = vmax.f32 %v3707, 0.0
      %v3767 = vmax.f32 %v3712, 0.0
      %v3768 = vmax.f32 %v3717, 0.0
      %v3769 = vmax.f32 %v3722, 0.0
      %v3770 = vmax.f32 %v3727, 0.0
      %v3771 = vmul.f32 %v3730, %v786
      %v3772 = vmul.f32 %v3731, %v791
      %v3773 = vmul.f32 %v3732, %v796
      %v3774 = vmul.f32 %v3733, %v801
      %v3775 = vmul.f32 %v3734, %v806
      %v3776 = vmul.f32 %v3735, %v811
      %v3777 = vmul.f32 %v3736, %v816
      %v3778 = vmul.f32 %v3737, %v821
      %v3779 = vmul.f32 %v3738, %v826
      %v3780 = vmul.f32 %v3739, %v831
      %v3781 = vmul.f32 %v3740, %v836
      %v3782 = vmul.f32 %v3741, %v841
      %v3783 = vmul.f32 %v3742, %v846
      %v3784 = vmul.f32 %v3743, %v851
      %v3785 = vmul.f32 %v3744, %v856
      %v3786 = vmul.f32 %v3745, %v861
      %v3787 = vmul.f32 %v3746, %v866
      %v3788 = vmul.f32 %v3747, %v871
      %v3789 = vmul.f32 %v3748, %v876
      %v3790 = vmul.f32 %v3749, %v881
      %v3791 = vmul.f32 %v3750, %v886
      %v3792 = vmul.f32 %v3751, %v891
      %v3793 = vmul.f32 %v3752, %v896
      %v3794 = vmul.f32 %v3753, %v901
      %v3795 = vmul.f32 %v3754, %v906
      %v3796 = vmul.f32 %v3755, %v911
      %v3797 = vmul.f32 %v3756, %v916
      %v3798 = vmul.f32 %v3757, %v921
      %v3799 = vmul.f32 %v3758, %v926
      %v3800 = vmul.f32 %v3759, %v931
      %v3801 = vmul.f32 %v3760, %v936
      %v3802 = vmul.f32 %v3761, %v941
      %v3803 = vmul.f32 %v3762, %v946
      %v3804 = vmul.f32 %v3763, %v951
      %v3805 = vmul.f32 %v3764, %v956
      %v3806 = vmul.f32 %v3765, %v961
      %v3807 = vmul.f32 %v3766, %v966
      %v3808 = vmul.f32 %v3767, %v971
      %v3809 = vmul.f32 %v3768, %v976
      %v3810 = vmul.f32 %v3769, %v981
      %v3811 = vmul.f32 %v3770, %v986
      %3812 = vst.msk [vmem:[#allocation2 + $0x18] sm:$0xff] %vm1029, %v3771
      %3813 = vst.msk [vmem:[#allocation2 + $0x20] sm:$0xff] %vm1029, %v3772
      %3814 = vst.msk [vmem:[#allocation2 + $0x28] sm:$0xff] %vm1029, %v3773
      %3815 = vst.msk [vmem:[#allocation2 + $0x30] sm:$0xff] %vm1029, %v3774
      %3816 = vst.msk [vmem:[#allocation2 + $0x38] sm:$0xff] %vm1029, %v3775
      %3817 = vst.msk [vmem:[#allocation2 + $0x40] sm:$0xff] %vm1029, %v3776
      %3818 = vst.msk [vmem:[#allocation2 + $0x48] sm:$0xff] %vm1029, %v3777
      %3819 = vst.msk [vmem:[#allocation2 + $0x50] sm:$0xff] %vm1029, %v3778
      %3820 = vst.msk [vmem:[#allocation2 + $0x58] sm:$0xff] %vm1029, %v3779
      %3821 = vst.msk [vmem:[#allocation2 + $0x60] sm:$0xff] %vm1029, %v3780
      %3822 = vst.msk [vmem:[#allocation2 + $0x68] sm:$0xff] %vm1029, %v3781
      %3823 = vst.msk [vmem:[#allocation2 + $0x70] sm:$0xff] %vm1029, %v3782
      %3824 = vst.msk [vmem:[#allocation2 + $0x78] sm:$0xff] %vm1029, %v3783
      %3825 = vst.msk [vmem:[#allocation2 + $0x80] sm:$0xff] %vm1029, %v3784
      %3826 = vst.msk [vmem:[#allocation2 + $0x88] sm:$0xff] %vm1029, %v3785
      %3827 = vst.msk [vmem:[#allocation2 + $0x90] sm:$0xff] %vm1029, %v3786
      %3828 = vst.msk [vmem:[#allocation2 + $0x98] sm:$0xff] %vm1029, %v3787
      %3829 = vst.msk [vmem:[#allocation2 + $0xa0] sm:$0xff] %vm1029, %v3788
      %3830 = vst.msk [vmem:[#allocation2 + $0xa8] sm:$0xff] %vm1029, %v3789
      %3831 = vst.msk [vmem:[#allocation2 + $0xb0] sm:$0xff] %vm1029, %v3790
      %3832 = vst.msk [vmem:[#allocation2 + $0xb8] sm:$0xff] %vm1029, %v3791
      %3833 = vst.msk [vmem:[#allocation2 + $0xc0] sm:$0xff] %vm1029, %v3792
      %3834 = vst.msk [vmem:[#allocation2 + $0xc8] sm:$0xff] %vm1029, %v3793
      %3835 = vst.msk [vmem:[#allocation2 + $0xd0] sm:$0xff] %vm1029, %v3794
      %3836 = vst.msk [vmem:[#allocation2 + $0xd8] sm:$0xff] %vm1029, %v3795
      %3837 = vst.msk [vmem:[#allocation2 + $0xe0] sm:$0xff] %vm1029, %v3796
      %3838 = vst.msk [vmem:[#allocation2 + $0xe8] sm:$0xff] %vm1029, %v3797
      %3839 = vst.msk [vmem:[#allocation2 + $0xf0] sm:$0xff] %vm1029, %v3798
      %3840 = vst.msk [vmem:[#allocation2 + $0xf8] sm:$0xff] %vm1029, %v3799
      %3841 = vst.msk [vmem:[#allocation2 + $0x100] sm:$0xff] %vm1029, %v3800
      %3842 = vst.msk [vmem:[#allocation2 + $0x108] sm:$0xff] %vm1029, %v3801
      %3843 = vst.msk [vmem:[#allocation2 + $0x110] sm:$0xff] %vm1029, %v3802
      %3844 = vst.msk [vmem:[#allocation2 + $0x118] sm:$0xff] %vm1029, %v3803
      %3845 = vst.msk [vmem:[#allocation2 + $0x120] sm:$0xff] %vm1029, %v3804
      %3846 = vst.msk [vmem:[#allocation2 + $0x128] sm:$0xff] %vm1029, %v3805
      %3847 = vst.msk [vmem:[#allocation2 + $0x130] sm:$0xff] %vm1029, %v3806
      %3848 = vst.msk [vmem:[#allocation2 + $0x138] sm:$0xff] %vm1029, %v3807
      %3849 = vst.msk [vmem:[#allocation2 + $0x140] sm:$0xff] %vm1029, %v3808
      %3850 = vst.msk [vmem:[#allocation2 + $0x148] sm:$0xff] %vm1029, %v3809
      %3851 = vst.msk [vmem:[#allocation2 + $0x150] sm:$0xff] %vm1029, %v3810
      %3852 = vst.msk [vmem:[#allocation2 + $0x158] sm:$0xf] %vm1076, %v3811
      %v3853 = vld [vmem:[#allocation2 + $0x5] sm:$0xff]
      %v3854 = vld [vmem:[#allocation2 + $0xd] sm:$0xff]
      %v3855 = vld [vmem:[#allocation2 + $0x15] sm:$0xff]
      %v3856 = vld [vmem:[#allocation2 + $0x1d] sm:$0xff]
      %v3857 = vld [vmem:[#allocation2 + $0x25] sm:$0xff]
      %v3858 = vld [vmem:[#allocation2 + $0x2d] sm:$0xff]
      %v3859 = vld [vmem:[#allocation2 + $0x35] sm:$0xff]
      %v3860 = vld [vmem:[#allocation2 + $0x3d] sm:$0xff]
      %v3861 = vld [vmem:[#allocation2 + $0x45] sm:$0xff]
      %v3862 = vld [vmem:[#allocation2 + $0x4d] sm:$0xff]
      %v3863 = vld [vmem:[#allocation2 + $0x55] sm:$0xff]
      %v3864 = vld [vmem:[#allocation2 + $0x5d] sm:$0xff]
      %v3865 = vld [vmem:[#allocation2 + $0x65] sm:$0xff]
      %v3866 = vld [vmem:[#allocation2 + $0x6d] sm:$0xff]
      %v3867 = vld [vmem:[#allocation2 + $0x75] sm:$0xff]
      %v3868 = vld [vmem:[#allocation2 + $0x7d] sm:$0xff]
      %v3869 = vld [vmem:[#allocation2 + $0x85] sm:$0xff]
      %v3870 = vld [vmem:[#allocation2 + $0x8d] sm:$0xff]
      %v3871 = vld [vmem:[#allocation2 + $0x95] sm:$0xff]
      %v3872 = vld [vmem:[#allocation2 + $0x9d] sm:$0xff]
      %v3873 = vld [vmem:[#allocation2 + $0xa5] sm:$0xff]
      %v3874 = vld [vmem:[#allocation2 + $0xad] sm:$0xff]
      %v3875 = vld [vmem:[#allocation2 + $0xb5] sm:$0xff]
      %v3876 = vld [vmem:[#allocation2 + $0xbd] sm:$0xff]
      %v3877 = vld [vmem:[#allocation2 + $0xc5] sm:$0xff]
      %v3878 = vld [vmem:[#allocation2 + $0xcd] sm:$0xff]
      %v3879 = vld [vmem:[#allocation2 + $0xd5] sm:$0xff]
      %v3880 = vld [vmem:[#allocation2 + $0xdd] sm:$0xff]
      %v3881 = vld [vmem:[#allocation2 + $0xe5] sm:$0xff]
      %v3882 = vld [vmem:[#allocation2 + $0xed] sm:$0xff]
      %v3883 = vld [vmem:[#allocation2 + $0xf5] sm:$0xff]
      %v3884 = vld [vmem:[#allocation2 + $0xfd] sm:$0xff]
      %v3885 = vld [vmem:[#allocation2 + $0x105] sm:$0xff]
      %v3886 = vld [vmem:[#allocation2 + $0x10d] sm:$0xff]
      %v3887 = vld [vmem:[#allocation2 + $0x115] sm:$0xff]
      %v3888 = vld [vmem:[#allocation2 + $0x11d] sm:$0xff]
      %v3889 = vld [vmem:[#allocation2 + $0x125] sm:$0xff]
      %v3890 = vld [vmem:[#allocation2 + $0x12d] sm:$0xff]
      %v3891 = vld [vmem:[#allocation2 + $0x135] sm:$0xff]
      %v3892 = vld [vmem:[#allocation2 + $0x13d] sm:$0xff]
      %v3893 = vld [vmem:[#allocation2 + $0x145] sm:$0xf]
      %3894 = vst.msk [vmem:[#allocation3] sm:$0xff] %vm1029, %v3853
      %3895 = vst.msk [vmem:[#allocation3 + $0x28] sm:$0xff] %vm1029, %v3854
      %3896 = vst.msk [vmem:[#allocation3 + $0x50] sm:$0xff] %vm1029, %v3855
      %3897 = vst.msk [vmem:[#allocation3 + $0x78] sm:$0xff] %vm1029, %v3856
      %3898 = vst.msk [vmem:[#allocation3 + $0xa0] sm:$0xff] %vm1029, %v3857
      %3899 = vst.msk [vmem:[#allocation3 + $0xc8] sm:$0xff] %vm1029, %v3858
      %3900 = vst.msk [vmem:[#allocation3 + $0xf0] sm:$0xff] %vm1029, %v3859
      %3901 = vst.msk [vmem:[#allocation3 + $0x118] sm:$0xff] %vm1029, %v3860
      %3902 = vst.msk [vmem:[#allocation3 + $0x140] sm:$0xff] %vm1029, %v3861
      %3903 = vst.msk [vmem:[#allocation3 + $0x168] sm:$0xff] %vm1029, %v3862
      %3904 = vst.msk [vmem:[#allocation3 + $0x190] sm:$0xff] %vm1029, %v3863
      %3905 = vst.msk [vmem:[#allocation3 + $0x1b8] sm:$0xff] %vm1029, %v3864
      %3906 = vst.msk [vmem:[#allocation3 + $0x1e0] sm:$0xff] %vm1029, %v3865
      %3907 = vst.msk [vmem:[#allocation3 + $0x208] sm:$0xff] %vm1029, %v3866
      %3908 = vst.msk [vmem:[#allocation3 + $0x230] sm:$0xff] %vm1029, %v3867
      %3909 = vst.msk [vmem:[#allocation3 + $0x258] sm:$0xff] %vm1029, %v3868
      %3910 = vst.msk [vmem:[#allocation3 + $0x280] sm:$0xff] %vm1029, %v3869
      %3911 = vst.msk [vmem:[#allocation3 + $0x2a8] sm:$0xff] %vm1029, %v3870
      %3912 = vst.msk [vmem:[#allocation3 + $0x2d0] sm:$0xff] %vm1029, %v3871
      %3913 = vst.msk [vmem:[#allocation3 + $0x2f8] sm:$0xff] %vm1029, %v3872
      %3914 = vst.msk [vmem:[#allocation3 + $0x320] sm:$0xff] %vm1029, %v3873
      %3915 = vst.msk [vmem:[#allocation3 + $0x348] sm:$0xff] %vm1029, %v3874
      %3916 = vst.msk [vmem:[#allocation3 + $0x370] sm:$0xff] %vm1029, %v3875
      %3917 = vst.msk [vmem:[#allocation3 + $0x398] sm:$0xff] %vm1029, %v3876
      %3918 = vst.msk [vmem:[#allocation3 + $0x3c0] sm:$0xff] %vm1029, %v3877
      %3919 = vst.msk [vmem:[#allocation3 + $0x3e8] sm:$0xff] %vm1029, %v3878
      %3920 = vst.msk [vmem:[#allocation3 + $0x410] sm:$0xff] %vm1029, %v3879
      %3921 = vst.msk [vmem:[#allocation3 + $0x438] sm:$0xff] %vm1029, %v3880
      %3922 = vst.msk [vmem:[#allocation3 + $0x460] sm:$0xff] %vm1029, %v3881
      %3923 = vst.msk [vmem:[#allocation3 + $0x488] sm:$0xff] %vm1029, %v3882
      %3924 = vst.msk [vmem:[#allocation3 + $0x4b0] sm:$0xff] %vm1029, %v3883
      %3925 = vst.msk [vmem:[#allocation3 + $0x4d8] sm:$0xff] %vm1029, %v3884
      %3926 = vst.msk [vmem:[#allocation3 + $0x500] sm:$0xff] %vm1029, %v3885
      %3927 = vst.msk [vmem:[#allocation3 + $0x528] sm:$0xff] %vm1029, %v3886
      %3928 = vst.msk [vmem:[#allocation3 + $0x550] sm:$0xff] %vm1029, %v3887
      %3929 = vst.msk [vmem:[#allocation3 + $0x578] sm:$0xff] %vm1029, %v3888
      %3930 = vst.msk [vmem:[#allocation3 + $0x5a0] sm:$0xff] %vm1029, %v3889
      %3931 = vst.msk [vmem:[#allocation3 + $0x5c8] sm:$0xff] %vm1029, %v3890
      %3932 = vst.msk [vmem:[#allocation3 + $0x5f0] sm:$0xff] %vm1029, %v3891
      %3933 = vst.msk [vmem:[#allocation3 + $0x618] sm:$0xff] %vm1029, %v3892
      %3934 = vst.msk [vmem:[#allocation3 + $0x640] sm:$0xf] %vm1076, %v3893
      %v3935 = vld [vmem:[#allocation2 + $0x6] sm:$0xff]
      %v3936 = vld [vmem:[#allocation2 + $0xe] sm:$0xff]
      %v3937 = vld [vmem:[#allocation2 + $0x16] sm:$0xff]
      %v3938 = vld [vmem:[#allocation2 + $0x1e] sm:$0xff]
      %v3939 = vld [vmem:[#allocation2 + $0x26] sm:$0xff]
      %v3940 = vld [vmem:[#allocation2 + $0x2e] sm:$0xff]
      %v3941 = vld [vmem:[#allocation2 + $0x36] sm:$0xff]
      %v3942 = vld [vmem:[#allocation2 + $0x3e] sm:$0xff]
      %v3943 = vld [vmem:[#allocation2 + $0x46] sm:$0xff]
      %v3944 = vld [vmem:[#allocation2 + $0x4e] sm:$0xff]
      %v3945 = vld [vmem:[#allocation2 + $0x56] sm:$0xff]
      %v3946 = vld [vmem:[#allocation2 + $0x5e] sm:$0xff]
      %v3947 = vld [vmem:[#allocation2 + $0x66] sm:$0xff]
      %v3948 = vld [vmem:[#allocation2 + $0x6e] sm:$0xff]
      %v3949 = vld [vmem:[#allocation2 + $0x76] sm:$0xff]
      %v3950 = vld [vmem:[#allocation2 + $0x7e] sm:$0xff]
      %v3951 = vld [vmem:[#allocation2 + $0x86] sm:$0xff]
      %v3952 = vld [vmem:[#allocation2 + $0x8e] sm:$0xff]
      %v3953 = vld [vmem:[#allocation2 + $0x96] sm:$0xff]
      %v3954 = vld [vmem:[#allocation2 + $0x9e] sm:$0xff]
      %v3955 = vld [vmem:[#allocation2 + $0xa6] sm:$0xff]
      %v3956 = vld [vmem:[#allocation2 + $0xae] sm:$0xff]
      %v3957 = vld [vmem:[#allocation2 + $0xb6] sm:$0xff]
      %v3958 = vld [vmem:[#allocation2 + $0xbe] sm:$0xff]
      %v3959 = vld [vmem:[#allocation2 + $0xc6] sm:$0xff]
      %v3960 = vld [vmem:[#allocation2 + $0xce] sm:$0xff]
      %v3961 = vld [vmem:[#allocation2 + $0xd6] sm:$0xff]
      %v3962 = vld [vmem:[#allocation2 + $0xde] sm:$0xff]
      %v3963 = vld [vmem:[#allocation2 + $0xe6] sm:$0xff]
      %v3964 = vld [vmem:[#allocation2 + $0xee] sm:$0xff]
      %v3965 = vld [vmem:[#allocation2 + $0xf6] sm:$0xff]
      %v3966 = vld [vmem:[#allocation2 + $0xfe] sm:$0xff]
      %v3967 = vld [vmem:[#allocation2 + $0x106] sm:$0xff]
      %v3968 = vld [vmem:[#allocation2 + $0x10e] sm:$0xff]
      %v3969 = vld [vmem:[#allocation2 + $0x116] sm:$0xff]
      %v3970 = vld [vmem:[#allocation2 + $0x11e] sm:$0xff]
      %v3971 = vld [vmem:[#allocation2 + $0x126] sm:$0xff]
      %v3972 = vld [vmem:[#allocation2 + $0x12e] sm:$0xff]
      %v3973 = vld [vmem:[#allocation2 + $0x136] sm:$0xff]
      %v3974 = vld [vmem:[#allocation2 + $0x13e] sm:$0xff]
      %v3975 = vld [vmem:[#allocation2 + $0x146] sm:$0xf]
      %4017 = vrot.lane.b32.xlu0 %v3935, 64
      %v4018 = vpop.permute.xlu0 %4017
      %4019 = vrot.lane.b32.xlu0 %v3936, 64
      %v4020 = vpop.permute.xlu0 %4019
      %4021 = vrot.lane.b32.xlu0 %v3937, 64
      %v4022 = vpop.permute.xlu0 %4021
      %4023 = vrot.lane.b32.xlu0 %v3938, 64
      %v4024 = vpop.permute.xlu0 %4023
      %4025 = vrot.lane.b32.xlu0 %v3939, 64
      %v4026 = vpop.permute.xlu0 %4025
      %4027 = vrot.lane.b32.xlu0 %v3940, 64
      %v4028 = vpop.permute.xlu0 %4027
      %4029 = vrot.lane.b32.xlu0 %v3941, 64
      %v4030 = vpop.permute.xlu0 %4029
      %4031 = vrot.lane.b32.xlu0 %v3942, 64
      %v4032 = vpop.permute.xlu0 %4031
      %4033 = vrot.lane.b32.xlu0 %v3943, 64
      %v4034 = vpop.permute.xlu0 %4033
      %4035 = vrot.lane.b32.xlu0 %v3944, 64
      %v4036 = vpop.permute.xlu0 %4035
      %4037 = vrot.lane.b32.xlu0 %v3945, 64
      %v4038 = vpop.permute.xlu0 %4037
      %4039 = vrot.lane.b32.xlu0 %v3946, 64
      %v4040 = vpop.permute.xlu0 %4039
      %4041 = vrot.lane.b32.xlu0 %v3947, 64
      %v4042 = vpop.permute.xlu0 %4041
      %4043 = vrot.lane.b32.xlu0 %v3948, 64
      %v4044 = vpop.permute.xlu0 %4043
      %4045 = vrot.lane.b32.xlu0 %v3949, 64
      %v4046 = vpop.permute.xlu0 %4045
      %4047 = vrot.lane.b32.xlu0 %v3950, 64
      %v4048 = vpop.permute.xlu0 %4047
      %4049 = vrot.lane.b32.xlu0 %v3951, 64
      %v4050 = vpop.permute.xlu0 %4049
      %4051 = vrot.lane.b32.xlu0 %v3952, 64
      %v4052 = vpop.permute.xlu0 %4051
      %4053 = vrot.lane.b32.xlu0 %v3953, 64
      %v4054 = vpop.permute.xlu0 %4053
      %4055 = vrot.lane.b32.xlu0 %v3954, 64
      %v4056 = vpop.permute.xlu0 %4055
      %4057 = vrot.lane.b32.xlu0 %v3955, 64
      %v4058 = vpop.permute.xlu0 %4057
      %4059 = vrot.lane.b32.xlu0 %v3956, 64
      %v4060 = vpop.permute.xlu0 %4059
      %4061 = vrot.lane.b32.xlu0 %v3957, 64
      %v4062 = vpop.permute.xlu0 %4061
      %4063 = vrot.lane.b32.xlu0 %v3958, 64
      %v4064 = vpop.permute.xlu0 %4063
      %4065 = vrot.lane.b32.xlu0 %v3959, 64
      %v4066 = vpop.permute.xlu0 %4065
      %4067 = vrot.lane.b32.xlu0 %v3960, 64
      %v4068 = vpop.permute.xlu0 %4067
      %4069 = vrot.lane.b32.xlu0 %v3961, 64
      %v4070 = vpop.permute.xlu0 %4069
      %4071 = vrot.lane.b32.xlu0 %v3962, 64
      %v4072 = vpop.permute.xlu0 %4071
      %4073 = vrot.lane.b32.xlu0 %v3963, 64
      %v4074 = vpop.permute.xlu0 %4073
      %4075 = vrot.lane.b32.xlu0 %v3964, 64
      %v4076 = vpop.permute.xlu0 %4075
      %4077 = vrot.lane.b32.xlu0 %v3965, 64
      %v4078 = vpop.permute.xlu0 %4077
      %4079 = vrot.lane.b32.xlu0 %v3966, 64
      %v4080 = vpop.permute.xlu0 %4079
      %4081 = vrot.lane.b32.xlu0 %v3967, 64
      %v4082 = vpop.permute.xlu0 %4081
      %4083 = vrot.lane.b32.xlu0 %v3968, 64
      %v4084 = vpop.permute.xlu0 %4083
      %4085 = vrot.lane.b32.xlu0 %v3969, 64
      %v4086 = vpop.permute.xlu0 %4085
      %4087 = vrot.lane.b32.xlu0 %v3970, 64
      %v4088 = vpop.permute.xlu0 %4087
      %4089 = vrot.lane.b32.xlu0 %v3971, 64
      %v4090 = vpop.permute.xlu0 %4089
      %4091 = vrot.lane.b32.xlu0 %v3972, 64
      %v4092 = vpop.permute.xlu0 %4091
      %4093 = vrot.lane.b32.xlu0 %v3973, 64
      %v4094 = vpop.permute.xlu0 %4093
      %4095 = vrot.lane.b32.xlu0 %v3974, 64
      %v4096 = vpop.permute.xlu0 %4095
      %4097 = vrot.lane.b32.xlu0 %v3975, 64
      %v4098 = vpop.permute.xlu0 %4097
      %4140 = vst.msk [vmem:[#allocation3] sm:$0xff] %vm1406, %v4018
      %4141 = vst.msk [vmem:[#allocation3 + $0x28] sm:$0xff] %vm1406, %v4020
      %4142 = vst.msk [vmem:[#allocation3 + $0x50] sm:$0xff] %vm1406, %v4022
      %4143 = vst.msk [vmem:[#allocation3 + $0x78] sm:$0xff] %vm1406, %v4024
      %4144 = vst.msk [vmem:[#allocation3 + $0xa0] sm:$0xff] %vm1406, %v4026
      %4145 = vst.msk [vmem:[#allocation3 + $0xc8] sm:$0xff] %vm1406, %v4028
      %4146 = vst.msk [vmem:[#allocation3 + $0xf0] sm:$0xff] %vm1406, %v4030
      %4147 = vst.msk [vmem:[#allocation3 + $0x118] sm:$0xff] %vm1406, %v4032
      %4148 = vst.msk [vmem:[#allocation3 + $0x140] sm:$0xff] %vm1406, %v4034
      %4149 = vst.msk [vmem:[#allocation3 + $0x168] sm:$0xff] %vm1406, %v4036
      %4150 = vst.msk [vmem:[#allocation3 + $0x190] sm:$0xff] %vm1406, %v4038
      %4151 = vst.msk [vmem:[#allocation3 + $0x1b8] sm:$0xff] %vm1406, %v4040
      %4152 = vst.msk [vmem:[#allocation3 + $0x1e0] sm:$0xff] %vm1406, %v4042
      %4153 = vst.msk [vmem:[#allocation3 + $0x208] sm:$0xff] %vm1406, %v4044
      %4154 = vst.msk [vmem:[#allocation3 + $0x230] sm:$0xff] %vm1406, %v4046
      %4155 = vst.msk [vmem:[#allocation3 + $0x258] sm:$0xff] %vm1406, %v4048
      %4156 = vst.msk [vmem:[#allocation3 + $0x280] sm:$0xff] %vm1406, %v4050
      %4157 = vst.msk [vmem:[#allocation3 + $0x2a8] sm:$0xff] %vm1406, %v4052
      %4158 = vst.msk [vmem:[#allocation3 + $0x2d0] sm:$0xff] %vm1406, %v4054
      %4159 = vst.msk [vmem:[#allocation3 + $0x2f8] sm:$0xff] %vm1406, %v4056
      %4160 = vst.msk [vmem:[#allocation3 + $0x320] sm:$0xff] %vm1406, %v4058
      %4161 = vst.msk [vmem:[#allocation3 + $0x348] sm:$0xff] %vm1406, %v4060
      %4162 = vst.msk [vmem:[#allocation3 + $0x370] sm:$0xff] %vm1406, %v4062
      %4163 = vst.msk [vmem:[#allocation3 + $0x398] sm:$0xff] %vm1406, %v4064
      %4164 = vst.msk [vmem:[#allocation3 + $0x3c0] sm:$0xff] %vm1406, %v4066
      %4165 = vst.msk [vmem:[#allocation3 + $0x3e8] sm:$0xff] %vm1406, %v4068
      %4166 = vst.msk [vmem:[#allocation3 + $0x410] sm:$0xff] %vm1406, %v4070
      %4167 = vst.msk [vmem:[#allocation3 + $0x438] sm:$0xff] %vm1406, %v4072
      %4168 = vst.msk [vmem:[#allocation3 + $0x460] sm:$0xff] %vm1406, %v4074
      %4169 = vst.msk [vmem:[#allocation3 + $0x488] sm:$0xff] %vm1406, %v4076
      %4170 = vst.msk [vmem:[#allocation3 + $0x4b0] sm:$0xff] %vm1406, %v4078
      %4171 = vst.msk [vmem:[#allocation3 + $0x4d8] sm:$0xff] %vm1406, %v4080
      %4172 = vst.msk [vmem:[#allocation3 + $0x500] sm:$0xff] %vm1406, %v4082
      %4173 = vst.msk [vmem:[#allocation3 + $0x528] sm:$0xff] %vm1406, %v4084
      %4174 = vst.msk [vmem:[#allocation3 + $0x550] sm:$0xff] %vm1406, %v4086
      %4175 = vst.msk [vmem:[#allocation3 + $0x578] sm:$0xff] %vm1406, %v4088
      %4176 = vst.msk [vmem:[#allocation3 + $0x5a0] sm:$0xff] %vm1406, %v4090
      %4177 = vst.msk [vmem:[#allocation3 + $0x5c8] sm:$0xff] %vm1406, %v4092
      %4178 = vst.msk [vmem:[#allocation3 + $0x5f0] sm:$0xff] %vm1406, %v4094
      %4179 = vst.msk [vmem:[#allocation3 + $0x618] sm:$0xff] %vm1406, %v4096
      %4180 = vst.msk [vmem:[#allocation3 + $0x640] sm:$0xf] %vm1447, %v4098
      %v4181 = vld [vmem:[#allocation2 + $0x7] sm:$0xff]
      %v4182 = vld [vmem:[#allocation2 + $0xf] sm:$0xff]
      %v4183 = vld [vmem:[#allocation2 + $0x17] sm:$0xff]
      %v4184 = vld [vmem:[#allocation2 + $0x1f] sm:$0xff]
      %v4185 = vld [vmem:[#allocation2 + $0x27] sm:$0xff]
      %v4186 = vld [vmem:[#allocation2 + $0x2f] sm:$0xff]
      %v4187 = vld [vmem:[#allocation2 + $0x37] sm:$0xff]
      %v4188 = vld [vmem:[#allocation2 + $0x3f] sm:$0xff]
      %v4189 = vld [vmem:[#allocation2 + $0x47] sm:$0xff]
      %v4190 = vld [vmem:[#allocation2 + $0x4f] sm:$0xff]
      %v4191 = vld [vmem:[#allocation2 + $0x57] sm:$0xff]
      %v4192 = vld [vmem:[#allocation2 + $0x5f] sm:$0xff]
      %v4193 = vld [vmem:[#allocation2 + $0x67] sm:$0xff]
      %v4194 = vld [vmem:[#allocation2 + $0x6f] sm:$0xff]
      %v4195 = vld [vmem:[#allocation2 + $0x77] sm:$0xff]
      %v4196 = vld [vmem:[#allocation2 + $0x7f] sm:$0xff]
      %v4197 = vld [vmem:[#allocation2 + $0x87] sm:$0xff]
      %v4198 = vld [vmem:[#allocation2 + $0x8f] sm:$0xff]
      %v4199 = vld [vmem:[#allocation2 + $0x97] sm:$0xff]
      %v4200 = vld [vmem:[#allocation2 + $0x9f] sm:$0xff]
      %v4201 = vld [vmem:[#allocation2 + $0xa7] sm:$0xff]
      %v4202 = vld [vmem:[#allocation2 + $0xaf] sm:$0xff]
      %v4203 = vld [vmem:[#allocation2 + $0xb7] sm:$0xff]
      %v4204 = vld [vmem:[#allocation2 + $0xbf] sm:$0xff]
      %v4205 = vld [vmem:[#allocation2 + $0xc7] sm:$0xff]
      %v4206 = vld [vmem:[#allocation2 + $0xcf] sm:$0xff]
      %v4207 = vld [vmem:[#allocation2 + $0xd7] sm:$0xff]
      %v4208 = vld [vmem:[#allocation2 + $0xdf] sm:$0xff]
      %v4209 = vld [vmem:[#allocation2 + $0xe7] sm:$0xff]
      %v4210 = vld [vmem:[#allocation2 + $0xef] sm:$0xff]
      %v4211 = vld [vmem:[#allocation2 + $0xf7] sm:$0xff]
      %v4212 = vld [vmem:[#allocation2 + $0xff] sm:$0xff]
      %v4213 = vld [vmem:[#allocation2 + $0x107] sm:$0xff]
      %v4214 = vld [vmem:[#allocation2 + $0x10f] sm:$0xff]
      %v4215 = vld [vmem:[#allocation2 + $0x117] sm:$0xff]
      %v4216 = vld [vmem:[#allocation2 + $0x11f] sm:$0xff]
      %v4217 = vld [vmem:[#allocation2 + $0x127] sm:$0xff]
      %v4218 = vld [vmem:[#allocation2 + $0x12f] sm:$0xff]
      %v4219 = vld [vmem:[#allocation2 + $0x137] sm:$0xff]
      %v4220 = vld [vmem:[#allocation2 + $0x13f] sm:$0xff]
      %v4221 = vld [vmem:[#allocation2 + $0x147] sm:$0xf]
      %4222 = vst.msk [vmem:[#allocation3 + $0x8] sm:$0xff] %vm1029, %v4181
      %4223 = vst.msk [vmem:[#allocation3 + $0x30] sm:$0xff] %vm1029, %v4182
      %4224 = vst.msk [vmem:[#allocation3 + $0x58] sm:$0xff] %vm1029, %v4183
      %4225 = vst.msk [vmem:[#allocation3 + $0x80] sm:$0xff] %vm1029, %v4184
      %4226 = vst.msk [vmem:[#allocation3 + $0xa8] sm:$0xff] %vm1029, %v4185
      %4227 = vst.msk [vmem:[#allocation3 + $0xd0] sm:$0xff] %vm1029, %v4186
      %4228 = vst.msk [vmem:[#allocation3 + $0xf8] sm:$0xff] %vm1029, %v4187
      %4229 = vst.msk [vmem:[#allocation3 + $0x120] sm:$0xff] %vm1029, %v4188
      %4230 = vst.msk [vmem:[#allocation3 + $0x148] sm:$0xff] %vm1029, %v4189
      %4231 = vst.msk [vmem:[#allocation3 + $0x170] sm:$0xff] %vm1029, %v4190
      %4232 = vst.msk [vmem:[#allocation3 + $0x198] sm:$0xff] %vm1029, %v4191
      %4233 = vst.msk [vmem:[#allocation3 + $0x1c0] sm:$0xff] %vm1029, %v4192
      %4234 = vst.msk [vmem:[#allocation3 + $0x1e8] sm:$0xff] %vm1029, %v4193
      %4235 = vst.msk [vmem:[#allocation3 + $0x210] sm:$0xff] %vm1029, %v4194
      %4236 = vst.msk [vmem:[#allocation3 + $0x238] sm:$0xff] %vm1029, %v4195
      %4237 = vst.msk [vmem:[#allocation3 + $0x260] sm:$0xff] %vm1029, %v4196
      %4238 = vst.msk [vmem:[#allocation3 + $0x288] sm:$0xff] %vm1029, %v4197
      %4239 = vst.msk [vmem:[#allocation3 + $0x2b0] sm:$0xff] %vm1029, %v4198
      %4240 = vst.msk [vmem:[#allocation3 + $0x2d8] sm:$0xff] %vm1029, %v4199
      %4241 = vst.msk [vmem:[#allocation3 + $0x300] sm:$0xff] %vm1029, %v4200
      %4242 = vst.msk [vmem:[#allocation3 + $0x328] sm:$0xff] %vm1029, %v4201
      %4243 = vst.msk [vmem:[#allocation3 + $0x350] sm:$0xff] %vm1029, %v4202
      %4244 = vst.msk [vmem:[#allocation3 + $0x378] sm:$0xff] %vm1029, %v4203
      %4245 = vst.msk [vmem:[#allocation3 + $0x3a0] sm:$0xff] %vm1029, %v4204
      %4246 = vst.msk [vmem:[#allocation3 + $0x3c8] sm:$0xff] %vm1029, %v4205
      %4247 = vst.msk [vmem:[#allocation3 + $0x3f0] sm:$0xff] %vm1029, %v4206
      %4248 = vst.msk [vmem:[#allocation3 + $0x418] sm:$0xff] %vm1029, %v4207
      %4249 = vst.msk [vmem:[#allocation3 + $0x440] sm:$0xff] %vm1029, %v4208
      %4250 = vst.msk [vmem:[#allocation3 + $0x468] sm:$0xff] %vm1029, %v4209
      %4251 = vst.msk [vmem:[#allocation3 + $0x490] sm:$0xff] %vm1029, %v4210
      %4252 = vst.msk [vmem:[#allocation3 + $0x4b8] sm:$0xff] %vm1029, %v4211
      %4253 = vst.msk [vmem:[#allocation3 + $0x4e0] sm:$0xff] %vm1029, %v4212
      %4254 = vst.msk [vmem:[#allocation3 + $0x508] sm:$0xff] %vm1029, %v4213
      %4255 = vst.msk [vmem:[#allocation3 + $0x530] sm:$0xff] %vm1029, %v4214
      %4256 = vst.msk [vmem:[#allocation3 + $0x558] sm:$0xff] %vm1029, %v4215
      %4257 = vst.msk [vmem:[#allocation3 + $0x580] sm:$0xff] %vm1029, %v4216
      %4258 = vst.msk [vmem:[#allocation3 + $0x5a8] sm:$0xff] %vm1029, %v4217
      %4259 = vst.msk [vmem:[#allocation3 + $0x5d0] sm:$0xff] %vm1029, %v4218
      %4260 = vst.msk [vmem:[#allocation3 + $0x5f8] sm:$0xff] %vm1029, %v4219
      %4261 = vst.msk [vmem:[#allocation3 + $0x620] sm:$0xff] %vm1029, %v4220
      %4262 = vst.msk [vmem:[#allocation3 + $0x648] sm:$0xf] %vm1076, %v4221
      %v4263 = vld [vmem:[#allocation2 + $0x17] sm:$0xff]
      %v4264 = vld [vmem:[#allocation2 + $0x1f] sm:$0xff]
      %v4265 = vld [vmem:[#allocation2 + $0x27] sm:$0xff]
      %v4266 = vld [vmem:[#allocation2 + $0x2f] sm:$0xff]
      %v4267 = vld [vmem:[#allocation2 + $0x37] sm:$0xff]
      %v4268 = vld [vmem:[#allocation2 + $0x3f] sm:$0xff]
      %v4269 = vld [vmem:[#allocation2 + $0x47] sm:$0xff]
      %v4270 = vld [vmem:[#allocation2 + $0x4f] sm:$0xff]
      %v4271 = vld [vmem:[#allocation2 + $0x57] sm:$0xff]
      %v4272 = vld [vmem:[#allocation2 + $0x5f] sm:$0xff]
      %v4273 = vld [vmem:[#allocation2 + $0x67] sm:$0xff]
      %v4274 = vld [vmem:[#allocation2 + $0x6f] sm:$0xff]
      %v4275 = vld [vmem:[#allocation2 + $0x77] sm:$0xff]
      %v4276 = vld [vmem:[#allocation2 + $0x7f] sm:$0xff]
      %v4277 = vld [vmem:[#allocation2 + $0x87] sm:$0xff]
      %v4278 = vld [vmem:[#allocation2 + $0x8f] sm:$0xff]
      %v4279 = vld [vmem:[#allocation2 + $0x97] sm:$0xff]
      %v4280 = vld [vmem:[#allocation2 + $0x9f] sm:$0xff]
      %v4281 = vld [vmem:[#allocation2 + $0xa7] sm:$0xff]
      %v4282 = vld [vmem:[#allocation2 + $0xaf] sm:$0xff]
      %v4283 = vld [vmem:[#allocation2 + $0xb7] sm:$0xff]
      %v4284 = vld [vmem:[#allocation2 + $0xbf] sm:$0xff]
      %v4285 = vld [vmem:[#allocation2 + $0xc7] sm:$0xff]
      %v4286 = vld [vmem:[#allocation2 + $0xcf] sm:$0xff]
      %v4287 = vld [vmem:[#allocation2 + $0xd7] sm:$0xff]
      %v4288 = vld [vmem:[#allocation2 + $0xdf] sm:$0xff]
      %v4289 = vld [vmem:[#allocation2 + $0xe7] sm:$0xff]
      %v4290 = vld [vmem:[#allocation2 + $0xef] sm:$0xff]
      %v4291 = vld [vmem:[#allocation2 + $0xf7] sm:$0xff]
      %v4292 = vld [vmem:[#allocation2 + $0xff] sm:$0xff]
      %v4293 = vld [vmem:[#allocation2 + $0x107] sm:$0xff]
      %v4294 = vld [vmem:[#allocation2 + $0x10f] sm:$0xff]
      %v4295 = vld [vmem:[#allocation2 + $0x117] sm:$0xff]
      %v4296 = vld [vmem:[#allocation2 + $0x11f] sm:$0xff]
      %v4297 = vld [vmem:[#allocation2 + $0x127] sm:$0xff]
      %v4298 = vld [vmem:[#allocation2 + $0x12f] sm:$0xff]
      %v4299 = vld [vmem:[#allocation2 + $0x137] sm:$0xff]
      %v4300 = vld [vmem:[#allocation2 + $0x13f] sm:$0xff]
      %v4301 = vld [vmem:[#allocation2 + $0x147] sm:$0xff]
      %v4302 = vld [vmem:[#allocation2 + $0x14f] sm:$0xff]
      %v4303 = vld [vmem:[#allocation2 + $0x157] sm:$0xf]
      %4345 = vrot.lane.b32.xlu0 %v4263, 64
      %v4346 = vpop.permute.xlu0 %4345
      %4347 = vrot.lane.b32.xlu0 %v4264, 64
      %v4348 = vpop.permute.xlu0 %4347
      %4349 = vrot.lane.b32.xlu0 %v4265, 64
      %v4350 = vpop.permute.xlu0 %4349
      %4351 = vrot.lane.b32.xlu0 %v4266, 64
      %v4352 = vpop.permute.xlu0 %4351
      %4353 = vrot.lane.b32.xlu0 %v4267, 64
      %v4354 = vpop.permute.xlu0 %4353
      %4355 = vrot.lane.b32.xlu0 %v4268, 64
      %v4356 = vpop.permute.xlu0 %4355
      %4357 = vrot.lane.b32.xlu0 %v4269, 64
      %v4358 = vpop.permute.xlu0 %4357
      %4359 = vrot.lane.b32.xlu0 %v4270, 64
      %v4360 = vpop.permute.xlu0 %4359
      %4361 = vrot.lane.b32.xlu0 %v4271, 64
      %v4362 = vpop.permute.xlu0 %4361
      %4363 = vrot.lane.b32.xlu0 %v4272, 64
      %v4364 = vpop.permute.xlu0 %4363
      %4365 = vrot.lane.b32.xlu0 %v4273, 64
      %v4366 = vpop.permute.xlu0 %4365
      %4367 = vrot.lane.b32.xlu0 %v4274, 64
      %v4368 = vpop.permute.xlu0 %4367
      %4369 = vrot.lane.b32.xlu0 %v4275, 64
      %v4370 = vpop.permute.xlu0 %4369
      %4371 = vrot.lane.b32.xlu0 %v4276, 64
      %v4372 = vpop.permute.xlu0 %4371
      %4373 = vrot.lane.b32.xlu0 %v4277, 64
      %v4374 = vpop.permute.xlu0 %4373
      %4375 = vrot.lane.b32.xlu0 %v4278, 64
      %v4376 = vpop.permute.xlu0 %4375
      %4377 = vrot.lane.b32.xlu0 %v4279, 64
      %v4378 = vpop.permute.xlu0 %4377
      %4379 = vrot.lane.b32.xlu0 %v4280, 64
      %v4380 = vpop.permute.xlu0 %4379
      %4381 = vrot.lane.b32.xlu0 %v4281, 64
      %v4382 = vpop.permute.xlu0 %4381
      %4383 = vrot.lane.b32.xlu0 %v4282, 64
      %v4384 = vpop.permute.xlu0 %4383
      %4385 = vrot.lane.b32.xlu0 %v4283, 64
      %v4386 = vpop.permute.xlu0 %4385
      %4387 = vrot.lane.b32.xlu0 %v4284, 64
      %v4388 = vpop.permute.xlu0 %4387
      %4389 = vrot.lane.b32.xlu0 %v4285, 64
      %v4390 = vpop.permute.xlu0 %4389
      %4391 = vrot.lane.b32.xlu0 %v4286, 64
      %v4392 = vpop.permute.xlu0 %4391
      %4393 = vrot.lane.b32.xlu0 %v4287, 64
      %v4394 = vpop.permute.xlu0 %4393
      %4395 = vrot.lane.b32.xlu0 %v4288, 64
      %v4396 = vpop.permute.xlu0 %4395
      %4397 = vrot.lane.b32.xlu0 %v4289, 64
      %v4398 = vpop.permute.xlu0 %4397
      %4399 = vrot.lane.b32.xlu0 %v4290, 64
      %v4400 = vpop.permute.xlu0 %4399
      %4401 = vrot.lane.b32.xlu0 %v4291, 64
      %v4402 = vpop.permute.xlu0 %4401
      %4403 = vrot.lane.b32.xlu0 %v4292, 64
      %v4404 = vpop.permute.xlu0 %4403
      %4405 = vrot.lane.b32.xlu0 %v4293, 64
      %v4406 = vpop.permute.xlu0 %4405
      %4407 = vrot.lane.b32.xlu0 %v4294, 64
      %v4408 = vpop.permute.xlu0 %4407
      %4409 = vrot.lane.b32.xlu0 %v4295, 64
      %v4410 = vpop.permute.xlu0 %4409
      %4411 = vrot.lane.b32.xlu0 %v4296, 64
      %v4412 = vpop.permute.xlu0 %4411
      %4413 = vrot.lane.b32.xlu0 %v4297, 64
      %v4414 = vpop.permute.xlu0 %4413
      %4415 = vrot.lane.b32.xlu0 %v4298, 64
      %v4416 = vpop.permute.xlu0 %4415
      %4417 = vrot.lane.b32.xlu0 %v4299, 64
      %v4418 = vpop.permute.xlu0 %4417
      %4419 = vrot.lane.b32.xlu0 %v4300, 64
      %v4420 = vpop.permute.xlu0 %4419
      %4421 = vrot.lane.b32.xlu0 %v4301, 64
      %v4422 = vpop.permute.xlu0 %4421
      %4423 = vrot.lane.b32.xlu0 %v4302, 64
      %v4424 = vpop.permute.xlu0 %4423
      %4425 = vrot.lane.b32.xlu0 %v4303, 64
      %v4426 = vpop.permute.xlu0 %4425
      %4468 = vst.msk [vmem:[#allocation3 + $0x8] sm:$0xff] %vm1406, %v4346
      %4469 = vst.msk [vmem:[#allocation3 + $0x30] sm:$0xff] %vm1406, %v4348
      %4470 = vst.msk [vmem:[#allocation3 + $0x58] sm:$0xff] %vm1406, %v4350
      %4471 = vst.msk [vmem:[#allocation3 + $0x80] sm:$0xff] %vm1406, %v4352
      %4472 = vst.msk [vmem:[#allocation3 + $0xa8] sm:$0xff] %vm1406, %v4354
      %4473 = vst.msk [vmem:[#allocation3 + $0xd0] sm:$0xff] %vm1406, %v4356
      %4474 = vst.msk [vmem:[#allocation3 + $0xf8] sm:$0xff] %vm1406, %v4358
      %4475 = vst.msk [vmem:[#allocation3 + $0x120] sm:$0xff] %vm1406, %v4360
      %4476 = vst.msk [vmem:[#allocation3 + $0x148] sm:$0xff] %vm1406, %v4362
      %4477 = vst.msk [vmem:[#allocation3 + $0x170] sm:$0xff] %vm1406, %v4364
      %4478 = vst.msk [vmem:[#allocation3 + $0x198] sm:$0xff] %vm1406, %v4366
      %4479 = vst.msk [vmem:[#allocation3 + $0x1c0] sm:$0xff] %vm1406, %v4368
      %4480 = vst.msk [vmem:[#allocation3 + $0x1e8] sm:$0xff] %vm1406, %v4370
      %4481 = vst.msk [vmem:[#allocation3 + $0x210] sm:$0xff] %vm1406, %v4372
      %4482 = vst.msk [vmem:[#allocation3 + $0x238] sm:$0xff] %vm1406, %v4374
      %4483 = vst.msk [vmem:[#allocation3 + $0x260] sm:$0xff] %vm1406, %v4376
      %4484 = vst.msk [vmem:[#allocation3 + $0x288] sm:$0xff] %vm1406, %v4378
      %4485 = vst.msk [vmem:[#allocation3 + $0x2b0] sm:$0xff] %vm1406, %v4380
      %4486 = vst.msk [vmem:[#allocation3 + $0x2d8] sm:$0xff] %vm1406, %v4382
      %4487 = vst.msk [vmem:[#allocation3 + $0x300] sm:$0xff] %vm1406, %v4384
      %4488 = vst.msk [vmem:[#allocation3 + $0x328] sm:$0xff] %vm1406, %v4386
      %4489 = vst.msk [vmem:[#allocation3 + $0x350] sm:$0xff] %vm1406, %v4388
      %4490 = vst.msk [vmem:[#allocation3 + $0x378] sm:$0xff] %vm1406, %v4390
      %4491 = vst.msk [vmem:[#allocation3 + $0x3a0] sm:$0xff] %vm1406, %v4392
      %4492 = vst.msk [vmem:[#allocation3 + $0x3c8] sm:$0xff] %vm1406, %v4394
      %4493 = vst.msk [vmem:[#allocation3 + $0x3f0] sm:$0xff] %vm1406, %v4396
      %4494 = vst.msk [vmem:[#allocation3 + $0x418] sm:$0xff] %vm1406, %v4398
      %4495 = vst.msk [vmem:[#allocation3 + $0x440] sm:$0xff] %vm1406, %v4400
      %4496 = vst.msk [vmem:[#allocation3 + $0x468] sm:$0xff] %vm1406, %v4402
      %4497 = vst.msk [vmem:[#allocation3 + $0x490] sm:$0xff] %vm1406, %v4404
      %4498 = vst.msk [vmem:[#allocation3 + $0x4b8] sm:$0xff] %vm1406, %v4406
      %4499 = vst.msk [vmem:[#allocation3 + $0x4e0] sm:$0xff] %vm1406, %v4408
      %4500 = vst.msk [vmem:[#allocation3 + $0x508] sm:$0xff] %vm1406, %v4410
      %4501 = vst.msk [vmem:[#allocation3 + $0x530] sm:$0xff] %vm1406, %v4412
      %4502 = vst.msk [vmem:[#allocation3 + $0x558] sm:$0xff] %vm1406, %v4414
      %4503 = vst.msk [vmem:[#allocation3 + $0x580] sm:$0xff] %vm1406, %v4416
      %4504 = vst.msk [vmem:[#allocation3 + $0x5a8] sm:$0xff] %vm1406, %v4418
      %4505 = vst.msk [vmem:[#allocation3 + $0x5d0] sm:$0xff] %vm1406, %v4420
      %4506 = vst.msk [vmem:[#allocation3 + $0x5f8] sm:$0xff] %vm1406, %v4422
      %4507 = vst.msk [vmem:[#allocation3 + $0x620] sm:$0xff] %vm1406, %v4424
      %4508 = vst.msk [vmem:[#allocation3 + $0x648] sm:$0xf] %vm1447, %v4426
      %v4509 = vld [vmem:[#allocation2 + $0x18] sm:$0xff]
      %v4510 = vld [vmem:[#allocation2 + $0x20] sm:$0xff]
      %v4511 = vld [vmem:[#allocation2 + $0x28] sm:$0xff]
      %v4512 = vld [vmem:[#allocation2 + $0x30] sm:$0xff]
      %v4513 = vld [vmem:[#allocation2 + $0x38] sm:$0xff]
      %v4514 = vld [vmem:[#allocation2 + $0x40] sm:$0xff]
      %v4515 = vld [vmem:[#allocation2 + $0x48] sm:$0xff]
      %v4516 = vld [vmem:[#allocation2 + $0x50] sm:$0xff]
      %v4517 = vld [vmem:[#allocation2 + $0x58] sm:$0xff]
      %v4518 = vld [vmem:[#allocation2 + $0x60] sm:$0xff]
      %v4519 = vld [vmem:[#allocation2 + $0x68] sm:$0xff]
      %v4520 = vld [vmem:[#allocation2 + $0x70] sm:$0xff]
      %v4521 = vld [vmem:[#allocation2 + $0x78] sm:$0xff]
      %v4522 = vld [vmem:[#allocation2 + $0x80] sm:$0xff]
      %v4523 = vld [vmem:[#allocation2 + $0x88] sm:$0xff]
      %v4524 = vld [vmem:[#allocation2 + $0x90] sm:$0xff]
      %v4525 = vld [vmem:[#allocation2 + $0x98] sm:$0xff]
      %v4526 = vld [vmem:[#allocation2 + $0xa0] sm:$0xff]
      %v4527 = vld [vmem:[#allocation2 + $0xa8] sm:$0xff]
      %v4528 = vld [vmem:[#allocation2 + $0xb0] sm:$0xff]
      %v4529 = vld [vmem:[#allocation2 + $0xb8] sm:$0xff]
      %v4530 = vld [vmem:[#allocation2 + $0xc0] sm:$0xff]
      %v4531 = vld [vmem:[#allocation2 + $0xc8] sm:$0xff]
      %v4532 = vld [vmem:[#allocation2 + $0xd0] sm:$0xff]
      %v4533 = vld [vmem:[#allocation2 + $0xd8] sm:$0xff]
      %v4534 = vld [vmem:[#allocation2 + $0xe0] sm:$0xff]
      %v4535 = vld [vmem:[#allocation2 + $0xe8] sm:$0xff]
      %v4536 = vld [vmem:[#allocation2 + $0xf0] sm:$0xff]
      %v4537 = vld [vmem:[#allocation2 + $0xf8] sm:$0xff]
      %v4538 = vld [vmem:[#allocation2 + $0x100] sm:$0xff]
      %v4539 = vld [vmem:[#allocation2 + $0x108] sm:$0xff]
      %v4540 = vld [vmem:[#allocation2 + $0x110] sm:$0xff]
      %v4541 = vld [vmem:[#allocation2 + $0x118] sm:$0xff]
      %v4542 = vld [vmem:[#allocation2 + $0x120] sm:$0xff]
      %v4543 = vld [vmem:[#allocation2 + $0x128] sm:$0xff]
      %v4544 = vld [vmem:[#allocation2 + $0x130] sm:$0xff]
      %v4545 = vld [vmem:[#allocation2 + $0x138] sm:$0xff]
      %v4546 = vld [vmem:[#allocation2 + $0x140] sm:$0xff]
      %v4547 = vld [vmem:[#allocation2 + $0x148] sm:$0xff]
      %v4548 = vld [vmem:[#allocation2 + $0x150] sm:$0xff]
      %v4549 = vld [vmem:[#allocation2 + $0x158] sm:$0xf]
      %4550 = vst.msk [vmem:[#allocation3 + $0x10] sm:$0xff] %vm1029, %v4509
      %4551 = vst.msk [vmem:[#allocation3 + $0x38] sm:$0xff] %vm1029, %v4510
      %4552 = vst.msk [vmem:[#allocation3 + $0x60] sm:$0xff] %vm1029, %v4511
      %4553 = vst.msk [vmem:[#allocation3 + $0x88] sm:$0xff] %vm1029, %v4512
      %4554 = vst.msk [vmem:[#allocation3 + $0xb0] sm:$0xff] %vm1029, %v4513
      %4555 = vst.msk [vmem:[#allocation3 + $0xd8] sm:$0xff] %vm1029, %v4514
      %4556 = vst.msk [vmem:[#allocation3 + $0x100] sm:$0xff] %vm1029, %v4515
      %4557 = vst.msk [vmem:[#allocation3 + $0x128] sm:$0xff] %vm1029, %v4516
      %4558 = vst.msk [vmem:[#allocation3 + $0x150] sm:$0xff] %vm1029, %v4517
      %4559 = vst.msk [vmem:[#allocation3 + $0x178] sm:$0xff] %vm1029, %v4518
      %4560 = vst.msk [vmem:[#allocation3 + $0x1a0] sm:$0xff] %vm1029, %v4519
      %4561 = vst.msk [vmem:[#allocation3 + $0x1c8] sm:$0xff] %vm1029, %v4520
      %4562 = vst.msk [vmem:[#allocation3 + $0x1f0] sm:$0xff] %vm1029, %v4521
      %4563 = vst.msk [vmem:[#allocation3 + $0x218] sm:$0xff] %vm1029, %v4522
      %4564 = vst.msk [vmem:[#allocation3 + $0x240] sm:$0xff] %vm1029, %v4523
      %4565 = vst.msk [vmem:[#allocation3 + $0x268] sm:$0xff] %vm1029, %v4524
      %4566 = vst.msk [vmem:[#allocation3 + $0x290] sm:$0xff] %vm1029, %v4525
      %4567 = vst.msk [vmem:[#allocation3 + $0x2b8] sm:$0xff] %vm1029, %v4526
      %4568 = vst.msk [vmem:[#allocation3 + $0x2e0] sm:$0xff] %vm1029, %v4527
      %4569 = vst.msk [vmem:[#allocation3 + $0x308] sm:$0xff] %vm1029, %v4528
      %4570 = vst.msk [vmem:[#allocation3 + $0x330] sm:$0xff] %vm1029, %v4529
      %4571 = vst.msk [vmem:[#allocation3 + $0x358] sm:$0xff] %vm1029, %v4530
      %4572 = vst.msk [vmem:[#allocation3 + $0x380] sm:$0xff] %vm1029, %v4531
      %4573 = vst.msk [vmem:[#allocation3 + $0x3a8] sm:$0xff] %vm1029, %v4532
      %4574 = vst.msk [vmem:[#allocation3 + $0x3d0] sm:$0xff] %vm1029, %v4533
      %4575 = vst.msk [vmem:[#allocation3 + $0x3f8] sm:$0xff] %vm1029, %v4534
      %4576 = vst.msk [vmem:[#allocation3 + $0x420] sm:$0xff] %vm1029, %v4535
      %4577 = vst.msk [vmem:[#allocation3 + $0x448] sm:$0xff] %vm1029, %v4536
      %4578 = vst.msk [vmem:[#allocation3 + $0x470] sm:$0xff] %vm1029, %v4537
      %4579 = vst.msk [vmem:[#allocation3 + $0x498] sm:$0xff] %vm1029, %v4538
      %4580 = vst.msk [vmem:[#allocation3 + $0x4c0] sm:$0xff] %vm1029, %v4539
      %4581 = vst.msk [vmem:[#allocation3 + $0x4e8] sm:$0xff] %vm1029, %v4540
      %4582 = vst.msk [vmem:[#allocation3 + $0x510] sm:$0xff] %vm1029, %v4541
      %4583 = vst.msk [vmem:[#allocation3 + $0x538] sm:$0xff] %vm1029, %v4542
      %4584 = vst.msk [vmem:[#allocation3 + $0x560] sm:$0xff] %vm1029, %v4543
      %4585 = vst.msk [vmem:[#allocation3 + $0x588] sm:$0xff] %vm1029, %v4544
      %4586 = vst.msk [vmem:[#allocation3 + $0x5b0] sm:$0xff] %vm1029, %v4545
      %4587 = vst.msk [vmem:[#allocation3 + $0x5d8] sm:$0xff] %vm1029, %v4546
      %4588 = vst.msk [vmem:[#allocation3 + $0x600] sm:$0xff] %vm1029, %v4547
      %4589 = vst.msk [vmem:[#allocation3 + $0x628] sm:$0xff] %vm1029, %v4548
      %4590 = vst.msk [vmem:[#allocation3 + $0x650] sm:$0xf] %vm1076, %v4549
      %v4591 = vld [vmem:[#allocation2 + $0x19] sm:$0xff]
      %v4592 = vld [vmem:[#allocation2 + $0x21] sm:$0xff]
      %v4593 = vld [vmem:[#allocation2 + $0x29] sm:$0xff]
      %v4594 = vld [vmem:[#allocation2 + $0x31] sm:$0xff]
      %v4595 = vld [vmem:[#allocation2 + $0x39] sm:$0xff]
      %v4596 = vld [vmem:[#allocation2 + $0x41] sm:$0xff]
      %v4597 = vld [vmem:[#allocation2 + $0x49] sm:$0xff]
      %v4598 = vld [vmem:[#allocation2 + $0x51] sm:$0xff]
      %v4599 = vld [vmem:[#allocation2 + $0x59] sm:$0xff]
      %v4600 = vld [vmem:[#allocation2 + $0x61] sm:$0xff]
      %v4601 = vld [vmem:[#allocation2 + $0x69] sm:$0xff]
      %v4602 = vld [vmem:[#allocation2 + $0x71] sm:$0xff]
      %v4603 = vld [vmem:[#allocation2 + $0x79] sm:$0xff]
      %v4604 = vld [vmem:[#allocation2 + $0x81] sm:$0xff]
      %v4605 = vld [vmem:[#allocation2 + $0x89] sm:$0xff]
      %v4606 = vld [vmem:[#allocation2 + $0x91] sm:$0xff]
      %v4607 = vld [vmem:[#allocation2 + $0x99] sm:$0xff]
      %v4608 = vld [vmem:[#allocation2 + $0xa1] sm:$0xff]
      %v4609 = vld [vmem:[#allocation2 + $0xa9] sm:$0xff]
      %v4610 = vld [vmem:[#allocation2 + $0xb1] sm:$0xff]
      %v4611 = vld [vmem:[#allocation2 + $0xb9] sm:$0xff]
      %v4612 = vld [vmem:[#allocation2 + $0xc1] sm:$0xff]
      %v4613 = vld [vmem:[#allocation2 + $0xc9] sm:$0xff]
      %v4614 = vld [vmem:[#allocation2 + $0xd1] sm:$0xff]
      %v4615 = vld [vmem:[#allocation2 + $0xd9] sm:$0xff]
      %v4616 = vld [vmem:[#allocation2 + $0xe1] sm:$0xff]
      %v4617 = vld [vmem:[#allocation2 + $0xe9] sm:$0xff]
      %v4618 = vld [vmem:[#allocation2 + $0xf1] sm:$0xff]
      %v4619 = vld [vmem:[#allocation2 + $0xf9] sm:$0xff]
      %v4620 = vld [vmem:[#allocation2 + $0x101] sm:$0xff]
      %v4621 = vld [vmem:[#allocation2 + $0x109] sm:$0xff]
      %v4622 = vld [vmem:[#allocation2 + $0x111] sm:$0xff]
      %v4623 = vld [vmem:[#allocation2 + $0x119] sm:$0xff]
      %v4624 = vld [vmem:[#allocation2 + $0x121] sm:$0xff]
      %v4625 = vld [vmem:[#allocation2 + $0x129] sm:$0xff]
      %v4626 = vld [vmem:[#allocation2 + $0x131] sm:$0xff]
      %v4627 = vld [vmem:[#allocation2 + $0x139] sm:$0xff]
      %v4628 = vld [vmem:[#allocation2 + $0x141] sm:$0xff]
      %v4629 = vld [vmem:[#allocation2 + $0x149] sm:$0xff]
      %v4630 = vld [vmem:[#allocation2 + $0x151] sm:$0xff]
      %v4631 = vld [vmem:[#allocation2 + $0x159] sm:$0xf]
      %4673 = vrot.lane.b32.xlu0 %v4591, 64
      %v4674 = vpop.permute.xlu0 %4673
      %4675 = vrot.lane.b32.xlu0 %v4592, 64
      %v4676 = vpop.permute.xlu0 %4675
      %4677 = vrot.lane.b32.xlu0 %v4593, 64
      %v4678 = vpop.permute.xlu0 %4677
      %4679 = vrot.lane.b32.xlu0 %v4594, 64
      %v4680 = vpop.permute.xlu0 %4679
      %4681 = vrot.lane.b32.xlu0 %v4595, 64
      %v4682 = vpop.permute.xlu0 %4681
      %4683 = vrot.lane.b32.xlu0 %v4596, 64
      %v4684 = vpop.permute.xlu0 %4683
      %4685 = vrot.lane.b32.xlu0 %v4597, 64
      %v4686 = vpop.permute.xlu0 %4685
      %4687 = vrot.lane.b32.xlu0 %v4598, 64
      %v4688 = vpop.permute.xlu0 %4687
      %4689 = vrot.lane.b32.xlu0 %v4599, 64
      %v4690 = vpop.permute.xlu0 %4689
      %4691 = vrot.lane.b32.xlu0 %v4600, 64
      %v4692 = vpop.permute.xlu0 %4691
      %4693 = vrot.lane.b32.xlu0 %v4601, 64
      %v4694 = vpop.permute.xlu0 %4693
      %4695 = vrot.lane.b32.xlu0 %v4602, 64
      %v4696 = vpop.permute.xlu0 %4695
      %4697 = vrot.lane.b32.xlu0 %v4603, 64
      %v4698 = vpop.permute.xlu0 %4697
      %4699 = vrot.lane.b32.xlu0 %v4604, 64
      %v4700 = vpop.permute.xlu0 %4699
      %4701 = vrot.lane.b32.xlu0 %v4605, 64
      %v4702 = vpop.permute.xlu0 %4701
      %4703 = vrot.lane.b32.xlu0 %v4606, 64
      %v4704 = vpop.permute.xlu0 %4703
      %4705 = vrot.lane.b32.xlu0 %v4607, 64
      %v4706 = vpop.permute.xlu0 %4705
      %4707 = vrot.lane.b32.xlu0 %v4608, 64
      %v4708 = vpop.permute.xlu0 %4707
      %4709 = vrot.lane.b32.xlu0 %v4609, 64
      %v4710 = vpop.permute.xlu0 %4709
      %4711 = vrot.lane.b32.xlu0 %v4610, 64
      %v4712 = vpop.permute.xlu0 %4711
      %4713 = vrot.lane.b32.xlu0 %v4611, 64
      %v4714 = vpop.permute.xlu0 %4713
      %4715 = vrot.lane.b32.xlu0 %v4612, 64
      %v4716 = vpop.permute.xlu0 %4715
      %4717 = vrot.lane.b32.xlu0 %v4613, 64
      %v4718 = vpop.permute.xlu0 %4717
      %4719 = vrot.lane.b32.xlu0 %v4614, 64
      %v4720 = vpop.permute.xlu0 %4719
      %4721 = vrot.lane.b32.xlu0 %v4615, 64
      %v4722 = vpop.permute.xlu0 %4721
      %4723 = vrot.lane.b32.xlu0 %v4616, 64
      %v4724 = vpop.permute.xlu0 %4723
      %4725 = vrot.lane.b32.xlu0 %v4617, 64
      %v4726 = vpop.permute.xlu0 %4725
      %4727 = vrot.lane.b32.xlu0 %v4618, 64
      %v4728 = vpop.permute.xlu0 %4727
      %4729 = vrot.lane.b32.xlu0 %v4619, 64
      %v4730 = vpop.permute.xlu0 %4729
      %4731 = vrot.lane.b32.xlu0 %v4620, 64
      %v4732 = vpop.permute.xlu0 %4731
      %4733 = vrot.lane.b32.xlu0 %v4621, 64
      %v4734 = vpop.permute.xlu0 %4733
      %4735 = vrot.lane.b32.xlu0 %v4622, 64
      %v4736 = vpop.permute.xlu0 %4735
      %4737 = vrot.lane.b32.xlu0 %v4623, 64
      %v4738 = vpop.permute.xlu0 %4737
      %4739 = vrot.lane.b32.xlu0 %v4624, 64
      %v4740 = vpop.permute.xlu0 %4739
      %4741 = vrot.lane.b32.xlu0 %v4625, 64
      %v4742 = vpop.permute.xlu0 %4741
      %4743 = vrot.lane.b32.xlu0 %v4626, 64
      %v4744 = vpop.permute.xlu0 %4743
      %4745 = vrot.lane.b32.xlu0 %v4627, 64
      %v4746 = vpop.permute.xlu0 %4745
      %4747 = vrot.lane.b32.xlu0 %v4628, 64
      %v4748 = vpop.permute.xlu0 %4747
      %4749 = vrot.lane.b32.xlu0 %v4629, 64
      %v4750 = vpop.permute.xlu0 %4749
      %4751 = vrot.lane.b32.xlu0 %v4630, 64
      %v4752 = vpop.permute.xlu0 %4751
      %4753 = vrot.lane.b32.xlu0 %v4631, 64
      %v4754 = vpop.permute.xlu0 %4753
      %4796 = vst.msk [vmem:[#allocation3 + $0x10] sm:$0xff] %vm1406, %v4674
      %4797 = vst.msk [vmem:[#allocation3 + $0x38] sm:$0xff] %vm1406, %v4676
      %4798 = vst.msk [vmem:[#allocation3 + $0x60] sm:$0xff] %vm1406, %v4678
      %4799 = vst.msk [vmem:[#allocation3 + $0x88] sm:$0xff] %vm1406, %v4680
      %4800 = vst.msk [vmem:[#allocation3 + $0xb0] sm:$0xff] %vm1406, %v4682
      %4801 = vst.msk [vmem:[#allocation3 + $0xd8] sm:$0xff] %vm1406, %v4684
      %4802 = vst.msk [vmem:[#allocation3 + $0x100] sm:$0xff] %vm1406, %v4686
      %4803 = vst.msk [vmem:[#allocation3 + $0x128] sm:$0xff] %vm1406, %v4688
      %4804 = vst.msk [vmem:[#allocation3 + $0x150] sm:$0xff] %vm1406, %v4690
      %4805 = vst.msk [vmem:[#allocation3 + $0x178] sm:$0xff] %vm1406, %v4692
      %4806 = vst.msk [vmem:[#allocation3 + $0x1a0] sm:$0xff] %vm1406, %v4694
      %4807 = vst.msk [vmem:[#allocation3 + $0x1c8] sm:$0xff] %vm1406, %v4696
      %4808 = vst.msk [vmem:[#allocation3 + $0x1f0] sm:$0xff] %vm1406, %v4698
      %4809 = vst.msk [vmem:[#allocation3 + $0x218] sm:$0xff] %vm1406, %v4700
      %4810 = vst.msk [vmem:[#allocation3 + $0x240] sm:$0xff] %vm1406, %v4702
      %4811 = vst.msk [vmem:[#allocation3 + $0x268] sm:$0xff] %vm1406, %v4704
      %4812 = vst.msk [vmem:[#allocation3 + $0x290] sm:$0xff] %vm1406, %v4706
      %4813 = vst.msk [vmem:[#allocation3 + $0x2b8] sm:$0xff] %vm1406, %v4708
      %4814 = vst.msk [vmem:[#allocation3 + $0x2e0] sm:$0xff] %vm1406, %v4710
      %4815 = vst.msk [vmem:[#allocation3 + $0x308] sm:$0xff] %vm1406, %v4712
      %4816 = vst.msk [vmem:[#allocation3 + $0x330] sm:$0xff] %vm1406, %v4714
      %4817 = vst.msk [vmem:[#allocation3 + $0x358] sm:$0xff] %vm1406, %v4716
      %4818 = vst.msk [vmem:[#allocation3 + $0x380] sm:$0xff] %vm1406, %v4718
      %4819 = vst.msk [vmem:[#allocation3 + $0x3a8] sm:$0xff] %vm1406, %v4720
      %4820 = vst.msk [vmem:[#allocation3 + $0x3d0] sm:$0xff] %vm1406, %v4722
      %4821 = vst.msk [vmem:[#allocation3 + $0x3f8] sm:$0xff] %vm1406, %v4724
      %4822 = vst.msk [vmem:[#allocation3 + $0x420] sm:$0xff] %vm1406, %v4726
      %4823 = vst.msk [vmem:[#allocation3 + $0x448] sm:$0xff] %vm1406, %v4728
      %4824 = vst.msk [vmem:[#allocation3 + $0x470] sm:$0xff] %vm1406, %v4730
      %4825 = vst.msk [vmem:[#allocation3 + $0x498] sm:$0xff] %vm1406, %v4732
      %4826 = vst.msk [vmem:[#allocation3 + $0x4c0] sm:$0xff] %vm1406, %v4734
      %4827 = vst.msk [vmem:[#allocation3 + $0x4e8] sm:$0xff] %vm1406, %v4736
      %4828 = vst.msk [vmem:[#allocation3 + $0x510] sm:$0xff] %vm1406, %v4738
      %4829 = vst.msk [vmem:[#allocation3 + $0x538] sm:$0xff] %vm1406, %v4740
      %4830 = vst.msk [vmem:[#allocation3 + $0x560] sm:$0xff] %vm1406, %v4742
      %4831 = vst.msk [vmem:[#allocation3 + $0x588] sm:$0xff] %vm1406, %v4744
      %4832 = vst.msk [vmem:[#allocation3 + $0x5b0] sm:$0xff] %vm1406, %v4746
      %4833 = vst.msk [vmem:[#allocation3 + $0x5d8] sm:$0xff] %vm1406, %v4748
      %4834 = vst.msk [vmem:[#allocation3 + $0x600] sm:$0xff] %vm1406, %v4750
      %4835 = vst.msk [vmem:[#allocation3 + $0x628] sm:$0xff] %vm1406, %v4752
      %4836 = vst.msk [vmem:[#allocation3 + $0x650] sm:$0xf] %vm1447, %v4754
      %v4837 = vld [vmem:[#allocation2 + $0x29] sm:$0xff]
      %v4838 = vld [vmem:[#allocation2 + $0x31] sm:$0xff]
      %v4839 = vld [vmem:[#allocation2 + $0x39] sm:$0xff]
      %v4840 = vld [vmem:[#allocation2 + $0x41] sm:$0xff]
      %v4841 = vld [vmem:[#allocation2 + $0x49] sm:$0xff]
      %v4842 = vld [vmem:[#allocation2 + $0x51] sm:$0xff]
      %v4843 = vld [vmem:[#allocation2 + $0x59] sm:$0xff]
      %v4844 = vld [vmem:[#allocation2 + $0x61] sm:$0xff]
      %v4845 = vld [vmem:[#allocation2 + $0x69] sm:$0xff]
      %v4846 = vld [vmem:[#allocation2 + $0x71] sm:$0xff]
      %v4847 = vld [vmem:[#allocation2 + $0x79] sm:$0xff]
      %v4848 = vld [vmem:[#allocation2 + $0x81] sm:$0xff]
      %v4849 = vld [vmem:[#allocation2 + $0x89] sm:$0xff]
      %v4850 = vld [vmem:[#allocation2 + $0x91] sm:$0xff]
      %v4851 = vld [vmem:[#allocation2 + $0x99] sm:$0xff]
      %v4852 = vld [vmem:[#allocation2 + $0xa1] sm:$0xff]
      %v4853 = vld [vmem:[#allocation2 + $0xa9] sm:$0xff]
      %v4854 = vld [vmem:[#allocation2 + $0xb1] sm:$0xff]
      %v4855 = vld [vmem:[#allocation2 + $0xb9] sm:$0xff]
      %v4856 = vld [vmem:[#allocation2 + $0xc1] sm:$0xff]
      %v4857 = vld [vmem:[#allocation2 + $0xc9] sm:$0xff]
      %v4858 = vld [vmem:[#allocation2 + $0xd1] sm:$0xff]
      %v4859 = vld [vmem:[#allocation2 + $0xd9] sm:$0xff]
      %v4860 = vld [vmem:[#allocation2 + $0xe1] sm:$0xff]
      %v4861 = vld [vmem:[#allocation2 + $0xe9] sm:$0xff]
      %v4862 = vld [vmem:[#allocation2 + $0xf1] sm:$0xff]
      %v4863 = vld [vmem:[#allocation2 + $0xf9] sm:$0xff]
      %v4864 = vld [vmem:[#allocation2 + $0x101] sm:$0xff]
      %v4865 = vld [vmem:[#allocation2 + $0x109] sm:$0xff]
      %v4866 = vld [vmem:[#allocation2 + $0x111] sm:$0xff]
      %v4867 = vld [vmem:[#allocation2 + $0x119] sm:$0xff]
      %v4868 = vld [vmem:[#allocation2 + $0x121] sm:$0xff]
      %v4869 = vld [vmem:[#allocation2 + $0x129] sm:$0xff]
      %v4870 = vld [vmem:[#allocation2 + $0x131] sm:$0xff]
      %v4871 = vld [vmem:[#allocation2 + $0x139] sm:$0xff]
      %v4872 = vld [vmem:[#allocation2 + $0x141] sm:$0xff]
      %v4873 = vld [vmem:[#allocation2 + $0x149] sm:$0xff]
      %v4874 = vld [vmem:[#allocation2 + $0x151] sm:$0xff]
      %v4875 = vld [vmem:[#allocation2 + $0x159] sm:$0xff]
      %v4876 = vld [vmem:[#allocation2 + $0x161] sm:$0xff]
      %v4877 = vld [vmem:[#allocation2 + $0x169] sm:$0xf]
      %4878 = vst.msk [vmem:[#allocation3 + $0x18] sm:$0xff] %vm1029, %v4837
      %4879 = vst.msk [vmem:[#allocation3 + $0x40] sm:$0xff] %vm1029, %v4838
      %4880 = vst.msk [vmem:[#allocation3 + $0x68] sm:$0xff] %vm1029, %v4839
      %4881 = vst.msk [vmem:[#allocation3 + $0x90] sm:$0xff] %vm1029, %v4840
      %4882 = vst.msk [vmem:[#allocation3 + $0xb8] sm:$0xff] %vm1029, %v4841
      %4883 = vst.msk [vmem:[#allocation3 + $0xe0] sm:$0xff] %vm1029, %v4842
      %4884 = vst.msk [vmem:[#allocation3 + $0x108] sm:$0xff] %vm1029, %v4843
      %4885 = vst.msk [vmem:[#allocation3 + $0x130] sm:$0xff] %vm1029, %v4844
      %4886 = vst.msk [vmem:[#allocation3 + $0x158] sm:$0xff] %vm1029, %v4845
      %4887 = vst.msk [vmem:[#allocation3 + $0x180] sm:$0xff] %vm1029, %v4846
      %4888 = vst.msk [vmem:[#allocation3 + $0x1a8] sm:$0xff] %vm1029, %v4847
      %4889 = vst.msk [vmem:[#allocation3 + $0x1d0] sm:$0xff] %vm1029, %v4848
      %4890 = vst.msk [vmem:[#allocation3 + $0x1f8] sm:$0xff] %vm1029, %v4849
      %4891 = vst.msk [vmem:[#allocation3 + $0x220] sm:$0xff] %vm1029, %v4850
      %4892 = vst.msk [vmem:[#allocation3 + $0x248] sm:$0xff] %vm1029, %v4851
      %4893 = vst.msk [vmem:[#allocation3 + $0x270] sm:$0xff] %vm1029, %v4852
      %4894 = vst.msk [vmem:[#allocation3 + $0x298] sm:$0xff] %vm1029, %v4853
      %4895 = vst.msk [vmem:[#allocation3 + $0x2c0] sm:$0xff] %vm1029, %v4854
      %4896 = vst.msk [vmem:[#allocation3 + $0x2e8] sm:$0xff] %vm1029, %v4855
      %4897 = vst.msk [vmem:[#allocation3 + $0x310] sm:$0xff] %vm1029, %v4856
      %4898 = vst.msk [vmem:[#allocation3 + $0x338] sm:$0xff] %vm1029, %v4857
      %4899 = vst.msk [vmem:[#allocation3 + $0x360] sm:$0xff] %vm1029, %v4858
      %4900 = vst.msk [vmem:[#allocation3 + $0x388] sm:$0xff] %vm1029, %v4859
      %4901 = vst.msk [vmem:[#allocation3 + $0x3b0] sm:$0xff] %vm1029, %v4860
      %4902 = vst.msk [vmem:[#allocation3 + $0x3d8] sm:$0xff] %vm1029, %v4861
      %4903 = vst.msk [vmem:[#allocation3 + $0x400] sm:$0xff] %vm1029, %v4862
      %4904 = vst.msk [vmem:[#allocation3 + $0x428] sm:$0xff] %vm1029, %v4863
      %4905 = vst.msk [vmem:[#allocation3 + $0x450] sm:$0xff] %vm1029, %v4864
      %4906 = vst.msk [vmem:[#allocation3 + $0x478] sm:$0xff] %vm1029, %v4865
      %4907 = vst.msk [vmem:[#allocation3 + $0x4a0] sm:$0xff] %vm1029, %v4866
      %4908 = vst.msk [vmem:[#allocation3 + $0x4c8] sm:$0xff] %vm1029, %v4867
      %4909 = vst.msk [vmem:[#allocation3 + $0x4f0] sm:$0xff] %vm1029, %v4868
      %4910 = vst.msk [vmem:[#allocation3 + $0x518] sm:$0xff] %vm1029, %v4869
      %4911 = vst.msk [vmem:[#allocation3 + $0x540] sm:$0xff] %vm1029, %v4870
      %4912 = vst.msk [vmem:[#allocation3 + $0x568] sm:$0xff] %vm1029, %v4871
      %4913 = vst.msk [vmem:[#allocation3 + $0x590] sm:$0xff] %vm1029, %v4872
      %4914 = vst.msk [vmem:[#allocation3 + $0x5b8] sm:$0xff] %vm1029, %v4873
      %4915 = vst.msk [vmem:[#allocation3 + $0x5e0] sm:$0xff] %vm1029, %v4874
      %4916 = vst.msk [vmem:[#allocation3 + $0x608] sm:$0xff] %vm1029, %v4875
      %4917 = vst.msk [vmem:[#allocation3 + $0x630] sm:$0xff] %vm1029, %v4876
      %4918 = vst.msk [vmem:[#allocation3 + $0x658] sm:$0xf] %vm1076, %v4877
      %v4919 = vld [vmem:[#allocation2 + $0x2a] sm:$0xff]
      %v4920 = vld [vmem:[#allocation2 + $0x32] sm:$0xff]
      %v4921 = vld [vmem:[#allocation2 + $0x3a] sm:$0xff]
      %v4922 = vld [vmem:[#allocation2 + $0x42] sm:$0xff]
      %v4923 = vld [vmem:[#allocation2 + $0x4a] sm:$0xff]
      %v4924 = vld [vmem:[#allocation2 + $0x52] sm:$0xff]
      %v4925 = vld [vmem:[#allocation2 + $0x5a] sm:$0xff]
      %v4926 = vld [vmem:[#allocation2 + $0x62] sm:$0xff]
      %v4927 = vld [vmem:[#allocation2 + $0x6a] sm:$0xff]
      %v4928 = vld [vmem:[#allocation2 + $0x72] sm:$0xff]
      %v4929 = vld [vmem:[#allocation2 + $0x7a] sm:$0xff]
      %v4930 = vld [vmem:[#allocation2 + $0x82] sm:$0xff]
      %v4931 = vld [vmem:[#allocation2 + $0x8a] sm:$0xff]
      %v4932 = vld [vmem:[#allocation2 + $0x92] sm:$0xff]
      %v4933 = vld [vmem:[#allocation2 + $0x9a] sm:$0xff]
      %v4934 = vld [vmem:[#allocation2 + $0xa2] sm:$0xff]
      %v4935 = vld [vmem:[#allocation2 + $0xaa] sm:$0xff]
      %v4936 = vld [vmem:[#allocation2 + $0xb2] sm:$0xff]
      %v4937 = vld [vmem:[#allocation2 + $0xba] sm:$0xff]
      %v4938 = vld [vmem:[#allocation2 + $0xc2] sm:$0xff]
      %v4939 = vld [vmem:[#allocation2 + $0xca] sm:$0xff]
      %v4940 = vld [vmem:[#allocation2 + $0xd2] sm:$0xff]
      %v4941 = vld [vmem:[#allocation2 + $0xda] sm:$0xff]
      %v4942 = vld [vmem:[#allocation2 + $0xe2] sm:$0xff]
      %v4943 = vld [vmem:[#allocation2 + $0xea] sm:$0xff]
      %v4944 = vld [vmem:[#allocation2 + $0xf2] sm:$0xff]
      %v4945 = vld [vmem:[#allocation2 + $0xfa] sm:$0xff]
      %v4946 = vld [vmem:[#allocation2 + $0x102] sm:$0xff]
      %v4947 = vld [vmem:[#allocation2 + $0x10a] sm:$0xff]
      %v4948 = vld [vmem:[#allocation2 + $0x112] sm:$0xff]
      %v4949 = vld [vmem:[#allocation2 + $0x11a] sm:$0xff]
      %v4950 = vld [vmem:[#allocation2 + $0x122] sm:$0xff]
      %v4951 = vld [vmem:[#allocation2 + $0x12a] sm:$0xff]
      %v4952 = vld [vmem:[#allocation2 + $0x132] sm:$0xff]
      %v4953 = vld [vmem:[#allocation2 + $0x13a] sm:$0xff]
      %v4954 = vld [vmem:[#allocation2 + $0x142] sm:$0xff]
      %v4955 = vld [vmem:[#allocation2 + $0x14a] sm:$0xff]
      %v4956 = vld [vmem:[#allocation2 + $0x152] sm:$0xff]
      %v4957 = vld [vmem:[#allocation2 + $0x15a] sm:$0xff]
      %v4958 = vld [vmem:[#allocation2 + $0x162] sm:$0xff]
      %v4959 = vld [vmem:[#allocation2 + $0x16a] sm:$0xf]
      %5001 = vrot.lane.b32.xlu0 %v4919, 64
      %v5002 = vpop.permute.xlu0 %5001
      %5003 = vrot.lane.b32.xlu0 %v4920, 64
      %v5004 = vpop.permute.xlu0 %5003
      %5005 = vrot.lane.b32.xlu0 %v4921, 64
      %v5006 = vpop.permute.xlu0 %5005
      %5007 = vrot.lane.b32.xlu0 %v4922, 64
      %v5008 = vpop.permute.xlu0 %5007
      %5009 = vrot.lane.b32.xlu0 %v4923, 64
      %v5010 = vpop.permute.xlu0 %5009
      %5011 = vrot.lane.b32.xlu0 %v4924, 64
      %v5012 = vpop.permute.xlu0 %5011
      %5013 = vrot.lane.b32.xlu0 %v4925, 64
      %v5014 = vpop.permute.xlu0 %5013
      %5015 = vrot.lane.b32.xlu0 %v4926, 64
      %v5016 = vpop.permute.xlu0 %5015
      %5017 = vrot.lane.b32.xlu0 %v4927, 64
      %v5018 = vpop.permute.xlu0 %5017
      %5019 = vrot.lane.b32.xlu0 %v4928, 64
      %v5020 = vpop.permute.xlu0 %5019
      %5021 = vrot.lane.b32.xlu0 %v4929, 64
      %v5022 = vpop.permute.xlu0 %5021
      %5023 = vrot.lane.b32.xlu0 %v4930, 64
      %v5024 = vpop.permute.xlu0 %5023
      %5025 = vrot.lane.b32.xlu0 %v4931, 64
      %v5026 = vpop.permute.xlu0 %5025
      %5027 = vrot.lane.b32.xlu0 %v4932, 64
      %v5028 = vpop.permute.xlu0 %5027
      %5029 = vrot.lane.b32.xlu0 %v4933, 64
      %v5030 = vpop.permute.xlu0 %5029
      %5031 = vrot.lane.b32.xlu0 %v4934, 64
      %v5032 = vpop.permute.xlu0 %5031
      %5033 = vrot.lane.b32.xlu0 %v4935, 64
      %v5034 = vpop.permute.xlu0 %5033
      %5035 = vrot.lane.b32.xlu0 %v4936, 64
      %v5036 = vpop.permute.xlu0 %5035
      %5037 = vrot.lane.b32.xlu0 %v4937, 64
      %v5038 = vpop.permute.xlu0 %5037
      %5039 = vrot.lane.b32.xlu0 %v4938, 64
      %v5040 = vpop.permute.xlu0 %5039
      %5041 = vrot.lane.b32.xlu0 %v4939, 64
      %v5042 = vpop.permute.xlu0 %5041
      %5043 = vrot.lane.b32.xlu0 %v4940, 64
      %v5044 = vpop.permute.xlu0 %5043
      %5045 = vrot.lane.b32.xlu0 %v4941, 64
      %v5046 = vpop.permute.xlu0 %5045
      %5047 = vrot.lane.b32.xlu0 %v4942, 64
      %v5048 = vpop.permute.xlu0 %5047
      %5049 = vrot.lane.b32.xlu0 %v4943, 64
      %v5050 = vpop.permute.xlu0 %5049
      %5051 = vrot.lane.b32.xlu0 %v4944, 64
      %v5052 = vpop.permute.xlu0 %5051
      %5053 = vrot.lane.b32.xlu0 %v4945, 64
      %v5054 = vpop.permute.xlu0 %5053
      %5055 = vrot.lane.b32.xlu0 %v4946, 64
      %v5056 = vpop.permute.xlu0 %5055
      %5057 = vrot.lane.b32.xlu0 %v4947, 64
      %v5058 = vpop.permute.xlu0 %5057
      %5059 = vrot.lane.b32.xlu0 %v4948, 64
      %v5060 = vpop.permute.xlu0 %5059
      %5061 = vrot.lane.b32.xlu0 %v4949, 64
      %v5062 = vpop.permute.xlu0 %5061
      %5063 = vrot.lane.b32.xlu0 %v4950, 64
      %v5064 = vpop.permute.xlu0 %5063
      %5065 = vrot.lane.b32.xlu0 %v4951, 64
      %v5066 = vpop.permute.xlu0 %5065
      %5067 = vrot.lane.b32.xlu0 %v4952, 64
      %v5068 = vpop.permute.xlu0 %5067
      %5069 = vrot.lane.b32.xlu0 %v4953, 64
      %v5070 = vpop.permute.xlu0 %5069
      %5071 = vrot.lane.b32.xlu0 %v4954, 64
      %v5072 = vpop.permute.xlu0 %5071
      %5073 = vrot.lane.b32.xlu0 %v4955, 64
      %v5074 = vpop.permute.xlu0 %5073
      %5075 = vrot.lane.b32.xlu0 %v4956, 64
      %v5076 = vpop.permute.xlu0 %5075
      %5077 = vrot.lane.b32.xlu0 %v4957, 64
      %v5078 = vpop.permute.xlu0 %5077
      %5079 = vrot.lane.b32.xlu0 %v4958, 64
      %v5080 = vpop.permute.xlu0 %5079
      %5081 = vrot.lane.b32.xlu0 %v4959, 64
      %v5082 = vpop.permute.xlu0 %5081
      %5124 = vst.msk [vmem:[#allocation3 + $0x18] sm:$0xff] %vm1406, %v5002
      %5125 = vst.msk [vmem:[#allocation3 + $0x40] sm:$0xff] %vm1406, %v5004
      %5126 = vst.msk [vmem:[#allocation3 + $0x68] sm:$0xff] %vm1406, %v5006
      %5127 = vst.msk [vmem:[#allocation3 + $0x90] sm:$0xff] %vm1406, %v5008
      %5128 = vst.msk [vmem:[#allocation3 + $0xb8] sm:$0xff] %vm1406, %v5010
      %5129 = vst.msk [vmem:[#allocation3 + $0xe0] sm:$0xff] %vm1406, %v5012
      %5130 = vst.msk [vmem:[#allocation3 + $0x108] sm:$0xff] %vm1406, %v5014
      %5131 = vst.msk [vmem:[#allocation3 + $0x130] sm:$0xff] %vm1406, %v5016
      %5132 = vst.msk [vmem:[#allocation3 + $0x158] sm:$0xff] %vm1406, %v5018
      %5133 = vst.msk [vmem:[#allocation3 + $0x180] sm:$0xff] %vm1406, %v5020
      %5134 = vst.msk [vmem:[#allocation3 + $0x1a8] sm:$0xff] %vm1406, %v5022
      %5135 = vst.msk [vmem:[#allocation3 + $0x1d0] sm:$0xff] %vm1406, %v5024
      %5136 = vst.msk [vmem:[#allocation3 + $0x1f8] sm:$0xff] %vm1406, %v5026
      %5137 = vst.msk [vmem:[#allocation3 + $0x220] sm:$0xff] %vm1406, %v5028
      %5138 = vst.msk [vmem:[#allocation3 + $0x248] sm:$0xff] %vm1406, %v5030
      %5139 = vst.msk [vmem:[#allocation3 + $0x270] sm:$0xff] %vm1406, %v5032
      %5140 = vst.msk [vmem:[#allocation3 + $0x298] sm:$0xff] %vm1406, %v5034
      %5141 = vst.msk [vmem:[#allocation3 + $0x2c0] sm:$0xff] %vm1406, %v5036
      %5142 = vst.msk [vmem:[#allocation3 + $0x2e8] sm:$0xff] %vm1406, %v5038
      %5143 = vst.msk [vmem:[#allocation3 + $0x310] sm:$0xff] %vm1406, %v5040
      %5144 = vst.msk [vmem:[#allocation3 + $0x338] sm:$0xff] %vm1406, %v5042
      %5145 = vst.msk [vmem:[#allocation3 + $0x360] sm:$0xff] %vm1406, %v5044
      %5146 = vst.msk [vmem:[#allocation3 + $0x388] sm:$0xff] %vm1406, %v5046
      %5147 = vst.msk [vmem:[#allocation3 + $0x3b0] sm:$0xff] %vm1406, %v5048
      %5148 = vst.msk [vmem:[#allocation3 + $0x3d8] sm:$0xff] %vm1406, %v5050
      %5149 = vst.msk [vmem:[#allocation3 + $0x400] sm:$0xff] %vm1406, %v5052
      %5150 = vst.msk [vmem:[#allocation3 + $0x428] sm:$0xff] %vm1406, %v5054
      %5151 = vst.msk [vmem:[#allocation3 + $0x450] sm:$0xff] %vm1406, %v5056
      %5152 = vst.msk [vmem:[#allocation3 + $0x478] sm:$0xff] %vm1406, %v5058
      %5153 = vst.msk [vmem:[#allocation3 + $0x4a0] sm:$0xff] %vm1406, %v5060
      %5154 = vst.msk [vmem:[#allocation3 + $0x4c8] sm:$0xff] %vm1406, %v5062
      %5155 = vst.msk [vmem:[#allocation3 + $0x4f0] sm:$0xff] %vm1406, %v5064
      %5156 = vst.msk [vmem:[#allocation3 + $0x518] sm:$0xff] %vm1406, %v5066
      %5157 = vst.msk [vmem:[#allocation3 + $0x540] sm:$0xff] %vm1406, %v5068
      %5158 = vst.msk [vmem:[#allocation3 + $0x568] sm:$0xff] %vm1406, %v5070
      %5159 = vst.msk [vmem:[#allocation3 + $0x590] sm:$0xff] %vm1406, %v5072
      %5160 = vst.msk [vmem:[#allocation3 + $0x5b8] sm:$0xff] %vm1406, %v5074
      %5161 = vst.msk [vmem:[#allocation3 + $0x5e0] sm:$0xff] %vm1406, %v5076
      %5162 = vst.msk [vmem:[#allocation3 + $0x608] sm:$0xff] %vm1406, %v5078
      %5163 = vst.msk [vmem:[#allocation3 + $0x630] sm:$0xff] %vm1406, %v5080
      %5164 = vst.msk [vmem:[#allocation3 + $0x658] sm:$0xf] %vm1447, %v5082
      %v5165 = vld [vmem:[#allocation2 + $0x2b] sm:$0xff]
      %v5166 = vld [vmem:[#allocation2 + $0x33] sm:$0xff]
      %v5167 = vld [vmem:[#allocation2 + $0x3b] sm:$0xff]
      %v5168 = vld [vmem:[#allocation2 + $0x43] sm:$0xff]
      %v5169 = vld [vmem:[#allocation2 + $0x4b] sm:$0xff]
      %v5170 = vld [vmem:[#allocation2 + $0x53] sm:$0xff]
      %v5171 = vld [vmem:[#allocation2 + $0x5b] sm:$0xff]
      %v5172 = vld [vmem:[#allocation2 + $0x63] sm:$0xff]
      %v5173 = vld [vmem:[#allocation2 + $0x6b] sm:$0xff]
      %v5174 = vld [vmem:[#allocation2 + $0x73] sm:$0xff]
      %v5175 = vld [vmem:[#allocation2 + $0x7b] sm:$0xff]
      %v5176 = vld [vmem:[#allocation2 + $0x83] sm:$0xff]
      %v5177 = vld [vmem:[#allocation2 + $0x8b] sm:$0xff]
      %v5178 = vld [vmem:[#allocation2 + $0x93] sm:$0xff]
      %v5179 = vld [vmem:[#allocation2 + $0x9b] sm:$0xff]
      %v5180 = vld [vmem:[#allocation2 + $0xa3] sm:$0xff]
      %v5181 = vld [vmem:[#allocation2 + $0xab] sm:$0xff]
      %v5182 = vld [vmem:[#allocation2 + $0xb3] sm:$0xff]
      %v5183 = vld [vmem:[#allocation2 + $0xbb] sm:$0xff]
      %v5184 = vld [vmem:[#allocation2 + $0xc3] sm:$0xff]
      %v5185 = vld [vmem:[#allocation2 + $0xcb] sm:$0xff]
      %v5186 = vld [vmem:[#allocation2 + $0xd3] sm:$0xff]
      %v5187 = vld [vmem:[#allocation2 + $0xdb] sm:$0xff]
      %v5188 = vld [vmem:[#allocation2 + $0xe3] sm:$0xff]
      %v5189 = vld [vmem:[#allocation2 + $0xeb] sm:$0xff]
      %v5190 = vld [vmem:[#allocation2 + $0xf3] sm:$0xff]
      %v5191 = vld [vmem:[#allocation2 + $0xfb] sm:$0xff]
      %v5192 = vld [vmem:[#allocation2 + $0x103] sm:$0xff]
      %v5193 = vld [vmem:[#allocation2 + $0x10b] sm:$0xff]
      %v5194 = vld [vmem:[#allocation2 + $0x113] sm:$0xff]
      %v5195 = vld [vmem:[#allocation2 + $0x11b] sm:$0xff]
      %v5196 = vld [vmem:[#allocation2 + $0x123] sm:$0xff]
      %v5197 = vld [vmem:[#allocation2 + $0x12b] sm:$0xff]
      %v5198 = vld [vmem:[#allocation2 + $0x133] sm:$0xff]
      %v5199 = vld [vmem:[#allocation2 + $0x13b] sm:$0xff]
      %v5200 = vld [vmem:[#allocation2 + $0x143] sm:$0xff]
      %v5201 = vld [vmem:[#allocation2 + $0x14b] sm:$0xff]
      %v5202 = vld [vmem:[#allocation2 + $0x153] sm:$0xff]
      %v5203 = vld [vmem:[#allocation2 + $0x15b] sm:$0xff]
      %v5204 = vld [vmem:[#allocation2 + $0x163] sm:$0xff]
      %v5205 = vld [vmem:[#allocation2 + $0x16b] sm:$0xf]
      %5206 = vst.msk [vmem:[#allocation3 + $0x20] sm:$0xff] %vm1029, %v5165
      %5207 = vst.msk [vmem:[#allocation3 + $0x48] sm:$0xff] %vm1029, %v5166
      %5208 = vst.msk [vmem:[#allocation3 + $0x70] sm:$0xff] %vm1029, %v5167
      %5209 = vst.msk [vmem:[#allocation3 + $0x98] sm:$0xff] %vm1029, %v5168
      %5210 = vst.msk [vmem:[#allocation3 + $0xc0] sm:$0xff] %vm1029, %v5169
      %5211 = vst.msk [vmem:[#allocation3 + $0xe8] sm:$0xff] %vm1029, %v5170
      %5212 = vst.msk [vmem:[#allocation3 + $0x110] sm:$0xff] %vm1029, %v5171
      %5213 = vst.msk [vmem:[#allocation3 + $0x138] sm:$0xff] %vm1029, %v5172
      %5214 = vst.msk [vmem:[#allocation3 + $0x160] sm:$0xff] %vm1029, %v5173
      %5215 = vst.msk [vmem:[#allocation3 + $0x188] sm:$0xff] %vm1029, %v5174
      %5216 = vst.msk [vmem:[#allocation3 + $0x1b0] sm:$0xff] %vm1029, %v5175
      %5217 = vst.msk [vmem:[#allocation3 + $0x1d8] sm:$0xff] %vm1029, %v5176
      %5218 = vst.msk [vmem:[#allocation3 + $0x200] sm:$0xff] %vm1029, %v5177
      %5219 = vst.msk [vmem:[#allocation3 + $0x228] sm:$0xff] %vm1029, %v5178
      %5220 = vst.msk [vmem:[#allocation3 + $0x250] sm:$0xff] %vm1029, %v5179
      %5221 = vst.msk [vmem:[#allocation3 + $0x278] sm:$0xff] %vm1029, %v5180
      %5222 = vst.msk [vmem:[#allocation3 + $0x2a0] sm:$0xff] %vm1029, %v5181
      %5223 = vst.msk [vmem:[#allocation3 + $0x2c8] sm:$0xff] %vm1029, %v5182
      %5224 = vst.msk [vmem:[#allocation3 + $0x2f0] sm:$0xff] %vm1029, %v5183
      %5225 = vst.msk [vmem:[#allocation3 + $0x318] sm:$0xff] %vm1029, %v5184
      %5226 = vst.msk [vmem:[#allocation3 + $0x340] sm:$0xff] %vm1029, %v5185
      %5227 = vst.msk [vmem:[#allocation3 + $0x368] sm:$0xff] %vm1029, %v5186
      %5228 = vst.msk [vmem:[#allocation3 + $0x390] sm:$0xff] %vm1029, %v5187
      %5229 = vst.msk [vmem:[#allocation3 + $0x3b8] sm:$0xff] %vm1029, %v5188
      %5230 = vst.msk [vmem:[#allocation3 + $0x3e0] sm:$0xff] %vm1029, %v5189
      %5231 = vst.msk [vmem:[#allocation3 + $0x408] sm:$0xff] %vm1029, %v5190
      %5232 = vst.msk [vmem:[#allocation3 + $0x430] sm:$0xff] %vm1029, %v5191
      %5233 = vst.msk [vmem:[#allocation3 + $0x458] sm:$0xff] %vm1029, %v5192
      %5234 = vst.msk [vmem:[#allocation3 + $0x480] sm:$0xff] %vm1029, %v5193
      %5235 = vst.msk [vmem:[#allocation3 + $0x4a8] sm:$0xff] %vm1029, %v5194
      %5236 = vst.msk [vmem:[#allocation3 + $0x4d0] sm:$0xff] %vm1029, %v5195
      %5237 = vst.msk [vmem:[#allocation3 + $0x4f8] sm:$0xff] %vm1029, %v5196
      %5238 = vst.msk [vmem:[#allocation3 + $0x520] sm:$0xff] %vm1029, %v5197
      %5239 = vst.msk [vmem:[#allocation3 + $0x548] sm:$0xff] %vm1029, %v5198
      %5240 = vst.msk [vmem:[#allocation3 + $0x570] sm:$0xff] %vm1029, %v5199
      %5241 = vst.msk [vmem:[#allocation3 + $0x598] sm:$0xff] %vm1029, %v5200
      %5242 = vst.msk [vmem:[#allocation3 + $0x5c0] sm:$0xff] %vm1029, %v5201
      %5243 = vst.msk [vmem:[#allocation3 + $0x5e8] sm:$0xff] %vm1029, %v5202
      %5244 = vst.msk [vmem:[#allocation3 + $0x610] sm:$0xff] %vm1029, %v5203
      %5245 = vst.msk [vmem:[#allocation3 + $0x638] sm:$0xff] %vm1029, %v5204
      %5246 = vst.msk [vmem:[#allocation3 + $0x660] sm:$0xf] %vm1076, %v5205
      %v5247 = vld [vmem:[#allocation3] sm:$0xff]
      %v5248 = vld [vmem:[#allocation3 + $0x8] sm:$0xff]
      %v5249 = vld [vmem:[#allocation3 + $0x10] sm:$0xff]
      %v5250 = vld [vmem:[#allocation3 + $0x18] sm:$0xff]
      %v5251 = vld [vmem:[#allocation3 + $0x20] sm:$0xff]
      %v5252 = vld [vmem:[#allocation3 + $0x28] sm:$0xff]
      %v5253 = vld [vmem:[#allocation3 + $0x30] sm:$0xff]
      %v5254 = vld [vmem:[#allocation3 + $0x38] sm:$0xff]
      %v5255 = vld [vmem:[#allocation3 + $0x40] sm:$0xff]
      %v5256 = vld [vmem:[#allocation3 + $0x48] sm:$0xff]
      %v5257 = vld [vmem:[#allocation3 + $0x50] sm:$0xff]
      %v5258 = vld [vmem:[#allocation3 + $0x58] sm:$0xff]
      %v5259 = vld [vmem:[#allocation3 + $0x60] sm:$0xff]
      %v5260 = vld [vmem:[#allocation3 + $0x68] sm:$0xff]
      %v5261 = vld [vmem:[#allocation3 + $0x70] sm:$0xff]
      %v5262 = vld [vmem:[#allocation3 + $0x78] sm:$0xff]
      %v5263 = vld [vmem:[#allocation3 + $0x80] sm:$0xff]
      %v5264 = vld [vmem:[#allocation3 + $0x88] sm:$0xff]
      %v5265 = vld [vmem:[#allocation3 + $0x90] sm:$0xff]
      %v5266 = vld [vmem:[#allocation3 + $0x98] sm:$0xff]
      %v5267 = vld [vmem:[#allocation3 + $0xa0] sm:$0xff]
      %v5268 = vld [vmem:[#allocation3 + $0xa8] sm:$0xff]
      %v5269 = vld [vmem:[#allocation3 + $0xb0] sm:$0xff]
      %v5270 = vld [vmem:[#allocation3 + $0xb8] sm:$0xff]
      %v5271 = vld [vmem:[#allocation3 + $0xc0] sm:$0xff]
      %v5272 = vld [vmem:[#allocation3 + $0xc8] sm:$0xff]
      %v5273 = vld [vmem:[#allocation3 + $0xd0] sm:$0xff]
      %v5274 = vld [vmem:[#allocation3 + $0xd8] sm:$0xff]
      %v5275 = vld [vmem:[#allocation3 + $0xe0] sm:$0xff]
      %v5276 = vld [vmem:[#allocation3 + $0xe8] sm:$0xff]
      %v5277 = vld [vmem:[#allocation3 + $0xf0] sm:$0xff]
      %v5278 = vld [vmem:[#allocation3 + $0xf8] sm:$0xff]
      %v5279 = vld [vmem:[#allocation3 + $0x100] sm:$0xff]
      %v5280 = vld [vmem:[#allocation3 + $0x108] sm:$0xff]
      %v5281 = vld [vmem:[#allocation3 + $0x110] sm:$0xff]
      %v5282 = vld [vmem:[#allocation3 + $0x118] sm:$0xff]
      %v5283 = vld [vmem:[#allocation3 + $0x120] sm:$0xff]
      %v5284 = vld [vmem:[#allocation3 + $0x128] sm:$0xff]
      %v5285 = vld [vmem:[#allocation3 + $0x130] sm:$0xff]
      %v5286 = vld [vmem:[#allocation3 + $0x138] sm:$0xff]
      %v5287 = vld [vmem:[#allocation3 + $0x140] sm:$0xff]
      %v5288 = vld [vmem:[#allocation3 + $0x148] sm:$0xff]
      %v5289 = vld [vmem:[#allocation3 + $0x150] sm:$0xff]
      %v5290 = vld [vmem:[#allocation3 + $0x158] sm:$0xff]
      %v5291 = vld [vmem:[#allocation3 + $0x160] sm:$0xff]
      %v5292 = vld [vmem:[#allocation3 + $0x168] sm:$0xff]
      %v5293 = vld [vmem:[#allocation3 + $0x170] sm:$0xff]
      %v5294 = vld [vmem:[#allocation3 + $0x178] sm:$0xff]
      %v5295 = vld [vmem:[#allocation3 + $0x180] sm:$0xff]
      %v5296 = vld [vmem:[#allocation3 + $0x188] sm:$0xff]
      %v5297 = vld [vmem:[#allocation3 + $0x190] sm:$0xff]
      %v5298 = vld [vmem:[#allocation3 + $0x198] sm:$0xff]
      %v5299 = vld [vmem:[#allocation3 + $0x1a0] sm:$0xff]
      %v5300 = vld [vmem:[#allocation3 + $0x1a8] sm:$0xff]
      %v5301 = vld [vmem:[#allocation3 + $0x1b0] sm:$0xff]
      %v5302 = vld [vmem:[#allocation3 + $0x1b8] sm:$0xff]
      %v5303 = vld [vmem:[#allocation3 + $0x1c0] sm:$0xff]
      %v5304 = vld [vmem:[#allocation3 + $0x1c8] sm:$0xff]
      %v5305 = vld [vmem:[#allocation3 + $0x1d0] sm:$0xff]
      %v5306 = vld [vmem:[#allocation3 + $0x1d8] sm:$0xff]
      %v5307 = vld [vmem:[#allocation3 + $0x1e0] sm:$0xff]
      %v5308 = vld [vmem:[#allocation3 + $0x1e8] sm:$0xff]
      %v5309 = vld [vmem:[#allocation3 + $0x1f0] sm:$0xff]
      %v5310 = vld [vmem:[#allocation3 + $0x1f8] sm:$0xff]
      %v5311 = vld [vmem:[#allocation3 + $0x200] sm:$0xff]
      %v5312 = vld [vmem:[#allocation3 + $0x208] sm:$0xff]
      %v5313 = vld [vmem:[#allocation3 + $0x210] sm:$0xff]
      %v5314 = vld [vmem:[#allocation3 + $0x218] sm:$0xff]
      %v5315 = vld [vmem:[#allocation3 + $0x220] sm:$0xff]
      %v5316 = vld [vmem:[#allocation3 + $0x228] sm:$0xff]
      %v5317 = vld [vmem:[#allocation3 + $0x230] sm:$0xff]
      %v5318 = vld [vmem:[#allocation3 + $0x238] sm:$0xff]
      %v5319 = vld [vmem:[#allocation3 + $0x240] sm:$0xff]
      %v5320 = vld [vmem:[#allocation3 + $0x248] sm:$0xff]
      %v5321 = vld [vmem:[#allocation3 + $0x250] sm:$0xff]
      %v5322 = vld [vmem:[#allocation3 + $0x258] sm:$0xff]
      %v5323 = vld [vmem:[#allocation3 + $0x260] sm:$0xff]
      %v5324 = vld [vmem:[#allocation3 + $0x268] sm:$0xff]
      %v5325 = vld [vmem:[#allocation3 + $0x270] sm:$0xff]
      %v5326 = vld [vmem:[#allocation3 + $0x278] sm:$0xff]
      %v5327 = vld [vmem:[#allocation3 + $0x280] sm:$0xff]
      %v5328 = vld [vmem:[#allocation3 + $0x288] sm:$0xff]
      %v5329 = vld [vmem:[#allocation3 + $0x290] sm:$0xff]
      %v5330 = vld [vmem:[#allocation3 + $0x298] sm:$0xff]
      %v5331 = vld [vmem:[#allocation3 + $0x2a0] sm:$0xff]
      %v5332 = vld [vmem:[#allocation3 + $0x2a8] sm:$0xff]
      %v5333 = vld [vmem:[#allocation3 + $0x2b0] sm:$0xff]
      %v5334 = vld [vmem:[#allocation3 + $0x2b8] sm:$0xff]
      %v5335 = vld [vmem:[#allocation3 + $0x2c0] sm:$0xff]
      %v5336 = vld [vmem:[#allocation3 + $0x2c8] sm:$0xff]
      %v5337 = vld [vmem:[#allocation3 + $0x2d0] sm:$0xff]
      %v5338 = vld [vmem:[#allocation3 + $0x2d8] sm:$0xff]
      %v5339 = vld [vmem:[#allocation3 + $0x2e0] sm:$0xff]
      %v5340 = vld [vmem:[#allocation3 + $0x2e8] sm:$0xff]
      %v5341 = vld [vmem:[#allocation3 + $0x2f0] sm:$0xff]
      %v5342 = vld [vmem:[#allocation3 + $0x2f8] sm:$0xff]
      %v5343 = vld [vmem:[#allocation3 + $0x300] sm:$0xff]
      %v5344 = vld [vmem:[#allocation3 + $0x308] sm:$0xff]
      %v5345 = vld [vmem:[#allocation3 + $0x310] sm:$0xff]
      %v5346 = vld [vmem:[#allocation3 + $0x318] sm:$0xff]
      %v5347 = vld [vmem:[#allocation3 + $0x320] sm:$0xff]
      %v5348 = vld [vmem:[#allocation3 + $0x328] sm:$0xff]
      %v5349 = vld [vmem:[#allocation3 + $0x330] sm:$0xff]
      %v5350 = vld [vmem:[#allocation3 + $0x338] sm:$0xff]
      %v5351 = vld [vmem:[#allocation3 + $0x340] sm:$0xff]
      %v5352 = vld [vmem:[#allocation3 + $0x348] sm:$0xff]
      %v5353 = vld [vmem:[#allocation3 + $0x350] sm:$0xff]
      %v5354 = vld [vmem:[#allocation3 + $0x358] sm:$0xff]
      %v5355 = vld [vmem:[#allocation3 + $0x360] sm:$0xff]
      %v5356 = vld [vmem:[#allocation3 + $0x368] sm:$0xff]
      %v5357 = vld [vmem:[#allocation3 + $0x370] sm:$0xff]
      %v5358 = vld [vmem:[#allocation3 + $0x378] sm:$0xff]
      %v5359 = vld [vmem:[#allocation3 + $0x380] sm:$0xff]
      %v5360 = vld [vmem:[#allocation3 + $0x388] sm:$0xff]
      %v5361 = vld [vmem:[#allocation3 + $0x390] sm:$0xff]
      %v5362 = vld [vmem:[#allocation3 + $0x398] sm:$0xff]
      %v5363 = vld [vmem:[#allocation3 + $0x3a0] sm:$0xff]
      %v5364 = vld [vmem:[#allocation3 + $0x3a8] sm:$0xff]
      %v5365 = vld [vmem:[#allocation3 + $0x3b0] sm:$0xff]
      %v5366 = vld [vmem:[#allocation3 + $0x3b8] sm:$0xff]
      %v5367 = vld [vmem:[#allocation3 + $0x3c0] sm:$0xff]
      %v5368 = vld [vmem:[#allocation3 + $0x3c8] sm:$0xff]
      %v5369 = vld [vmem:[#allocation3 + $0x3d0] sm:$0xff]
      %v5370 = vld [vmem:[#allocation3 + $0x3d8] sm:$0xff]
      %v5371 = vld [vmem:[#allocation3 + $0x3e0] sm:$0xff]
      %v5372 = vld [vmem:[#allocation3 + $0x3e8] sm:$0xff]
      %v5373 = vld [vmem:[#allocation3 + $0x3f0] sm:$0xff]
      %v5374 = vld [vmem:[#allocation3 + $0x3f8] sm:$0xff]
      %v5375 = vld [vmem:[#allocation3 + $0x400] sm:$0xff]
      %v5376 = vld [vmem:[#allocation3 + $0x408] sm:$0xff]
      %v5377 = vld [vmem:[#allocation3 + $0x410] sm:$0xff]
      %v5378 = vld [vmem:[#allocation3 + $0x418] sm:$0xff]
      %v5379 = vld [vmem:[#allocation3 + $0x420] sm:$0xff]
      %v5380 = vld [vmem:[#allocation3 + $0x428] sm:$0xff]
      %v5381 = vld [vmem:[#allocation3 + $0x430] sm:$0xff]
      %v5382 = vld [vmem:[#allocation3 + $0x438] sm:$0xff]
      %v5383 = vld [vmem:[#allocation3 + $0x440] sm:$0xff]
      %v5384 = vld [vmem:[#allocation3 + $0x448] sm:$0xff]
      %v5385 = vld [vmem:[#allocation3 + $0x450] sm:$0xff]
      %v5386 = vld [vmem:[#allocation3 + $0x458] sm:$0xff]
      %v5387 = vld [vmem:[#allocation3 + $0x460] sm:$0xff]
      %v5388 = vld [vmem:[#allocation3 + $0x468] sm:$0xff]
      %v5389 = vld [vmem:[#allocation3 + $0x470] sm:$0xff]
      %v5390 = vld [vmem:[#allocation3 + $0x478] sm:$0xff]
      %v5391 = vld [vmem:[#allocation3 + $0x480] sm:$0xff]
      %v5392 = vld [vmem:[#allocation3 + $0x488] sm:$0xff]
      %v5393 = vld [vmem:[#allocation3 + $0x490] sm:$0xff]
      %v5394 = vld [vmem:[#allocation3 + $0x498] sm:$0xff]
      %v5395 = vld [vmem:[#allocation3 + $0x4a0] sm:$0xff]
      %v5396 = vld [vmem:[#allocation3 + $0x4a8] sm:$0xff]
      %v5397 = vld [vmem:[#allocation3 + $0x4b0] sm:$0xff]
      %v5398 = vld [vmem:[#allocation3 + $0x4b8] sm:$0xff]
      %v5399 = vld [vmem:[#allocation3 + $0x4c0] sm:$0xff]
      %v5400 = vld [vmem:[#allocation3 + $0x4c8] sm:$0xff]
      %v5401 = vld [vmem:[#allocation3 + $0x4d0] sm:$0xff]
      %v5402 = vld [vmem:[#allocation3 + $0x4d8] sm:$0xff]
      %v5403 = vld [vmem:[#allocation3 + $0x4e0] sm:$0xff]
      %v5404 = vld [vmem:[#allocation3 + $0x4e8] sm:$0xff]
      %v5405 = vld [vmem:[#allocation3 + $0x4f0] sm:$0xff]
      %v5406 = vld [vmem:[#allocation3 + $0x4f8] sm:$0xff]
      %v5407 = vld [vmem:[#allocation3 + $0x500] sm:$0xff]
      %v5408 = vld [vmem:[#allocation3 + $0x508] sm:$0xff]
      %v5409 = vld [vmem:[#allocation3 + $0x510] sm:$0xff]
      %v5410 = vld [vmem:[#allocation3 + $0x518] sm:$0xff]
      %v5411 = vld [vmem:[#allocation3 + $0x520] sm:$0xff]
      %v5412 = vld [vmem:[#allocation3 + $0x528] sm:$0xff]
      %v5413 = vld [vmem:[#allocation3 + $0x530] sm:$0xff]
      %v5414 = vld [vmem:[#allocation3 + $0x538] sm:$0xff]
      %v5415 = vld [vmem:[#allocation3 + $0x540] sm:$0xff]
      %v5416 = vld [vmem:[#allocation3 + $0x548] sm:$0xff]
      %v5417 = vld [vmem:[#allocation3 + $0x550] sm:$0xff]
      %v5418 = vld [vmem:[#allocation3 + $0x558] sm:$0xff]
      %v5419 = vld [vmem:[#allocation3 + $0x560] sm:$0xff]
      %v5420 = vld [vmem:[#allocation3 + $0x568] sm:$0xff]
      %v5421 = vld [vmem:[#allocation3 + $0x570] sm:$0xff]
      %v5422 = vld [vmem:[#allocation3 + $0x578] sm:$0xff]
      %v5423 = vld [vmem:[#allocation3 + $0x580] sm:$0xff]
      %v5424 = vld [vmem:[#allocation3 + $0x588] sm:$0xff]
      %v5425 = vld [vmem:[#allocation3 + $0x590] sm:$0xff]
      %v5426 = vld [vmem:[#allocation3 + $0x598] sm:$0xff]
      %v5427 = vld [vmem:[#allocation3 + $0x5a0] sm:$0xff]
      %v5428 = vld [vmem:[#allocation3 + $0x5a8] sm:$0xff]
      %v5429 = vld [vmem:[#allocation3 + $0x5b0] sm:$0xff]
      %v5430 = vld [vmem:[#allocation3 + $0x5b8] sm:$0xff]
      %v5431 = vld [vmem:[#allocation3 + $0x5c0] sm:$0xff]
      %v5432 = vld [vmem:[#allocation3 + $0x5c8] sm:$0xff]
      %v5433 = vld [vmem:[#allocation3 + $0x5d0] sm:$0xff]
      %v5434 = vld [vmem:[#allocation3 + $0x5d8] sm:$0xff]
      %v5435 = vld [vmem:[#allocation3 + $0x5e0] sm:$0xff]
      %v5436 = vld [vmem:[#allocation3 + $0x5e8] sm:$0xff]
      %v5437 = vld [vmem:[#allocation3 + $0x5f0] sm:$0xff]
      %v5438 = vld [vmem:[#allocation3 + $0x5f8] sm:$0xff]
      %v5439 = vld [vmem:[#allocation3 + $0x600] sm:$0xff]
      %v5440 = vld [vmem:[#allocation3 + $0x608] sm:$0xff]
      %v5441 = vld [vmem:[#allocation3 + $0x610] sm:$0xff]
      %v5442 = vld [vmem:[#allocation3 + $0x618] sm:$0xff]
      %v5443 = vld [vmem:[#allocation3 + $0x620] sm:$0xff]
      %v5444 = vld [vmem:[#allocation3 + $0x628] sm:$0xff]
      %v5445 = vld [vmem:[#allocation3 + $0x630] sm:$0xff]
      %v5446 = vld [vmem:[#allocation3 + $0x638] sm:$0xff]
      %v5447 = vld [vmem:[#allocation3 + $0x640] sm:$0xf]
      %v5448 = vld [vmem:[#allocation3 + $0x648] sm:$0xf]
      %v5449 = vld [vmem:[#allocation3 + $0x650] sm:$0xf]
      %v5450 = vld [vmem:[#allocation3 + $0x658] sm:$0xf]
      %v5451 = vld [vmem:[#allocation3 + $0x660] sm:$0xf]
      %v5452 = vld [vmem:[%s3] sm:$0xff]
      %v5453 = vld [vmem:[%s3 + $0x8] sm:$0xff]
      %v5454 = vld [vmem:[%s3 + $0x10] sm:$0xff]
      %v5455 = vld [vmem:[%s3 + $0x18] sm:$0xff]
      %v5456 = vld [vmem:[%s3 + $0x20] sm:$0xff]
      %v5457 = vld [vmem:[%s3 + $0x28] sm:$0xff]
      %v5458 = vld [vmem:[%s3 + $0x30] sm:$0xff]
      %v5459 = vld [vmem:[%s3 + $0x38] sm:$0xff]
      %v5460 = vld [vmem:[%s3 + $0x40] sm:$0xff]
      %v5461 = vld [vmem:[%s3 + $0x48] sm:$0xff]
      %v5462 = vld [vmem:[%s3 + $0x50] sm:$0xff]
      %v5463 = vld [vmem:[%s3 + $0x58] sm:$0xff]
      %v5464 = vld [vmem:[%s3 + $0x60] sm:$0xff]
      %v5465 = vld [vmem:[%s3 + $0x68] sm:$0xff]
      %v5466 = vld [vmem:[%s3 + $0x70] sm:$0xff]
      %v5467 = vld [vmem:[%s3 + $0x78] sm:$0xff]
      %v5468 = vld [vmem:[%s3 + $0x80] sm:$0xff]
      %v5469 = vld [vmem:[%s3 + $0x88] sm:$0xff]
      %v5470 = vld [vmem:[%s3 + $0x90] sm:$0xff]
      %v5471 = vld [vmem:[%s3 + $0x98] sm:$0xff]
      %v5472 = vld [vmem:[%s3 + $0xa0] sm:$0xff]
      %v5473 = vld [vmem:[%s3 + $0xa8] sm:$0xff]
      %v5474 = vld [vmem:[%s3 + $0xb0] sm:$0xff]
      %v5475 = vld [vmem:[%s3 + $0xb8] sm:$0xff]
      %v5476 = vld [vmem:[%s3 + $0xc0] sm:$0xff]
      %v5477 = vld [vmem:[%s3 + $0xc8] sm:$0xff]
      %v5478 = vld [vmem:[%s3 + $0xd0] sm:$0xff]
      %v5479 = vld [vmem:[%s3 + $0xd8] sm:$0xff]
      %v5480 = vld [vmem:[%s3 + $0xe0] sm:$0xff]
      %v5481 = vld [vmem:[%s3 + $0xe8] sm:$0xff]
      %v5482 = vld [vmem:[%s3 + $0xf0] sm:$0xff]
      %v5483 = vld [vmem:[%s3 + $0xf8] sm:$0xff]
      %v5484 = vld [vmem:[%s3 + $0x100] sm:$0xff]
      %v5485 = vld [vmem:[%s3 + $0x108] sm:$0xff]
      %v5486 = vld [vmem:[%s3 + $0x110] sm:$0xff]
      %v5487 = vld [vmem:[%s3 + $0x118] sm:$0xff]
      %v5488 = vld [vmem:[%s3 + $0x120] sm:$0xff]
      %v5489 = vld [vmem:[%s3 + $0x128] sm:$0xff]
      %v5490 = vld [vmem:[%s3 + $0x130] sm:$0xff]
      %v5491 = vld [vmem:[%s3 + $0x138] sm:$0xff]
      %v5492 = vld [vmem:[%s3 + $0x140] sm:$0xff]
      %v5493 = vld [vmem:[%s3 + $0x148] sm:$0xff]
      %v5494 = vld [vmem:[%s3 + $0x150] sm:$0xff]
      %v5495 = vld [vmem:[%s3 + $0x158] sm:$0xff]
      %v5496 = vld [vmem:[%s3 + $0x160] sm:$0xff]
      %v5497 = vld [vmem:[%s3 + $0x168] sm:$0xff]
      %v5498 = vld [vmem:[%s3 + $0x170] sm:$0xff]
      %v5499 = vld [vmem:[%s3 + $0x178] sm:$0xff]
      %v5500 = vld [vmem:[%s3 + $0x180] sm:$0xff]
      %v5501 = vld [vmem:[%s3 + $0x188] sm:$0xff]
      %v5502 = vld [vmem:[%s3 + $0x190] sm:$0xff]
      %v5503 = vld [vmem:[%s3 + $0x198] sm:$0xff]
      %v5504 = vld [vmem:[%s3 + $0x1a0] sm:$0xff]
      %v5505 = vld [vmem:[%s3 + $0x1a8] sm:$0xff]
      %v5506 = vld [vmem:[%s3 + $0x1b0] sm:$0xff]
      %v5507 = vld [vmem:[%s3 + $0x1b8] sm:$0xff]
      %v5508 = vld [vmem:[%s3 + $0x1c0] sm:$0xff]
      %v5509 = vld [vmem:[%s3 + $0x1c8] sm:$0xff]
      %v5510 = vld [vmem:[%s3 + $0x1d0] sm:$0xff]
      %v5511 = vld [vmem:[%s3 + $0x1d8] sm:$0xff]
      %v5512 = vld [vmem:[%s3 + $0x1e0] sm:$0xff]
      %v5513 = vld [vmem:[%s3 + $0x1e8] sm:$0xff]
      %v5514 = vld [vmem:[%s3 + $0x1f0] sm:$0xff]
      %v5515 = vld [vmem:[%s3 + $0x1f8] sm:$0xff]
      %v5516 = vld [vmem:[%s3 + $0x200] sm:$0xff]
      %v5517 = vld [vmem:[%s3 + $0x208] sm:$0xff]
      %v5518 = vld [vmem:[%s3 + $0x210] sm:$0xff]
      %v5519 = vld [vmem:[%s3 + $0x218] sm:$0xff]
      %v5520 = vld [vmem:[%s3 + $0x220] sm:$0xff]
      %v5521 = vld [vmem:[%s3 + $0x228] sm:$0xff]
      %v5522 = vld [vmem:[%s3 + $0x230] sm:$0xff]
      %v5523 = vld [vmem:[%s3 + $0x238] sm:$0xff]
      %v5524 = vld [vmem:[%s4 + $0x2] sm:$0x1]
      %v5525 = vlaneseq
      %v5526 = vshrl.u32 %v5525, 7
      %v5527 = vsub.s32 0, %v5526
      %v5528 = vrot.slane %v5524, %v5527
      %v5530 = vsel %vm1029, %v5251, 0
      %v5533 = vsel %vm1029, %v5256, 0
      %v5536 = vsel %vm1029, %v5261, 0
      %v5539 = vsel %vm1029, %v5266, 0
      %v5542 = vsel %vm1029, %v5271, 0
      %v5545 = vsel %vm1029, %v5276, 0
      %v5548 = vsel %vm1029, %v5281, 0
      %v5551 = vsel %vm1029, %v5286, 0
      %v5554 = vsel %vm1029, %v5291, 0
      %v5557 = vsel %vm1029, %v5296, 0
      %v5560 = vsel %vm1029, %v5301, 0
      %v5563 = vsel %vm1029, %v5306, 0
      %v5566 = vsel %vm1029, %v5311, 0
      %v5569 = vsel %vm1029, %v5316, 0
      %v5572 = vsel %vm1029, %v5321, 0
      %v5575 = vsel %vm1029, %v5326, 0
      %v5578 = vsel %vm1029, %v5331, 0
      %v5581 = vsel %vm1029, %v5336, 0
      %v5584 = vsel %vm1029, %v5341, 0
      %v5587 = vsel %vm1029, %v5346, 0
      %v5590 = vsel %vm1029, %v5351, 0
      %v5593 = vsel %vm1029, %v5356, 0
      %v5596 = vsel %vm1029, %v5361, 0
      %v5599 = vsel %vm1029, %v5366, 0
      %v5602 = vsel %vm1029, %v5371, 0
      %v5605 = vsel %vm1029, %v5376, 0
      %v5608 = vsel %vm1029, %v5381, 0
      %v5611 = vsel %vm1029, %v5386, 0
      %v5614 = vsel %vm1029, %v5391, 0
      %v5617 = vsel %vm1029, %v5396, 0
      %v5620 = vsel %vm1029, %v5401, 0
      %v5623 = vsel %vm1029, %v5406, 0
      %v5626 = vsel %vm1029, %v5411, 0
      %v5629 = vsel %vm1029, %v5416, 0
      %v5632 = vsel %vm1029, %v5421, 0
      %v5635 = vsel %vm1029, %v5426, 0
      %v5638 = vsel %vm1029, %v5431, 0
      %v5641 = vsel %vm1029, %v5436, 0
      %v5644 = vsel %vm1029, %v5441, 0
      %v5647 = vsel %vm1029, %v5446, 0
      %v5650 = vsel %vm1029, %v5451, 0
      %5652 = vmatprep.subr.mxu0 0.0
      %5653 = vmatpush1.msra.mxu0 %v5452
      %5654 = vmatprep.subr.mxu0 0.0
      %5655 = vmatpush1.msra.mxu0 %v5453
      %5656 = vmatprep.subr.mxu0 0.0
      %5657 = vmatpush1.msra.mxu0 %v5454
      %5658 = vmatprep.subr.mxu0 0.0
      %5659 = vmatpush1.msra.mxu0 %v5455
      %5660 = vmatprep.subr.mxu0 0.0
      %5661 = vmatpush1.msra.mxu0 %v5456
      %5662 = vmatprep.subr.mxu0 0.0
      %5663 = vmatpush1.msra.mxu0 %v5457
      %5664 = vmatprep.subr.mxu0 0.0
      %5665 = vmatpush1.msra.mxu0 %v5458
      %5666 = vmatprep.subr.mxu0 0.0
      %5667 = vmatpush1.msra.mxu0 %v5459
      %5668 = vmatprep.subr.mxu0 0.0
      %5669 = vmatpush1.msra.mxu0 %v5460
      %5670 = vmatprep.subr.mxu0 0.0
      %5671 = vmatpush1.msra.mxu0 %v5461
      %5672 = vmatprep.subr.mxu0 0.0
      %5673 = vmatpush1.msra.mxu0 %v5462
      %5674 = vmatprep.subr.mxu0 0.0
      %5675 = vmatpush1.msra.mxu0 %v5463
      %5676 = vmatprep.subr.mxu0 0.0
      %5677 = vmatpush1.msra.mxu0 %v5464
      %5678 = vmatprep.subr.mxu0 0.0
      %5679 = vmatpush1.msra.mxu0 %v5465
      %5680 = vmatprep.subr.mxu0 0.0
      %5681 = vmatpush1.msra.mxu0 %v5466
      %5682 = vmatprep.subr.mxu0 0.0
      %5683 = vmatpush1.msra.mxu0 %v5467
      %5684 = vmatprep.subr.mxu0 0.0
      %5685 = vmatpush1.msra.mxu0 %v5468
      %5686 = vmatprep.subr.mxu0 0.0
      %5687 = vmatpush1.msra.mxu0 %v5469
      %5688 = vmatprep.subr.mxu0 0.0
      %5689 = vmatpush1.msra.mxu0 %v5470
      %5690 = vmatprep.subr.mxu0 0.0
      %5691 = vmatpush1.msra.mxu0 %v5471
      %5692 = vmatprep.subr.mxu0 0.0
      %5693 = vmatpush1.msra.mxu0 %v5472
      %5694 = vmatprep.subr.mxu0 0.0
      %5695 = vmatpush1.msra.mxu0 %v5473
      %5696 = vmatprep.subr.mxu0 0.0
      %5697 = vmatpush1.msra.mxu0 %v5474
      %5698 = vmatprep.subr.mxu0 0.0
      %5699 = vmatpush1.msra.mxu0 %v5475
      %5700 = vmatprep.subr.mxu0 0.0
      %5701 = vmatpush1.msra.mxu0 %v5476
      %5702 = vmatprep.subr.mxu0 0.0
      %5703 = vmatpush1.msra.mxu0 %v5477
      %5704 = vmatprep.subr.mxu0 0.0
      %5705 = vmatpush1.msra.mxu0 %v5478
      %5706 = vmatprep.subr.mxu0 0.0
      %5707 = vmatpush1.msra.mxu0 %v5479
      %5708 = vmatprep.subr.mxu0 0.0
      %5709 = vmatpush1.msra.mxu0 %v5480
      %5710 = vmatprep.subr.mxu0 0.0
      %5711 = vmatpush1.msra.mxu0 %v5481
      %5712 = vmatprep.subr.mxu0 0.0
      %5713 = vmatpush1.msra.mxu0 %v5482
      %5714 = vmatprep.subr.mxu0 0.0
      %5715 = vmatpush1.msra.mxu0 %v5483
      %5716 = vmatprep.mubr.f32.mxu0 %v5248
      %5717 = vmatmul.mubr.f32.gmra.mrb[0].mxu0 %v5247
      %v5718 = vpop.f32.mrb[0].mxu0
      %v5719 = vadd.f32 %v5528, %v5718
      %v5720 = vpop.f32.mrb[0].mxu0
      %5721 = vmatprep.mubr.f32.mxu0 %v5253
      %5722 = vmatmul.mubr.f32.gmra.mrb[0].mxu0 %v5252
      %v5723 = vpop.f32.mrb[0].mxu0
      %v5724 = vadd.f32 %v5528, %v5723
      %v5725 = vpop.f32.mrb[0].mxu0
      %5726 = vmatprep.mubr.f32.mxu0 %v5258
      %5727 = vmatmul.mubr.f32.gmra.mrb[0].mxu0 %v5257
      %v5728 = vpop.f32.mrb[0].mxu0
      %v5729 = vadd.f32 %v5528, %v5728
      %v5730 = vpop.f32.mrb[0].mxu0
      %5731 = vmatprep.mubr.f32.mxu0 %v5263
      %5732 = vmatmul.mubr.f32.gmra.mrb[0].mxu0 %v5262
      %v5733 = vpop.f32.mrb[0].mxu0
      %v5734 = vadd.f32 %v5528, %v5733
      %v5735 = vpop.f32.mrb[0].mxu0
      %5736 = vmatprep.mubr.f32.mxu0 %v5268
      %5737 = vmatmul.mubr.f32.gmra.mrb[0].mxu0 %v5267
      %v5738 = vpop.f32.mrb[0].mxu0
      %v5739 = vadd.f32 %v5528, %v5738
      %v5740 = vpop.f32.mrb[0].mxu0
      %5741 = vmatprep.mubr.f32.mxu0 %v5273
      %5742 = vmatmul.mubr.f32.gmra.mrb[0].mxu0 %v5272
      %v5743 = vpop.f32.mrb[0].mxu0
      %v5744 = vadd.f32 %v5528, %v5743
      %v5745 = vpop.f32.mrb[0].mxu0
      %5746 = vmatprep.mubr.f32.mxu0 %v5278
      %5747 = vmatmul.mubr.f32.gmra.mrb[0].mxu0 %v5277
      %v5748 = vpop.f32.mrb[0].mxu0
      %v5749 = vadd.f32 %v5528, %v5748
      %v5750 = vpop.f32.mrb[0].mxu0
      %5751 = vmatprep.mubr.f32.mxu0 %v5283
      %5752 = vmatmul.mubr.f32.gmra.mrb[0].mxu0 %v5282
      %v5753 = vpop.f32.mrb[0].mxu0
      %v5754 = vadd.f32 %v5528, %v5753
      %v5755 = vpop.f32.mrb[0].mxu0
      %5756 = vmatprep.mubr.f32.mxu0 %v5288
      %5757 = vmatmul.mubr.f32.gmra.mrb[0].mxu0 %v5287
      %v5758 = vpop.f32.mrb[0].mxu0
      %v5759 = vadd.f32 %v5528, %v5758
      %v5760 = vpop.f32.mrb[0].mxu0
      %5761 = vmatprep.mubr.f32.mxu0 %v5293
      %5762 = vmatmul.mubr.f32.gmra.mrb[0].mxu0 %v5292
      %v5763 = vpop.f32.mrb[0].mxu0
      %v5764 = vadd.f32 %v5528, %v5763
      %v5765 = vpop.f32.mrb[0].mxu0
      %5766 = vmatprep.mubr.f32.mxu0 %v5298
      %5767 = vmatmul.mubr.f32.gmra.mrb[0].mxu0 %v5297
      %v5768 = vpop.f32.mrb[0].mxu0
      %v5769 = vadd.f32 %v5528, %v5768
      %v5770 = vpop.f32.mrb[0].mxu0
      %5771 = vmatprep.mubr.f32.mxu0 %v5303
      %5772 = vmatmul.mubr.f32.gmra.mrb[0].mxu0 %v5302
      %v5773 = vpop.f32.mrb[0].mxu0
      %v5774 = vadd.f32 %v5528, %v5773
      %v5775 = vpop.f32.mrb[0].mxu0
      %5776 = vmatprep.mubr.f32.mxu0 %v5308
      %5777 = vmatmul.mubr.f32.gmra.mrb[0].mxu0 %v5307
      %v5778 = vpop.f32.mrb[0].mxu0
      %v5779 = vadd.f32 %v5528, %v5778
      %v5780 = vpop.f32.mrb[0].mxu0
      %5781 = vmatprep.mubr.f32.mxu0 %v5313
      %5782 = vmatmul.mubr.f32.gmra.mrb[0].mxu0 %v5312
      %v5783 = vpop.f32.mrb[0].mxu0
      %v5784 = vadd.f32 %v5528, %v5783
      %v5785 = vpop.f32.mrb[0].mxu0
      %5786 = vmatprep.mubr.f32.mxu0 %v5318
      %5787 = vmatmul.mubr.f32.gmra.mrb[0].mxu0 %v5317
      %v5788 = vpop.f32.mrb[0].mxu0
      %v5789 = vadd.f32 %v5528, %v5788
      %v5790 = vpop.f32.mrb[0].mxu0
      %5791 = vmatprep.mubr.f32.mxu0 %v5323
      %5792 = vmatmul.mubr.f32.gmra.mrb[0].mxu0 %v5322
      %v5793 = vpop.f32.mrb[0].mxu0
      %v5794 = vadd.f32 %v5528, %v5793
      %v5795 = vpop.f32.mrb[0].mxu0
      %5796 = vmatprep.mubr.f32.mxu0 %v5328
      %5797 = vmatmul.mubr.f32.gmra.mrb[0].mxu0 %v5327
      %v5798 = vpop.f32.mrb[0].mxu0
      %v5799 = vadd.f32 %v5528, %v5798
      %v5800 = vpop.f32.mrb[0].mxu0
      %5801 = vmatprep.mubr.f32.mxu0 %v5333
      %5802 = vmatmul.mubr.f32.gmra.mrb[0].mxu0 %v5332
      %v5803 = vpop.f32.mrb[0].mxu0
      %v5804 = vadd.f32 %v5528, %v5803
      %v5805 = vpop.f32.mrb[0].mxu0
      %5806 = vmatprep.mubr.f32.mxu0 %v5338
      %5807 = vmatmul.mubr.f32.gmra.mrb[0].mxu0 %v5337
      %v5808 = vpop.f32.mrb[0].mxu0
      %v5809 = vadd.f32 %v5528, %v5808
      %v5810 = vpop.f32.mrb[0].mxu0
      %5811 = vmatprep.mubr.f32.mxu0 %v5343
      %5812 = vmatmul.mubr.f32.gmra.mrb[0].mxu0 %v5342
      %v5813 = vpop.f32.mrb[0].mxu0
      %v5814 = vadd.f32 %v5528, %v5813
      %v5815 = vpop.f32.mrb[0].mxu0
      %5816 = vmatprep.mubr.f32.mxu0 %v5348
      %5817 = vmatmul.mubr.f32.gmra.mrb[0].mxu0 %v5347
      %v5818 = vpop.f32.mrb[0].mxu0
      %v5819 = vadd.f32 %v5528, %v5818
      %v5820 = vpop.f32.mrb[0].mxu0
      %5821 = vmatprep.mubr.f32.mxu0 %v5353
      %5822 = vmatmul.mubr.f32.gmra.mrb[0].mxu0 %v5352
      %v5823 = vpop.f32.mrb[0].mxu0
      %v5824 = vadd.f32 %v5528, %v5823
      %v5825 = vpop.f32.mrb[0].mxu0
      %5826 = vmatprep.mubr.f32.mxu0 %v5358
      %5827 = vmatmul.mubr.f32.gmra.mrb[0].mxu0 %v5357
      %v5828 = vpop.f32.mrb[0].mxu0
      %v5829 = vadd.f32 %v5528, %v5828
      %v5830 = vpop.f32.mrb[0].mxu0
      %5831 = vmatprep.mubr.f32.mxu0 %v5363
      %5832 = vmatmul.mubr.f32.gmra.mrb[0].mxu0 %v5362
      %v5833 = vpop.f32.mrb[0].mxu0
      %v5834 = vadd.f32 %v5528, %v5833
      %v5835 = vpop.f32.mrb[0].mxu0
      %5836 = vmatprep.mubr.f32.mxu0 %v5368
      %5837 = vmatmul.mubr.f32.gmra.mrb[0].mxu0 %v5367
      %v5838 = vpop.f32.mrb[0].mxu0
      %v5839 = vadd.f32 %v5528, %v5838
      %v5840 = vpop.f32.mrb[0].mxu0
      %5841 = vmatprep.mubr.f32.mxu0 %v5373
      %5842 = vmatmul.mubr.f32.gmra.mrb[0].mxu0 %v5372
      %v5843 = vpop.f32.mrb[0].mxu0
      %v5844 = vadd.f32 %v5528, %v5843
      %v5845 = vpop.f32.mrb[0].mxu0
      %5846 = vmatprep.mubr.f32.mxu0 %v5378
      %5847 = vmatmul.mubr.f32.gmra.mrb[0].mxu0 %v5377
      %v5848 = vpop.f32.mrb[0].mxu0
      %v5849 = vadd.f32 %v5528, %v5848
      %v5850 = vpop.f32.mrb[0].mxu0
      %5851 = vmatprep.mubr.f32.mxu0 %v5383
      %5852 = vmatmul.mubr.f32.gmra.mrb[0].mxu0 %v5382
      %v5853 = vpop.f32.mrb[0].mxu0
      %v5854 = vadd.f32 %v5528, %v5853
      %v5855 = vpop.f32.mrb[0].mxu0
      %5856 = vmatprep.mubr.f32.mxu0 %v5388
      %5857 = vmatmul.mubr.f32.gmra.mrb[0].mxu0 %v5387
      %v5858 = vpop.f32.mrb[0].mxu0
      %v5859 = vadd.f32 %v5528, %v5858
      %v5860 = vpop.f32.mrb[0].mxu0
      %5861 = vmatprep.mubr.f32.mxu0 %v5393
      %5862 = vmatmul.mubr.f32.gmra.mrb[0].mxu0 %v5392
      %v5863 = vpop.f32.mrb[0].mxu0
      %v5864 = vadd.f32 %v5528, %v5863
      %v5865 = vpop.f32.mrb[0].mxu0
      %5866 = vmatprep.mubr.f32.mxu0 %v5398
      %5867 = vmatmul.mubr.f32.gmra.mrb[0].mxu0 %v5397
      %v5868 = vpop.f32.mrb[0].mxu0
      %v5869 = vadd.f32 %v5528, %v5868
      %v5870 = vpop.f32.mrb[0].mxu0
      %5871 = vmatprep.mubr.f32.mxu0 %v5403
      %5872 = vmatmul.mubr.f32.gmra.mrb[0].mxu0 %v5402
      %v5873 = vpop.f32.mrb[0].mxu0
      %v5874 = vadd.f32 %v5528, %v5873
      %v5875 = vpop.f32.mrb[0].mxu0
      %5876 = vmatprep.mubr.f32.mxu0 %v5408
      %5877 = vmatmul.mubr.f32.gmra.mrb[0].mxu0 %v5407
      %v5878 = vpop.f32.mrb[0].mxu0
      %v5879 = vadd.f32 %v5528, %v5878
      %v5880 = vpop.f32.mrb[0].mxu0
      %5881 = vmatprep.mubr.f32.mxu0 %v5413
      %5882 = vmatmul.mubr.f32.gmra.mrb[0].mxu0 %v5412
      %v5883 = vpop.f32.mrb[0].mxu0
      %v5884 = vadd.f32 %v5528, %v5883
      %v5885 = vpop.f32.mrb[0].mxu0
      %5886 = vmatprep.mubr.f32.mxu0 %v5418
      %5887 = vmatmul.mubr.f32.gmra.mrb[0].mxu0 %v5417
      %v5888 = vpop.f32.mrb[0].mxu0
      %v5889 = vadd.f32 %v5528, %v5888
      %v5890 = vpop.f32.mrb[0].mxu0
      %5891 = vmatprep.mubr.f32.mxu0 %v5423
      %5892 = vmatmul.mubr.f32.gmra.mrb[0].mxu0 %v5422
      %v5893 = vpop.f32.mrb[0].mxu0
      %v5894 = vadd.f32 %v5528, %v5893
      %v5895 = vpop.f32.mrb[0].mxu0
      %5896 = vmatprep.mubr.f32.mxu0 %v5428
      %5897 = vmatmul.mubr.f32.gmra.mrb[0].mxu0 %v5427
      %v5898 = vpop.f32.mrb[0].mxu0
      %v5899 = vadd.f32 %v5528, %v5898
      %v5900 = vpop.f32.mrb[0].mxu0
      %5901 = vmatprep.mubr.f32.mxu0 %v5433
      %5902 = vmatmul.mubr.f32.gmra.mrb[0].mxu0 %v5432
      %v5903 = vpop.f32.mrb[0].mxu0
      %v5904 = vadd.f32 %v5528, %v5903
      %v5905 = vpop.f32.mrb[0].mxu0
      %5906 = vmatprep.mubr.f32.mxu0 %v5438
      %5907 = vmatmul.mubr.f32.gmra.mrb[0].mxu0 %v5437
      %v5908 = vpop.f32.mrb[0].mxu0
      %v5909 = vadd.f32 %v5528, %v5908
      %v5910 = vpop.f32.mrb[0].mxu0
      %5911 = vmatprep.mubr.f32.mxu0 %v5443
      %5912 = vmatmul.mubr.f32.gmra.mrb[0].mxu0 %v5442
      %v5913 = vpop.f32.mrb[0].mxu0
      %v5914 = vadd.f32 %v5528, %v5913
      %v5915 = vpop.f32.mrb[0].mxu0
      %5916 = vmatprep.mubr.f32.mxu0 %v5448
      %5917 = vmatmul.mubr.f32.gmra.mrb[0].mxu0 %v5447
      %v5918 = vpop.f32.mrb[0].mxu0
      %v5919 = vadd.f32 %v5528, %v5918
      %v5920 = vpop.f32.mrb[0].mxu0
      %5921 = vdwg.mxu0
      %5922 = vmatprep.subr.mxu0 0.0
      %5923 = vmatpush1.msra.mxu0 %v5484
      %5924 = vmatprep.subr.mxu0 0.0
      %5925 = vmatpush1.msra.mxu0 %v5485
      %5926 = vmatprep.subr.mxu0 0.0
      %5927 = vmatpush1.msra.mxu0 %v5486
      %5928 = vmatprep.subr.mxu0 0.0
      %5929 = vmatpush1.msra.mxu0 %v5487
      %5930 = vmatprep.subr.mxu0 0.0
      %5931 = vmatpush1.msra.mxu0 %v5488
      %5932 = vmatprep.subr.mxu0 0.0
      %5933 = vmatpush1.msra.mxu0 %v5489
      %5934 = vmatprep.subr.mxu0 0.0
      %5935 = vmatpush1.msra.mxu0 %v5490
      %5936 = vmatprep.subr.mxu0 0.0
      %5937 = vmatpush1.msra.mxu0 %v5491
      %5938 = vmatprep.subr.mxu0 0.0
      %5939 = vmatpush1.msra.mxu0 %v5492
      %5940 = vmatprep.subr.mxu0 0.0
      %5941 = vmatpush1.msra.mxu0 %v5493
      %5942 = vmatprep.subr.mxu0 0.0
      %5943 = vmatpush1.msra.mxu0 %v5494
      %5944 = vmatprep.subr.mxu0 0.0
      %5945 = vmatpush1.msra.mxu0 %v5495
      %5946 = vmatprep.subr.mxu0 0.0
      %5947 = vmatpush1.msra.mxu0 %v5496
      %5948 = vmatprep.subr.mxu0 0.0
      %5949 = vmatpush1.msra.mxu0 %v5497
      %5950 = vmatprep.subr.mxu0 0.0
      %5951 = vmatpush1.msra.mxu0 %v5498
      %5952 = vmatprep.subr.mxu0 0.0
      %5953 = vmatpush1.msra.mxu0 %v5499
      %5954 = vmatprep.subr.mxu0 0.0
      %5955 = vmatpush1.msra.mxu0 %v5500
      %5956 = vmatprep.subr.mxu0 0.0
      %5957 = vmatpush1.msra.mxu0 %v5501
      %5958 = vmatprep.subr.mxu0 0.0
      %5959 = vmatpush1.msra.mxu0 %v5502
      %5960 = vmatprep.subr.mxu0 0.0
      %5961 = vmatpush1.msra.mxu0 %v5503
      %5962 = vmatprep.subr.mxu0 0.0
      %5963 = vmatpush1.msra.mxu0 %v5504
      %5964 = vmatprep.subr.mxu0 0.0
      %5965 = vmatpush1.msra.mxu0 %v5505
      %5966 = vmatprep.subr.mxu0 0.0
      %5967 = vmatpush1.msra.mxu0 %v5506
      %5968 = vmatprep.subr.mxu0 0.0
      %5969 = vmatpush1.msra.mxu0 %v5507
      %5970 = vmatprep.subr.mxu0 0.0
      %5971 = vmatpush1.msra.mxu0 %v5508
      %5972 = vmatprep.subr.mxu0 0.0
      %5973 = vmatpush1.msra.mxu0 %v5509
      %5974 = vmatprep.subr.mxu0 0.0
      %5975 = vmatpush1.msra.mxu0 %v5510
      %5976 = vmatprep.subr.mxu0 0.0
      %5977 = vmatpush1.msra.mxu0 %v5511
      %5978 = vmatprep.subr.mxu0 0.0
      %5979 = vmatpush1.msra.mxu0 %v5512
      %5980 = vmatprep.subr.mxu0 0.0
      %5981 = vmatpush1.msra.mxu0 %v5513
      %5982 = vmatprep.subr.mxu0 0.0
      %5983 = vmatpush1.msra.mxu0 %v5514
      %5984 = vmatprep.subr.mxu0 0.0
      %5985 = vmatpush1.msra.mxu0 %v5515
      %5986 = vmatprep.mubr.f32.mxu0 %v5250
      %5987 = vmatmul.mubr.f32.gmra.mrb[0].mxu0 %v5249
      %v5988 = vpop.f32.mrb[0].mxu0
      %v5989 = vadd.f32 %v5719, %v5988
      %v5990 = vpop.f32.mrb[0].mxu0
      %5991 = vmatprep.mubr.f32.mxu0 %v5255
      %5992 = vmatmul.mubr.f32.gmra.mrb[0].mxu0 %v5254
      %v5993 = vpop.f32.mrb[0].mxu0
      %v5994 = vadd.f32 %v5724, %v5993
      %v5995 = vpop.f32.mrb[0].mxu0
      %5996 = vmatprep.mubr.f32.mxu0 %v5260
      %5997 = vmatmul.mubr.f32.gmra.mrb[0].mxu0 %v5259
      %v5998 = vpop.f32.mrb[0].mxu0
      %v5999 = vadd.f32 %v5729, %v5998
      %v6000 = vpop.f32.mrb[0].mxu0
      %6001 = vmatprep.mubr.f32.mxu0 %v5265
      %6002 = vmatmul.mubr.f32.gmra.mrb[0].mxu0 %v5264
      %v6003 = vpop.f32.mrb[0].mxu0
      %v6004 = vadd.f32 %v5734, %v6003
      %v6005 = vpop.f32.mrb[0].mxu0
      %6006 = vmatprep.mubr.f32.mxu0 %v5270
      %6007 = vmatmul.mubr.f32.gmra.mrb[0].mxu0 %v5269
      %v6008 = vpop.f32.mrb[0].mxu0
      %v6009 = vadd.f32 %v5739, %v6008
      %v6010 = vpop.f32.mrb[0].mxu0
      %6011 = vmatprep.mubr.f32.mxu0 %v5275
      %6012 = vmatmul.mubr.f32.gmra.mrb[0].mxu0 %v5274
      %v6013 = vpop.f32.mrb[0].mxu0
      %v6014 = vadd.f32 %v5744, %v6013
      %v6015 = vpop.f32.mrb[0].mxu0
      %6016 = vmatprep.mubr.f32.mxu0 %v5280
      %6017 = vmatmul.mubr.f32.gmra.mrb[0].mxu0 %v5279
      %v6018 = vpop.f32.mrb[0].mxu0
      %v6019 = vadd.f32 %v5749, %v6018
      %v6020 = vpop.f32.mrb[0].mxu0
      %6021 = vmatprep.mubr.f32.mxu0 %v5285
      %6022 = vmatmul.mubr.f32.gmra.mrb[0].mxu0 %v5284
      %v6023 = vpop.f32.mrb[0].mxu0
      %v6024 = vadd.f32 %v5754, %v6023
      %v6025 = vpop.f32.mrb[0].mxu0
      %6026 = vmatprep.mubr.f32.mxu0 %v5290
      %6027 = vmatmul.mubr.f32.gmra.mrb[0].mxu0 %v5289
      %v6028 = vpop.f32.mrb[0].mxu0
      %v6029 = vadd.f32 %v5759, %v6028
      %v6030 = vpop.f32.mrb[0].mxu0
      %6031 = vmatprep.mubr.f32.mxu0 %v5295
      %6032 = vmatmul.mubr.f32.gmra.mrb[0].mxu0 %v5294
      %v6033 = vpop.f32.mrb[0].mxu0
      %v6034 = vadd.f32 %v5764, %v6033
      %v6035 = vpop.f32.mrb[0].mxu0
      %6036 = vmatprep.mubr.f32.mxu0 %v5300
      %6037 = vmatmul.mubr.f32.gmra.mrb[0].mxu0 %v5299
      %v6038 = vpop.f32.mrb[0].mxu0
      %v6039 = vadd.f32 %v5769, %v6038
      %v6040 = vpop.f32.mrb[0].mxu0
      %6041 = vmatprep.mubr.f32.mxu0 %v5305
      %6042 = vmatmul.mubr.f32.gmra.mrb[0].mxu0 %v5304
      %v6043 = vpop.f32.mrb[0].mxu0
      %v6044 = vadd.f32 %v5774, %v6043
      %v6045 = vpop.f32.mrb[0].mxu0
      %6046 = vmatprep.mubr.f32.mxu0 %v5310
      %6047 = vmatmul.mubr.f32.gmra.mrb[0].mxu0 %v5309
      %v6048 = vpop.f32.mrb[0].mxu0
      %v6049 = vadd.f32 %v5779, %v6048
      %v6050 = vpop.f32.mrb[0].mxu0
      %6051 = vmatprep.mubr.f32.mxu0 %v5315
      %6052 = vmatmul.mubr.f32.gmra.mrb[0].mxu0 %v5314
      %v6053 = vpop.f32.mrb[0].mxu0
      %v6054 = vadd.f32 %v5784, %v6053
      %v6055 = vpop.f32.mrb[0].mxu0
      %6056 = vmatprep.mubr.f32.mxu0 %v5320
      %6057 = vmatmul.mubr.f32.gmra.mrb[0].mxu0 %v5319
      %v6058 = vpop.f32.mrb[0].mxu0
      %v6059 = vadd.f32 %v5789, %v6058
      %v6060 = vpop.f32.mrb[0].mxu0
      %6061 = vmatprep.mubr.f32.mxu0 %v5325
      %6062 = vmatmul.mubr.f32.gmra.mrb[0].mxu0 %v5324
      %v6063 = vpop.f32.mrb[0].mxu0
      %v6064 = vadd.f32 %v5794, %v6063
      %v6065 = vpop.f32.mrb[0].mxu0
      %6066 = vmatprep.mubr.f32.mxu0 %v5330
      %6067 = vmatmul.mubr.f32.gmra.mrb[0].mxu0 %v5329
      %v6068 = vpop.f32.mrb[0].mxu0
      %v6069 = vadd.f32 %v5799, %v6068
      %v6070 = vpop.f32.mrb[0].mxu0
      %6071 = vmatprep.mubr.f32.mxu0 %v5335
      %6072 = vmatmul.mubr.f32.gmra.mrb[0].mxu0 %v5334
      %v6073 = vpop.f32.mrb[0].mxu0
      %v6074 = vadd.f32 %v5804, %v6073
      %v6075 = vpop.f32.mrb[0].mxu0
      %6076 = vmatprep.mubr.f32.mxu0 %v5340
      %6077 = vmatmul.mubr.f32.gmra.mrb[0].mxu0 %v5339
      %v6078 = vpop.f32.mrb[0].mxu0
      %v6079 = vadd.f32 %v5809, %v6078
      %v6080 = vpop.f32.mrb[0].mxu0
      %6081 = vmatprep.mubr.f32.mxu0 %v5345
      %6082 = vmatmul.mubr.f32.gmra.mrb[0].mxu0 %v5344
      %v6083 = vpop.f32.mrb[0].mxu0
      %v6084 = vadd.f32 %v5814, %v6083
      %v6085 = vpop.f32.mrb[0].mxu0
      %6086 = vmatprep.mubr.f32.mxu0 %v5350
      %6087 = vmatmul.mubr.f32.gmra.mrb[0].mxu0 %v5349
      %v6088 = vpop.f32.mrb[0].mxu0
      %v6089 = vadd.f32 %v5819, %v6088
      %v6090 = vpop.f32.mrb[0].mxu0
      %6091 = vmatprep.mubr.f32.mxu0 %v5355
      %6092 = vmatmul.mubr.f32.gmra.mrb[0].mxu0 %v5354
      %v6093 = vpop.f32.mrb[0].mxu0
      %v6094 = vadd.f32 %v5824, %v6093
      %v6095 = vpop.f32.mrb[0].mxu0
      %6096 = vmatprep.mubr.f32.mxu0 %v5360
      %6097 = vmatmul.mubr.f32.gmra.mrb[0].mxu0 %v5359
      %v6098 = vpop.f32.mrb[0].mxu0
      %v6099 = vadd.f32 %v5829, %v6098
      %v6100 = vpop.f32.mrb[0].mxu0
      %6101 = vmatprep.mubr.f32.mxu0 %v5365
      %6102 = vmatmul.mubr.f32.gmra.mrb[0].mxu0 %v5364
      %v6103 = vpop.f32.mrb[0].mxu0
      %v6104 = vadd.f32 %v5834, %v6103
      %v6105 = vpop.f32.mrb[0].mxu0
      %6106 = vmatprep.mubr.f32.mxu0 %v5370
      %6107 = vmatmul.mubr.f32.gmra.mrb[0].mxu0 %v5369
      %v6108 = vpop.f32.mrb[0].mxu0
      %v6109 = vadd.f32 %v5839, %v6108
      %v6110 = vpop.f32.mrb[0].mxu0
      %6111 = vmatprep.mubr.f32.mxu0 %v5375
      %6112 = vmatmul.mubr.f32.gmra.mrb[0].mxu0 %v5374
      %v6113 = vpop.f32.mrb[0].mxu0
      %v6114 = vadd.f32 %v5844, %v6113
      %v6115 = vpop.f32.mrb[0].mxu0
      %6116 = vmatprep.mubr.f32.mxu0 %v5380
      %6117 = vmatmul.mubr.f32.gmra.mrb[0].mxu0 %v5379
      %v6118 = vpop.f32.mrb[0].mxu0
      %v6119 = vadd.f32 %v5849, %v6118
      %v6120 = vpop.f32.mrb[0].mxu0
      %6121 = vmatprep.mubr.f32.mxu0 %v5385
      %6122 = vmatmul.mubr.f32.gmra.mrb[0].mxu0 %v5384
      %v6123 = vpop.f32.mrb[0].mxu0
      %v6124 = vadd.f32 %v5854, %v6123
      %v6125 = vpop.f32.mrb[0].mxu0
      %6126 = vmatprep.mubr.f32.mxu0 %v5390
      %6127 = vmatmul.mubr.f32.gmra.mrb[0].mxu0 %v5389
      %v6128 = vpop.f32.mrb[0].mxu0
      %v6129 = vadd.f32 %v5859, %v6128
      %v6130 = vpop.f32.mrb[0].mxu0
      %6131 = vmatprep.mubr.f32.mxu0 %v5395
      %6132 = vmatmul.mubr.f32.gmra.mrb[0].mxu0 %v5394
      %v6133 = vpop.f32.mrb[0].mxu0
      %v6134 = vadd.f32 %v5864, %v6133
      %v6135 = vpop.f32.mrb[0].mxu0
      %6136 = vmatprep.mubr.f32.mxu0 %v5400
      %6137 = vmatmul.mubr.f32.gmra.mrb[0].mxu0 %v5399
      %v6138 = vpop.f32.mrb[0].mxu0
      %v6139 = vadd.f32 %v5869, %v6138
      %v6140 = vpop.f32.mrb[0].mxu0
      %6141 = vmatprep.mubr.f32.mxu0 %v5405
      %6142 = vmatmul.mubr.f32.gmra.mrb[0].mxu0 %v5404
      %v6143 = vpop.f32.mrb[0].mxu0
      %v6144 = vadd.f32 %v5874, %v6143
      %v6145 = vpop.f32.mrb[0].mxu0
      %6146 = vmatprep.mubr.f32.mxu0 %v5410
      %6147 = vmatmul.mubr.f32.gmra.mrb[0].mxu0 %v5409
      %v6148 = vpop.f32.mrb[0].mxu0
      %v6149 = vadd.f32 %v5879, %v6148
      %v6150 = vpop.f32.mrb[0].mxu0
      %6151 = vmatprep.mubr.f32.mxu0 %v5415
      %6152 = vmatmul.mubr.f32.gmra.mrb[0].mxu0 %v5414
      %v6153 = vpop.f32.mrb[0].mxu0
      %v6154 = vadd.f32 %v5884, %v6153
      %v6155 = vpop.f32.mrb[0].mxu0
      %6156 = vmatprep.mubr.f32.mxu0 %v5420
      %6157 = vmatmul.mubr.f32.gmra.mrb[0].mxu0 %v5419
      %v6158 = vpop.f32.mrb[0].mxu0
      %v6159 = vadd.f32 %v5889, %v6158
      %v6160 = vpop.f32.mrb[0].mxu0
      %6161 = vmatprep.mubr.f32.mxu0 %v5425
      %6162 = vmatmul.mubr.f32.gmra.mrb[0].mxu0 %v5424
      %v6163 = vpop.f32.mrb[0].mxu0
      %v6164 = vadd.f32 %v5894, %v6163
      %v6165 = vpop.f32.mrb[0].mxu0
      %6166 = vmatprep.mubr.f32.mxu0 %v5430
      %6167 = vmatmul.mubr.f32.gmra.mrb[0].mxu0 %v5429
      %v6168 = vpop.f32.mrb[0].mxu0
      %v6169 = vadd.f32 %v5899, %v6168
      %v6170 = vpop.f32.mrb[0].mxu0
      %6171 = vmatprep.mubr.f32.mxu0 %v5435
      %6172 = vmatmul.mubr.f32.gmra.mrb[0].mxu0 %v5434
      %v6173 = vpop.f32.mrb[0].mxu0
      %v6174 = vadd.f32 %v5904, %v6173
      %v6175 = vpop.f32.mrb[0].mxu0
      %6176 = vmatprep.mubr.f32.mxu0 %v5440
      %6177 = vmatmul.mubr.f32.gmra.mrb[0].mxu0 %v5439
      %v6178 = vpop.f32.mrb[0].mxu0
      %v6179 = vadd.f32 %v5909, %v6178
      %v6180 = vpop.f32.mrb[0].mxu0
      %6181 = vmatprep.mubr.f32.mxu0 %v5445
      %6182 = vmatmul.mubr.f32.gmra.mrb[0].mxu0 %v5444
      %v6183 = vpop.f32.mrb[0].mxu0
      %v6184 = vadd.f32 %v5914, %v6183
      %v6185 = vpop.f32.mrb[0].mxu0
      %6186 = vmatprep.mubr.f32.mxu0 %v5450
      %6187 = vmatmul.mubr.f32.gmra.mrb[0].mxu0 %v5449
      %v6188 = vpop.f32.mrb[0].mxu0
      %v6189 = vadd.f32 %v5919, %v6188
      %v6190 = vpop.f32.mrb[0].mxu0
      %6191 = vdwg.mxu0
      %6192 = vmatprep.subr.mxu0 0.0
      %6193 = vmatpush1.msra.mxu0 %v5516
      %6194 = vmatprep.subr.mxu0 0.0
      %6195 = vmatpush1.msra.mxu0 %v5517
      %6196 = vmatprep.subr.mxu0 0.0
      %6197 = vmatpush1.msra.mxu0 %v5518
      %6198 = vmatprep.subr.mxu0 0.0
      %6199 = vmatpush1.msra.mxu0 %v5519
      %6200 = vmatprep.subr.mxu0 0.0
      %6201 = vmatpush1.msra.mxu0 %v5520
      %6202 = vmatprep.subr.mxu0 0.0
      %6203 = vmatpush1.msra.mxu0 %v5521
      %6204 = vmatprep.subr.mxu0 0.0
      %6205 = vmatpush1.msra.mxu0 %v5522
      %6206 = vmatprep.subr.mxu0 0.0
      %6207 = vmatpush1.msra.mxu0 %v5523
      %6208 = vmatprep.subr.mxu0 0.0
      %6209 = vmatpush1.msra.mxu0 0.0
      %6210 = vmatprep.subr.mxu0 0.0
      %6211 = vmatpush1.msra.mxu0 0.0
      %6212 = vmatprep.subr.mxu0 0.0
      %6213 = vmatpush1.msra.mxu0 0.0
      %6214 = vmatprep.subr.mxu0 0.0
      %6215 = vmatpush1.msra.mxu0 0.0
      %6216 = vmatprep.subr.mxu0 0.0
      %6217 = vmatpush1.msra.mxu0 0.0
      %6218 = vmatprep.subr.mxu0 0.0
      %6219 = vmatpush1.msra.mxu0 0.0
      %6220 = vmatprep.subr.mxu0 0.0
      %6221 = vmatpush1.msra.mxu0 0.0
      %6222 = vmatprep.subr.mxu0 0.0
      %6223 = vmatpush1.msra.mxu0 0.0
      %6224 = vmatprep.subr.mxu0 0.0
      %6225 = vmatpush1.msra.mxu0 0.0
      %6226 = vmatprep.subr.mxu0 0.0
      %6227 = vmatpush1.msra.mxu0 0.0
      %6228 = vmatprep.subr.mxu0 0.0
      %6229 = vmatpush1.msra.mxu0 0.0
      %6230 = vmatprep.subr.mxu0 0.0
      %6231 = vmatpush1.msra.mxu0 0.0
      %6232 = vmatprep.subr.mxu0 0.0
      %6233 = vmatpush1.msra.mxu0 0.0
      %6234 = vmatprep.subr.mxu0 0.0
      %6235 = vmatpush1.msra.mxu0 0.0
      %6236 = vmatprep.subr.mxu0 0.0
      %6237 = vmatpush1.msra.mxu0 0.0
      %6238 = vmatprep.subr.mxu0 0.0
      %6239 = vmatpush1.msra.mxu0 0.0
      %6240 = vmatprep.subr.mxu0 0.0
      %6241 = vmatpush1.msra.mxu0 0.0
      %6242 = vmatprep.subr.mxu0 0.0
      %6243 = vmatpush1.msra.mxu0 0.0
      %6244 = vmatprep.subr.mxu0 0.0
      %6245 = vmatpush1.msra.mxu0 0.0
      %6246 = vmatprep.subr.mxu0 0.0
      %6247 = vmatpush1.msra.mxu0 0.0
      %6248 = vmatprep.subr.mxu0 0.0
      %6249 = vmatpush1.msra.mxu0 0.0
      %6250 = vmatprep.subr.mxu0 0.0
      %6251 = vmatpush1.msra.mxu0 0.0
      %6252 = vmatprep.subr.mxu0 0.0
      %6253 = vmatpush1.msra.mxu0 0.0
      %6254 = vmatprep.subr.mxu0 0.0
      %6255 = vmatpush1.msra.mxu0 0.0
      %6256 = vmatprep.mubr.f32.mxu0 0.0
      %6257 = vmatmul.mubr.f32.gmra.mrb[0].mxu0 %v5530
      %v6258 = vpop.f32.mrb[0].mxu0
      %v6259 = vadd.f32 %v5989, %v6258
      %v6260 = vpop.f32.mrb[0].mxu0
      %6261 = vmatprep.mubr.f32.mxu0 0.0
      %6262 = vmatmul.mubr.f32.gmra.mrb[0].mxu0 %v5533
      %v6263 = vpop.f32.mrb[0].mxu0
      %v6264 = vadd.f32 %v5994, %v6263
      %v6265 = vpop.f32.mrb[0].mxu0
      %6266 = vmatprep.mubr.f32.mxu0 0.0
      %6267 = vmatmul.mubr.f32.gmra.mrb[0].mxu0 %v5536
      %v6268 = vpop.f32.mrb[0].mxu0
      %v6269 = vadd.f32 %v5999, %v6268
      %v6270 = vpop.f32.mrb[0].mxu0
      %6271 = vmatprep.mubr.f32.mxu0 0.0
      %6272 = vmatmul.mubr.f32.gmra.mrb[0].mxu0 %v5539
      %v6273 = vpop.f32.mrb[0].mxu0
      %v6274 = vadd.f32 %v6004, %v6273
      %v6275 = vpop.f32.mrb[0].mxu0
      %6276 = vmatprep.mubr.f32.mxu0 0.0
      %6277 = vmatmul.mubr.f32.gmra.mrb[0].mxu0 %v5542
      %v6278 = vpop.f32.mrb[0].mxu0
      %v6279 = vadd.f32 %v6009, %v6278
      %v6280 = vpop.f32.mrb[0].mxu0
      %6281 = vmatprep.mubr.f32.mxu0 0.0
      %6282 = vmatmul.mubr.f32.gmra.mrb[0].mxu0 %v5545
      %v6283 = vpop.f32.mrb[0].mxu0
      %v6284 = vadd.f32 %v6014, %v6283
      %v6285 = vpop.f32.mrb[0].mxu0
      %6286 = vmatprep.mubr.f32.mxu0 0.0
      %6287 = vmatmul.mubr.f32.gmra.mrb[0].mxu0 %v5548
      %v6288 = vpop.f32.mrb[0].mxu0
      %v6289 = vadd.f32 %v6019, %v6288
      %v6290 = vpop.f32.mrb[0].mxu0
      %6291 = vmatprep.mubr.f32.mxu0 0.0
      %6292 = vmatmul.mubr.f32.gmra.mrb[0].mxu0 %v5551
      %v6293 = vpop.f32.mrb[0].mxu0
      %v6294 = vadd.f32 %v6024, %v6293
      %v6295 = vpop.f32.mrb[0].mxu0
      %6296 = vmatprep.mubr.f32.mxu0 0.0
      %6297 = vmatmul.mubr.f32.gmra.mrb[0].mxu0 %v5554
      %v6298 = vpop.f32.mrb[0].mxu0
      %v6299 = vadd.f32 %v6029, %v6298
      %v6300 = vpop.f32.mrb[0].mxu0
      %6301 = vmatprep.mubr.f32.mxu0 0.0
      %6302 = vmatmul.mubr.f32.gmra.mrb[0].mxu0 %v5557
      %v6303 = vpop.f32.mrb[0].mxu0
      %v6304 = vadd.f32 %v6034, %v6303
      %v6305 = vpop.f32.mrb[0].mxu0
      %6306 = vmatprep.mubr.f32.mxu0 0.0
      %6307 = vmatmul.mubr.f32.gmra.mrb[0].mxu0 %v5560
      %v6308 = vpop.f32.mrb[0].mxu0
      %v6309 = vadd.f32 %v6039, %v6308
      %v6310 = vpop.f32.mrb[0].mxu0
      %6311 = vmatprep.mubr.f32.mxu0 0.0
      %6312 = vmatmul.mubr.f32.gmra.mrb[0].mxu0 %v5563
      %v6313 = vpop.f32.mrb[0].mxu0
      %v6314 = vadd.f32 %v6044, %v6313
      %v6315 = vpop.f32.mrb[0].mxu0
      %6316 = vmatprep.mubr.f32.mxu0 0.0
      %6317 = vmatmul.mubr.f32.gmra.mrb[0].mxu0 %v5566
      %v6318 = vpop.f32.mrb[0].mxu0
      %v6319 = vadd.f32 %v6049, %v6318
      %v6320 = vpop.f32.mrb[0].mxu0
      %6321 = vmatprep.mubr.f32.mxu0 0.0
      %6322 = vmatmul.mubr.f32.gmra.mrb[0].mxu0 %v5569
      %v6323 = vpop.f32.mrb[0].mxu0
      %v6324 = vadd.f32 %v6054, %v6323
      %v6325 = vpop.f32.mrb[0].mxu0
      %6326 = vmatprep.mubr.f32.mxu0 0.0
      %6327 = vmatmul.mubr.f32.gmra.mrb[0].mxu0 %v5572
      %v6328 = vpop.f32.mrb[0].mxu0
      %v6329 = vadd.f32 %v6059, %v6328
      %v6330 = vpop.f32.mrb[0].mxu0
      %6331 = vmatprep.mubr.f32.mxu0 0.0
      %6332 = vmatmul.mubr.f32.gmra.mrb[0].mxu0 %v5575
      %v6333 = vpop.f32.mrb[0].mxu0
      %v6334 = vadd.f32 %v6064, %v6333
      %v6335 = vpop.f32.mrb[0].mxu0
      %6336 = vmatprep.mubr.f32.mxu0 0.0
      %6337 = vmatmul.mubr.f32.gmra.mrb[0].mxu0 %v5578
      %v6338 = vpop.f32.mrb[0].mxu0
      %v6339 = vadd.f32 %v6069, %v6338
      %v6340 = vpop.f32.mrb[0].mxu0
      %6341 = vmatprep.mubr.f32.mxu0 0.0
      %6342 = vmatmul.mubr.f32.gmra.mrb[0].mxu0 %v5581
      %v6343 = vpop.f32.mrb[0].mxu0
      %v6344 = vadd.f32 %v6074, %v6343
      %v6345 = vpop.f32.mrb[0].mxu0
      %6346 = vmatprep.mubr.f32.mxu0 0.0
      %6347 = vmatmul.mubr.f32.gmra.mrb[0].mxu0 %v5584
      %v6348 = vpop.f32.mrb[0].mxu0
      %v6349 = vadd.f32 %v6079, %v6348
      %v6350 = vpop.f32.mrb[0].mxu0
      %6351 = vmatprep.mubr.f32.mxu0 0.0
      %6352 = vmatmul.mubr.f32.gmra.mrb[0].mxu0 %v5587
      %v6353 = vpop.f32.mrb[0].mxu0
      %v6354 = vadd.f32 %v6084, %v6353
      %v6355 = vpop.f32.mrb[0].mxu0
      %6356 = vmatprep.mubr.f32.mxu0 0.0
      %6357 = vmatmul.mubr.f32.gmra.mrb[0].mxu0 %v5590
      %v6358 = vpop.f32.mrb[0].mxu0
      %v6359 = vadd.f32 %v6089, %v6358
      %v6360 = vpop.f32.mrb[0].mxu0
      %6361 = vmatprep.mubr.f32.mxu0 0.0
      %6362 = vmatmul.mubr.f32.gmra.mrb[0].mxu0 %v5593
      %v6363 = vpop.f32.mrb[0].mxu0
      %v6364 = vadd.f32 %v6094, %v6363
      %v6365 = vpop.f32.mrb[0].mxu0
      %6366 = vmatprep.mubr.f32.mxu0 0.0
      %6367 = vmatmul.mubr.f32.gmra.mrb[0].mxu0 %v5596
      %v6368 = vpop.f32.mrb[0].mxu0
      %v6369 = vadd.f32 %v6099, %v6368
      %v6370 = vpop.f32.mrb[0].mxu0
      %6371 = vmatprep.mubr.f32.mxu0 0.0
      %6372 = vmatmul.mubr.f32.gmra.mrb[0].mxu0 %v5599
      %v6373 = vpop.f32.mrb[0].mxu0
      %v6374 = vadd.f32 %v6104, %v6373
      %v6375 = vpop.f32.mrb[0].mxu0
      %6376 = vmatprep.mubr.f32.mxu0 0.0
      %6377 = vmatmul.mubr.f32.gmra.mrb[0].mxu0 %v5602
      %v6378 = vpop.f32.mrb[0].mxu0
      %v6379 = vadd.f32 %v6109, %v6378
      %v6380 = vpop.f32.mrb[0].mxu0
      %6381 = vmatprep.mubr.f32.mxu0 0.0
      %6382 = vmatmul.mubr.f32.gmra.mrb[0].mxu0 %v5605
      %v6383 = vpop.f32.mrb[0].mxu0
      %v6384 = vadd.f32 %v6114, %v6383
      %v6385 = vpop.f32.mrb[0].mxu0
      %6386 = vmatprep.mubr.f32.mxu0 0.0
      %6387 = vmatmul.mubr.f32.gmra.mrb[0].mxu0 %v5608
      %v6388 = vpop.f32.mrb[0].mxu0
      %v6389 = vadd.f32 %v6119, %v6388
      %v6390 = vpop.f32.mrb[0].mxu0
      %6391 = vmatprep.mubr.f32.mxu0 0.0
      %6392 = vmatmul.mubr.f32.gmra.mrb[0].mxu0 %v5611
      %v6393 = vpop.f32.mrb[0].mxu0
      %v6394 = vadd.f32 %v6124, %v6393
      %v6395 = vpop.f32.mrb[0].mxu0
      %6396 = vmatprep.mubr.f32.mxu0 0.0
      %6397 = vmatmul.mubr.f32.gmra.mrb[0].mxu0 %v5614
      %v6398 = vpop.f32.mrb[0].mxu0
      %v6399 = vadd.f32 %v6129, %v6398
      %v6400 = vpop.f32.mrb[0].mxu0
      %6401 = vmatprep.mubr.f32.mxu0 0.0
      %6402 = vmatmul.mubr.f32.gmra.mrb[0].mxu0 %v5617
      %v6403 = vpop.f32.mrb[0].mxu0
      %v6404 = vadd.f32 %v6134, %v6403
      %v6405 = vpop.f32.mrb[0].mxu0
      %6406 = vmatprep.mubr.f32.mxu0 0.0
      %6407 = vmatmul.mubr.f32.gmra.mrb[0].mxu0 %v5620
      %v6408 = vpop.f32.mrb[0].mxu0
      %v6409 = vadd.f32 %v6139, %v6408
      %v6410 = vpop.f32.mrb[0].mxu0
      %6411 = vmatprep.mubr.f32.mxu0 0.0
      %6412 = vmatmul.mubr.f32.gmra.mrb[0].mxu0 %v5623
      %v6413 = vpop.f32.mrb[0].mxu0
      %v6414 = vadd.f32 %v6144, %v6413
      %v6415 = vpop.f32.mrb[0].mxu0
      %6416 = vmatprep.mubr.f32.mxu0 0.0
      %6417 = vmatmul.mubr.f32.gmra.mrb[0].mxu0 %v5626
      %v6418 = vpop.f32.mrb[0].mxu0
      %v6419 = vadd.f32 %v6149, %v6418
      %v6420 = vpop.f32.mrb[0].mxu0
      %6421 = vmatprep.mubr.f32.mxu0 0.0
      %6422 = vmatmul.mubr.f32.gmra.mrb[0].mxu0 %v5629
      %v6423 = vpop.f32.mrb[0].mxu0
      %v6424 = vadd.f32 %v6154, %v6423
      %v6425 = vpop.f32.mrb[0].mxu0
      %6426 = vmatprep.mubr.f32.mxu0 0.0
      %6427 = vmatmul.mubr.f32.gmra.mrb[0].mxu0 %v5632
      %v6428 = vpop.f32.mrb[0].mxu0
      %v6429 = vadd.f32 %v6159, %v6428
      %v6430 = vpop.f32.mrb[0].mxu0
      %6431 = vmatprep.mubr.f32.mxu0 0.0
      %6432 = vmatmul.mubr.f32.gmra.mrb[0].mxu0 %v5635
      %v6433 = vpop.f32.mrb[0].mxu0
      %v6434 = vadd.f32 %v6164, %v6433
      %v6435 = vpop.f32.mrb[0].mxu0
      %6436 = vmatprep.mubr.f32.mxu0 0.0
      %6437 = vmatmul.mubr.f32.gmra.mrb[0].mxu0 %v5638
      %v6438 = vpop.f32.mrb[0].mxu0
      %v6439 = vadd.f32 %v6169, %v6438
      %v6440 = vpop.f32.mrb[0].mxu0
      %6441 = vmatprep.mubr.f32.mxu0 0.0
      %6442 = vmatmul.mubr.f32.gmra.mrb[0].mxu0 %v5641
      %v6443 = vpop.f32.mrb[0].mxu0
      %v6444 = vadd.f32 %v6174, %v6443
      %v6445 = vpop.f32.mrb[0].mxu0
      %6446 = vmatprep.mubr.f32.mxu0 0.0
      %6447 = vmatmul.mubr.f32.gmra.mrb[0].mxu0 %v5644
      %v6448 = vpop.f32.mrb[0].mxu0
      %v6449 = vadd.f32 %v6179, %v6448
      %v6450 = vpop.f32.mrb[0].mxu0
      %6451 = vmatprep.mubr.f32.mxu0 0.0
      %6452 = vmatmul.mubr.f32.gmra.mrb[0].mxu0 %v5647
      %v6453 = vpop.f32.mrb[0].mxu0
      %v6454 = vadd.f32 %v6184, %v6453
      %v6455 = vpop.f32.mrb[0].mxu0
      %6456 = vmatprep.mubr.f32.mxu0 0.0
      %6457 = vmatmul.mubr.f32.gmra.mrb[0].mxu0 %v5650
      %v6458 = vpop.f32.mrb[0].mxu0
      %v6459 = vadd.f32 %v6189, %v6458
      %v6460 = vpop.f32.mrb[0].mxu0
      %6461 = vdwg.mxu0
      %6462 = vst.msk [vmem:[%s251] sm:$0xff] %vm1029, %v6259
      %6463 = vst.msk [vmem:[%s251 + $0x8] sm:$0xff] %vm1029, %v6264
      %6464 = vst.msk [vmem:[%s251 + $0x10] sm:$0xff] %vm1029, %v6269
      %6465 = vst.msk [vmem:[%s251 + $0x18] sm:$0xff] %vm1029, %v6274
      %6466 = vst.msk [vmem:[%s251 + $0x20] sm:$0xff] %vm1029, %v6279
      %6467 = vst.msk [vmem:[%s251 + $0x28] sm:$0xff] %vm1029, %v6284
      %6468 = vst.msk [vmem:[%s251 + $0x30] sm:$0xff] %vm1029, %v6289
      %6469 = vst.msk [vmem:[%s251 + $0x38] sm:$0xff] %vm1029, %v6294
      %6470 = vst.msk [vmem:[%s251 + $0x40] sm:$0xff] %vm1029, %v6299
      %6471 = vst.msk [vmem:[%s251 + $0x48] sm:$0xff] %vm1029, %v6304
      %6472 = vst.msk [vmem:[%s251 + $0x50] sm:$0xff] %vm1029, %v6309
      %6473 = vst.msk [vmem:[%s251 + $0x58] sm:$0xff] %vm1029, %v6314
      %6474 = vst.msk [vmem:[%s251 + $0x60] sm:$0xff] %vm1029, %v6319
      %6475 = vst.msk [vmem:[%s251 + $0x68] sm:$0xff] %vm1029, %v6324
      %6476 = vst.msk [vmem:[%s251 + $0x70] sm:$0xff] %vm1029, %v6329
      %6477 = vst.msk [vmem:[%s251 + $0x78] sm:$0xff] %vm1029, %v6334
      %6478 = vst.msk [vmem:[%s251 + $0x80] sm:$0xff] %vm1029, %v6339
      %6479 = vst.msk [vmem:[%s251 + $0x88] sm:$0xff] %vm1029, %v6344
      %6480 = vst.msk [vmem:[%s251 + $0x90] sm:$0xff] %vm1029, %v6349
      %6481 = vst.msk [vmem:[%s251 + $0x98] sm:$0xff] %vm1029, %v6354
      %6482 = vst.msk [vmem:[%s251 + $0xa0] sm:$0xff] %vm1029, %v6359
      %6483 = vst.msk [vmem:[%s251 + $0xa8] sm:$0xff] %vm1029, %v6364
      %6484 = vst.msk [vmem:[%s251 + $0xb0] sm:$0xff] %vm1029, %v6369
      %6485 = vst.msk [vmem:[%s251 + $0xb8] sm:$0xff] %vm1029, %v6374
      %6486 = vst.msk [vmem:[%s251 + $0xc0] sm:$0xff] %vm1029, %v6379
      %6487 = vst.msk [vmem:[%s251 + $0xc8] sm:$0xff] %vm1029, %v6384
      %6488 = vst.msk [vmem:[%s251 + $0xd0] sm:$0xff] %vm1029, %v6389
      %6489 = vst.msk [vmem:[%s251 + $0xd8] sm:$0xff] %vm1029, %v6394
      %6490 = vst.msk [vmem:[%s251 + $0xe0] sm:$0xff] %vm1029, %v6399
      %6491 = vst.msk [vmem:[%s251 + $0xe8] sm:$0xff] %vm1029, %v6404
      %6492 = vst.msk [vmem:[%s251 + $0xf0] sm:$0xff] %vm1029, %v6409
      %6493 = vst.msk [vmem:[%s251 + $0xf8] sm:$0xff] %vm1029, %v6414
      %6494 = vst.msk [vmem:[%s251 + $0x100] sm:$0xff] %vm1029, %v6419
      %6495 = vst.msk [vmem:[%s251 + $0x108] sm:$0xff] %vm1029, %v6424
      %6496 = vst.msk [vmem:[%s251 + $0x110] sm:$0xff] %vm1029, %v6429
      %6497 = vst.msk [vmem:[%s251 + $0x118] sm:$0xff] %vm1029, %v6434
      %6498 = vst.msk [vmem:[%s251 + $0x120] sm:$0xff] %vm1029, %v6439
      %6499 = vst.msk [vmem:[%s251 + $0x128] sm:$0xff] %vm1029, %v6444
      %6500 = vst.msk [vmem:[%s251 + $0x130] sm:$0xff] %vm1029, %v6449
      %6501 = vst.msk [vmem:[%s251 + $0x138] sm:$0xff] %vm1029, %v6454
      %6502 = vst.msk [vmem:[%s251 + $0x140] sm:$0xf] %vm1076, %v6459
      %p6503 = scmp.lt.s32.totalorder %s17, 1
      %s6504 = scalar_select %p6503, %s17, 1
      %s6505 = smul.addr %s6504, 41
      %s6506 = smul.addr %s6505, 8
      %s6507 = scalar_lea.vmem %s6, %s6506
      // Predicated region
      $region45: #{cnn_model_forward.1} parent=43 // pred_check
        %p6508 = pneg %p166
      $region46: #{cnn_model_forward.1} parent=43 // pred_check_branch
        %6510 = sbr.rel (%p6508) target = $region48
      $region47: #{cnn_model_forward.1} parent=43 // pred_region
        _
      $region48: #{cnn_model_forward.1} parent=43 // pred_fallthru
        _
    $region44: #{cnn_model_forward.1} parent=5 // pred_fallthru
      _
    %p6511 = scmp.le.s32.totalorder 2, %s12
    // Predicated region
    $region49: #{cnn_model_forward.1} parent=5 // pred_check
      %p6512 = pneg %p6511
    $region50: #{cnn_model_forward.1} parent=5 // pred_check_branch
      %6514 = sbr.rel (%p6512) target = $region52
    $region51: #{cnn_model_forward.1} parent=5 // pred_region
      %s6515 = ssub.s32 %s12, 2
      // Predicated region
      $region53: #{cnn_model_forward.1} parent=51 // pred_check
        %p6516 = pneg %p172
      $region54: #{cnn_model_forward.1} parent=51 // pred_check_branch
        %6518 = sbr.rel (%p6516) target = $region56
      $region55: #{cnn_model_forward.1} parent=51 // pred_region
        %p6519 = scmp.lt.s32.totalorder %s18, 1
        %s6520 = scalar_select %p6519, %s18, 1
        %s6521 = smul.addr %s6520, 41
        %s6522 = smul.addr %s6521, 8
        %s6523 = scalar_lea.vmem %s6, %s6522
      $region56: #{cnn_model_forward.1} parent=51 // pred_fallthru
        _
    $region52: #{cnn_model_forward.1} parent=5 // pred_fallthru
      _
  $region6: #{cnn_model_forward.1} parent=0 // loop_footer
    %s16 = sadd.s32 1, %s12
  $region7: #{cnn_model_forward.1} parent=0 // loop_footer_branch
    %11 = sbr.rel target = $region3
  $region8: #{cnn_model_forward.1} parent=0 // loop_exit
    _

</llo_original>
